<compile_context>
chip_gen: v6e
topology: v6e:2x2x1
jax: 0.10.0
libtpu: 0.0.40
codegen_flags: <defaults>
</compile_context>

<pallas_src>
import functools

import jax
import jax.numpy as jnp
from jax.experimental import pallas as pl
from jax.experimental.pallas import tpu as pltpu

REPEAT_1, REPEAT_2, REPEAT_3 = 2, 2, 1   # TODO(synk): original repeats are (5, 10, 5)


# ----------------------------- Pallas kernels -------------------------------

def _mm_kernel(x_ref, w_ref, s_ref, b_ref, o_ref, acc_ref, *, relu):
    """o = maybe_relu((x @ w) * s + b); K accumulated over grid axis 2."""
    @pl.when(pl.program_id(2) == 0)
    def _():
        acc_ref[...] = jnp.zeros_like(acc_ref)

    acc_ref[...] += jnp.dot(x_ref[...], w_ref[...],
                            preferred_element_type=jnp.float32)

    @pl.when(pl.program_id(2) == pl.num_programs(2) - 1)
    def _():
        y = acc_ref[...] * s_ref[...] + b_ref[...]
        if relu:
            y = jnp.maximum(y, 0.0)
        o_ref[...] = y


def _mm_res_kernel(x_ref, w_ref, s_ref, b_ref, r_ref, o_ref, acc_ref, *,
                   relu, res_scale):
    """Inception-ResNet fused: o = maybe_relu(r + res_scale*((x@w)*s + b))."""
    @pl.when(pl.program_id(2) == 0)
    def _():
        acc_ref[...] = jnp.zeros_like(acc_ref)

    acc_ref[...] += jnp.dot(x_ref[...], w_ref[...],
                            preferred_element_type=jnp.float32)

    @pl.when(pl.program_id(2) == pl.num_programs(2) - 1)
    def _():
        y = acc_ref[...] * s_ref[...] + b_ref[...]
        y = r_ref[...] + res_scale * y
        if relu:
            y = jnp.maximum(y, 0.0)
        o_ref[...] = y


def _head_kernel(x_ref, w_ref, s_ref, b_ref, o_ref, *, inv_hw):
    """Global avg-pool + last_linear(no bias) + last_bn + L2 normalize."""
    xm = jnp.sum(x_ref[...], axis=1) * inv_hw                 # (N, C)
    y = jnp.dot(xm, w_ref[...], preferred_element_type=jnp.float32)
    y = y * s_ref[...] + b_ref[...]
    nrm = jnp.sqrt(jnp.sum(y * y, axis=-1, keepdims=True))
    o_ref[...] = y / jnp.maximum(nrm, 1e-12)                  # F.normalize(dim=1)


# ------------------------------- helpers -------------------------------------

def _round_up(v, m):
    return (v + m - 1) // m * m


def _pad2(a, pr, pc):
    if pr == 0 and pc == 0:
        return a
    return jnp.pad(a, ((0, pr), (0, pc)))


def _full_spec(shape):
    n = len(shape)
    return pl.BlockSpec(shape, lambda i, n=n: (0,) * n)


# --------------------------- pallas_call wrappers ----------------------------

def fused_matmul(x, w, scale, bias, *, relu, residual=None, res_scale=1.0):
    """Tiled bf16 MXU matmul with fused BN scale/bias (+ReLU) (+residual add).

    M/N/K are zero-padded to tile multiples (N to 128 -> lane-dense stores);
    grid = (M tiles, N tiles, K tiles) with a VMEM f32 accumulator and
    dimension_semantics = (parallel, parallel, arbitrary).
    """
    M, K = x.shape
    N = w.shape[1]

    tm = min(256, _round_up(M, 16))
    tn = 128
    tk = 256 if K > 512 else _round_up(K, 128)
    Mp, Np, Kp = _round_up(M, tm), _round_up(N, tn), _round_up(K, tk)

    xp = _pad2(x.astype(jnp.bfloat16), Mp - M, Kp - K)
    wp = _pad2(w.astype(jnp.bfloat16), Kp - K, Np - N)
    sp = _pad2(scale.reshape(1, N).astype(jnp.float32), 0, Np - N)
    bp = _pad2(bias.reshape(1, N).astype(jnp.float32), 0, Np - N)

    in_specs = [
        pl.BlockSpec((tm, tk), lambda i, j, k: (i, k)),
        pl.BlockSpec((tk, tn), lambda i, j, k: (k, j)),
        pl.BlockSpec((1, tn), lambda i, j, k: (0, j)),
        pl.BlockSpec((1, tn), lambda i, j, k: (0, j)),
    ]
    args = [xp, wp, sp, bp]
    if residual is None:
        kernel = functools.partial(_mm_kernel, relu=relu)
    else:
        rp = _pad2(residual.astype(jnp.float32), Mp - M, Np - N)
        in_specs.append(pl.BlockSpec((tm, tn), lambda i, j, k: (i, j)))
        args.append(rp)
        kernel = functools.partial(_mm_res_kernel, relu=relu,
                                   res_scale=res_scale)

    out = pl.pallas_call(
        kernel,
        out_shape=jax.ShapeDtypeStruct((Mp, Np), jnp.float32),
        grid=(Mp // tm, Np // tn, Kp // tk),
        in_specs=in_specs,
        out_specs=pl.BlockSpec((tm, tn), lambda i, j, k: (i, j)),
        scratch_shapes=[pltpu.VMEM((tm, tn), jnp.float32)],
        compiler_params=pltpu.CompilerParams(
            dimension_semantics=("parallel", "parallel", "arbitrary"),
            vmem_limit_bytes=32 * 1024 * 1024),
    )(*args)
    return out[:M, :N]


def head(x, w, scale, bias):
    """Fused avg-pool + last_linear + last_bn + L2 norm (single tiny block)."""
    N, H, W, C = x.shape
    x3 = x.reshape(N, H * W, C)
    cout = w.shape[1]
    s2 = scale.reshape(1, cout)
    b2 = bias.reshape(1, cout)
    return pl.pallas_call(
        functools.partial(_head_kernel, inv_hw=1.0 / (H * W)),
        out_shape=jax.ShapeDtypeStruct((N, cout), jnp.float32),
        grid=(1,),
        in_specs=[_full_spec(x3.shape), _full_spec(w.shape),
                  _full_spec(s2.shape), _full_spec(b2.shape)],
        out_specs=_full_spec((N, cout)),
        compiler_params=pltpu.CompilerParams(
            dimension_semantics=("arbitrary",)),
    )(x3, w, s2, b2)


# ------------------------------ conv-as-matmul -------------------------------

def _im2col(x, kh, kw, sh, sw, ph, pw):
    N, H, W, C = x.shape
    x = jnp.pad(x, ((0, 0), (ph, ph), (pw, pw), (0, 0)))
    Hp, Wp = H + 2 * ph, W + 2 * pw
    OH = (Hp - kh) // sh + 1
    OW = (Wp - kw) // sw + 1
    cols = []
    for i in range(kh):
        for j in range(kw):
            cols.append(x[:, i:i + sh * OH:sh, j:j + sw * OW:sw, :])
    patches = jnp.stack(cols, axis=3)              # (N, OH, OW, kh*kw, C)
    return patches.reshape(N * OH * OW, kh * kw * C), (N, OH, OW)


def conv2d(x, p, stride=(1, 1), pad=(0, 0), relu=True,
           residual=None, res_scale=1.0):
    """Conv (+ folded BN) (+ReLU) (+fused residual) as one Pallas matmul.

    kh/kw are recovered from the (static) weight shape, so params stay a pure
    array pytree and the whole forward can be jitted over it.
    """
    kh, kw, cin, cout = p['w'].shape
    if kh == 1 and kw == 1 and stride == (1, 1) and pad == (0, 0):
        N, H, W, _ = x.shape
        cols, (n, oh, ow) = x.reshape(N * H * W, cin), (N, H, W)
    else:
        cols, (n, oh, ow) = _im2col(x, kh, kw, stride[0], stride[1],
                                    pad[0], pad[1])
    w2 = p['w'].reshape(kh * kw * cin, cout)
    r2 = residual.reshape(-1, cout) if residual is not None else None
    y = fused_matmul(cols, w2, p['scale'], p['bias'], relu=relu,
                     residual=r2, res_scale=res_scale)
    return y.reshape(n, oh, ow, cout)


def conv1x1_multi(x, plist, relu=True):
    """Batch several 1x1 convs sharing the same input into ONE matmul."""
    N, H, W, cin = x.shape
    w = jnp.concatenate([p['w'].reshape(cin, p['w'].shape[-1]) for p in plist],
                        axis=1)
    s = jnp.concatenate([p['scale'] for p in plist])
    b = jnp.concatenate([p['bias'] for p in plist])
    y = fused_matmul(x.reshape(N * H * W, cin), w, s, b, relu=relu)
    y = y.reshape(N, H, W, w.shape[1])
    outs, off = [], 0
    for p in plist:
        c = p['w'].shape[-1]
        outs.append(y[..., off:off + c])
        off += c
    return outs


def max_pool(x, k=3, s=2):
    """Max-pool via a fused jnp.maximum tree (no k*k HBM materialization)."""
    N, H, W, C = x.shape
    OH = (H - k) // s + 1
    OW = (W - k) // s + 1
    out = None
    for i in range(k):
        for j in range(k):
            sl = x[:, i:i + s * OH:s, j:j + s * OW:s, :]
            out = sl if out is None else jnp.maximum(out, sl)
    return out


# ------------------------------- parameters ----------------------------------

class _KeyGen:
    def __init__(self, seed):
        self._key = jax.random.PRNGKey(seed)
        self._i = 0

    def __call__(self):
        self._i += 1
        return jax.random.fold_in(self._key, self._i)


def _make_conv(kg, cin, cout, kh, kw, bn=True):
    fan_in = kh * kw * cin
    w = jax.random.normal(kg(), (kh, kw, cin, cout), jnp.float32) \
        * jnp.sqrt(2.0 / fan_in)
    if bn:  # eval-mode BatchNorm2d (eps=1e-3) folded into scale/bias
        eps = 1e-3
        gamma = 1.0 + 0.1 * jax.random.normal(kg(), (cout,), jnp.float32)
        beta = 0.1 * jax.random.normal(kg(), (cout,), jnp.float32)
        mean = 0.1 * jax.random.normal(kg(), (cout,), jnp.float32)
        var = 1.0 + 0.1 * jnp.abs(jax.random.normal(kg(), (cout,), jnp.float32))
        scale = gamma / jnp.sqrt(var + eps)
        bias = beta - mean * scale
    else:  # plain conv bias (Block up-projection), no BN, no ReLU
        scale = jnp.ones((cout,), jnp.float32)
        bias = 0.01 * jax.random.normal(kg(), (cout,), jnp.float32)
    # bf16 weights: MXU-native dtype, halves weight DMA traffic.
    return dict(w=w.astype(jnp.bfloat16),
                scale=scale.astype(jnp.float32),
                bias=bias.astype(jnp.float32))


def _D(c):  # channel reduction vs. real facenet widths
    return max(4, c // 8)


def init_params(seed=0):
    kg = _KeyGen(seed)
    p = {}
    p['conv2d_1a'] = _make_conv(kg, 3, _D(32), 3, 3)
    p['conv2d_2a'] = _make_conv(kg, _D(32), _D(32), 3, 3)
    p['conv2d_2b'] = _make_conv(kg, _D(32), _D(64), 3, 3)
    p['conv2d_3b'] = _make_conv(kg, _D(64), _D(80), 1, 1)
    p['conv2d_4a'] = _make_conv(kg, _D(80), _D(192), 3, 3)
    p['conv2d_4b'] = _make_conv(kg, _D(192), _D(256), 3, 3)

    c256, c896, c1792 = _D(256), _D(896), _D(1792)

    def block35():
        return dict(
            b0=_make_conv(kg, c256, _D(32), 1, 1),
            b1_0=_make_conv(kg, c256, _D(32), 1, 1),
            b1_1=_make_conv(kg, _D(32), _D(32), 3, 3),
            b2_0=_make_conv(kg, c256, _D(32), 1, 1),
            b2_1=_make_conv(kg, _D(32), _D(32), 3, 3),
            b2_2=_make_conv(kg, _D(32), _D(32), 3, 3),
            up=_make_conv(kg, 3 * _D(32), c256, 1, 1, bn=False),
        )

    def block17():
        return dict(
            b0=_make_conv(kg, c896, _D(128), 1, 1),
            b1_0=_make_conv(kg, c896, _D(128), 1, 1),
            b1_1=_make_conv(kg, _D(128), _D(128), 1, 7),
            b1_2=_make_conv(kg, _D(128), _D(128), 7, 1),
            up=_make_conv(kg, 2 * _D(128), c896, 1, 1, bn=False),
        )

    def block8():
        return dict(
            b0=_make_conv(kg, c1792, _D(192), 1, 1),
            b1_0=_make_conv(kg, c1792, _D(192), 1, 1),
            b1_1=_make_conv(kg, _D(192), _D(192), 1, 3),
            b1_2=_make_conv(kg, _D(192), _D(192), 3, 1),
            up=_make_conv(kg, 2 * _D(192), c1792, 1, 1, bn=False),
        )

    p['repeat_1'] = [block35() for _ in range(REPEAT_1)]
    p['mixed_6a'] = dict(
        b0=_make_conv(kg, c256, _D(384), 3, 3),
        b1_0=_make_conv(kg, c256, _D(192), 1, 1),
        b1_1=_make_conv(kg, _D(192), _D(192), 3, 3),
        b1_2=_make_conv(kg, _D(192), _D(256), 3, 3),
    )
    p['repeat_2'] = [block17() for _ in range(REPEAT_2)]
    p['mixed_7a'] = dict(
        b0_0=_make_conv(kg, c896, _D(256), 1, 1),
        b0_1=_make_conv(kg, _D(256), _D(384), 3, 3),
        b1_0=_make_conv(kg, c896, _D(256), 1, 1),
        b1_1=_make_conv(kg, _D(256), _D(256), 3, 3),
        b2_0=_make_conv(kg, c896, _D(256), 1, 1),
        b2_1=_make_conv(kg, _D(256), _D(256), 3, 3),
        b2_2=_make_conv(kg, _D(256), _D(256), 3, 3),
    )
    p['repeat_3'] = [block8() for _ in range(REPEAT_3)]
    p['block8'] = block8()

    # last_linear (no bias) + BatchNorm1d folded (kept f32 for the head kernel)
    cin, cout = c1792, _D(512)
    w = jax.random.normal(kg(), (cin, cout), jnp.float32) * jnp.sqrt(1.0 / cin)
    eps = 1e-3
    gamma = 1.0 + 0.1 * jax.random.normal(kg(), (cout,), jnp.float32)
    beta = 0.1 * jax.random.normal(kg(), (cout,), jnp.float32)
    mean = 0.1 * jax.random.normal(kg(), (cout,), jnp.float32)
    var = 1.0 + 0.1 * jnp.abs(jax.random.normal(kg(), (cout,), jnp.float32))
    s = gamma / jnp.sqrt(var + eps)
    p['last_linear'] = dict(w=w)
    p['last_bn'] = dict(scale=s, bias=beta - mean * s)
    return p


# --------------------------------- forward -----------------------------------

def _block35_fwd(x, p):
    h0, h1, h2 = conv1x1_multi(x, [p['b0'], p['b1_0'], p['b2_0']])
    b1 = conv2d(h1, p['b1_1'], pad=(1, 1))
    b2 = conv2d(conv2d(h2, p['b2_1'], pad=(1, 1)), p['b2_2'], pad=(1, 1))
    mixed = jnp.concatenate([h0, b1, b2], axis=-1)
    # up-conv + residual add + ReLU fused into one kernel
    return conv2d(mixed, p['up'], relu=True, residual=x, res_scale=0.17)


def _block17_fwd(x, p):
    h0, h1 = conv1x1_multi(x, [p['b0'], p['b1_0']])
    b1 = conv2d(h1, p['b1_1'], pad=(0, 3))
    b1 = conv2d(b1, p['b1_2'], pad=(3, 0))
    mixed = jnp.concatenate([h0, b1], axis=-1)
    return conv2d(mixed, p['up'], relu=True, residual=x, res_scale=0.10)


def _block8_fwd(x, p, no_relu=False):
    h0, h1 = conv1x1_multi(x, [p['b0'], p['b1_0']])
    b1 = conv2d(h1, p['b1_1'], pad=(0, 1))
    b1 = conv2d(b1, p['b1_2'], pad=(1, 0))
    mixed = jnp.concatenate([h0, b1], axis=-1)
    return conv2d(mixed, p['up'], relu=not no_relu, residual=x, res_scale=0.20)


def _mixed_6a_fwd(x, p):
    b0 = conv2d(x, p['b0'], stride=(2, 2))
    b1 = conv2d(x, p['b1_0'])
    b1 = conv2d(b1, p['b1_1'], pad=(1, 1))
    b1 = conv2d(b1, p['b1_2'], stride=(2, 2))
    b2 = max_pool(x, 3, 2)
    return jnp.concatenate([b0, b1, b2], axis=-1)


def _mixed_7a_fwd(x, p):
    h0, h1, h2 = conv1x1_multi(x, [p['b0_0'], p['b1_0'], p['b2_0']])
    b0 = conv2d(h0, p['b0_1'], stride=(2, 2))
    b1 = conv2d(h1, p['b1_1'], stride=(2, 2))
    b2 = conv2d(h2, p['b2_1'], pad=(1, 1))
    b2 = conv2d(b2, p['b2_2'], stride=(2, 2))
    b3 = max_pool(x, 3, 2)
    return jnp.concatenate([b0, b1, b2, b3], axis=-1)


def forward(params, x_nchw):
    x = jnp.transpose(x_nchw, (0, 2, 3, 1)).astype(jnp.float32)  # NCHW -> NHWC
    x = conv2d(x, params['conv2d_1a'], stride=(2, 2))
    x = conv2d(x, params['conv2d_2a'])
    x = conv2d(x, params['conv2d_2b'], pad=(1, 1))
    x = max_pool(x, 3, 2)
    x = conv2d(x, params['conv2d_3b'])
    x = conv2d(x, params['conv2d_4a'])
    x = conv2d(x, params['conv2d_4b'], stride=(2, 2))
    for bp in params['repeat_1']:
        x = _block35_fwd(x, bp)
    x = _mixed_6a_fwd(x, params['mixed_6a'])
    for bp in params['repeat_2']:
        x = _block17_fwd(x, bp)
    x = _mixed_7a_fwd(x, params['mixed_7a'])
    for bp in params['repeat_3']:
        x = _block8_fwd(x, bp)
    x = _block8_fwd(x, params['block8'], no_relu=True)
    # Dropout(0.6) is identity in eval mode.
    # avg-pool + last_linear (no bias) + last_bn + F.normalize fused:
    x = head(x, params['last_linear']['w'],
             params['last_bn']['scale'], params['last_bn']['bias'])
    return x


if __name__ == "__main__":
    params = init_params(seed=0)
    x = jax.random.normal(jax.random.PRNGKey(0), (2, 3, 80, 80), jnp.float32)
    out = jax.block_until_ready(jax.jit(forward)(params, x))
    assert out.shape == (2, _D(512))
    assert bool(jnp.all(jnp.isfinite(out)))
    print("KERNEL_OK")
</pallas_src>

<mosaic_0001>
module attributes {stable_mosaic.version = 11 : i64} {
  func.func @_mm_kernel(%arg0: i32, %arg1: i32, %arg2: i32, %arg3: memref<256x128xbf16, #tpu.memory_space<vmem>>, %arg4: memref<128x128xbf16, #tpu.memory_space<vmem>>, %arg5: memref<1x128xf32, #tpu.memory_space<vmem>>, %arg6: memref<1x128xf32, #tpu.memory_space<vmem>>, %arg7: memref<256x128xf32, #tpu.memory_space<vmem>>, %arg8: memref<256x128xf32, #tpu.memory_space<vmem>>) attributes {dimension_semantics = [#tpu.dimension_semantics<parallel>, #tpu.dimension_semantics<parallel>, #tpu.dimension_semantics<arbitrary>], iteration_bounds = array<i64: 12, 1, 1>, scalar_prefetch = 0 : i64, scratch_operands = 1 : i64, tpu.core_type = #tpu.core_type<tc>, window_params = [{transform_indices = @transform_0, window_bounds = array<i64: 256, 128>}, {transform_indices = @transform_1, window_bounds = array<i64: 128, 128>}, {transform_indices = @transform_2, window_bounds = array<i64: 1, 128>}, {transform_indices = @transform_3, window_bounds = array<i64: 1, 128>}, {transform_indices = @transform_4, window_bounds = array<i64: 256, 128>}]} {
    %c0_i32 = arith.constant 0 : i32
    %0 = arith.cmpi eq, %arg2, %c0_i32 : i32
    %1 = arith.extui %0 : i1 to i32
    %c0_i32_0 = arith.constant 0 : i32
    %2 = arith.cmpi ne, %1, %c0_i32_0 : i32
    scf.if %2 {
      %cst_10 = arith.constant 0.000000e+00 : f32
      %12 = vector.broadcast %cst_10 : f32 to vector<256x128xf32>
      %c0_11 = arith.constant 0 : index
      %c0_12 = arith.constant 0 : index
      %13 = vector.load %arg8[%c0_11, %c0_12] : memref<256x128xf32, #tpu.memory_space<vmem>>, vector<256x128xf32>
      tpu.vector_store %arg8[%c0_11, %c0_12], %12 {strides = array<i32>} : memref<256x128xf32, #tpu.memory_space<vmem>>, vector<256x128xf32>,
    } else {
    }
    %c0 = arith.constant 0 : index
    %c0_1 = arith.constant 0 : index
    %3 = vector.load %arg8[%c0, %c0_1] : memref<256x128xf32, #tpu.memory_space<vmem>>, vector<256x128xf32>
    %c0_2 = arith.constant 0 : index
    %c0_3 = arith.constant 0 : index
    %4 = vector.load %arg3[%c0_2, %c0_3] : memref<256x128xbf16, #tpu.memory_space<vmem>>, vector<256x128xbf16>
    %c0_4 = arith.constant 0 : index
    %c0_5 = arith.constant 0 : index
    %5 = vector.load %arg4[%c0_4, %c0_5] : memref<128x128xbf16, #tpu.memory_space<vmem>>, vector<128x128xbf16>
    %cst = arith.constant dense<0.000000e+00> : vector<256x128xf32>
    %6 = tpu.matmul %4, %5, %cst {dimension_numbers = #tpu.dot_dimension_numbers<[1], [0], [0], [1], [0, 0, 1, 1], [], []>} : vector<256x128xbf16>, vector<128x128xbf16>, vector<256x128xf32> -> vector<256x128xf32>
    %7 = arith.addf %3, %6 : vector<256x128xf32>
    %c0_6 = arith.constant 0 : index
    %c0_7 = arith.constant 0 : index
    %8 = vector.load %arg8[%c0_6, %c0_7] : memref<256x128xf32, #tpu.memory_space<vmem>>, vector<256x128xf32>
    tpu.vector_store %arg8[%c0_6, %c0_7], %7 {strides = array<i32>} : memref<256x128xf32, #tpu.memory_space<vmem>>, vector<256x128xf32>,
    %c0_i32_8 = arith.constant 0 : i32
    %9 = arith.cmpi eq, %arg2, %c0_i32_8 : i32
    %10 = arith.extui %9 : i1 to i32
    %c0_i32_9 = arith.constant 0 : i32
    %11 = arith.cmpi ne, %10, %c0_i32_9 : i32
    scf.if %11 {
      %c0_10 = arith.constant 0 : index
      %c0_11 = arith.constant 0 : index
      %12 = vector.load %arg8[%c0_10, %c0_11] : memref<256x128xf32, #tpu.memory_space<vmem>>, vector<256x128xf32>
      %c0_12 = arith.constant 0 : index
      %c0_13 = arith.constant 0 : index
      %13 = vector.load %arg5[%c0_12, %c0_13] : memref<1x128xf32, #tpu.memory_space<vmem>>, vector<1x128xf32>
      %14 = vector.broadcast %13 : vector<1x128xf32> to vector<256x128xf32>
      %15 = arith.mulf %12, %14 : vector<256x128xf32>
      %c0_14 = arith.constant 0 : index
      %c0_15 = arith.constant 0 : index
      %16 = vector.load %arg6[%c0_14, %c0_15] : memref<1x128xf32, #tpu.memory_space<vmem>>, vector<1x128xf32>
      %17 = vector.broadcast %16 : vector<1x128xf32> to vector<256x128xf32>
      %18 = arith.addf %15, %17 : vector<256x128xf32>
      %cst_16 = arith.constant 0.000000e+00 : f32
      %19 = vector.broadcast %cst_16 : f32 to vector<256x128xf32>
      %20 = arith.maximumf %18, %19 : vector<256x128xf32>
      %c0_17 = arith.constant 0 : index
      %c0_18 = arith.constant 0 : index
      %21 = vector.load %arg7[%c0_17, %c0_18] : memref<256x128xf32, #tpu.memory_space<vmem>>, vector<256x128xf32>
      tpu.vector_store %arg7[%c0_17, %c0_18], %20 {strides = array<i32>} : memref<256x128xf32, #tpu.memory_space<vmem>>, vector<256x128xf32>,
    } else {
    }
    return
  }
  func.func @transform_0(%arg0: i32, %arg1: i32, %arg2: i32) -> (i32, i32) {
    %c0_i32 = arith.constant 0 : i32
    return %arg0, %arg2 : i32, i32
  }
  func.func @transform_1(%arg0: i32, %arg1: i32, %arg2: i32) -> (i32, i32) {
    %c0_i32 = arith.constant 0 : i32
    return %arg2, %arg1 : i32, i32
  }
  func.func @transform_2(%arg0: i32, %arg1: i32, %arg2: i32) -> (i32, i32) {
    %c0_i32 = arith.constant 0 : i32
    %c0_i32_0 = arith.constant 0 : i32
    return %c0_i32, %arg1 : i32, i32
  }
  func.func @transform_3(%arg0: i32, %arg1: i32, %arg2: i32) -> (i32, i32) {
    %c0_i32 = arith.constant 0 : i32
    %c0_i32_0 = arith.constant 0 : i32
    return %c0_i32, %arg1 : i32, i32
  }
  func.func @transform_4(%arg0: i32, %arg1: i32, %arg2: i32) -> (i32, i32) {
    %c0_i32 = arith.constant 0 : i32
    return %arg0, %arg1 : i32, i32
  }
}

module attributes {stable_mosaic.version = 11 : i64} {
  func.func @_mm_kernel(%arg0: i32, %arg1: i32, %arg2: i32, %arg3: memref<256x128xbf16, #tpu.memory_space<vmem>>, %arg4: memref<128x128xbf16, #tpu.memory_space<vmem>>, %arg5: memref<1x128xf32, #tpu.memory_space<vmem>>, %arg6: memref<1x128xf32, #tpu.memory_space<vmem>>, %arg7: memref<256x128xf32, #tpu.memory_space<vmem>>, %arg8: memref<256x128xf32, #tpu.memory_space<vmem>>) attributes {dimension_semantics = [#tpu.dimension_semantics<parallel>, #tpu.dimension_semantics<parallel>, #tpu.dimension_semantics<arbitrary>], iteration_bounds = array<i64: 11, 1, 1>, scalar_prefetch = 0 : i64, scratch_operands = 1 : i64, tpu.core_type = #tpu.core_type<tc>, window_params = [{transform_indices = @transform_0, window_bounds = array<i64: 256, 128>}, {transform_indices = @transform_1, window_bounds = array<i64: 128, 128>}, {transform_indices = @transform_2, window_bounds = array<i64: 1, 128>}, {transform_indices = @transform_3, window_bounds = array<i64: 1, 128>}, {transform_indices = @transform_4, window_bounds = array<i64: 256, 128>}]} {
    %c0_i32 = arith.constant 0 : i32
    %0 = arith.cmpi eq, %arg2, %c0_i32 : i32
    %1 = arith.extui %0 : i1 to i32
    %c0_i32_0 = arith.constant 0 : i32
    %2 = arith.cmpi ne, %1, %c0_i32_0 : i32
    scf.if %2 {
      %cst_10 = arith.constant 0.000000e+00 : f32
      %12 = vector.broadcast %cst_10 : f32 to vector<256x128xf32>
      %c0_11 = arith.constant 0 : index
      %c0_12 = arith.constant 0 : index
      %13 = vector.load %arg8[%c0_11, %c0_12] : memref<256x128xf32, #tpu.memory_space<vmem>>, vector<256x128xf32>
      tpu.vector_store %arg8[%c0_11, %c0_12], %12 {strides = array<i32>} : memref<256x128xf32, #tpu.memory_space<vmem>>, vector<256x128xf32>,
    } else {
    }
    %c0 = arith.constant 0 : index
    %c0_1 = arith.constant 0 : index
    %3 = vector.load %arg8[%c0, %c0_1] : memref<256x128xf32, #tpu.memory_space<vmem>>, vector<256x128xf32>
    %c0_2 = arith.constant 0 : index
    %c0_3 = arith.constant 0 : index
    %4 = vector.load %arg3[%c0_2, %c0_3] : memref<256x128xbf16, #tpu.memory_space<vmem>>, vector<256x128xbf16>
    %c0_4 = arith.constant 0 : index
    %c0_5 = arith.constant 0 : index
    %5 = vector.load %arg4[%c0_4, %c0_5] : memref<128x128xbf16, #tpu.memory_space<vmem>>, vector<128x128xbf16>
    %cst = arith.constant dense<0.000000e+00> : vector<256x128xf32>
    %6 = tpu.matmul %4, %5, %cst {dimension_numbers = #tpu.dot_dimension_numbers<[1], [0], [0], [1], [0, 0, 1, 1], [], []>} : vector<256x128xbf16>, vector<128x128xbf16>, vector<256x128xf32> -> vector<256x128xf32>
    %7 = arith.addf %3, %6 : vector<256x128xf32>
    %c0_6 = arith.constant 0 : index
    %c0_7 = arith.constant 0 : index
    %8 = vector.load %arg8[%c0_6, %c0_7] : memref<256x128xf32, #tpu.memory_space<vmem>>, vector<256x128xf32>
    tpu.vector_store %arg8[%c0_6, %c0_7], %7 {strides = array<i32>} : memref<256x128xf32, #tpu.memory_space<vmem>>, vector<256x128xf32>,
    %c0_i32_8 = arith.constant 0 : i32
    %9 = arith.cmpi eq, %arg2, %c0_i32_8 : i32
    %10 = arith.extui %9 : i1 to i32
    %c0_i32_9 = arith.constant 0 : i32
    %11 = arith.cmpi ne, %10, %c0_i32_9 : i32
    scf.if %11 {
      %c0_10 = arith.constant 0 : index
      %c0_11 = arith.constant 0 : index
      %12 = vector.load %arg8[%c0_10, %c0_11] : memref<256x128xf32, #tpu.memory_space<vmem>>, vector<256x128xf32>
      %c0_12 = arith.constant 0 : index
      %c0_13 = arith.constant 0 : index
      %13 = vector.load %arg5[%c0_12, %c0_13] : memref<1x128xf32, #tpu.memory_space<vmem>>, vector<1x128xf32>
      %14 = vector.broadcast %13 : vector<1x128xf32> to vector<256x128xf32>
      %15 = arith.mulf %12, %14 : vector<256x128xf32>
      %c0_14 = arith.constant 0 : index
      %c0_15 = arith.constant 0 : index
      %16 = vector.load %arg6[%c0_14, %c0_15] : memref<1x128xf32, #tpu.memory_space<vmem>>, vector<1x128xf32>
      %17 = vector.broadcast %16 : vector<1x128xf32> to vector<256x128xf32>
      %18 = arith.addf %15, %17 : vector<256x128xf32>
      %cst_16 = arith.constant 0.000000e+00 : f32
      %19 = vector.broadcast %cst_16 : f32 to vector<256x128xf32>
      %20 = arith.maximumf %18, %19 : vector<256x128xf32>
      %c0_17 = arith.constant 0 : index
      %c0_18 = arith.constant 0 : index
      %21 = vector.load %arg7[%c0_17, %c0_18] : memref<256x128xf32, #tpu.memory_space<vmem>>, vector<256x128xf32>
      tpu.vector_store %arg7[%c0_17, %c0_18], %20 {strides = array<i32>} : memref<256x128xf32, #tpu.memory_space<vmem>>, vector<256x128xf32>,
    } else {
    }
    return
  }
  func.func @transform_0(%arg0: i32, %arg1: i32, %arg2: i32) -> (i32, i32) {
    %c0_i32 = arith.constant 0 : i32
    return %arg0, %arg2 : i32, i32
  }
  func.func @transform_1(%arg0: i32, %arg1: i32, %arg2: i32) -> (i32, i32) {
    %c0_i32 = arith.constant 0 : i32
    return %arg2, %arg1 : i32, i32
  }
  func.func @transform_2(%arg0: i32, %arg1: i32, %arg2: i32) -> (i32, i32) {
    %c0_i32 = arith.constant 0 : i32
    %c0_i32_0 = arith.constant 0 : i32
    return %c0_i32, %arg1 : i32, i32
  }
  func.func @transform_3(%arg0: i32, %arg1: i32, %arg2: i32) -> (i32, i32) {
    %c0_i32 = arith.constant 0 : i32
    %c0_i32_0 = arith.constant 0 : i32
    return %c0_i32, %arg1 : i32, i32
  }
  func.func @transform_4(%arg0: i32, %arg1: i32, %arg2: i32) -> (i32, i32) {
    %c0_i32 = arith.constant 0 : i32
    return %arg0, %arg1 : i32, i32
  }
}

module attributes {stable_mosaic.version = 11 : i64} {
  func.func @_mm_kernel(%arg0: i32, %arg1: i32, %arg2: i32, %arg3: memref<256x128xbf16, #tpu.memory_space<vmem>>, %arg4: memref<128x128xbf16, #tpu.memory_space<vmem>>, %arg5: memref<1x128xf32, #tpu.memory_space<vmem>>, %arg6: memref<1x128xf32, #tpu.memory_space<vmem>>, %arg7: memref<256x128xf32, #tpu.memory_space<vmem>>, %arg8: memref<256x128xf32, #tpu.memory_space<vmem>>) attributes {dimension_semantics = [#tpu.dimension_semantics<parallel>, #tpu.dimension_semantics<parallel>, #tpu.dimension_semantics<arbitrary>], iteration_bounds = array<i64: 3, 1, 1>, scalar_prefetch = 0 : i64, scratch_operands = 1 : i64, tpu.core_type = #tpu.core_type<tc>, window_params = [{transform_indices = @transform_0, window_bounds = array<i64: 256, 128>}, {transform_indices = @transform_1, window_bounds = array<i64: 128, 128>}, {transform_indices = @transform_2, window_bounds = array<i64: 1, 128>}, {transform_indices = @transform_3, window_bounds = array<i64: 1, 128>}, {transform_indices = @transform_4, window_bounds = array<i64: 256, 128>}]} {
    %c0_i32 = arith.constant 0 : i32
    %0 = arith.cmpi eq, %arg2, %c0_i32 : i32
    %1 = arith.extui %0 : i1 to i32
    %c0_i32_0 = arith.constant 0 : i32
    %2 = arith.cmpi ne, %1, %c0_i32_0 : i32
    scf.if %2 {
      %cst_10 = arith.constant 0.000000e+00 : f32
      %12 = vector.broadcast %cst_10 : f32 to vector<256x128xf32>
      %c0_11 = arith.constant 0 : index
      %c0_12 = arith.constant 0 : index
      %13 = vector.load %arg8[%c0_11, %c0_12] : memref<256x128xf32, #tpu.memory_space<vmem>>, vector<256x128xf32>
      tpu.vector_store %arg8[%c0_11, %c0_12], %12 {strides = array<i32>} : memref<256x128xf32, #tpu.memory_space<vmem>>, vector<256x128xf32>,
    } else {
    }
    %c0 = arith.constant 0 : index
    %c0_1 = arith.constant 0 : index
    %3 = vector.load %arg8[%c0, %c0_1] : memref<256x128xf32, #tpu.memory_space<vmem>>, vector<256x128xf32>
    %c0_2 = arith.constant 0 : index
    %c0_3 = arith.constant 0 : index
    %4 = vector.load %arg3[%c0_2, %c0_3] : memref<256x128xbf16, #tpu.memory_space<vmem>>, vector<256x128xbf16>
    %c0_4 = arith.constant 0 : index
    %c0_5 = arith.constant 0 : index
    %5 = vector.load %arg4[%c0_4, %c0_5] : memref<128x128xbf16, #tpu.memory_space<vmem>>, vector<128x128xbf16>
    %cst = arith.constant dense<0.000000e+00> : vector<256x128xf32>
    %6 = tpu.matmul %4, %5, %cst {dimension_numbers = #tpu.dot_dimension_numbers<[1], [0], [0], [1], [0, 0, 1, 1], [], []>} : vector<256x128xbf16>, vector<128x128xbf16>, vector<256x128xf32> -> vector<256x128xf32>
    %7 = arith.addf %3, %6 : vector<256x128xf32>
    %c0_6 = arith.constant 0 : index
    %c0_7 = arith.constant 0 : index
    %8 = vector.load %arg8[%c0_6, %c0_7] : memref<256x128xf32, #tpu.memory_space<vmem>>, vector<256x128xf32>
    tpu.vector_store %arg8[%c0_6, %c0_7], %7 {strides = array<i32>} : memref<256x128xf32, #tpu.memory_space<vmem>>, vector<256x128xf32>,
    %c0_i32_8 = arith.constant 0 : i32
    %9 = arith.cmpi eq, %arg2, %c0_i32_8 : i32
    %10 = arith.extui %9 : i1 to i32
    %c0_i32_9 = arith.constant 0 : i32
    %11 = arith.cmpi ne, %10, %c0_i32_9 : i32
    scf.if %11 {
      %c0_10 = arith.constant 0 : index
      %c0_11 = arith.constant 0 : index
      %12 = vector.load %arg8[%c0_10, %c0_11] : memref<256x128xf32, #tpu.memory_space<vmem>>, vector<256x128xf32>
      %c0_12 = arith.constant 0 : index
      %c0_13 = arith.constant 0 : index
      %13 = vector.load %arg5[%c0_12, %c0_13] : memref<1x128xf32, #tpu.memory_space<vmem>>, vector<1x128xf32>
      %14 = vector.broadcast %13 : vector<1x128xf32> to vector<256x128xf32>
      %15 = arith.mulf %12, %14 : vector<256x128xf32>
      %c0_14 = arith.constant 0 : index
      %c0_15 = arith.constant 0 : index
      %16 = vector.load %arg6[%c0_14, %c0_15] : memref<1x128xf32, #tpu.memory_space<vmem>>, vector<1x128xf32>
      %17 = vector.broadcast %16 : vector<1x128xf32> to vector<256x128xf32>
      %18 = arith.addf %15, %17 : vector<256x128xf32>
      %cst_16 = arith.constant 0.000000e+00 : f32
      %19 = vector.broadcast %cst_16 : f32 to vector<256x128xf32>
      %20 = arith.maximumf %18, %19 : vector<256x128xf32>
      %c0_17 = arith.constant 0 : index
      %c0_18 = arith.constant 0 : index
      %21 = vector.load %arg7[%c0_17, %c0_18] : memref<256x128xf32, #tpu.memory_space<vmem>>, vector<256x128xf32>
      tpu.vector_store %arg7[%c0_17, %c0_18], %20 {strides = array<i32>} : memref<256x128xf32, #tpu.memory_space<vmem>>, vector<256x128xf32>,
    } else {
    }
    return
  }
  func.func @transform_0(%arg0: i32, %arg1: i32, %arg2: i32) -> (i32, i32) {
    %c0_i32 = arith.constant 0 : i32
    return %arg0, %arg2 : i32, i32
  }
  func.func @transform_1(%arg0: i32, %arg1: i32, %arg2: i32) -> (i32, i32) {
    %c0_i32 = arith.constant 0 : i32
    return %arg2, %arg1 : i32, i32
  }
  func.func @transform_2(%arg0: i32, %arg1: i32, %arg2: i32) -> (i32, i32) {
    %c0_i32 = arith.constant 0 : i32
    %c0_i32_0 = arith.constant 0 : i32
    return %c0_i32, %arg1 : i32, i32
  }
  func.func @transform_3(%arg0: i32, %arg1: i32, %arg2: i32) -> (i32, i32) {
    %c0_i32 = arith.constant 0 : i32
    %c0_i32_0 = arith.constant 0 : i32
    return %c0_i32, %arg1 : i32, i32
  }
  func.func @transform_4(%arg0: i32, %arg1: i32, %arg2: i32) -> (i32, i32) {
    %c0_i32 = arith.constant 0 : i32
    return %arg0, %arg1 : i32, i32
  }
}

module attributes {stable_mosaic.version = 11 : i64} {
  func.func @_mm_kernel(%arg0: i32, %arg1: i32, %arg2: i32, %arg3: memref<256x128xbf16, #tpu.memory_space<vmem>>, %arg4: memref<128x128xbf16, #tpu.memory_space<vmem>>, %arg5: memref<1x128xf32, #tpu.memory_space<vmem>>, %arg6: memref<1x128xf32, #tpu.memory_space<vmem>>, %arg7: memref<256x128xf32, #tpu.memory_space<vmem>>, %arg8: memref<256x128xf32, #tpu.memory_space<vmem>>) attributes {dimension_semantics = [#tpu.dimension_semantics<parallel>, #tpu.dimension_semantics<parallel>, #tpu.dimension_semantics<arbitrary>], iteration_bounds = array<i64: 2, 1, 1>, scalar_prefetch = 0 : i64, scratch_operands = 1 : i64, tpu.core_type = #tpu.core_type<tc>, window_params = [{transform_indices = @transform_0, window_bounds = array<i64: 256, 128>}, {transform_indices = @transform_1, window_bounds = array<i64: 128, 128>}, {transform_indices = @transform_2, window_bounds = array<i64: 1, 128>}, {transform_indices = @transform_3, window_bounds = array<i64: 1, 128>}, {transform_indices = @transform_4, window_bounds = array<i64: 256, 128>}]} {
    %c0_i32 = arith.constant 0 : i32
    %0 = arith.cmpi eq, %arg2, %c0_i32 : i32
    %1 = arith.extui %0 : i1 to i32
    %c0_i32_0 = arith.constant 0 : i32
    %2 = arith.cmpi ne, %1, %c0_i32_0 : i32
    scf.if %2 {
      %cst_10 = arith.constant 0.000000e+00 : f32
      %12 = vector.broadcast %cst_10 : f32 to vector<256x128xf32>
      %c0_11 = arith.constant 0 : index
      %c0_12 = arith.constant 0 : index
      %13 = vector.load %arg8[%c0_11, %c0_12] : memref<256x128xf32, #tpu.memory_space<vmem>>, vector<256x128xf32>
      tpu.vector_store %arg8[%c0_11, %c0_12], %12 {strides = array<i32>} : memref<256x128xf32, #tpu.memory_space<vmem>>, vector<256x128xf32>,
    } else {
    }
    %c0 = arith.constant 0 : index
    %c0_1 = arith.constant 0 : index
    %3 = vector.load %arg8[%c0, %c0_1] : memref<256x128xf32, #tpu.memory_space<vmem>>, vector<256x128xf32>
    %c0_2 = arith.constant 0 : index
    %c0_3 = arith.constant 0 : index
    %4 = vector.load %arg3[%c0_2, %c0_3] : memref<256x128xbf16, #tpu.memory_space<vmem>>, vector<256x128xbf16>
    %c0_4 = arith.constant 0 : index
    %c0_5 = arith.constant 0 : index
    %5 = vector.load %arg4[%c0_4, %c0_5] : memref<128x128xbf16, #tpu.memory_space<vmem>>, vector<128x128xbf16>
    %cst = arith.constant dense<0.000000e+00> : vector<256x128xf32>
    %6 = tpu.matmul %4, %5, %cst {dimension_numbers = #tpu.dot_dimension_numbers<[1], [0], [0], [1], [0, 0, 1, 1], [], []>} : vector<256x128xbf16>, vector<128x128xbf16>, vector<256x128xf32> -> vector<256x128xf32>
    %7 = arith.addf %3, %6 : vector<256x128xf32>
    %c0_6 = arith.constant 0 : index
    %c0_7 = arith.constant 0 : index
    %8 = vector.load %arg8[%c0_6, %c0_7] : memref<256x128xf32, #tpu.memory_space<vmem>>, vector<256x128xf32>
    tpu.vector_store %arg8[%c0_6, %c0_7], %7 {strides = array<i32>} : memref<256x128xf32, #tpu.memory_space<vmem>>, vector<256x128xf32>,
    %c0_i32_8 = arith.constant 0 : i32
    %9 = arith.cmpi eq, %arg2, %c0_i32_8 : i32
    %10 = arith.extui %9 : i1 to i32
    %c0_i32_9 = arith.constant 0 : i32
    %11 = arith.cmpi ne, %10, %c0_i32_9 : i32
    scf.if %11 {
      %c0_10 = arith.constant 0 : index
      %c0_11 = arith.constant 0 : index
      %12 = vector.load %arg8[%c0_10, %c0_11] : memref<256x128xf32, #tpu.memory_space<vmem>>, vector<256x128xf32>
      %c0_12 = arith.constant 0 : index
      %c0_13 = arith.constant 0 : index
      %13 = vector.load %arg5[%c0_12, %c0_13] : memref<1x128xf32, #tpu.memory_space<vmem>>, vector<1x128xf32>
      %14 = vector.broadcast %13 : vector<1x128xf32> to vector<256x128xf32>
      %15 = arith.mulf %12, %14 : vector<256x128xf32>
      %c0_14 = arith.constant 0 : index
      %c0_15 = arith.constant 0 : index
      %16 = vector.load %arg6[%c0_14, %c0_15] : memref<1x128xf32, #tpu.memory_space<vmem>>, vector<1x128xf32>
      %17 = vector.broadcast %16 : vector<1x128xf32> to vector<256x128xf32>
      %18 = arith.addf %15, %17 : vector<256x128xf32>
      %cst_16 = arith.constant 0.000000e+00 : f32
      %19 = vector.broadcast %cst_16 : f32 to vector<256x128xf32>
      %20 = arith.maximumf %18, %19 : vector<256x128xf32>
      %c0_17 = arith.constant 0 : index
      %c0_18 = arith.constant 0 : index
      %21 = vector.load %arg7[%c0_17, %c0_18] : memref<256x128xf32, #tpu.memory_space<vmem>>, vector<256x128xf32>
      tpu.vector_store %arg7[%c0_17, %c0_18], %20 {strides = array<i32>} : memref<256x128xf32, #tpu.memory_space<vmem>>, vector<256x128xf32>,
    } else {
    }
    return
  }
  func.func @transform_0(%arg0: i32, %arg1: i32, %arg2: i32) -> (i32, i32) {
    %c0_i32 = arith.constant 0 : i32
    return %arg0, %arg2 : i32, i32
  }
  func.func @transform_1(%arg0: i32, %arg1: i32, %arg2: i32) -> (i32, i32) {
    %c0_i32 = arith.constant 0 : i32
    return %arg2, %arg1 : i32, i32
  }
  func.func @transform_2(%arg0: i32, %arg1: i32, %arg2: i32) -> (i32, i32) {
    %c0_i32 = arith.constant 0 : i32
    %c0_i32_0 = arith.constant 0 : i32
    return %c0_i32, %arg1 : i32, i32
  }
  func.func @transform_3(%arg0: i32, %arg1: i32, %arg2: i32) -> (i32, i32) {
    %c0_i32 = arith.constant 0 : i32
    %c0_i32_0 = arith.constant 0 : i32
    return %c0_i32, %arg1 : i32, i32
  }
  func.func @transform_4(%arg0: i32, %arg1: i32, %arg2: i32) -> (i32, i32) {
    %c0_i32 = arith.constant 0 : i32
    return %arg0, %arg1 : i32, i32
  }
}

module attributes {stable_mosaic.version = 11 : i64} {
  func.func @_mm_kernel(%arg0: i32, %arg1: i32, %arg2: i32, %arg3: memref<112x256xbf16, #tpu.memory_space<vmem>>, %arg4: memref<256x128xbf16, #tpu.memory_space<vmem>>, %arg5: memref<1x128xf32, #tpu.memory_space<vmem>>, %arg6: memref<1x128xf32, #tpu.memory_space<vmem>>, %arg7: memref<112x128xf32, #tpu.memory_space<vmem>>, %arg8: memref<112x128xf32, #tpu.memory_space<vmem>>) attributes {dimension_semantics = [#tpu.dimension_semantics<parallel>, #tpu.dimension_semantics<parallel>, #tpu.dimension_semantics<arbitrary>], iteration_bounds = array<i64: 1, 1, 1>, scalar_prefetch = 0 : i64, scratch_operands = 1 : i64, tpu.core_type = #tpu.core_type<tc>, window_params = [{transform_indices = @transform_0, window_bounds = array<i64: 112, 256>}, {transform_indices = @transform_1, window_bounds = array<i64: 256, 128>}, {transform_indices = @transform_2, window_bounds = array<i64: 1, 128>}, {transform_indices = @transform_3, window_bounds = array<i64: 1, 128>}, {transform_indices = @transform_4, window_bounds = array<i64: 112, 128>}]} {
    %c0_i32 = arith.constant 0 : i32
    %0 = arith.cmpi eq, %arg2, %c0_i32 : i32
    %1 = arith.extui %0 : i1 to i32
    %c0_i32_0 = arith.constant 0 : i32
    %2 = arith.cmpi ne, %1, %c0_i32_0 : i32
    scf.if %2 {
      %cst_10 = arith.constant 0.000000e+00 : f32
      %12 = vector.broadcast %cst_10 : f32 to vector<112x128xf32>
      %c0_11 = arith.constant 0 : index
      %c0_12 = arith.constant 0 : index
      %13 = vector.load %arg8[%c0_11, %c0_12] : memref<112x128xf32, #tpu.memory_space<vmem>>, vector<112x128xf32>
      tpu.vector_store %arg8[%c0_11, %c0_12], %12 {strides = array<i32>} : memref<112x128xf32, #tpu.memory_space<vmem>>, vector<112x128xf32>,
    } else {
    }
    %c0 = arith.constant 0 : index
    %c0_1 = arith.constant 0 : index
    %3 = vector.load %arg8[%c0, %c0_1] : memref<112x128xf32, #tpu.memory_space<vmem>>, vector<112x128xf32>
    %c0_2 = arith.constant 0 : index
    %c0_3 = arith.constant 0 : index
    %4 = vector.load %arg3[%c0_2, %c0_3] : memref<112x256xbf16, #tpu.memory_space<vmem>>, vector<112x256xbf16>
    %c0_4 = arith.constant 0 : index
    %c0_5 = arith.constant 0 : index
    %5 = vector.load %arg4[%c0_4, %c0_5] : memref<256x128xbf16, #tpu.memory_space<vmem>>, vector<256x128xbf16>
    %cst = arith.constant dense<0.000000e+00> : vector<112x128xf32>
    %6 = tpu.matmul %4, %5, %cst {dimension_numbers = #tpu.dot_dimension_numbers<[1], [0], [0], [1], [0, 0, 1, 1], [], []>} : vector<112x256xbf16>, vector<256x128xbf16>, vector<112x128xf32> -> vector<112x128xf32>
    %7 = arith.addf %3, %6 : vector<112x128xf32>
    %c0_6 = arith.constant 0 : index
    %c0_7 = arith.constant 0 : index
    %8 = vector.load %arg8[%c0_6, %c0_7] : memref<112x128xf32, #tpu.memory_space<vmem>>, vector<112x128xf32>
    tpu.vector_store %arg8[%c0_6, %c0_7], %7 {strides = array<i32>} : memref<112x128xf32, #tpu.memory_space<vmem>>, vector<112x128xf32>,
    %c0_i32_8 = arith.constant 0 : i32
    %9 = arith.cmpi eq, %arg2, %c0_i32_8 : i32
    %10 = arith.extui %9 : i1 to i32
    %c0_i32_9 = arith.constant 0 : i32
    %11 = arith.cmpi ne, %10, %c0_i32_9 : i32
    scf.if %11 {
      %c0_10 = arith.constant 0 : index
      %c0_11 = arith.constant 0 : index
      %12 = vector.load %arg8[%c0_10, %c0_11] : memref<112x128xf32, #tpu.memory_space<vmem>>, vector<112x128xf32>
      %c0_12 = arith.constant 0 : index
      %c0_13 = arith.constant 0 : index
      %13 = vector.load %arg5[%c0_12, %c0_13] : memref<1x128xf32, #tpu.memory_space<vmem>>, vector<1x128xf32>
      %14 = vector.broadcast %13 : vector<1x128xf32> to vector<112x128xf32>
      %15 = arith.mulf %12, %14 : vector<112x128xf32>
      %c0_14 = arith.constant 0 : index
      %c0_15 = arith.constant 0 : index
      %16 = vector.load %arg6[%c0_14, %c0_15] : memref<1x128xf32, #tpu.memory_space<vmem>>, vector<1x128xf32>
      %17 = vector.broadcast %16 : vector<1x128xf32> to vector<112x128xf32>
      %18 = arith.addf %15, %17 : vector<112x128xf32>
      %cst_16 = arith.constant 0.000000e+00 : f32
      %19 = vector.broadcast %cst_16 : f32 to vector<112x128xf32>
      %20 = arith.maximumf %18, %19 : vector<112x128xf32>
      %c0_17 = arith.constant 0 : index
      %c0_18 = arith.constant 0 : index
      %21 = vector.load %arg7[%c0_17, %c0_18] : memref<112x128xf32, #tpu.memory_space<vmem>>, vector<112x128xf32>
      tpu.vector_store %arg7[%c0_17, %c0_18], %20 {strides = array<i32>} : memref<112x128xf32, #tpu.memory_space<vmem>>, vector<112x128xf32>,
    } else {
    }
    return
  }
  func.func @transform_0(%arg0: i32, %arg1: i32, %arg2: i32) -> (i32, i32) {
    %c0_i32 = arith.constant 0 : i32
    return %arg0, %arg2 : i32, i32
  }
  func.func @transform_1(%arg0: i32, %arg1: i32, %arg2: i32) -> (i32, i32) {
    %c0_i32 = arith.constant 0 : i32
    return %arg2, %arg1 : i32, i32
  }
  func.func @transform_2(%arg0: i32, %arg1: i32, %arg2: i32) -> (i32, i32) {
    %c0_i32 = arith.constant 0 : i32
    %c0_i32_0 = arith.constant 0 : i32
    return %c0_i32, %arg1 : i32, i32
  }
  func.func @transform_3(%arg0: i32, %arg1: i32, %arg2: i32) -> (i32, i32) {
    %c0_i32 = arith.constant 0 : i32
    %c0_i32_0 = arith.constant 0 : i32
    return %c0_i32, %arg1 : i32, i32
  }
  func.func @transform_4(%arg0: i32, %arg1: i32, %arg2: i32) -> (i32, i32) {
    %c0_i32 = arith.constant 0 : i32
    return %arg0, %arg1 : i32, i32
  }
}

module attributes {stable_mosaic.version = 11 : i64} {
  func.func @_mm_kernel(%arg0: i32, %arg1: i32, %arg2: i32, %arg3: memref<112x128xbf16, #tpu.memory_space<vmem>>, %arg4: memref<128x128xbf16, #tpu.memory_space<vmem>>, %arg5: memref<1x128xf32, #tpu.memory_space<vmem>>, %arg6: memref<1x128xf32, #tpu.memory_space<vmem>>, %arg7: memref<112x128xf32, #tpu.memory_space<vmem>>, %arg8: memref<112x128xf32, #tpu.memory_space<vmem>>) attributes {dimension_semantics = [#tpu.dimension_semantics<parallel>, #tpu.dimension_semantics<parallel>, #tpu.dimension_semantics<arbitrary>], iteration_bounds = array<i64: 1, 1, 1>, scalar_prefetch = 0 : i64, scratch_operands = 1 : i64, tpu.core_type = #tpu.core_type<tc>, window_params = [{transform_indices = @transform_0, window_bounds = array<i64: 112, 128>}, {transform_indices = @transform_1, window_bounds = array<i64: 128, 128>}, {transform_indices = @transform_2, window_bounds = array<i64: 1, 128>}, {transform_indices = @transform_3, window_bounds = array<i64: 1, 128>}, {transform_indices = @transform_4, window_bounds = array<i64: 112, 128>}]} {
    %c0_i32 = arith.constant 0 : i32
    %0 = arith.cmpi eq, %arg2, %c0_i32 : i32
    %1 = arith.extui %0 : i1 to i32
    %c0_i32_0 = arith.constant 0 : i32
    %2 = arith.cmpi ne, %1, %c0_i32_0 : i32
    scf.if %2 {
      %cst_10 = arith.constant 0.000000e+00 : f32
      %12 = vector.broadcast %cst_10 : f32 to vector<112x128xf32>
      %c0_11 = arith.constant 0 : index
      %c0_12 = arith.constant 0 : index
      %13 = vector.load %arg8[%c0_11, %c0_12] : memref<112x128xf32, #tpu.memory_space<vmem>>, vector<112x128xf32>
      tpu.vector_store %arg8[%c0_11, %c0_12], %12 {strides = array<i32>} : memref<112x128xf32, #tpu.memory_space<vmem>>, vector<112x128xf32>,
    } else {
    }
    %c0 = arith.constant 0 : index
    %c0_1 = arith.constant 0 : index
    %3 = vector.load %arg8[%c0, %c0_1] : memref<112x128xf32, #tpu.memory_space<vmem>>, vector<112x128xf32>
    %c0_2 = arith.constant 0 : index
    %c0_3 = arith.constant 0 : index
    %4 = vector.load %arg3[%c0_2, %c0_3] : memref<112x128xbf16, #tpu.memory_space<vmem>>, vector<112x128xbf16>
    %c0_4 = arith.constant 0 : index
    %c0_5 = arith.constant 0 : index
    %5 = vector.load %arg4[%c0_4, %c0_5] : memref<128x128xbf16, #tpu.memory_space<vmem>>, vector<128x128xbf16>
    %cst = arith.constant dense<0.000000e+00> : vector<112x128xf32>
    %6 = tpu.matmul %4, %5, %cst {dimension_numbers = #tpu.dot_dimension_numbers<[1], [0], [0], [1], [0, 0, 1, 1], [], []>} : vector<112x128xbf16>, vector<128x128xbf16>, vector<112x128xf32> -> vector<112x128xf32>
    %7 = arith.addf %3, %6 : vector<112x128xf32>
    %c0_6 = arith.constant 0 : index
    %c0_7 = arith.constant 0 : index
    %8 = vector.load %arg8[%c0_6, %c0_7] : memref<112x128xf32, #tpu.memory_space<vmem>>, vector<112x128xf32>
    tpu.vector_store %arg8[%c0_6, %c0_7], %7 {strides = array<i32>} : memref<112x128xf32, #tpu.memory_space<vmem>>, vector<112x128xf32>,
    %c0_i32_8 = arith.constant 0 : i32
    %9 = arith.cmpi eq, %arg2, %c0_i32_8 : i32
    %10 = arith.extui %9 : i1 to i32
    %c0_i32_9 = arith.constant 0 : i32
    %11 = arith.cmpi ne, %10, %c0_i32_9 : i32
    scf.if %11 {
      %c0_10 = arith.constant 0 : index
      %c0_11 = arith.constant 0 : index
      %12 = vector.load %arg8[%c0_10, %c0_11] : memref<112x128xf32, #tpu.memory_space<vmem>>, vector<112x128xf32>
      %c0_12 = arith.constant 0 : index
      %c0_13 = arith.constant 0 : index
      %13 = vector.load %arg5[%c0_12, %c0_13] : memref<1x128xf32, #tpu.memory_space<vmem>>, vector<1x128xf32>
      %14 = vector.broadcast %13 : vector<1x128xf32> to vector<112x128xf32>
      %15 = arith.mulf %12, %14 : vector<112x128xf32>
      %c0_14 = arith.constant 0 : index
      %c0_15 = arith.constant 0 : index
      %16 = vector.load %arg6[%c0_14, %c0_15] : memref<1x128xf32, #tpu.memory_space<vmem>>, vector<1x128xf32>
      %17 = vector.broadcast %16 : vector<1x128xf32> to vector<112x128xf32>
      %18 = arith.addf %15, %17 : vector<112x128xf32>
      %cst_16 = arith.constant 0.000000e+00 : f32
      %19 = vector.broadcast %cst_16 : f32 to vector<112x128xf32>
      %20 = arith.maximumf %18, %19 : vector<112x128xf32>
      %c0_17 = arith.constant 0 : index
      %c0_18 = arith.constant 0 : index
      %21 = vector.load %arg7[%c0_17, %c0_18] : memref<112x128xf32, #tpu.memory_space<vmem>>, vector<112x128xf32>
      tpu.vector_store %arg7[%c0_17, %c0_18], %20 {strides = array<i32>} : memref<112x128xf32, #tpu.memory_space<vmem>>, vector<112x128xf32>,
    } else {
    }
    return
  }
  func.func @transform_0(%arg0: i32, %arg1: i32, %arg2: i32) -> (i32, i32) {
    %c0_i32 = arith.constant 0 : i32
    return %arg0, %arg2 : i32, i32
  }
  func.func @transform_1(%arg0: i32, %arg1: i32, %arg2: i32) -> (i32, i32) {
    %c0_i32 = arith.constant 0 : i32
    return %arg2, %arg1 : i32, i32
  }
  func.func @transform_2(%arg0: i32, %arg1: i32, %arg2: i32) -> (i32, i32) {
    %c0_i32 = arith.constant 0 : i32
    %c0_i32_0 = arith.constant 0 : i32
    return %c0_i32, %arg1 : i32, i32
  }
  func.func @transform_3(%arg0: i32, %arg1: i32, %arg2: i32) -> (i32, i32) {
    %c0_i32 = arith.constant 0 : i32
    %c0_i32_0 = arith.constant 0 : i32
    return %c0_i32, %arg1 : i32, i32
  }
  func.func @transform_4(%arg0: i32, %arg1: i32, %arg2: i32) -> (i32, i32) {
    %c0_i32 = arith.constant 0 : i32
    return %arg0, %arg1 : i32, i32
  }
}

module attributes {stable_mosaic.version = 11 : i64} {
  func.func @_mm_res_kernel(%arg0: i32, %arg1: i32, %arg2: i32, %arg3: memref<112x128xbf16, #tpu.memory_space<vmem>>, %arg4: memref<128x128xbf16, #tpu.memory_space<vmem>>, %arg5: memref<1x128xf32, #tpu.memory_space<vmem>>, %arg6: memref<1x128xf32, #tpu.memory_space<vmem>>, %arg7: memref<112x128xf32, #tpu.memory_space<vmem>>, %arg8: memref<112x128xf32, #tpu.memory_space<vmem>>, %arg9: memref<112x128xf32, #tpu.memory_space<vmem>>) attributes {dimension_semantics = [#tpu.dimension_semantics<parallel>, #tpu.dimension_semantics<parallel>, #tpu.dimension_semantics<arbitrary>], iteration_bounds = array<i64: 1, 1, 1>, scalar_prefetch = 0 : i64, scratch_operands = 1 : i64, tpu.core_type = #tpu.core_type<tc>, window_params = [{transform_indices = @transform_0, window_bounds = array<i64: 112, 128>}, {transform_indices = @transform_1, window_bounds = array<i64: 128, 128>}, {transform_indices = @transform_2, window_bounds = array<i64: 1, 128>}, {transform_indices = @transform_3, window_bounds = array<i64: 1, 128>}, {transform_indices = @transform_4, window_bounds = array<i64: 112, 128>}, {transform_indices = @transform_5, window_bounds = array<i64: 112, 128>}]} {
    %c0_i32 = arith.constant 0 : i32
    %0 = arith.cmpi eq, %arg2, %c0_i32 : i32
    %1 = arith.extui %0 : i1 to i32
    %c0_i32_0 = arith.constant 0 : i32
    %2 = arith.cmpi ne, %1, %c0_i32_0 : i32
    scf.if %2 {
      %cst_10 = arith.constant 0.000000e+00 : f32
      %12 = vector.broadcast %cst_10 : f32 to vector<112x128xf32>
      %c0_11 = arith.constant 0 : index
      %c0_12 = arith.constant 0 : index
      %13 = vector.load %arg9[%c0_11, %c0_12] : memref<112x128xf32, #tpu.memory_space<vmem>>, vector<112x128xf32>
      tpu.vector_store %arg9[%c0_11, %c0_12], %12 {strides = array<i32>} : memref<112x128xf32, #tpu.memory_space<vmem>>, vector<112x128xf32>,
    } else {
    }
    %c0 = arith.constant 0 : index
    %c0_1 = arith.constant 0 : index
    %3 = vector.load %arg9[%c0, %c0_1] : memref<112x128xf32, #tpu.memory_space<vmem>>, vector<112x128xf32>
    %c0_2 = arith.constant 0 : index
    %c0_3 = arith.constant 0 : index
    %4 = vector.load %arg3[%c0_2, %c0_3] : memref<112x128xbf16, #tpu.memory_space<vmem>>, vector<112x128xbf16>
    %c0_4 = arith.constant 0 : index
    %c0_5 = arith.constant 0 : index
    %5 = vector.load %arg4[%c0_4, %c0_5] : memref<128x128xbf16, #tpu.memory_space<vmem>>, vector<128x128xbf16>
    %cst = arith.constant dense<0.000000e+00> : vector<112x128xf32>
    %6 = tpu.matmul %4, %5, %cst {dimension_numbers = #tpu.dot_dimension_numbers<[1], [0], [0], [1], [0, 0, 1, 1], [], []>} : vector<112x128xbf16>, vector<128x128xbf16>, vector<112x128xf32> -> vector<112x128xf32>
    %7 = arith.addf %3, %6 : vector<112x128xf32>
    %c0_6 = arith.constant 0 : index
    %c0_7 = arith.constant 0 : index
    %8 = vector.load %arg9[%c0_6, %c0_7] : memref<112x128xf32, #tpu.memory_space<vmem>>, vector<112x128xf32>
    tpu.vector_store %arg9[%c0_6, %c0_7], %7 {strides = array<i32>} : memref<112x128xf32, #tpu.memory_space<vmem>>, vector<112x128xf32>,
    %c0_i32_8 = arith.constant 0 : i32
    %9 = arith.cmpi eq, %arg2, %c0_i32_8 : i32
    %10 = arith.extui %9 : i1 to i32
    %c0_i32_9 = arith.constant 0 : i32
    %11 = arith.cmpi ne, %10, %c0_i32_9 : i32
    scf.if %11 {
      %c0_10 = arith.constant 0 : index
      %c0_11 = arith.constant 0 : index
      %12 = vector.load %arg9[%c0_10, %c0_11] : memref<112x128xf32, #tpu.memory_space<vmem>>, vector<112x128xf32>
      %c0_12 = arith.constant 0 : index
      %c0_13 = arith.constant 0 : index
      %13 = vector.load %arg5[%c0_12, %c0_13] : memref<1x128xf32, #tpu.memory_space<vmem>>, vector<1x128xf32>
      %14 = vector.broadcast %13 : vector<1x128xf32> to vector<112x128xf32>
      %15 = arith.mulf %12, %14 : vector<112x128xf32>
      %c0_14 = arith.constant 0 : index
      %c0_15 = arith.constant 0 : index
      %16 = vector.load %arg6[%c0_14, %c0_15] : memref<1x128xf32, #tpu.memory_space<vmem>>, vector<1x128xf32>
      %17 = vector.broadcast %16 : vector<1x128xf32> to vector<112x128xf32>
      %18 = arith.addf %15, %17 : vector<112x128xf32>
      %c0_16 = arith.constant 0 : index
      %c0_17 = arith.constant 0 : index
      %19 = vector.load %arg7[%c0_16, %c0_17] : memref<112x128xf32, #tpu.memory_space<vmem>>, vector<112x128xf32>
      %cst_18 = arith.constant 1.700000e-01 : f32
      %20 = vector.broadcast %cst_18 : f32 to vector<112x128xf32>
      %21 = arith.mulf %20, %18 : vector<112x128xf32>
      %22 = arith.addf %19, %21 : vector<112x128xf32>
      %cst_19 = arith.constant 0.000000e+00 : f32
      %23 = vector.broadcast %cst_19 : f32 to vector<112x128xf32>
      %24 = arith.maximumf %22, %23 : vector<112x128xf32>
      %c0_20 = arith.constant 0 : index
      %c0_21 = arith.constant 0 : index
      %25 = vector.load %arg8[%c0_20, %c0_21] : memref<112x128xf32, #tpu.memory_space<vmem>>, vector<112x128xf32>
      tpu.vector_store %arg8[%c0_20, %c0_21], %24 {strides = array<i32>} : memref<112x128xf32, #tpu.memory_space<vmem>>, vector<112x128xf32>,
    } else {
    }
    return
  }
  func.func @transform_0(%arg0: i32, %arg1: i32, %arg2: i32) -> (i32, i32) {
    %c0_i32 = arith.constant 0 : i32
    return %arg0, %arg2 : i32, i32
  }
  func.func @transform_1(%arg0: i32, %arg1: i32, %arg2: i32) -> (i32, i32) {
    %c0_i32 = arith.constant 0 : i32
    return %arg2, %arg1 : i32, i32
  }
  func.func @transform_2(%arg0: i32, %arg1: i32, %arg2: i32) -> (i32, i32) {
    %c0_i32 = arith.constant 0 : i32
    %c0_i32_0 = arith.constant 0 : i32
    return %c0_i32, %arg1 : i32, i32
  }
  func.func @transform_3(%arg0: i32, %arg1: i32, %arg2: i32) -> (i32, i32) {
    %c0_i32 = arith.constant 0 : i32
    %c0_i32_0 = arith.constant 0 : i32
    return %c0_i32, %arg1 : i32, i32
  }
  func.func @transform_4(%arg0: i32, %arg1: i32, %arg2: i32) -> (i32, i32) {
    %c0_i32 = arith.constant 0 : i32
    return %arg0, %arg1 : i32, i32
  }
  func.func @transform_5(%arg0: i32, %arg1: i32, %arg2: i32) -> (i32, i32) {
    %c0_i32 = arith.constant 0 : i32
    return %arg0, %arg1 : i32, i32
  }
}

module attributes {stable_mosaic.version = 11 : i64} {
  func.func @_mm_kernel(%arg0: i32, %arg1: i32, %arg2: i32, %arg3: memref<32x384xbf16, #tpu.memory_space<vmem>>, %arg4: memref<384x128xbf16, #tpu.memory_space<vmem>>, %arg5: memref<1x128xf32, #tpu.memory_space<vmem>>, %arg6: memref<1x128xf32, #tpu.memory_space<vmem>>, %arg7: memref<32x128xf32, #tpu.memory_space<vmem>>, %arg8: memref<32x128xf32, #tpu.memory_space<vmem>>) attributes {dimension_semantics = [#tpu.dimension_semantics<parallel>, #tpu.dimension_semantics<parallel>, #tpu.dimension_semantics<arbitrary>], iteration_bounds = array<i64: 1, 1, 1>, scalar_prefetch = 0 : i64, scratch_operands = 1 : i64, tpu.core_type = #tpu.core_type<tc>, window_params = [{transform_indices = @transform_0, window_bounds = array<i64: 32, 384>}, {transform_indices = @transform_1, window_bounds = array<i64: 384, 128>}, {transform_indices = @transform_2, window_bounds = array<i64: 1, 128>}, {transform_indices = @transform_3, window_bounds = array<i64: 1, 128>}, {transform_indices = @transform_4, window_bounds = array<i64: 32, 128>}]} {
    %c0_i32 = arith.constant 0 : i32
    %0 = arith.cmpi eq, %arg2, %c0_i32 : i32
    %1 = arith.extui %0 : i1 to i32
    %c0_i32_0 = arith.constant 0 : i32
    %2 = arith.cmpi ne, %1, %c0_i32_0 : i32
    scf.if %2 {
      %cst_10 = arith.constant 0.000000e+00 : f32
      %12 = vector.broadcast %cst_10 : f32 to vector<32x128xf32>
      %c0_11 = arith.constant 0 : index
      %c0_12 = arith.constant 0 : index
      %13 = vector.load %arg8[%c0_11, %c0_12] : memref<32x128xf32, #tpu.memory_space<vmem>>, vector<32x128xf32>
      tpu.vector_store %arg8[%c0_11, %c0_12], %12 {strides = array<i32>} : memref<32x128xf32, #tpu.memory_space<vmem>>, vector<32x128xf32>,
    } else {
    }
    %c0 = arith.constant 0 : index
    %c0_1 = arith.constant 0 : index
    %3 = vector.load %arg8[%c0, %c0_1] : memref<32x128xf32, #tpu.memory_space<vmem>>, vector<32x128xf32>
    %c0_2 = arith.constant 0 : index
    %c0_3 = arith.constant 0 : index
    %4 = vector.load %arg3[%c0_2, %c0_3] : memref<32x384xbf16, #tpu.memory_space<vmem>>, vector<32x384xbf16>
    %c0_4 = arith.constant 0 : index
    %c0_5 = arith.constant 0 : index
    %5 = vector.load %arg4[%c0_4, %c0_5] : memref<384x128xbf16, #tpu.memory_space<vmem>>, vector<384x128xbf16>
    %cst = arith.constant dense<0.000000e+00> : vector<32x128xf32>
    %6 = tpu.matmul %4, %5, %cst {dimension_numbers = #tpu.dot_dimension_numbers<[1], [0], [0], [1], [0, 0, 1, 1], [], []>} : vector<32x384xbf16>, vector<384x128xbf16>, vector<32x128xf32> -> vector<32x128xf32>
    %7 = arith.addf %3, %6 : vector<32x128xf32>
    %c0_6 = arith.constant 0 : index
    %c0_7 = arith.constant 0 : index
    %8 = vector.load %arg8[%c0_6, %c0_7] : memref<32x128xf32, #tpu.memory_space<vmem>>, vector<32x128xf32>
    tpu.vector_store %arg8[%c0_6, %c0_7], %7 {strides = array<i32>} : memref<32x128xf32, #tpu.memory_space<vmem>>, vector<32x128xf32>,
    %c0_i32_8 = arith.constant 0 : i32
    %9 = arith.cmpi eq, %arg2, %c0_i32_8 : i32
    %10 = arith.extui %9 : i1 to i32
    %c0_i32_9 = arith.constant 0 : i32
    %11 = arith.cmpi ne, %10, %c0_i32_9 : i32
    scf.if %11 {
      %c0_10 = arith.constant 0 : index
      %c0_11 = arith.constant 0 : index
      %12 = vector.load %arg8[%c0_10, %c0_11] : memref<32x128xf32, #tpu.memory_space<vmem>>, vector<32x128xf32>
      %c0_12 = arith.constant 0 : index
      %c0_13 = arith.constant 0 : index
      %13 = vector.load %arg5[%c0_12, %c0_13] : memref<1x128xf32, #tpu.memory_space<vmem>>, vector<1x128xf32>
      %14 = vector.broadcast %13 : vector<1x128xf32> to vector<32x128xf32>
      %15 = arith.mulf %12, %14 : vector<32x128xf32>
      %c0_14 = arith.constant 0 : index
      %c0_15 = arith.constant 0 : index
      %16 = vector.load %arg6[%c0_14, %c0_15] : memref<1x128xf32, #tpu.memory_space<vmem>>, vector<1x128xf32>
      %17 = vector.broadcast %16 : vector<1x128xf32> to vector<32x128xf32>
      %18 = arith.addf %15, %17 : vector<32x128xf32>
      %cst_16 = arith.constant 0.000000e+00 : f32
      %19 = vector.broadcast %cst_16 : f32 to vector<32x128xf32>
      %20 = arith.maximumf %18, %19 : vector<32x128xf32>
      %c0_17 = arith.constant 0 : index
      %c0_18 = arith.constant 0 : index
      %21 = vector.load %arg7[%c0_17, %c0_18] : memref<32x128xf32, #tpu.memory_space<vmem>>, vector<32x128xf32>
      tpu.vector_store %arg7[%c0_17, %c0_18], %20 {strides = array<i32>} : memref<32x128xf32, #tpu.memory_space<vmem>>, vector<32x128xf32>,
    } else {
    }
    return
  }
  func.func @transform_0(%arg0: i32, %arg1: i32, %arg2: i32) -> (i32, i32) {
    %c0_i32 = arith.constant 0 : i32
    return %arg0, %arg2 : i32, i32
  }
  func.func @transform_1(%arg0: i32, %arg1: i32, %arg2: i32) -> (i32, i32) {
    %c0_i32 = arith.constant 0 : i32
    return %arg2, %arg1 : i32, i32
  }
  func.func @transform_2(%arg0: i32, %arg1: i32, %arg2: i32) -> (i32, i32) {
    %c0_i32 = arith.constant 0 : i32
    %c0_i32_0 = arith.constant 0 : i32
    return %c0_i32, %arg1 : i32, i32
  }
  func.func @transform_3(%arg0: i32, %arg1: i32, %arg2: i32) -> (i32, i32) {
    %c0_i32 = arith.constant 0 : i32
    %c0_i32_0 = arith.constant 0 : i32
    return %c0_i32, %arg1 : i32, i32
  }
  func.func @transform_4(%arg0: i32, %arg1: i32, %arg2: i32) -> (i32, i32) {
    %c0_i32 = arith.constant 0 : i32
    return %arg0, %arg1 : i32, i32
  }
}

module attributes {stable_mosaic.version = 11 : i64} {
  func.func @_mm_kernel(%arg0: i32, %arg1: i32, %arg2: i32, %arg3: memref<32x256xbf16, #tpu.memory_space<vmem>>, %arg4: memref<256x128xbf16, #tpu.memory_space<vmem>>, %arg5: memref<1x128xf32, #tpu.memory_space<vmem>>, %arg6: memref<1x128xf32, #tpu.memory_space<vmem>>, %arg7: memref<32x128xf32, #tpu.memory_space<vmem>>, %arg8: memref<32x128xf32, #tpu.memory_space<vmem>>) attributes {dimension_semantics = [#tpu.dimension_semantics<parallel>, #tpu.dimension_semantics<parallel>, #tpu.dimension_semantics<arbitrary>], iteration_bounds = array<i64: 1, 1, 1>, scalar_prefetch = 0 : i64, scratch_operands = 1 : i64, tpu.core_type = #tpu.core_type<tc>, window_params = [{transform_indices = @transform_0, window_bounds = array<i64: 32, 256>}, {transform_indices = @transform_1, window_bounds = array<i64: 256, 128>}, {transform_indices = @transform_2, window_bounds = array<i64: 1, 128>}, {transform_indices = @transform_3, window_bounds = array<i64: 1, 128>}, {transform_indices = @transform_4, window_bounds = array<i64: 32, 128>}]} {
    %c0_i32 = arith.constant 0 : i32
    %0 = arith.cmpi eq, %arg2, %c0_i32 : i32
    %1 = arith.extui %0 : i1 to i32
    %c0_i32_0 = arith.constant 0 : i32
    %2 = arith.cmpi ne, %1, %c0_i32_0 : i32
    scf.if %2 {
      %cst_10 = arith.constant 0.000000e+00 : f32
      %12 = vector.broadcast %cst_10 : f32 to vector<32x128xf32>
      %c0_11 = arith.constant 0 : index
      %c0_12 = arith.constant 0 : index
      %13 = vector.load %arg8[%c0_11, %c0_12] : memref<32x128xf32, #tpu.memory_space<vmem>>, vector<32x128xf32>
      tpu.vector_store %arg8[%c0_11, %c0_12], %12 {strides = array<i32>} : memref<32x128xf32, #tpu.memory_space<vmem>>, vector<32x128xf32>,
    } else {
    }
    %c0 = arith.constant 0 : index
    %c0_1 = arith.constant 0 : index
    %3 = vector.load %arg8[%c0, %c0_1] : memref<32x128xf32, #tpu.memory_space<vmem>>, vector<32x128xf32>
    %c0_2 = arith.constant 0 : index
    %c0_3 = arith.constant 0 : index
    %4 = vector.load %arg3[%c0_2, %c0_3] : memref<32x256xbf16, #tpu.memory_space<vmem>>, vector<32x256xbf16>
    %c0_4 = arith.constant 0 : index
    %c0_5 = arith.constant 0 : index
    %5 = vector.load %arg4[%c0_4, %c0_5] : memref<256x128xbf16, #tpu.memory_space<vmem>>, vector<256x128xbf16>
    %cst = arith.constant dense<0.000000e+00> : vector<32x128xf32>
    %6 = tpu.matmul %4, %5, %cst {dimension_numbers = #tpu.dot_dimension_numbers<[1], [0], [0], [1], [0, 0, 1, 1], [], []>} : vector<32x256xbf16>, vector<256x128xbf16>, vector<32x128xf32> -> vector<32x128xf32>
    %7 = arith.addf %3, %6 : vector<32x128xf32>
    %c0_6 = arith.constant 0 : index
    %c0_7 = arith.constant 0 : index
    %8 = vector.load %arg8[%c0_6, %c0_7] : memref<32x128xf32, #tpu.memory_space<vmem>>, vector<32x128xf32>
    tpu.vector_store %arg8[%c0_6, %c0_7], %7 {strides = array<i32>} : memref<32x128xf32, #tpu.memory_space<vmem>>, vector<32x128xf32>,
    %c0_i32_8 = arith.constant 0 : i32
    %9 = arith.cmpi eq, %arg2, %c0_i32_8 : i32
    %10 = arith.extui %9 : i1 to i32
    %c0_i32_9 = arith.constant 0 : i32
    %11 = arith.cmpi ne, %10, %c0_i32_9 : i32
    scf.if %11 {
      %c0_10 = arith.constant 0 : index
      %c0_11 = arith.constant 0 : index
      %12 = vector.load %arg8[%c0_10, %c0_11] : memref<32x128xf32, #tpu.memory_space<vmem>>, vector<32x128xf32>
      %c0_12 = arith.constant 0 : index
      %c0_13 = arith.constant 0 : index
      %13 = vector.load %arg5[%c0_12, %c0_13] : memref<1x128xf32, #tpu.memory_space<vmem>>, vector<1x128xf32>
      %14 = vector.broadcast %13 : vector<1x128xf32> to vector<32x128xf32>
      %15 = arith.mulf %12, %14 : vector<32x128xf32>
      %c0_14 = arith.constant 0 : index
      %c0_15 = arith.constant 0 : index
      %16 = vector.load %arg6[%c0_14, %c0_15] : memref<1x128xf32, #tpu.memory_space<vmem>>, vector<1x128xf32>
      %17 = vector.broadcast %16 : vector<1x128xf32> to vector<32x128xf32>
      %18 = arith.addf %15, %17 : vector<32x128xf32>
      %cst_16 = arith.constant 0.000000e+00 : f32
      %19 = vector.broadcast %cst_16 : f32 to vector<32x128xf32>
      %20 = arith.maximumf %18, %19 : vector<32x128xf32>
      %c0_17 = arith.constant 0 : index
      %c0_18 = arith.constant 0 : index
      %21 = vector.load %arg7[%c0_17, %c0_18] : memref<32x128xf32, #tpu.memory_space<vmem>>, vector<32x128xf32>
      tpu.vector_store %arg7[%c0_17, %c0_18], %20 {strides = array<i32>} : memref<32x128xf32, #tpu.memory_space<vmem>>, vector<32x128xf32>,
    } else {
    }
    return
  }
  func.func @transform_0(%arg0: i32, %arg1: i32, %arg2: i32) -> (i32, i32) {
    %c0_i32 = arith.constant 0 : i32
    return %arg0, %arg2 : i32, i32
  }
  func.func @transform_1(%arg0: i32, %arg1: i32, %arg2: i32) -> (i32, i32) {
    %c0_i32 = arith.constant 0 : i32
    return %arg2, %arg1 : i32, i32
  }
  func.func @transform_2(%arg0: i32, %arg1: i32, %arg2: i32) -> (i32, i32) {
    %c0_i32 = arith.constant 0 : i32
    %c0_i32_0 = arith.constant 0 : i32
    return %c0_i32, %arg1 : i32, i32
  }
  func.func @transform_3(%arg0: i32, %arg1: i32, %arg2: i32) -> (i32, i32) {
    %c0_i32 = arith.constant 0 : i32
    %c0_i32_0 = arith.constant 0 : i32
    return %c0_i32, %arg1 : i32, i32
  }
  func.func @transform_4(%arg0: i32, %arg1: i32, %arg2: i32) -> (i32, i32) {
    %c0_i32 = arith.constant 0 : i32
    return %arg0, %arg1 : i32, i32
  }
}

module attributes {stable_mosaic.version = 11 : i64} {
  func.func @_mm_kernel(%arg0: i32, %arg1: i32, %arg2: i32, %arg3: memref<32x128xbf16, #tpu.memory_space<vmem>>, %arg4: memref<128x128xbf16, #tpu.memory_space<vmem>>, %arg5: memref<1x128xf32, #tpu.memory_space<vmem>>, %arg6: memref<1x128xf32, #tpu.memory_space<vmem>>, %arg7: memref<32x128xf32, #tpu.memory_space<vmem>>, %arg8: memref<32x128xf32, #tpu.memory_space<vmem>>) attributes {dimension_semantics = [#tpu.dimension_semantics<parallel>, #tpu.dimension_semantics<parallel>, #tpu.dimension_semantics<arbitrary>], iteration_bounds = array<i64: 1, 1, 1>, scalar_prefetch = 0 : i64, scratch_operands = 1 : i64, tpu.core_type = #tpu.core_type<tc>, window_params = [{transform_indices = @transform_0, window_bounds = array<i64: 32, 128>}, {transform_indices = @transform_1, window_bounds = array<i64: 128, 128>}, {transform_indices = @transform_2, window_bounds = array<i64: 1, 128>}, {transform_indices = @transform_3, window_bounds = array<i64: 1, 128>}, {transform_indices = @transform_4, window_bounds = array<i64: 32, 128>}]} {
    %c0_i32 = arith.constant 0 : i32
    %0 = arith.cmpi eq, %arg2, %c0_i32 : i32
    %1 = arith.extui %0 : i1 to i32
    %c0_i32_0 = arith.constant 0 : i32
    %2 = arith.cmpi ne, %1, %c0_i32_0 : i32
    scf.if %2 {
      %cst_10 = arith.constant 0.000000e+00 : f32
      %12 = vector.broadcast %cst_10 : f32 to vector<32x128xf32>
      %c0_11 = arith.constant 0 : index
      %c0_12 = arith.constant 0 : index
      %13 = vector.load %arg8[%c0_11, %c0_12] : memref<32x128xf32, #tpu.memory_space<vmem>>, vector<32x128xf32>
      tpu.vector_store %arg8[%c0_11, %c0_12], %12 {strides = array<i32>} : memref<32x128xf32, #tpu.memory_space<vmem>>, vector<32x128xf32>,
    } else {
    }
    %c0 = arith.constant 0 : index
    %c0_1 = arith.constant 0 : index
    %3 = vector.load %arg8[%c0, %c0_1] : memref<32x128xf32, #tpu.memory_space<vmem>>, vector<32x128xf32>
    %c0_2 = arith.constant 0 : index
    %c0_3 = arith.constant 0 : index
    %4 = vector.load %arg3[%c0_2, %c0_3] : memref<32x128xbf16, #tpu.memory_space<vmem>>, vector<32x128xbf16>
    %c0_4 = arith.constant 0 : index
    %c0_5 = arith.constant 0 : index
    %5 = vector.load %arg4[%c0_4, %c0_5] : memref<128x128xbf16, #tpu.memory_space<vmem>>, vector<128x128xbf16>
    %cst = arith.constant dense<0.000000e+00> : vector<32x128xf32>
    %6 = tpu.matmul %4, %5, %cst {dimension_numbers = #tpu.dot_dimension_numbers<[1], [0], [0], [1], [0, 0, 1, 1], [], []>} : vector<32x128xbf16>, vector<128x128xbf16>, vector<32x128xf32> -> vector<32x128xf32>
    %7 = arith.addf %3, %6 : vector<32x128xf32>
    %c0_6 = arith.constant 0 : index
    %c0_7 = arith.constant 0 : index
    %8 = vector.load %arg8[%c0_6, %c0_7] : memref<32x128xf32, #tpu.memory_space<vmem>>, vector<32x128xf32>
    tpu.vector_store %arg8[%c0_6, %c0_7], %7 {strides = array<i32>} : memref<32x128xf32, #tpu.memory_space<vmem>>, vector<32x128xf32>,
    %c0_i32_8 = arith.constant 0 : i32
    %9 = arith.cmpi eq, %arg2, %c0_i32_8 : i32
    %10 = arith.extui %9 : i1 to i32
    %c0_i32_9 = arith.constant 0 : i32
    %11 = arith.cmpi ne, %10, %c0_i32_9 : i32
    scf.if %11 {
      %c0_10 = arith.constant 0 : index
      %c0_11 = arith.constant 0 : index
      %12 = vector.load %arg8[%c0_10, %c0_11] : memref<32x128xf32, #tpu.memory_space<vmem>>, vector<32x128xf32>
      %c0_12 = arith.constant 0 : index
      %c0_13 = arith.constant 0 : index
      %13 = vector.load %arg5[%c0_12, %c0_13] : memref<1x128xf32, #tpu.memory_space<vmem>>, vector<1x128xf32>
      %14 = vector.broadcast %13 : vector<1x128xf32> to vector<32x128xf32>
      %15 = arith.mulf %12, %14 : vector<32x128xf32>
      %c0_14 = arith.constant 0 : index
      %c0_15 = arith.constant 0 : index
      %16 = vector.load %arg6[%c0_14, %c0_15] : memref<1x128xf32, #tpu.memory_space<vmem>>, vector<1x128xf32>
      %17 = vector.broadcast %16 : vector<1x128xf32> to vector<32x128xf32>
      %18 = arith.addf %15, %17 : vector<32x128xf32>
      %cst_16 = arith.constant 0.000000e+00 : f32
      %19 = vector.broadcast %cst_16 : f32 to vector<32x128xf32>
      %20 = arith.maximumf %18, %19 : vector<32x128xf32>
      %c0_17 = arith.constant 0 : index
      %c0_18 = arith.constant 0 : index
      %21 = vector.load %arg7[%c0_17, %c0_18] : memref<32x128xf32, #tpu.memory_space<vmem>>, vector<32x128xf32>
      tpu.vector_store %arg7[%c0_17, %c0_18], %20 {strides = array<i32>} : memref<32x128xf32, #tpu.memory_space<vmem>>, vector<32x128xf32>,
    } else {
    }
    return
  }
  func.func @transform_0(%arg0: i32, %arg1: i32, %arg2: i32) -> (i32, i32) {
    %c0_i32 = arith.constant 0 : i32
    return %arg0, %arg2 : i32, i32
  }
  func.func @transform_1(%arg0: i32, %arg1: i32, %arg2: i32) -> (i32, i32) {
    %c0_i32 = arith.constant 0 : i32
    return %arg2, %arg1 : i32, i32
  }
  func.func @transform_2(%arg0: i32, %arg1: i32, %arg2: i32) -> (i32, i32) {
    %c0_i32 = arith.constant 0 : i32
    %c0_i32_0 = arith.constant 0 : i32
    return %c0_i32, %arg1 : i32, i32
  }
  func.func @transform_3(%arg0: i32, %arg1: i32, %arg2: i32) -> (i32, i32) {
    %c0_i32 = arith.constant 0 : i32
    %c0_i32_0 = arith.constant 0 : i32
    return %c0_i32, %arg1 : i32, i32
  }
  func.func @transform_4(%arg0: i32, %arg1: i32, %arg2: i32) -> (i32, i32) {
    %c0_i32 = arith.constant 0 : i32
    return %arg0, %arg1 : i32, i32
  }
}

module attributes {stable_mosaic.version = 11 : i64} {
  func.func @_mm_res_kernel(%arg0: i32, %arg1: i32, %arg2: i32, %arg3: memref<32x128xbf16, #tpu.memory_space<vmem>>, %arg4: memref<128x128xbf16, #tpu.memory_space<vmem>>, %arg5: memref<1x128xf32, #tpu.memory_space<vmem>>, %arg6: memref<1x128xf32, #tpu.memory_space<vmem>>, %arg7: memref<32x128xf32, #tpu.memory_space<vmem>>, %arg8: memref<32x128xf32, #tpu.memory_space<vmem>>, %arg9: memref<32x128xf32, #tpu.memory_space<vmem>>) attributes {dimension_semantics = [#tpu.dimension_semantics<parallel>, #tpu.dimension_semantics<parallel>, #tpu.dimension_semantics<arbitrary>], iteration_bounds = array<i64: 1, 1, 1>, scalar_prefetch = 0 : i64, scratch_operands = 1 : i64, tpu.core_type = #tpu.core_type<tc>, window_params = [{transform_indices = @transform_0, window_bounds = array<i64: 32, 128>}, {transform_indices = @transform_1, window_bounds = array<i64: 128, 128>}, {transform_indices = @transform_2, window_bounds = array<i64: 1, 128>}, {transform_indices = @transform_3, window_bounds = array<i64: 1, 128>}, {transform_indices = @transform_4, window_bounds = array<i64: 32, 128>}, {transform_indices = @transform_5, window_bounds = array<i64: 32, 128>}]} {
    %c0_i32 = arith.constant 0 : i32
    %0 = arith.cmpi eq, %arg2, %c0_i32 : i32
    %1 = arith.extui %0 : i1 to i32
    %c0_i32_0 = arith.constant 0 : i32
    %2 = arith.cmpi ne, %1, %c0_i32_0 : i32
    scf.if %2 {
      %cst_10 = arith.constant 0.000000e+00 : f32
      %12 = vector.broadcast %cst_10 : f32 to vector<32x128xf32>
      %c0_11 = arith.constant 0 : index
      %c0_12 = arith.constant 0 : index
      %13 = vector.load %arg9[%c0_11, %c0_12] : memref<32x128xf32, #tpu.memory_space<vmem>>, vector<32x128xf32>
      tpu.vector_store %arg9[%c0_11, %c0_12], %12 {strides = array<i32>} : memref<32x128xf32, #tpu.memory_space<vmem>>, vector<32x128xf32>,
    } else {
    }
    %c0 = arith.constant 0 : index
    %c0_1 = arith.constant 0 : index
    %3 = vector.load %arg9[%c0, %c0_1] : memref<32x128xf32, #tpu.memory_space<vmem>>, vector<32x128xf32>
    %c0_2 = arith.constant 0 : index
    %c0_3 = arith.constant 0 : index
    %4 = vector.load %arg3[%c0_2, %c0_3] : memref<32x128xbf16, #tpu.memory_space<vmem>>, vector<32x128xbf16>
    %c0_4 = arith.constant 0 : index
    %c0_5 = arith.constant 0 : index
    %5 = vector.load %arg4[%c0_4, %c0_5] : memref<128x128xbf16, #tpu.memory_space<vmem>>, vector<128x128xbf16>
    %cst = arith.constant dense<0.000000e+00> : vector<32x128xf32>
    %6 = tpu.matmul %4, %5, %cst {dimension_numbers = #tpu.dot_dimension_numbers<[1], [0], [0], [1], [0, 0, 1, 1], [], []>} : vector<32x128xbf16>, vector<128x128xbf16>, vector<32x128xf32> -> vector<32x128xf32>
    %7 = arith.addf %3, %6 : vector<32x128xf32>
    %c0_6 = arith.constant 0 : index
    %c0_7 = arith.constant 0 : index
    %8 = vector.load %arg9[%c0_6, %c0_7] : memref<32x128xf32, #tpu.memory_space<vmem>>, vector<32x128xf32>
    tpu.vector_store %arg9[%c0_6, %c0_7], %7 {strides = array<i32>} : memref<32x128xf32, #tpu.memory_space<vmem>>, vector<32x128xf32>,
    %c0_i32_8 = arith.constant 0 : i32
    %9 = arith.cmpi eq, %arg2, %c0_i32_8 : i32
    %10 = arith.extui %9 : i1 to i32
    %c0_i32_9 = arith.constant 0 : i32
    %11 = arith.cmpi ne, %10, %c0_i32_9 : i32
    scf.if %11 {
      %c0_10 = arith.constant 0 : index
      %c0_11 = arith.constant 0 : index
      %12 = vector.load %arg9[%c0_10, %c0_11] : memref<32x128xf32, #tpu.memory_space<vmem>>, vector<32x128xf32>
      %c0_12 = arith.constant 0 : index
      %c0_13 = arith.constant 0 : index
      %13 = vector.load %arg5[%c0_12, %c0_13] : memref<1x128xf32, #tpu.memory_space<vmem>>, vector<1x128xf32>
      %14 = vector.broadcast %13 : vector<1x128xf32> to vector<32x128xf32>
      %15 = arith.mulf %12, %14 : vector<32x128xf32>
      %c0_14 = arith.constant 0 : index
      %c0_15 = arith.constant 0 : index
      %16 = vector.load %arg6[%c0_14, %c0_15] : memref<1x128xf32, #tpu.memory_space<vmem>>, vector<1x128xf32>
      %17 = vector.broadcast %16 : vector<1x128xf32> to vector<32x128xf32>
      %18 = arith.addf %15, %17 : vector<32x128xf32>
      %c0_16 = arith.constant 0 : index
      %c0_17 = arith.constant 0 : index
      %19 = vector.load %arg7[%c0_16, %c0_17] : memref<32x128xf32, #tpu.memory_space<vmem>>, vector<32x128xf32>
      %cst_18 = arith.constant 1.000000e-01 : f32
      %20 = vector.broadcast %cst_18 : f32 to vector<32x128xf32>
      %21 = arith.mulf %20, %18 : vector<32x128xf32>
      %22 = arith.addf %19, %21 : vector<32x128xf32>
      %cst_19 = arith.constant 0.000000e+00 : f32
      %23 = vector.broadcast %cst_19 : f32 to vector<32x128xf32>
      %24 = arith.maximumf %22, %23 : vector<32x128xf32>
      %c0_20 = arith.constant 0 : index
      %c0_21 = arith.constant 0 : index
      %25 = vector.load %arg8[%c0_20, %c0_21] : memref<32x128xf32, #tpu.memory_space<vmem>>, vector<32x128xf32>
      tpu.vector_store %arg8[%c0_20, %c0_21], %24 {strides = array<i32>} : memref<32x128xf32, #tpu.memory_space<vmem>>, vector<32x128xf32>,
    } else {
    }
    return
  }
  func.func @transform_0(%arg0: i32, %arg1: i32, %arg2: i32) -> (i32, i32) {
    %c0_i32 = arith.constant 0 : i32
    return %arg0, %arg2 : i32, i32
  }
  func.func @transform_1(%arg0: i32, %arg1: i32, %arg2: i32) -> (i32, i32) {
    %c0_i32 = arith.constant 0 : i32
    return %arg2, %arg1 : i32, i32
  }
  func.func @transform_2(%arg0: i32, %arg1: i32, %arg2: i32) -> (i32, i32) {
    %c0_i32 = arith.constant 0 : i32
    %c0_i32_0 = arith.constant 0 : i32
    return %c0_i32, %arg1 : i32, i32
  }
  func.func @transform_3(%arg0: i32, %arg1: i32, %arg2: i32) -> (i32, i32) {
    %c0_i32 = arith.constant 0 : i32
    %c0_i32_0 = arith.constant 0 : i32
    return %c0_i32, %arg1 : i32, i32
  }
  func.func @transform_4(%arg0: i32, %arg1: i32, %arg2: i32) -> (i32, i32) {
    %c0_i32 = arith.constant 0 : i32
    return %arg0, %arg1 : i32, i32
  }
  func.func @transform_5(%arg0: i32, %arg1: i32, %arg2: i32) -> (i32, i32) {
    %c0_i32 = arith.constant 0 : i32
    return %arg0, %arg1 : i32, i32
  }
}

module attributes {stable_mosaic.version = 11 : i64} {
  func.func @_mm_kernel(%arg0: i32, %arg1: i32, %arg2: i32, %arg3: memref<16x384xbf16, #tpu.memory_space<vmem>>, %arg4: memref<384x128xbf16, #tpu.memory_space<vmem>>, %arg5: memref<1x128xf32, #tpu.memory_space<vmem>>, %arg6: memref<1x128xf32, #tpu.memory_space<vmem>>, %arg7: memref<16x128xf32, #tpu.memory_space<vmem>>, %arg8: memref<16x128xf32, #tpu.memory_space<vmem>>) attributes {dimension_semantics = [#tpu.dimension_semantics<parallel>, #tpu.dimension_semantics<parallel>, #tpu.dimension_semantics<arbitrary>], iteration_bounds = array<i64: 1, 1, 1>, scalar_prefetch = 0 : i64, scratch_operands = 1 : i64, tpu.core_type = #tpu.core_type<tc>, window_params = [{transform_indices = @transform_0, window_bounds = array<i64: 16, 384>}, {transform_indices = @transform_1, window_bounds = array<i64: 384, 128>}, {transform_indices = @transform_2, window_bounds = array<i64: 1, 128>}, {transform_indices = @transform_3, window_bounds = array<i64: 1, 128>}, {transform_indices = @transform_4, window_bounds = array<i64: 16, 128>}]} {
    %c0_i32 = arith.constant 0 : i32
    %0 = arith.cmpi eq, %arg2, %c0_i32 : i32
    %1 = arith.extui %0 : i1 to i32
    %c0_i32_0 = arith.constant 0 : i32
    %2 = arith.cmpi ne, %1, %c0_i32_0 : i32
    scf.if %2 {
      %cst_10 = arith.constant 0.000000e+00 : f32
      %12 = vector.broadcast %cst_10 : f32 to vector<16x128xf32>
      %c0_11 = arith.constant 0 : index
      %c0_12 = arith.constant 0 : index
      %13 = vector.load %arg8[%c0_11, %c0_12] : memref<16x128xf32, #tpu.memory_space<vmem>>, vector<16x128xf32>
      tpu.vector_store %arg8[%c0_11, %c0_12], %12 {strides = array<i32>} : memref<16x128xf32, #tpu.memory_space<vmem>>, vector<16x128xf32>,
    } else {
    }
    %c0 = arith.constant 0 : index
    %c0_1 = arith.constant 0 : index
    %3 = vector.load %arg8[%c0, %c0_1] : memref<16x128xf32, #tpu.memory_space<vmem>>, vector<16x128xf32>
    %c0_2 = arith.constant 0 : index
    %c0_3 = arith.constant 0 : index
    %4 = vector.load %arg3[%c0_2, %c0_3] : memref<16x384xbf16, #tpu.memory_space<vmem>>, vector<16x384xbf16>
    %c0_4 = arith.constant 0 : index
    %c0_5 = arith.constant 0 : index
    %5 = vector.load %arg4[%c0_4, %c0_5] : memref<384x128xbf16, #tpu.memory_space<vmem>>, vector<384x128xbf16>
    %cst = arith.constant dense<0.000000e+00> : vector<16x128xf32>
    %6 = tpu.matmul %4, %5, %cst {dimension_numbers = #tpu.dot_dimension_numbers<[1], [0], [0], [1], [0, 0, 1, 1], [], []>} : vector<16x384xbf16>, vector<384x128xbf16>, vector<16x128xf32> -> vector<16x128xf32>
    %7 = arith.addf %3, %6 : vector<16x128xf32>
    %c0_6 = arith.constant 0 : index
    %c0_7 = arith.constant 0 : index
    %8 = vector.load %arg8[%c0_6, %c0_7] : memref<16x128xf32, #tpu.memory_space<vmem>>, vector<16x128xf32>
    tpu.vector_store %arg8[%c0_6, %c0_7], %7 {strides = array<i32>} : memref<16x128xf32, #tpu.memory_space<vmem>>, vector<16x128xf32>,
    %c0_i32_8 = arith.constant 0 : i32
    %9 = arith.cmpi eq, %arg2, %c0_i32_8 : i32
    %10 = arith.extui %9 : i1 to i32
    %c0_i32_9 = arith.constant 0 : i32
    %11 = arith.cmpi ne, %10, %c0_i32_9 : i32
    scf.if %11 {
      %c0_10 = arith.constant 0 : index
      %c0_11 = arith.constant 0 : index
      %12 = vector.load %arg8[%c0_10, %c0_11] : memref<16x128xf32, #tpu.memory_space<vmem>>, vector<16x128xf32>
      %c0_12 = arith.constant 0 : index
      %c0_13 = arith.constant 0 : index
      %13 = vector.load %arg5[%c0_12, %c0_13] : memref<1x128xf32, #tpu.memory_space<vmem>>, vector<1x128xf32>
      %14 = vector.broadcast %13 : vector<1x128xf32> to vector<16x128xf32>
      %15 = arith.mulf %12, %14 : vector<16x128xf32>
      %c0_14 = arith.constant 0 : index
      %c0_15 = arith.constant 0 : index
      %16 = vector.load %arg6[%c0_14, %c0_15] : memref<1x128xf32, #tpu.memory_space<vmem>>, vector<1x128xf32>
      %17 = vector.broadcast %16 : vector<1x128xf32> to vector<16x128xf32>
      %18 = arith.addf %15, %17 : vector<16x128xf32>
      %cst_16 = arith.constant 0.000000e+00 : f32
      %19 = vector.broadcast %cst_16 : f32 to vector<16x128xf32>
      %20 = arith.maximumf %18, %19 : vector<16x128xf32>
      %c0_17 = arith.constant 0 : index
      %c0_18 = arith.constant 0 : index
      %21 = vector.load %arg7[%c0_17, %c0_18] : memref<16x128xf32, #tpu.memory_space<vmem>>, vector<16x128xf32>
      tpu.vector_store %arg7[%c0_17, %c0_18], %20 {strides = array<i32>} : memref<16x128xf32, #tpu.memory_space<vmem>>, vector<16x128xf32>,
    } else {
    }
    return
  }
  func.func @transform_0(%arg0: i32, %arg1: i32, %arg2: i32) -> (i32, i32) {
    %c0_i32 = arith.constant 0 : i32
    return %arg0, %arg2 : i32, i32
  }
  func.func @transform_1(%arg0: i32, %arg1: i32, %arg2: i32) -> (i32, i32) {
    %c0_i32 = arith.constant 0 : i32
    return %arg2, %arg1 : i32, i32
  }
  func.func @transform_2(%arg0: i32, %arg1: i32, %arg2: i32) -> (i32, i32) {
    %c0_i32 = arith.constant 0 : i32
    %c0_i32_0 = arith.constant 0 : i32
    return %c0_i32, %arg1 : i32, i32
  }
  func.func @transform_3(%arg0: i32, %arg1: i32, %arg2: i32) -> (i32, i32) {
    %c0_i32 = arith.constant 0 : i32
    %c0_i32_0 = arith.constant 0 : i32
    return %c0_i32, %arg1 : i32, i32
  }
  func.func @transform_4(%arg0: i32, %arg1: i32, %arg2: i32) -> (i32, i32) {
    %c0_i32 = arith.constant 0 : i32
    return %arg0, %arg1 : i32, i32
  }
}

module attributes {stable_mosaic.version = 11 : i64} {
  func.func @_mm_kernel(%arg0: i32, %arg1: i32, %arg2: i32, %arg3: memref<16x256xbf16, #tpu.memory_space<vmem>>, %arg4: memref<256x128xbf16, #tpu.memory_space<vmem>>, %arg5: memref<1x128xf32, #tpu.memory_space<vmem>>, %arg6: memref<1x128xf32, #tpu.memory_space<vmem>>, %arg7: memref<16x128xf32, #tpu.memory_space<vmem>>, %arg8: memref<16x128xf32, #tpu.memory_space<vmem>>) attributes {dimension_semantics = [#tpu.dimension_semantics<parallel>, #tpu.dimension_semantics<parallel>, #tpu.dimension_semantics<arbitrary>], iteration_bounds = array<i64: 1, 1, 1>, scalar_prefetch = 0 : i64, scratch_operands = 1 : i64, tpu.core_type = #tpu.core_type<tc>, window_params = [{transform_indices = @transform_0, window_bounds = array<i64: 16, 256>}, {transform_indices = @transform_1, window_bounds = array<i64: 256, 128>}, {transform_indices = @transform_2, window_bounds = array<i64: 1, 128>}, {transform_indices = @transform_3, window_bounds = array<i64: 1, 128>}, {transform_indices = @transform_4, window_bounds = array<i64: 16, 128>}]} {
    %c0_i32 = arith.constant 0 : i32
    %0 = arith.cmpi eq, %arg2, %c0_i32 : i32
    %1 = arith.extui %0 : i1 to i32
    %c0_i32_0 = arith.constant 0 : i32
    %2 = arith.cmpi ne, %1, %c0_i32_0 : i32
    scf.if %2 {
      %cst_10 = arith.constant 0.000000e+00 : f32
      %12 = vector.broadcast %cst_10 : f32 to vector<16x128xf32>
      %c0_11 = arith.constant 0 : index
      %c0_12 = arith.constant 0 : index
      %13 = vector.load %arg8[%c0_11, %c0_12] : memref<16x128xf32, #tpu.memory_space<vmem>>, vector<16x128xf32>
      tpu.vector_store %arg8[%c0_11, %c0_12], %12 {strides = array<i32>} : memref<16x128xf32, #tpu.memory_space<vmem>>, vector<16x128xf32>,
    } else {
    }
    %c0 = arith.constant 0 : index
    %c0_1 = arith.constant 0 : index
    %3 = vector.load %arg8[%c0, %c0_1] : memref<16x128xf32, #tpu.memory_space<vmem>>, vector<16x128xf32>
    %c0_2 = arith.constant 0 : index
    %c0_3 = arith.constant 0 : index
    %4 = vector.load %arg3[%c0_2, %c0_3] : memref<16x256xbf16, #tpu.memory_space<vmem>>, vector<16x256xbf16>
    %c0_4 = arith.constant 0 : index
    %c0_5 = arith.constant 0 : index
    %5 = vector.load %arg4[%c0_4, %c0_5] : memref<256x128xbf16, #tpu.memory_space<vmem>>, vector<256x128xbf16>
    %cst = arith.constant dense<0.000000e+00> : vector<16x128xf32>
    %6 = tpu.matmul %4, %5, %cst {dimension_numbers = #tpu.dot_dimension_numbers<[1], [0], [0], [1], [0, 0, 1, 1], [], []>} : vector<16x256xbf16>, vector<256x128xbf16>, vector<16x128xf32> -> vector<16x128xf32>
    %7 = arith.addf %3, %6 : vector<16x128xf32>
    %c0_6 = arith.constant 0 : index
    %c0_7 = arith.constant 0 : index
    %8 = vector.load %arg8[%c0_6, %c0_7] : memref<16x128xf32, #tpu.memory_space<vmem>>, vector<16x128xf32>
    tpu.vector_store %arg8[%c0_6, %c0_7], %7 {strides = array<i32>} : memref<16x128xf32, #tpu.memory_space<vmem>>, vector<16x128xf32>,
    %c0_i32_8 = arith.constant 0 : i32
    %9 = arith.cmpi eq, %arg2, %c0_i32_8 : i32
    %10 = arith.extui %9 : i1 to i32
    %c0_i32_9 = arith.constant 0 : i32
    %11 = arith.cmpi ne, %10, %c0_i32_9 : i32
    scf.if %11 {
      %c0_10 = arith.constant 0 : index
      %c0_11 = arith.constant 0 : index
      %12 = vector.load %arg8[%c0_10, %c0_11] : memref<16x128xf32, #tpu.memory_space<vmem>>, vector<16x128xf32>
      %c0_12 = arith.constant 0 : index
      %c0_13 = arith.constant 0 : index
      %13 = vector.load %arg5[%c0_12, %c0_13] : memref<1x128xf32, #tpu.memory_space<vmem>>, vector<1x128xf32>
      %14 = vector.broadcast %13 : vector<1x128xf32> to vector<16x128xf32>
      %15 = arith.mulf %12, %14 : vector<16x128xf32>
      %c0_14 = arith.constant 0 : index
      %c0_15 = arith.constant 0 : index
      %16 = vector.load %arg6[%c0_14, %c0_15] : memref<1x128xf32, #tpu.memory_space<vmem>>, vector<1x128xf32>
      %17 = vector.broadcast %16 : vector<1x128xf32> to vector<16x128xf32>
      %18 = arith.addf %15, %17 : vector<16x128xf32>
      %cst_16 = arith.constant 0.000000e+00 : f32
      %19 = vector.broadcast %cst_16 : f32 to vector<16x128xf32>
      %20 = arith.maximumf %18, %19 : vector<16x128xf32>
      %c0_17 = arith.constant 0 : index
      %c0_18 = arith.constant 0 : index
      %21 = vector.load %arg7[%c0_17, %c0_18] : memref<16x128xf32, #tpu.memory_space<vmem>>, vector<16x128xf32>
      tpu.vector_store %arg7[%c0_17, %c0_18], %20 {strides = array<i32>} : memref<16x128xf32, #tpu.memory_space<vmem>>, vector<16x128xf32>,
    } else {
    }
    return
  }
  func.func @transform_0(%arg0: i32, %arg1: i32, %arg2: i32) -> (i32, i32) {
    %c0_i32 = arith.constant 0 : i32
    return %arg0, %arg2 : i32, i32
  }
  func.func @transform_1(%arg0: i32, %arg1: i32, %arg2: i32) -> (i32, i32) {
    %c0_i32 = arith.constant 0 : i32
    return %arg2, %arg1 : i32, i32
  }
  func.func @transform_2(%arg0: i32, %arg1: i32, %arg2: i32) -> (i32, i32) {
    %c0_i32 = arith.constant 0 : i32
    %c0_i32_0 = arith.constant 0 : i32
    return %c0_i32, %arg1 : i32, i32
  }
  func.func @transform_3(%arg0: i32, %arg1: i32, %arg2: i32) -> (i32, i32) {
    %c0_i32 = arith.constant 0 : i32
    %c0_i32_0 = arith.constant 0 : i32
    return %c0_i32, %arg1 : i32, i32
  }
  func.func @transform_4(%arg0: i32, %arg1: i32, %arg2: i32) -> (i32, i32) {
    %c0_i32 = arith.constant 0 : i32
    return %arg0, %arg1 : i32, i32
  }
}

module attributes {stable_mosaic.version = 11 : i64} {
  func.func @_mm_kernel(%arg0: i32, %arg1: i32, %arg2: i32, %arg3: memref<16x128xbf16, #tpu.memory_space<vmem>>, %arg4: memref<128x128xbf16, #tpu.memory_space<vmem>>, %arg5: memref<1x128xf32, #tpu.memory_space<vmem>>, %arg6: memref<1x128xf32, #tpu.memory_space<vmem>>, %arg7: memref<16x128xf32, #tpu.memory_space<vmem>>, %arg8: memref<16x128xf32, #tpu.memory_space<vmem>>) attributes {dimension_semantics = [#tpu.dimension_semantics<parallel>, #tpu.dimension_semantics<parallel>, #tpu.dimension_semantics<arbitrary>], iteration_bounds = array<i64: 1, 1, 1>, scalar_prefetch = 0 : i64, scratch_operands = 1 : i64, tpu.core_type = #tpu.core_type<tc>, window_params = [{transform_indices = @transform_0, window_bounds = array<i64: 16, 128>}, {transform_indices = @transform_1, window_bounds = array<i64: 128, 128>}, {transform_indices = @transform_2, window_bounds = array<i64: 1, 128>}, {transform_indices = @transform_3, window_bounds = array<i64: 1, 128>}, {transform_indices = @transform_4, window_bounds = array<i64: 16, 128>}]} {
    %c0_i32 = arith.constant 0 : i32
    %0 = arith.cmpi eq, %arg2, %c0_i32 : i32
    %1 = arith.extui %0 : i1 to i32
    %c0_i32_0 = arith.constant 0 : i32
    %2 = arith.cmpi ne, %1, %c0_i32_0 : i32
    scf.if %2 {
      %cst_10 = arith.constant 0.000000e+00 : f32
      %12 = vector.broadcast %cst_10 : f32 to vector<16x128xf32>
      %c0_11 = arith.constant 0 : index
      %c0_12 = arith.constant 0 : index
      %13 = vector.load %arg8[%c0_11, %c0_12] : memref<16x128xf32, #tpu.memory_space<vmem>>, vector<16x128xf32>
      tpu.vector_store %arg8[%c0_11, %c0_12], %12 {strides = array<i32>} : memref<16x128xf32, #tpu.memory_space<vmem>>, vector<16x128xf32>,
    } else {
    }
    %c0 = arith.constant 0 : index
    %c0_1 = arith.constant 0 : index
    %3 = vector.load %arg8[%c0, %c0_1] : memref<16x128xf32, #tpu.memory_space<vmem>>, vector<16x128xf32>
    %c0_2 = arith.constant 0 : index
    %c0_3 = arith.constant 0 : index
    %4 = vector.load %arg3[%c0_2, %c0_3] : memref<16x128xbf16, #tpu.memory_space<vmem>>, vector<16x128xbf16>
    %c0_4 = arith.constant 0 : index
    %c0_5 = arith.constant 0 : index
    %5 = vector.load %arg4[%c0_4, %c0_5] : memref<128x128xbf16, #tpu.memory_space<vmem>>, vector<128x128xbf16>
    %cst = arith.constant dense<0.000000e+00> : vector<16x128xf32>
    %6 = tpu.matmul %4, %5, %cst {dimension_numbers = #tpu.dot_dimension_numbers<[1], [0], [0], [1], [0, 0, 1, 1], [], []>} : vector<16x128xbf16>, vector<128x128xbf16>, vector<16x128xf32> -> vector<16x128xf32>
    %7 = arith.addf %3, %6 : vector<16x128xf32>
    %c0_6 = arith.constant 0 : index
    %c0_7 = arith.constant 0 : index
    %8 = vector.load %arg8[%c0_6, %c0_7] : memref<16x128xf32, #tpu.memory_space<vmem>>, vector<16x128xf32>
    tpu.vector_store %arg8[%c0_6, %c0_7], %7 {strides = array<i32>} : memref<16x128xf32, #tpu.memory_space<vmem>>, vector<16x128xf32>,
    %c0_i32_8 = arith.constant 0 : i32
    %9 = arith.cmpi eq, %arg2, %c0_i32_8 : i32
    %10 = arith.extui %9 : i1 to i32
    %c0_i32_9 = arith.constant 0 : i32
    %11 = arith.cmpi ne, %10, %c0_i32_9 : i32
    scf.if %11 {
      %c0_10 = arith.constant 0 : index
      %c0_11 = arith.constant 0 : index
      %12 = vector.load %arg8[%c0_10, %c0_11] : memref<16x128xf32, #tpu.memory_space<vmem>>, vector<16x128xf32>
      %c0_12 = arith.constant 0 : index
      %c0_13 = arith.constant 0 : index
      %13 = vector.load %arg5[%c0_12, %c0_13] : memref<1x128xf32, #tpu.memory_space<vmem>>, vector<1x128xf32>
      %14 = vector.broadcast %13 : vector<1x128xf32> to vector<16x128xf32>
      %15 = arith.mulf %12, %14 : vector<16x128xf32>
      %c0_14 = arith.constant 0 : index
      %c0_15 = arith.constant 0 : index
      %16 = vector.load %arg6[%c0_14, %c0_15] : memref<1x128xf32, #tpu.memory_space<vmem>>, vector<1x128xf32>
      %17 = vector.broadcast %16 : vector<1x128xf32> to vector<16x128xf32>
      %18 = arith.addf %15, %17 : vector<16x128xf32>
      %cst_16 = arith.constant 0.000000e+00 : f32
      %19 = vector.broadcast %cst_16 : f32 to vector<16x128xf32>
      %20 = arith.maximumf %18, %19 : vector<16x128xf32>
      %c0_17 = arith.constant 0 : index
      %c0_18 = arith.constant 0 : index
      %21 = vector.load %arg7[%c0_17, %c0_18] : memref<16x128xf32, #tpu.memory_space<vmem>>, vector<16x128xf32>
      tpu.vector_store %arg7[%c0_17, %c0_18], %20 {strides = array<i32>} : memref<16x128xf32, #tpu.memory_space<vmem>>, vector<16x128xf32>,
    } else {
    }
    return
  }
  func.func @transform_0(%arg0: i32, %arg1: i32, %arg2: i32) -> (i32, i32) {
    %c0_i32 = arith.constant 0 : i32
    return %arg0, %arg2 : i32, i32
  }
  func.func @transform_1(%arg0: i32, %arg1: i32, %arg2: i32) -> (i32, i32) {
    %c0_i32 = arith.constant 0 : i32
    return %arg2, %arg1 : i32, i32
  }
  func.func @transform_2(%arg0: i32, %arg1: i32, %arg2: i32) -> (i32, i32) {
    %c0_i32 = arith.constant 0 : i32
    %c0_i32_0 = arith.constant 0 : i32
    return %c0_i32, %arg1 : i32, i32
  }
  func.func @transform_3(%arg0: i32, %arg1: i32, %arg2: i32) -> (i32, i32) {
    %c0_i32 = arith.constant 0 : i32
    %c0_i32_0 = arith.constant 0 : i32
    return %c0_i32, %arg1 : i32, i32
  }
  func.func @transform_4(%arg0: i32, %arg1: i32, %arg2: i32) -> (i32, i32) {
    %c0_i32 = arith.constant 0 : i32
    return %arg0, %arg1 : i32, i32
  }
}

module attributes {stable_mosaic.version = 11 : i64} {
  func.func @_mm_res_kernel(%arg0: i32, %arg1: i32, %arg2: i32, %arg3: memref<16x128xbf16, #tpu.memory_space<vmem>>, %arg4: memref<128x128xbf16, #tpu.memory_space<vmem>>, %arg5: memref<1x128xf32, #tpu.memory_space<vmem>>, %arg6: memref<1x128xf32, #tpu.memory_space<vmem>>, %arg7: memref<16x128xf32, #tpu.memory_space<vmem>>, %arg8: memref<16x128xf32, #tpu.memory_space<vmem>>, %arg9: memref<16x128xf32, #tpu.memory_space<vmem>>) attributes {dimension_semantics = [#tpu.dimension_semantics<parallel>, #tpu.dimension_semantics<parallel>, #tpu.dimension_semantics<arbitrary>], iteration_bounds = array<i64: 1, 2, 1>, scalar_prefetch = 0 : i64, scratch_operands = 1 : i64, tpu.core_type = #tpu.core_type<tc>, window_params = [{transform_indices = @transform_0, window_bounds = array<i64: 16, 128>}, {transform_indices = @transform_1, window_bounds = array<i64: 128, 128>}, {transform_indices = @transform_2, window_bounds = array<i64: 1, 128>}, {transform_indices = @transform_3, window_bounds = array<i64: 1, 128>}, {transform_indices = @transform_4, window_bounds = array<i64: 16, 128>}, {transform_indices = @transform_5, window_bounds = array<i64: 16, 128>}]} {
    %c0_i32 = arith.constant 0 : i32
    %0 = arith.cmpi eq, %arg2, %c0_i32 : i32
    %1 = arith.extui %0 : i1 to i32
    %c0_i32_0 = arith.constant 0 : i32
    %2 = arith.cmpi ne, %1, %c0_i32_0 : i32
    scf.if %2 {
      %cst_10 = arith.constant 0.000000e+00 : f32
      %12 = vector.broadcast %cst_10 : f32 to vector<16x128xf32>
      %c0_11 = arith.constant 0 : index
      %c0_12 = arith.constant 0 : index
      %13 = vector.load %arg9[%c0_11, %c0_12] : memref<16x128xf32, #tpu.memory_space<vmem>>, vector<16x128xf32>
      tpu.vector_store %arg9[%c0_11, %c0_12], %12 {strides = array<i32>} : memref<16x128xf32, #tpu.memory_space<vmem>>, vector<16x128xf32>,
    } else {
    }
    %c0 = arith.constant 0 : index
    %c0_1 = arith.constant 0 : index
    %3 = vector.load %arg9[%c0, %c0_1] : memref<16x128xf32, #tpu.memory_space<vmem>>, vector<16x128xf32>
    %c0_2 = arith.constant 0 : index
    %c0_3 = arith.constant 0 : index
    %4 = vector.load %arg3[%c0_2, %c0_3] : memref<16x128xbf16, #tpu.memory_space<vmem>>, vector<16x128xbf16>
    %c0_4 = arith.constant 0 : index
    %c0_5 = arith.constant 0 : index
    %5 = vector.load %arg4[%c0_4, %c0_5] : memref<128x128xbf16, #tpu.memory_space<vmem>>, vector<128x128xbf16>
    %cst = arith.constant dense<0.000000e+00> : vector<16x128xf32>
    %6 = tpu.matmul %4, %5, %cst {dimension_numbers = #tpu.dot_dimension_numbers<[1], [0], [0], [1], [0, 0, 1, 1], [], []>} : vector<16x128xbf16>, vector<128x128xbf16>, vector<16x128xf32> -> vector<16x128xf32>
    %7 = arith.addf %3, %6 : vector<16x128xf32>
    %c0_6 = arith.constant 0 : index
    %c0_7 = arith.constant 0 : index
    %8 = vector.load %arg9[%c0_6, %c0_7] : memref<16x128xf32, #tpu.memory_space<vmem>>, vector<16x128xf32>
    tpu.vector_store %arg9[%c0_6, %c0_7], %7 {strides = array<i32>} : memref<16x128xf32, #tpu.memory_space<vmem>>, vector<16x128xf32>,
    %c0_i32_8 = arith.constant 0 : i32
    %9 = arith.cmpi eq, %arg2, %c0_i32_8 : i32
    %10 = arith.extui %9 : i1 to i32
    %c0_i32_9 = arith.constant 0 : i32
    %11 = arith.cmpi ne, %10, %c0_i32_9 : i32
    scf.if %11 {
      %c0_10 = arith.constant 0 : index
      %c0_11 = arith.constant 0 : index
      %12 = vector.load %arg9[%c0_10, %c0_11] : memref<16x128xf32, #tpu.memory_space<vmem>>, vector<16x128xf32>
      %c0_12 = arith.constant 0 : index
      %c0_13 = arith.constant 0 : index
      %13 = vector.load %arg5[%c0_12, %c0_13] : memref<1x128xf32, #tpu.memory_space<vmem>>, vector<1x128xf32>
      %14 = vector.broadcast %13 : vector<1x128xf32> to vector<16x128xf32>
      %15 = arith.mulf %12, %14 : vector<16x128xf32>
      %c0_14 = arith.constant 0 : index
      %c0_15 = arith.constant 0 : index
      %16 = vector.load %arg6[%c0_14, %c0_15] : memref<1x128xf32, #tpu.memory_space<vmem>>, vector<1x128xf32>
      %17 = vector.broadcast %16 : vector<1x128xf32> to vector<16x128xf32>
      %18 = arith.addf %15, %17 : vector<16x128xf32>
      %c0_16 = arith.constant 0 : index
      %c0_17 = arith.constant 0 : index
      %19 = vector.load %arg7[%c0_16, %c0_17] : memref<16x128xf32, #tpu.memory_space<vmem>>, vector<16x128xf32>
      %cst_18 = arith.constant 2.000000e-01 : f32
      %20 = vector.broadcast %cst_18 : f32 to vector<16x128xf32>
      %21 = arith.mulf %20, %18 : vector<16x128xf32>
      %22 = arith.addf %19, %21 : vector<16x128xf32>
      %c0_19 = arith.constant 0 : index
      %c0_20 = arith.constant 0 : index
      %23 = vector.load %arg8[%c0_19, %c0_20] : memref<16x128xf32, #tpu.memory_space<vmem>>, vector<16x128xf32>
      tpu.vector_store %arg8[%c0_19, %c0_20], %22 {strides = array<i32>} : memref<16x128xf32, #tpu.memory_space<vmem>>, vector<16x128xf32>,
    } else {
    }
    return
  }
  func.func @transform_0(%arg0: i32, %arg1: i32, %arg2: i32) -> (i32, i32) {
    %c0_i32 = arith.constant 0 : i32
    return %arg0, %arg2 : i32, i32
  }
  func.func @transform_1(%arg0: i32, %arg1: i32, %arg2: i32) -> (i32, i32) {
    %c0_i32 = arith.constant 0 : i32
    return %arg2, %arg1 : i32, i32
  }
  func.func @transform_2(%arg0: i32, %arg1: i32, %arg2: i32) -> (i32, i32) {
    %c0_i32 = arith.constant 0 : i32
    %c0_i32_0 = arith.constant 0 : i32
    return %c0_i32, %arg1 : i32, i32
  }
  func.func @transform_3(%arg0: i32, %arg1: i32, %arg2: i32) -> (i32, i32) {
    %c0_i32 = arith.constant 0 : i32
    %c0_i32_0 = arith.constant 0 : i32
    return %c0_i32, %arg1 : i32, i32
  }
  func.func @transform_4(%arg0: i32, %arg1: i32, %arg2: i32) -> (i32, i32) {
    %c0_i32 = arith.constant 0 : i32
    return %arg0, %arg1 : i32, i32
  }
  func.func @transform_5(%arg0: i32, %arg1: i32, %arg2: i32) -> (i32, i32) {
    %c0_i32 = arith.constant 0 : i32
    return %arg0, %arg1 : i32, i32
  }
}

module attributes {stable_mosaic.version = 11 : i64} {
  func.func @_mm_res_kernel(%arg0: i32, %arg1: i32, %arg2: i32, %arg3: memref<16x128xbf16, #tpu.memory_space<vmem>>, %arg4: memref<128x128xbf16, #tpu.memory_space<vmem>>, %arg5: memref<1x128xf32, #tpu.memory_space<vmem>>, %arg6: memref<1x128xf32, #tpu.memory_space<vmem>>, %arg7: memref<16x128xf32, #tpu.memory_space<vmem>>, %arg8: memref<16x128xf32, #tpu.memory_space<vmem>>, %arg9: memref<16x128xf32, #tpu.memory_space<vmem>>) attributes {dimension_semantics = [#tpu.dimension_semantics<parallel>, #tpu.dimension_semantics<parallel>, #tpu.dimension_semantics<arbitrary>], iteration_bounds = array<i64: 1, 2, 1>, scalar_prefetch = 0 : i64, scratch_operands = 1 : i64, tpu.core_type = #tpu.core_type<tc>, window_params = [{transform_indices = @transform_0, window_bounds = array<i64: 16, 128>}, {transform_indices = @transform_1, window_bounds = array<i64: 128, 128>}, {transform_indices = @transform_2, window_bounds = array<i64: 1, 128>}, {transform_indices = @transform_3, window_bounds = array<i64: 1, 128>}, {transform_indices = @transform_4, window_bounds = array<i64: 16, 128>}, {transform_indices = @transform_5, window_bounds = array<i64: 16, 128>}]} {
    %c0_i32 = arith.constant 0 : i32
    %0 = arith.cmpi eq, %arg2, %c0_i32 : i32
    %1 = arith.extui %0 : i1 to i32
    %c0_i32_0 = arith.constant 0 : i32
    %2 = arith.cmpi ne, %1, %c0_i32_0 : i32
    scf.if %2 {
      %cst_10 = arith.constant 0.000000e+00 : f32
      %12 = vector.broadcast %cst_10 : f32 to vector<16x128xf32>
      %c0_11 = arith.constant 0 : index
      %c0_12 = arith.constant 0 : index
      %13 = vector.load %arg9[%c0_11, %c0_12] : memref<16x128xf32, #tpu.memory_space<vmem>>, vector<16x128xf32>
      tpu.vector_store %arg9[%c0_11, %c0_12], %12 {strides = array<i32>} : memref<16x128xf32, #tpu.memory_space<vmem>>, vector<16x128xf32>,
    } else {
    }
    %c0 = arith.constant 0 : index
    %c0_1 = arith.constant 0 : index
    %3 = vector.load %arg9[%c0, %c0_1] : memref<16x128xf32, #tpu.memory_space<vmem>>, vector<16x128xf32>
    %c0_2 = arith.constant 0 : index
    %c0_3 = arith.constant 0 : index
    %4 = vector.load %arg3[%c0_2, %c0_3] : memref<16x128xbf16, #tpu.memory_space<vmem>>, vector<16x128xbf16>
    %c0_4 = arith.constant 0 : index
    %c0_5 = arith.constant 0 : index
    %5 = vector.load %arg4[%c0_4, %c0_5] : memref<128x128xbf16, #tpu.memory_space<vmem>>, vector<128x128xbf16>
    %cst = arith.constant dense<0.000000e+00> : vector<16x128xf32>
    %6 = tpu.matmul %4, %5, %cst {dimension_numbers = #tpu.dot_dimension_numbers<[1], [0], [0], [1], [0, 0, 1, 1], [], []>} : vector<16x128xbf16>, vector<128x128xbf16>, vector<16x128xf32> -> vector<16x128xf32>
    %7 = arith.addf %3, %6 : vector<16x128xf32>
    %c0_6 = arith.constant 0 : index
    %c0_7 = arith.constant 0 : index
    %8 = vector.load %arg9[%c0_6, %c0_7] : memref<16x128xf32, #tpu.memory_space<vmem>>, vector<16x128xf32>
    tpu.vector_store %arg9[%c0_6, %c0_7], %7 {strides = array<i32>} : memref<16x128xf32, #tpu.memory_space<vmem>>, vector<16x128xf32>,
    %c0_i32_8 = arith.constant 0 : i32
    %9 = arith.cmpi eq, %arg2, %c0_i32_8 : i32
    %10 = arith.extui %9 : i1 to i32
    %c0_i32_9 = arith.constant 0 : i32
    %11 = arith.cmpi ne, %10, %c0_i32_9 : i32
    scf.if %11 {
      %c0_10 = arith.constant 0 : index
      %c0_11 = arith.constant 0 : index
      %12 = vector.load %arg9[%c0_10, %c0_11] : memref<16x128xf32, #tpu.memory_space<vmem>>, vector<16x128xf32>
      %c0_12 = arith.constant 0 : index
      %c0_13 = arith.constant 0 : index
      %13 = vector.load %arg5[%c0_12, %c0_13] : memref<1x128xf32, #tpu.memory_space<vmem>>, vector<1x128xf32>
      %14 = vector.broadcast %13 : vector<1x128xf32> to vector<16x128xf32>
      %15 = arith.mulf %12, %14 : vector<16x128xf32>
      %c0_14 = arith.constant 0 : index
      %c0_15 = arith.constant 0 : index
      %16 = vector.load %arg6[%c0_14, %c0_15] : memref<1x128xf32, #tpu.memory_space<vmem>>, vector<1x128xf32>
      %17 = vector.broadcast %16 : vector<1x128xf32> to vector<16x128xf32>
      %18 = arith.addf %15, %17 : vector<16x128xf32>
      %c0_16 = arith.constant 0 : index
      %c0_17 = arith.constant 0 : index
      %19 = vector.load %arg7[%c0_16, %c0_17] : memref<16x128xf32, #tpu.memory_space<vmem>>, vector<16x128xf32>
      %cst_18 = arith.constant 2.000000e-01 : f32
      %20 = vector.broadcast %cst_18 : f32 to vector<16x128xf32>
      %21 = arith.mulf %20, %18 : vector<16x128xf32>
      %22 = arith.addf %19, %21 : vector<16x128xf32>
      %cst_19 = arith.constant 0.000000e+00 : f32
      %23 = vector.broadcast %cst_19 : f32 to vector<16x128xf32>
      %24 = arith.maximumf %22, %23 : vector<16x128xf32>
      %c0_20 = arith.constant 0 : index
      %c0_21 = arith.constant 0 : index
      %25 = vector.load %arg8[%c0_20, %c0_21] : memref<16x128xf32, #tpu.memory_space<vmem>>, vector<16x128xf32>
      tpu.vector_store %arg8[%c0_20, %c0_21], %24 {strides = array<i32>} : memref<16x128xf32, #tpu.memory_space<vmem>>, vector<16x128xf32>,
    } else {
    }
    return
  }
  func.func @transform_0(%arg0: i32, %arg1: i32, %arg2: i32) -> (i32, i32) {
    %c0_i32 = arith.constant 0 : i32
    return %arg0, %arg2 : i32, i32
  }
  func.func @transform_1(%arg0: i32, %arg1: i32, %arg2: i32) -> (i32, i32) {
    %c0_i32 = arith.constant 0 : i32
    return %arg2, %arg1 : i32, i32
  }
  func.func @transform_2(%arg0: i32, %arg1: i32, %arg2: i32) -> (i32, i32) {
    %c0_i32 = arith.constant 0 : i32
    %c0_i32_0 = arith.constant 0 : i32
    return %c0_i32, %arg1 : i32, i32
  }
  func.func @transform_3(%arg0: i32, %arg1: i32, %arg2: i32) -> (i32, i32) {
    %c0_i32 = arith.constant 0 : i32
    %c0_i32_0 = arith.constant 0 : i32
    return %c0_i32, %arg1 : i32, i32
  }
  func.func @transform_4(%arg0: i32, %arg1: i32, %arg2: i32) -> (i32, i32) {
    %c0_i32 = arith.constant 0 : i32
    return %arg0, %arg1 : i32, i32
  }
  func.func @transform_5(%arg0: i32, %arg1: i32, %arg2: i32) -> (i32, i32) {
    %c0_i32 = arith.constant 0 : i32
    return %arg0, %arg1 : i32, i32
  }
}

module attributes {stable_mosaic.version = 11 : i64} {
  func.func @_head_kernel(%arg0: i32, %arg1: memref<2x1x224xf32, #tpu.memory_space<vmem>>, %arg2: memref<224x64xf32, #tpu.memory_space<vmem>>, %arg3: memref<1x64xf32, #tpu.memory_space<vmem>>, %arg4: memref<1x64xf32, #tpu.memory_space<vmem>>, %arg5: memref<2x64xf32, #tpu.memory_space<vmem>>) attributes {dimension_semantics = [#tpu.dimension_semantics<arbitrary>], iteration_bounds = array<i64: 1>, scalar_prefetch = 0 : i64, scratch_operands = 0 : i64, tpu.core_type = #tpu.core_type<tc>, window_params = [{pipeline_mode = #tpu.pipeline_mode<synchronous>, transform_indices = @transform_0, window_bounds = array<i64: 2, 1, 224>}, {pipeline_mode = #tpu.pipeline_mode<synchronous>, transform_indices = @transform_1, window_bounds = array<i64: 224, 64>}, {pipeline_mode = #tpu.pipeline_mode<synchronous>, transform_indices = @transform_2, window_bounds = array<i64: 1, 64>}, {pipeline_mode = #tpu.pipeline_mode<synchronous>, transform_indices = @transform_3, window_bounds = array<i64: 1, 64>}, {pipeline_mode = #tpu.pipeline_mode<synchronous>, transform_indices = @transform_4, window_bounds = array<i64: 2, 64>}]} {
    %c0 = arith.constant 0 : index
    %c0_0 = arith.constant 0 : index
    %c0_1 = arith.constant 0 : index
    %0 = vector.load %arg1[%c0, %c0_0, %c0_1] : memref<2x1x224xf32, #tpu.memory_space<vmem>>, vector<2x1x224xf32>
    %cst = arith.constant dense<0.000000e+00> : vector<2x224xf32>
    %1 = vector.multi_reduction <add>, %0, %cst [1] : vector<2x1x224xf32> to vector<2x224xf32>
    %cst_2 = arith.constant 1.000000e+00 : f32
    %2 = vector.broadcast %cst_2 : f32 to vector<2x224xf32>
    %3 = arith.mulf %1, %2 : vector<2x224xf32>
    %c0_3 = arith.constant 0 : index
    %c0_4 = arith.constant 0 : index
    %4 = vector.load %arg2[%c0_3, %c0_4] : memref<224x64xf32, #tpu.memory_space<vmem>>, vector<224x64xf32>
    %cst_5 = arith.constant dense<0.000000e+00> : vector<2x64xf32>
    %5 = tpu.matmul %3, %4, %cst_5 {dimension_numbers = #tpu.dot_dimension_numbers<[1], [0], [0], [1], [0, 0, 1, 1], [], []>} : vector<2x224xf32>, vector<224x64xf32>, vector<2x64xf32> -> vector<2x64xf32>
    %c0_6 = arith.constant 0 : index
    %c0_7 = arith.constant 0 : index
    %6 = vector.load %arg3[%c0_6, %c0_7] : memref<1x64xf32, #tpu.memory_space<vmem>>, vector<1x64xf32>
    %7 = vector.broadcast %6 : vector<1x64xf32> to vector<2x64xf32>
    %8 = arith.mulf %5, %7 : vector<2x64xf32>
    %c0_8 = arith.constant 0 : index
    %c0_9 = arith.constant 0 : index
    %9 = vector.load %arg4[%c0_8, %c0_9] : memref<1x64xf32, #tpu.memory_space<vmem>>, vector<1x64xf32>
    %10 = vector.broadcast %9 : vector<1x64xf32> to vector<2x64xf32>
    %11 = arith.addf %8, %10 : vector<2x64xf32>
    %12 = arith.mulf %11, %11 : vector<2x64xf32>
    %cst_10 = arith.constant dense<0.000000e+00> : vector<2xf32>
    %13 = vector.multi_reduction <add>, %12, %cst_10 [1] : vector<2x64xf32> to vector<2xf32>
    %14 = vector.shape_cast %13 : vector<2xf32> to vector<2x1xf32>
    %15 = math.sqrt %14 : vector<2x1xf32>
    %cst_11 = arith.constant 9.99999996E-13 : f32
    %16 = vector.broadcast %cst_11 : f32 to vector<2x1xf32>
    %17 = arith.maximumf %15, %16 : vector<2x1xf32>
    %18 = vector.broadcast %17 : vector<2x1xf32> to vector<2x64xf32>
    %19 = arith.divf %11, %18 : vector<2x64xf32>
    %c0_12 = arith.constant 0 : index
    %c0_13 = arith.constant 0 : index
    %20 = vector.load %arg5[%c0_12, %c0_13] : memref<2x64xf32, #tpu.memory_space<vmem>>, vector<2x64xf32>
    tpu.vector_store %arg5[%c0_12, %c0_13], %19 {strides = array<i32>} : memref<2x64xf32, #tpu.memory_space<vmem>>, vector<2x64xf32>,
    return
  }
  func.func @transform_0(%arg0: i32) -> (i32, i32, i32) {
    %c0_i32 = arith.constant 0 : i32
    %c0_i32_0 = arith.constant 0 : i32
    %c0_i32_1 = arith.constant 0 : i32
    %c0_i32_2 = arith.constant 0 : i32
    return %c0_i32, %c0_i32_0, %c0_i32_1 : i32, i32, i32
  }
  func.func @transform_1(%arg0: i32) -> (i32, i32) {
    %c0_i32 = arith.constant 0 : i32
    %c0_i32_0 = arith.constant 0 : i32
    %c0_i32_1 = arith.constant 0 : i32
    return %c0_i32, %c0_i32_0 : i32, i32
  }
  func.func @transform_2(%arg0: i32) -> (i32, i32) {
    %c0_i32 = arith.constant 0 : i32
    %c0_i32_0 = arith.constant 0 : i32
    %c0_i32_1 = arith.constant 0 : i32
    return %c0_i32, %c0_i32_0 : i32, i32
  }
  func.func @transform_3(%arg0: i32) -> (i32, i32) {
    %c0_i32 = arith.constant 0 : i32
    %c0_i32_0 = arith.constant 0 : i32
    %c0_i32_1 = arith.constant 0 : i32
    return %c0_i32, %c0_i32_0 : i32, i32
  }
  func.func @transform_4(%arg0: i32) -> (i32, i32) {
    %c0_i32 = arith.constant 0 : i32
    %c0_i32_0 = arith.constant 0 : i32
    %c0_i32_1 = arith.constant 0 : i32
    return %c0_i32, %c0_i32_0 : i32, i32
  }
}

</mosaic_0001>

<llo_original>
// kernel: forward.42
$region0: #{forward.42}
  #allocation0 [shape = 'u32[]', space=smem, size = 0x4, offset = 0x4, fixed_abs, tag = 'smem constant byte address 0x4 - core index']
  #allocation1 [shape = 'u32[144,128]{1,0:T(1,128)}', space=vmem, size = 0x12000, scoped, tag = 'internal scratch']
  #allocation2 [shape = 'f32[256,128]{1,0:T(8,128)}', space=vmem, size = 0x20000, scoped, tag = 'scratch operand']
  %s0 = inlined_call_operand.vmem [shape: bf16[3072,128], index: 0, kind: input, shape index: {}]
  %s1 = inlined_call_operand.vmem [shape: bf16[128,128], index: 1, kind: input, shape index: {}]
  %s2 = inlined_call_operand.vmem [shape: f32[1,128], index: 2, kind: input, shape index: {}]
  %s3 = inlined_call_operand.vmem [shape: f32[1,128], index: 3, kind: input, shape index: {}]
  %s4 = inlined_call_operand.vmem [shape: f32[3072,128], index: 4, kind: output, shape index: {}]
  %s5 = sld [smem:[#allocation0]]
  $region57: #{forward.42} parent=0
    _
  %s7 = ssub.s32 1, %s5
  %s8 = scalar_select 0, %s7, %s5
  loop: start=0, step=1, limit=14
  $region2: #{forward.42} parent=0 // loop_pre_header
    _
  $region3: #{forward.42} parent=0 // loop_header
    %s10 = sphi 0, %s14
    %p11 = scmp.ge.s32.totalorder %s10, 14
    %s17 = sphi 0, %s36
    %s18 = sphi 0, %s32
    %s19 = sphi 0, %s28
    %s20 = sphi 0, %s17
    %s21 = sphi 0, %s18
    %s22 = sphi 0, %s19
    %s23 = sphi 0, %s20
    %s24 = sphi 0, %s21
    %s25 = sphi 0, %s22
    %s41 = sphi 0, %s43
    %s44 = sphi 0, %s41
    %s45 = sphi 0, %s44
    %s61 = sphi 0, %s45
    %s69 = sphi 0, %s71
    %s72 = sphi 0, %s69
    %s73 = sphi 0, %s72
    %s89 = sphi 0, %s73
    %s95 = sphi 0, %s97
    %s98 = sphi 0, %s95
    %s99 = sphi 0, %s98
    %s115 = sphi 0, %s99
    %s121 = sphi 0, %s123
    %s124 = sphi 0, %s121
    %s125 = sphi 0, %s124
    %s141 = sphi 0, %s125
    %s149 = sphi 0, %s151
    %s152 = sphi 0, %s149
    %s153 = sphi 0, %s152
    %s169 = sphi 0, %s153
  $region4: #{forward.42} parent=0 // loop_header_branch
    %13 = sbr.rel (%p11) target = $region8
  $region5: #{forward.42} parent=0 // loop_body
    %s15 = ssub.s32 %s10, 1
    %s16 = ssub.s32 %s10, 2
    %s26 = sadd.s32 1, %s19
    %p27 = scmp.ge.s32.totalorder %s26, 1
    %s28 = scalar_select %p27, 0, %s26
    %s29 = sadd.s32 1, %s18
    %s30 = scalar_select %p27, %s29, %s18
    %p31 = scmp.ge.s32.totalorder %s30, 1
    %s32 = scalar_select %p31, 0, %s30
    %s33 = sadd.s32 1, %s17
    %s34 = scalar_select %p31, %s33, %s17
    %p35 = scmp.ge.s32.totalorder %s34, 12
    %s36 = scalar_select %p35, 0, %s34
    %s37 = ssub.s32 %s17, %s36
    %s38 = ssub.s32 %s19, %s28
    %s39 = sor.u32 %s37, %s38
    %p40 = scmp.eq.s32.totalorder %s39, 0
    %s42 = sadd.s32 %s41, 1
    %s43 = scalar_select %p40, %s41, %s42
    %p46 = pneg %p40
    %p47 = scmp.eq.s32.totalorder %s10, 11
    %p48 = por %p46, %p47
    %p49 = scmp.ne.s32.totalorder %s41, %s44
    %p50 = scmp.eq.s32.totalorder %s10, 0
    %p51 = por %p49, %p50
    %p52 = scmp.ne.s32.totalorder %s41, %s44
    %p53 = scmp.eq.s32.totalorder %s15, 11
    %p54 = por %p52, %p53
    %p55 = scmp.ne.s32.totalorder %s44, %s45
    %p56 = scmp.eq.s32.totalorder %s15, 0
    %p57 = por %p55, %p56
    %p58 = scmp.ne.s32.totalorder %s44, %s45
    %p59 = scmp.eq.s32.totalorder %s16, 11
    %p60 = por %p58, %p59
    %p62 = scmp.ne.s32.totalorder %s45, %s61
    %p63 = scmp.eq.s32.totalorder %s16, 0
    %p64 = por %p62, %p63
    %s65 = ssub.s32 %s19, %s28
    %s66 = ssub.s32 %s18, %s32
    %s67 = sor.u32 %s65, %s66
    %p68 = scmp.eq.s32.totalorder %s67, 0
    %s70 = sadd.s32 %s69, 1
    %s71 = scalar_select %p68, %s69, %s70
    %p74 = pneg %p68
    %p75 = scmp.eq.s32.totalorder %s10, 11
    %p76 = por %p74, %p75
    %p77 = scmp.ne.s32.totalorder %s69, %s72
    %p78 = scmp.eq.s32.totalorder %s10, 0
    %p79 = por %p77, %p78
    %p80 = scmp.ne.s32.totalorder %s69, %s72
    %p81 = scmp.eq.s32.totalorder %s15, 11
    %p82 = por %p80, %p81
    %p83 = scmp.ne.s32.totalorder %s72, %s73
    %p84 = scmp.eq.s32.totalorder %s15, 0
    %p85 = por %p83, %p84
    %p86 = scmp.ne.s32.totalorder %s72, %s73
    %p87 = scmp.eq.s32.totalorder %s16, 11
    %p88 = por %p86, %p87
    %p90 = scmp.ne.s32.totalorder %s73, %s89
    %p91 = scmp.eq.s32.totalorder %s16, 0
    %p92 = por %p90, %p91
    %s93 = ssub.s32 %s18, %s32
    %p94 = scmp.eq.s32.totalorder %s93, 0
    %s96 = sadd.s32 %s95, 1
    %s97 = scalar_select %p94, %s95, %s96
    %p100 = pneg %p94
    %p101 = scmp.eq.s32.totalorder %s10, 11
    %p102 = por %p100, %p101
    %p103 = scmp.ne.s32.totalorder %s95, %s98
    %p104 = scmp.eq.s32.totalorder %s10, 0
    %p105 = por %p103, %p104
    %p106 = scmp.ne.s32.totalorder %s95, %s98
    %p107 = scmp.eq.s32.totalorder %s15, 11
    %p108 = por %p106, %p107
    %p109 = scmp.ne.s32.totalorder %s98, %s99
    %p110 = scmp.eq.s32.totalorder %s15, 0
    %p111 = por %p109, %p110
    %p112 = scmp.ne.s32.totalorder %s98, %s99
    %p113 = scmp.eq.s32.totalorder %s16, 11
    %p114 = por %p112, %p113
    %p116 = scmp.ne.s32.totalorder %s99, %s115
    %p117 = scmp.eq.s32.totalorder %s16, 0
    %p118 = por %p116, %p117
    %s119 = ssub.s32 %s18, %s32
    %p120 = scmp.eq.s32.totalorder %s119, 0
    %s122 = sadd.s32 %s121, 1
    %s123 = scalar_select %p120, %s121, %s122
    %p126 = pneg %p120
    %p127 = scmp.eq.s32.totalorder %s10, 11
    %p128 = por %p126, %p127
    %p129 = scmp.ne.s32.totalorder %s121, %s124
    %p130 = scmp.eq.s32.totalorder %s10, 0
    %p131 = por %p129, %p130
    %p132 = scmp.ne.s32.totalorder %s121, %s124
    %p133 = scmp.eq.s32.totalorder %s15, 11
    %p134 = por %p132, %p133
    %p135 = scmp.ne.s32.totalorder %s124, %s125
    %p136 = scmp.eq.s32.totalorder %s15, 0
    %p137 = por %p135, %p136
    %p138 = scmp.ne.s32.totalorder %s124, %s125
    %p139 = scmp.eq.s32.totalorder %s16, 11
    %p140 = por %p138, %p139
    %p142 = scmp.ne.s32.totalorder %s125, %s141
    %p143 = scmp.eq.s32.totalorder %s16, 0
    %p144 = por %p142, %p143
    %s145 = ssub.s32 %s17, %s36
    %s146 = ssub.s32 %s18, %s32
    %s147 = sor.u32 %s145, %s146
    %p148 = scmp.eq.s32.totalorder %s147, 0
    %s150 = sadd.s32 %s149, 1
    %s151 = scalar_select %p148, %s149, %s150
    %p154 = pneg %p148
    %p155 = scmp.eq.s32.totalorder %s10, 11
    %p156 = por %p154, %p155
    %p157 = scmp.ne.s32.totalorder %s149, %s152
    %p158 = scmp.eq.s32.totalorder %s10, 0
    %p159 = por %p157, %p158
    %p160 = scmp.ne.s32.totalorder %s149, %s152
    %p161 = scmp.eq.s32.totalorder %s15, 11
    %p162 = por %p160, %p161
    %p163 = scmp.ne.s32.totalorder %s152, %s153
    %p164 = scmp.eq.s32.totalorder %s15, 0
    %p165 = por %p163, %p164
    %p166 = scmp.ne.s32.totalorder %s152, %s153
    %p167 = scmp.eq.s32.totalorder %s16, 11
    %p168 = por %p166, %p167
    %p170 = scmp.ne.s32.totalorder %s153, %s169
    %p171 = scmp.eq.s32.totalorder %s16, 0
    %p172 = por %p170, %p171
    %p173 = scmp.le.s32.totalorder 1, %s10
    %p174 = scmp.lt.s32.totalorder %s10, 13
    %p175 = pnand %p173, %p174
    %p176 = pneg %p175
    // Predicated region
    $region9: #{forward.42} parent=5 // pred_check
      _
    $region10: #{forward.42} parent=5 // pred_check_branch
      %178 = sbr.rel (%p175) target = $region12
    $region11: #{forward.42} parent=5 // pred_region
      %s179 = ssub.s32 %s10, 1
      // Predicated region
      $region13: #{forward.42} parent=11 // pred_check
        %p180 = pneg %p85
      $region14: #{forward.42} parent=11 // pred_check_branch
        %182 = sbr.rel (%p180) target = $region16
      $region15: #{forward.42} parent=11 // pred_region
        %s183 = smul.u32 16, %s22
        %p184 = scmp.lt.s32.totalorder %s183, 15
        %s185 = scalar_select %p184, %s183, 15
        %p186 = scmp.lt.s32.totalorder %s21, 0
        %s187 = scalar_select %p186, %s21, 0
        %s188 = sadd.s32 %s187, %s185
        %s189 = smul.addr %s188, 4
        %s190 = scalar_lea.vmem %s1, %s189
        %s191 = smul.u32 16, %s22
      $region16: #{forward.42} parent=11 // pred_fallthru
        _
      // Predicated region
      $region17: #{forward.42} parent=11 // pred_check
        %p192 = pneg %p111
      $region18: #{forward.42} parent=11 // pred_check_branch
        %194 = sbr.rel (%p192) target = $region20
      $region19: #{forward.42} parent=11 // pred_region
        %p195 = scmp.lt.s32.totalorder %s21, 0
        %s196 = scalar_select %p195, %s21, 0
        %s197 = scalar_lea.vmem %s2, %s196
      $region20: #{forward.42} parent=11 // pred_fallthru
        _
      // Predicated region
      $region21: #{forward.42} parent=11 // pred_check
        %p198 = pneg %p137
      $region22: #{forward.42} parent=11 // pred_check_branch
        %200 = sbr.rel (%p198) target = $region24
      $region23: #{forward.42} parent=11 // pred_region
        %p201 = scmp.lt.s32.totalorder %s21, 0
        %s202 = scalar_select %p201, %s21, 0
        %s203 = scalar_lea.vmem %s3, %s202
      $region24: #{forward.42} parent=11 // pred_fallthru
        _
    $region12: #{forward.42} parent=5 // pred_fallthru
      _
    %p204 = scmp.lt.s32.totalorder %s10, 12
    // Predicated region
    $region25: #{forward.42} parent=5 // pred_check
      %p205 = pneg %p204
    $region26: #{forward.42} parent=5 // pred_check_branch
      %207 = sbr.rel (%p205) target = $region28
    $region27: #{forward.42} parent=5 // pred_region
      // Predicated region
      $region29: #{forward.42} parent=27 // pred_check
        %p208 = pneg %p51
      $region30: #{forward.42} parent=27 // pred_check_branch
        %210 = sbr.rel (%p208) target = $region32
      $region31: #{forward.42} parent=27 // pred_region
        %s211 = smul.u32 32, %s17
        %p212 = scmp.lt.s32.totalorder %s211, 383
        %s213 = scalar_select %p212, %s211, 383
        %p214 = scmp.lt.s32.totalorder %s19, 0
        %s215 = scalar_select %p214, %s19, 0
        %s216 = sadd.s32 %s215, %s213
        %s217 = smul.addr %s216, 4
        %s218 = scalar_lea.vmem %s0, %s217
        %s219 = smul.u32 32, %s17
      $region32: #{forward.42} parent=27 // pred_fallthru
        _
    $region28: #{forward.42} parent=5 // pred_fallthru
      _
    %p220 = scmp.le.s32.totalorder 1, %s10
    %p221 = scmp.lt.s32.totalorder %s10, 13
    %p222 = pnand %p220, %p221
    %p223 = pneg %p222
    // Predicated region
    $region33: #{forward.42} parent=5 // pred_check
      _
    $region34: #{forward.42} parent=5 // pred_check_branch
      %225 = sbr.rel (%p222) target = $region36
    $region35: #{forward.42} parent=5 // pred_region
      %s226 = ssub.s32 %s10, 1
      %s227 = smul.u32 32, %s20
      %p228 = scmp.lt.s32.totalorder %s227, 383
      %s229 = scalar_select %p228, %s227, 383
      %p230 = scmp.lt.s32.totalorder %s22, 0
      %s231 = scalar_select %p230, %s22, 0
      %s232 = sadd.s32 %s231, %s229
      %s233 = smul.addr %s232, 4
      %s234 = scalar_lea.vmem %s0, %s233
      %p235 = pneg %p57
      %p236 = pneg %p54
      %s237 = smul.u32 16, %s22
      %p238 = scmp.lt.s32.totalorder %s237, 15
      %s239 = scalar_select %p238, %s237, 15
      %p240 = scmp.lt.s32.totalorder %s21, 0
      %s241 = scalar_select %p240, %s21, 0
      %s242 = sadd.s32 %s241, %s239
      %s243 = smul.addr %s242, 4
      %s244 = scalar_lea.vmem %s1, %s243
      %p245 = pneg %p85
      %p246 = pneg %p82
      %p247 = scmp.lt.s32.totalorder %s21, 0
      %s248 = scalar_select %p247, %s21, 0
      %s249 = scalar_lea.vmem %s2, %s248
      %p250 = pneg %p111
      %p251 = pneg %p108
      %p252 = scmp.lt.s32.totalorder %s21, 0
      %s253 = scalar_select %p252, %s21, 0
      %s254 = scalar_lea.vmem %s3, %s253
      %p255 = pneg %p137
      %p256 = pneg %p134
      %p257 = pneg %p165
      %p258 = pneg %p162
      %s259 = smul.u32 32, %s20
      %p260 = scmp.lt.s32.totalorder %s259, 383
      %s261 = scalar_select %p260, %s259, 383
      %p262 = scmp.lt.s32.totalorder %s21, 0
      %s263 = scalar_select %p262, %s21, 0
      %s264 = sadd.s32 %s263, %s261
      %s265 = smul.addr %s264, 8
      %s266 = scalar_lea.vmem %s4, %s265
      %s267 = smul.u32 32, %s20
      %p268 = scmp.lt.s32.totalorder %s267, 383
      %s269 = scalar_select %p268, %s267, 383
      %p270 = scmp.lt.s32.totalorder %s22, 0
      %s271 = scalar_select %p270, %s22, 0
      %s272 = sadd.s32 %s271, %s269
      %s273 = smul.addr %s272, 4
      %s274 = scalar_lea.vmem %s0, %s273
      %s275 = smul.u32 32, %s20
      %s276 = smul.u32 16, %s22
      %p277 = scmp.lt.s32.totalorder %s276, 15
      %s278 = scalar_select %p277, %s276, 15
      %p279 = scmp.lt.s32.totalorder %s21, 0
      %s280 = scalar_select %p279, %s21, 0
      %s281 = sadd.s32 %s280, %s278
      %s282 = smul.addr %s281, 4
      %s283 = scalar_lea.vmem %s1, %s282
      %s284 = smul.u32 16, %s22
      %p285 = scmp.lt.s32.totalorder %s21, 0
      %s286 = scalar_select %p285, %s21, 0
      %s287 = scalar_lea.vmem %s2, %s286
      %p288 = scmp.lt.s32.totalorder %s21, 0
      %s289 = scalar_select %p288, %s21, 0
      %s290 = scalar_lea.vmem %s3, %s289
      %s291 = smul.u32 32, %s20
      %p292 = scmp.lt.s32.totalorder %s291, 383
      %s293 = scalar_select %p292, %s291, 383
      %p294 = scmp.lt.s32.totalorder %s21, 0
      %s295 = scalar_select %p294, %s21, 0
      %s296 = sadd.s32 %s295, %s293
      %s297 = smul.addr %s296, 8
      %s298 = scalar_lea.vmem %s4, %s297
      %s299 = smul.u32 32, %s20
      %p301 = scmp.eq.s32.totalorder %s22, 0
      // Predicated region
      $region37: #{forward.42} parent=35 // pred_check
        %p302 = pneg %p301
      $region38: #{forward.42} parent=35 // pred_check_branch
        %304 = sbr.rel (%p302) target = $region40
      $region39: #{forward.42} parent=35 // pred_region
        %305 = vst [vmem:[#allocation2] sm:$0xff] 0.0
        %306 = vst [vmem:[#allocation2 + $0x8] sm:$0xff] 0.0
        %307 = vst [vmem:[#allocation2 + $0x10] sm:$0xff] 0.0
        %308 = vst [vmem:[#allocation2 + $0x18] sm:$0xff] 0.0
        %309 = vst [vmem:[#allocation2 + $0x20] sm:$0xff] 0.0
        %310 = vst [vmem:[#allocation2 + $0x28] sm:$0xff] 0.0
        %311 = vst [vmem:[#allocation2 + $0x30] sm:$0xff] 0.0
        %312 = vst [vmem:[#allocation2 + $0x38] sm:$0xff] 0.0
        %313 = vst [vmem:[#allocation2 + $0x40] sm:$0xff] 0.0
        %314 = vst [vmem:[#allocation2 + $0x48] sm:$0xff] 0.0
        %315 = vst [vmem:[#allocation2 + $0x50] sm:$0xff] 0.0
        %316 = vst [vmem:[#allocation2 + $0x58] sm:$0xff] 0.0
        %317 = vst [vmem:[#allocation2 + $0x60] sm:$0xff] 0.0
        %318 = vst [vmem:[#allocation2 + $0x68] sm:$0xff] 0.0
        %319 = vst [vmem:[#allocation2 + $0x70] sm:$0xff] 0.0
        %320 = vst [vmem:[#allocation2 + $0x78] sm:$0xff] 0.0
        %321 = vst [vmem:[#allocation2 + $0x80] sm:$0xff] 0.0
        %322 = vst [vmem:[#allocation2 + $0x88] sm:$0xff] 0.0
        %323 = vst [vmem:[#allocation2 + $0x90] sm:$0xff] 0.0
        %324 = vst [vmem:[#allocation2 + $0x98] sm:$0xff] 0.0
        %325 = vst [vmem:[#allocation2 + $0xa0] sm:$0xff] 0.0
        %326 = vst [vmem:[#allocation2 + $0xa8] sm:$0xff] 0.0
        %327 = vst [vmem:[#allocation2 + $0xb0] sm:$0xff] 0.0
        %328 = vst [vmem:[#allocation2 + $0xb8] sm:$0xff] 0.0
        %329 = vst [vmem:[#allocation2 + $0xc0] sm:$0xff] 0.0
        %330 = vst [vmem:[#allocation2 + $0xc8] sm:$0xff] 0.0
        %331 = vst [vmem:[#allocation2 + $0xd0] sm:$0xff] 0.0
        %332 = vst [vmem:[#allocation2 + $0xd8] sm:$0xff] 0.0
        %333 = vst [vmem:[#allocation2 + $0xe0] sm:$0xff] 0.0
        %334 = vst [vmem:[#allocation2 + $0xe8] sm:$0xff] 0.0
        %335 = vst [vmem:[#allocation2 + $0xf0] sm:$0xff] 0.0
        %336 = vst [vmem:[#allocation2 + $0xf8] sm:$0xff] 0.0
      $region40: #{forward.42} parent=35 // pred_fallthru
        _
      %v337 = vld [vmem:[#allocation2] sm:$0xff]
      %v338 = vld [vmem:[#allocation2 + $0x8] sm:$0xff]
      %v339 = vld [vmem:[#allocation2 + $0x10] sm:$0xff]
      %v340 = vld [vmem:[#allocation2 + $0x18] sm:$0xff]
      %v341 = vld [vmem:[#allocation2 + $0x20] sm:$0xff]
      %v342 = vld [vmem:[#allocation2 + $0x28] sm:$0xff]
      %v343 = vld [vmem:[#allocation2 + $0x30] sm:$0xff]
      %v344 = vld [vmem:[#allocation2 + $0x38] sm:$0xff]
      %v345 = vld [vmem:[#allocation2 + $0x40] sm:$0xff]
      %v346 = vld [vmem:[#allocation2 + $0x48] sm:$0xff]
      %v347 = vld [vmem:[#allocation2 + $0x50] sm:$0xff]
      %v348 = vld [vmem:[#allocation2 + $0x58] sm:$0xff]
      %v349 = vld [vmem:[#allocation2 + $0x60] sm:$0xff]
      %v350 = vld [vmem:[#allocation2 + $0x68] sm:$0xff]
      %v351 = vld [vmem:[#allocation2 + $0x70] sm:$0xff]
      %v352 = vld [vmem:[#allocation2 + $0x78] sm:$0xff]
      %v353 = vld [vmem:[#allocation2 + $0x80] sm:$0xff]
      %v354 = vld [vmem:[#allocation2 + $0x88] sm:$0xff]
      %v355 = vld [vmem:[#allocation2 + $0x90] sm:$0xff]
      %v356 = vld [vmem:[#allocation2 + $0x98] sm:$0xff]
      %v357 = vld [vmem:[#allocation2 + $0xa0] sm:$0xff]
      %v358 = vld [vmem:[#allocation2 + $0xa8] sm:$0xff]
      %v359 = vld [vmem:[#allocation2 + $0xb0] sm:$0xff]
      %v360 = vld [vmem:[#allocation2 + $0xb8] sm:$0xff]
      %v361 = vld [vmem:[#allocation2 + $0xc0] sm:$0xff]
      %v362 = vld [vmem:[#allocation2 + $0xc8] sm:$0xff]
      %v363 = vld [vmem:[#allocation2 + $0xd0] sm:$0xff]
      %v364 = vld [vmem:[#allocation2 + $0xd8] sm:$0xff]
      %v365 = vld [vmem:[#allocation2 + $0xe0] sm:$0xff]
      %v366 = vld [vmem:[#allocation2 + $0xe8] sm:$0xff]
      %v367 = vld [vmem:[#allocation2 + $0xf0] sm:$0xff]
      %v368 = vld [vmem:[#allocation2 + $0xf8] sm:$0xff]
      %v369 = vld [vmem:[%s274] sm:$0xf]
      %v370 = vld [vmem:[%s274 + $0x4] sm:$0xf]
      %v371 = vld [vmem:[%s274 + $0x8] sm:$0xf]
      %v372 = vld [vmem:[%s274 + $0xc] sm:$0xf]
      %v373 = vld [vmem:[%s274 + $0x10] sm:$0xf]
      %v374 = vld [vmem:[%s274 + $0x14] sm:$0xf]
      %v375 = vld [vmem:[%s274 + $0x18] sm:$0xf]
      %v376 = vld [vmem:[%s274 + $0x1c] sm:$0xf]
      %v377 = vld [vmem:[%s274 + $0x20] sm:$0xf]
      %v378 = vld [vmem:[%s274 + $0x24] sm:$0xf]
      %v379 = vld [vmem:[%s274 + $0x28] sm:$0xf]
      %v380 = vld [vmem:[%s274 + $0x2c] sm:$0xf]
      %v381 = vld [vmem:[%s274 + $0x30] sm:$0xf]
      %v382 = vld [vmem:[%s274 + $0x34] sm:$0xf]
      %v383 = vld [vmem:[%s274 + $0x38] sm:$0xf]
      %v384 = vld [vmem:[%s274 + $0x3c] sm:$0xf]
      %v385 = vld [vmem:[%s274 + $0x40] sm:$0xf]
      %v386 = vld [vmem:[%s274 + $0x44] sm:$0xf]
      %v387 = vld [vmem:[%s274 + $0x48] sm:$0xf]
      %v388 = vld [vmem:[%s274 + $0x4c] sm:$0xf]
      %v389 = vld [vmem:[%s274 + $0x50] sm:$0xf]
      %v390 = vld [vmem:[%s274 + $0x54] sm:$0xf]
      %v391 = vld [vmem:[%s274 + $0x58] sm:$0xf]
      %v392 = vld [vmem:[%s274 + $0x5c] sm:$0xf]
      %v393 = vld [vmem:[%s274 + $0x60] sm:$0xf]
      %v394 = vld [vmem:[%s274 + $0x64] sm:$0xf]
      %v395 = vld [vmem:[%s274 + $0x68] sm:$0xf]
      %v396 = vld [vmem:[%s274 + $0x6c] sm:$0xf]
      %v397 = vld [vmem:[%s274 + $0x70] sm:$0xf]
      %v398 = vld [vmem:[%s274 + $0x74] sm:$0xf]
      %v399 = vld [vmem:[%s274 + $0x78] sm:$0xf]
      %v400 = vld [vmem:[%s274 + $0x7c] sm:$0xf]
      %v401 = vld [vmem:[%s283] sm:$0xf]
      %v402 = vld [vmem:[%s283 + $0x4] sm:$0xf]
      %v403 = vld [vmem:[%s283 + $0x8] sm:$0xf]
      %v404 = vld [vmem:[%s283 + $0xc] sm:$0xf]
      %v405 = vld [vmem:[%s283 + $0x10] sm:$0xf]
      %v406 = vld [vmem:[%s283 + $0x14] sm:$0xf]
      %v407 = vld [vmem:[%s283 + $0x18] sm:$0xf]
      %v408 = vld [vmem:[%s283 + $0x1c] sm:$0xf]
      %v409 = vld [vmem:[%s283 + $0x20] sm:$0xf]
      %v410 = vld [vmem:[%s283 + $0x24] sm:$0xf]
      %v411 = vld [vmem:[%s283 + $0x28] sm:$0xf]
      %v412 = vld [vmem:[%s283 + $0x2c] sm:$0xf]
      %v413 = vld [vmem:[%s283 + $0x30] sm:$0xf]
      %v414 = vld [vmem:[%s283 + $0x34] sm:$0xf]
      %v415 = vld [vmem:[%s283 + $0x38] sm:$0xf]
      %v416 = vld [vmem:[%s283 + $0x3c] sm:$0xf]
      %v449 = vunpack.c.l.b16 %v369
      %v450 = vunpack.c.l.b16 %v370
      %v451 = vunpack.c.l.b16 %v371
      %v452 = vunpack.c.l.b16 %v372
      %v453 = vunpack.c.l.b16 %v373
      %v454 = vunpack.c.l.b16 %v374
      %v455 = vunpack.c.l.b16 %v375
      %v456 = vunpack.c.l.b16 %v376
      %v457 = vunpack.c.l.b16 %v377
      %v458 = vunpack.c.l.b16 %v378
      %v459 = vunpack.c.l.b16 %v379
      %v460 = vunpack.c.l.b16 %v380
      %v461 = vunpack.c.l.b16 %v381
      %v462 = vunpack.c.l.b16 %v382
      %v463 = vunpack.c.l.b16 %v383
      %v464 = vunpack.c.l.b16 %v384
      %v465 = vunpack.c.l.b16 %v385
      %v466 = vunpack.c.l.b16 %v386
      %v467 = vunpack.c.l.b16 %v387
      %v468 = vunpack.c.l.b16 %v388
      %v469 = vunpack.c.l.b16 %v389
      %v470 = vunpack.c.l.b16 %v390
      %v471 = vunpack.c.l.b16 %v391
      %v472 = vunpack.c.l.b16 %v392
      %v473 = vunpack.c.l.b16 %v393
      %v474 = vunpack.c.l.b16 %v394
      %v475 = vunpack.c.l.b16 %v395
      %v476 = vunpack.c.l.b16 %v396
      %v477 = vunpack.c.l.b16 %v397
      %v478 = vunpack.c.l.b16 %v398
      %v479 = vunpack.c.l.b16 %v399
      %v480 = vunpack.c.l.b16 %v400
      %v481 = vpack.c.b16 %v450, %v449
      %v482 = vpack.c.b16 %v452, %v451
      %v483 = vpack.c.b16 %v454, %v453
      %v484 = vpack.c.b16 %v456, %v455
      %v485 = vpack.c.b16 %v458, %v457
      %v486 = vpack.c.b16 %v460, %v459
      %v487 = vpack.c.b16 %v462, %v461
      %v488 = vpack.c.b16 %v464, %v463
      %v489 = vpack.c.b16 %v466, %v465
      %v490 = vpack.c.b16 %v468, %v467
      %v491 = vpack.c.b16 %v470, %v469
      %v492 = vpack.c.b16 %v472, %v471
      %v493 = vpack.c.b16 %v474, %v473
      %v494 = vpack.c.b16 %v476, %v475
      %v495 = vpack.c.b16 %v478, %v477
      %v496 = vpack.c.b16 %v480, %v479
      %v529 = vunpack.c.l.b16 %v401
      %v530 = vunpack.c.l.b16 %v402
      %v531 = vunpack.c.l.b16 %v403
      %v532 = vunpack.c.l.b16 %v404
      %v533 = vunpack.c.l.b16 %v405
      %v534 = vunpack.c.l.b16 %v406
      %v535 = vunpack.c.l.b16 %v407
      %v536 = vunpack.c.l.b16 %v408
      %v537 = vunpack.c.l.b16 %v409
      %v538 = vunpack.c.l.b16 %v410
      %v539 = vunpack.c.l.b16 %v411
      %v540 = vunpack.c.l.b16 %v412
      %v541 = vunpack.c.l.b16 %v413
      %v542 = vunpack.c.l.b16 %v414
      %v543 = vunpack.c.l.b16 %v415
      %v544 = vunpack.c.l.b16 %v416
      %v545 = vpack.c.b16 %v530, %v529
      %v546 = vpack.c.b16 %v532, %v531
      %v547 = vpack.c.b16 %v534, %v533
      %v548 = vpack.c.b16 %v536, %v535
      %v549 = vpack.c.b16 %v538, %v537
      %v550 = vpack.c.b16 %v540, %v539
      %v551 = vpack.c.b16 %v542, %v541
      %v552 = vpack.c.b16 %v544, %v543
      %561 = vmatprep.subr.bf16.mxu0 0
      %562 = vmatpush1.bf16.msra.mxu0 %v552
      %563 = vmatprep.subr.bf16.mxu0 0
      %564 = vmatpush1.bf16.msra.mxu0 %v551
      %565 = vmatprep.subr.bf16.mxu0 0
      %566 = vmatpush1.bf16.msra.mxu0 %v550
      %567 = vmatprep.subr.bf16.mxu0 0
      %568 = vmatpush1.bf16.msra.mxu0 %v549
      %569 = vmatprep.subr.bf16.mxu0 0
      %570 = vmatpush1.bf16.msra.mxu0 %v548
      %571 = vmatprep.subr.bf16.mxu0 0
      %572 = vmatpush1.bf16.msra.mxu0 %v547
      %573 = vmatprep.subr.bf16.mxu0 0
      %574 = vmatpush1.bf16.msra.mxu0 %v546
      %575 = vmatprep.subr.bf16.mxu0 0
      %576 = vmatpush1.bf16.msra.mxu0 %v545
      %577 = vmatprep.subr.bf16.mxu0 0
      %578 = vmatpush2.bf16.msra.mxu0 0
      %579 = vmatprep.subr.bf16.mxu0 0
      %580 = vmatpush2.bf16.msra.mxu0 0
      %581 = vmatprep.subr.bf16.mxu0 0
      %582 = vmatpush2.bf16.msra.mxu0 0
      %583 = vmatprep.subr.bf16.mxu0 0
      %584 = vmatpush2.bf16.msra.mxu0 0
      %585 = vmatprep.subr.bf16.mxu0 0
      %586 = vmatpush2.bf16.msra.mxu0 0
      %587 = vmatprep.subr.bf16.mxu0 0
      %588 = vmatpush2.bf16.msra.mxu0 0
      %589 = vmatprep.subr.bf16.mxu0 0
      %590 = vmatpush2.bf16.msra.mxu0 0
      %591 = vmatprep.subr.bf16.mxu0 0
      %592 = vmatpush2.bf16.msra.mxu0 0
      %593 = vmatprep.mubr.bf16.mxu0 0
      %594 = vmatmul.mubr.bf16.gmra.mxu0 %v481
      %v595 = vpop.f32.mrf.mxu0
      %v596 = vadd.f32 0.0, %v595
      %v597 = vpop.f32.mrf.mxu0
      %v598 = vpop.f32.mrf.mxu0
      %v599 = vadd.f32 0.0, %v598
      %v600 = vpop.f32.mrf.mxu0
      %601 = vmatprep.mubr.bf16.mxu0 0
      %602 = vmatmul.mubr.bf16.gmra.mxu0 %v482
      %v603 = vpop.f32.mrf.mxu0
      %v604 = vadd.f32 0.0, %v603
      %v605 = vpop.f32.mrf.mxu0
      %v606 = vpop.f32.mrf.mxu0
      %v607 = vadd.f32 0.0, %v606
      %v608 = vpop.f32.mrf.mxu0
      %609 = vmatprep.mubr.bf16.mxu0 0
      %610 = vmatmul.mubr.bf16.gmra.mxu0 %v483
      %v611 = vpop.f32.mrf.mxu0
      %v612 = vadd.f32 0.0, %v611
      %v613 = vpop.f32.mrf.mxu0
      %v614 = vpop.f32.mrf.mxu0
      %v615 = vadd.f32 0.0, %v614
      %v616 = vpop.f32.mrf.mxu0
      %617 = vmatprep.mubr.bf16.mxu0 0
      %618 = vmatmul.mubr.bf16.gmra.mxu0 %v484
      %v619 = vpop.f32.mrf.mxu0
      %v620 = vadd.f32 0.0, %v619
      %v621 = vpop.f32.mrf.mxu0
      %v622 = vpop.f32.mrf.mxu0
      %v623 = vadd.f32 0.0, %v622
      %v624 = vpop.f32.mrf.mxu0
      %625 = vmatprep.mubr.bf16.mxu0 0
      %626 = vmatmul.mubr.bf16.gmra.mxu0 %v485
      %v627 = vpop.f32.mrf.mxu0
      %v628 = vadd.f32 0.0, %v627
      %v629 = vpop.f32.mrf.mxu0
      %v630 = vpop.f32.mrf.mxu0
      %v631 = vadd.f32 0.0, %v630
      %v632 = vpop.f32.mrf.mxu0
      %633 = vmatprep.mubr.bf16.mxu0 0
      %634 = vmatmul.mubr.bf16.gmra.mxu0 %v486
      %v635 = vpop.f32.mrf.mxu0
      %v636 = vadd.f32 0.0, %v635
      %v637 = vpop.f32.mrf.mxu0
      %v638 = vpop.f32.mrf.mxu0
      %v639 = vadd.f32 0.0, %v638
      %v640 = vpop.f32.mrf.mxu0
      %641 = vmatprep.mubr.bf16.mxu0 0
      %642 = vmatmul.mubr.bf16.gmra.mxu0 %v487
      %v643 = vpop.f32.mrf.mxu0
      %v644 = vadd.f32 0.0, %v643
      %v645 = vpop.f32.mrf.mxu0
      %v646 = vpop.f32.mrf.mxu0
      %v647 = vadd.f32 0.0, %v646
      %v648 = vpop.f32.mrf.mxu0
      %649 = vmatprep.mubr.bf16.mxu0 0
      %650 = vmatmul.mubr.bf16.gmra.mxu0 %v488
      %v651 = vpop.f32.mrf.mxu0
      %v652 = vadd.f32 0.0, %v651
      %v653 = vpop.f32.mrf.mxu0
      %v654 = vpop.f32.mrf.mxu0
      %v655 = vadd.f32 0.0, %v654
      %v656 = vpop.f32.mrf.mxu0
      %657 = vmatprep.mubr.bf16.mxu0 0
      %658 = vmatmul.mubr.bf16.gmra.mxu0 %v489
      %v659 = vpop.f32.mrf.mxu0
      %v660 = vadd.f32 0.0, %v659
      %v661 = vpop.f32.mrf.mxu0
      %v662 = vpop.f32.mrf.mxu0
      %v663 = vadd.f32 0.0, %v662
      %v664 = vpop.f32.mrf.mxu0
      %665 = vmatprep.mubr.bf16.mxu0 0
      %666 = vmatmul.mubr.bf16.gmra.mxu0 %v490
      %v667 = vpop.f32.mrf.mxu0
      %v668 = vadd.f32 0.0, %v667
      %v669 = vpop.f32.mrf.mxu0
      %v670 = vpop.f32.mrf.mxu0
      %v671 = vadd.f32 0.0, %v670
      %v672 = vpop.f32.mrf.mxu0
      %673 = vmatprep.mubr.bf16.mxu0 0
      %674 = vmatmul.mubr.bf16.gmra.mxu0 %v491
      %v675 = vpop.f32.mrf.mxu0
      %v676 = vadd.f32 0.0, %v675
      %v677 = vpop.f32.mrf.mxu0
      %v678 = vpop.f32.mrf.mxu0
      %v679 = vadd.f32 0.0, %v678
      %v680 = vpop.f32.mrf.mxu0
      %681 = vmatprep.mubr.bf16.mxu0 0
      %682 = vmatmul.mubr.bf16.gmra.mxu0 %v492
      %v683 = vpop.f32.mrf.mxu0
      %v684 = vadd.f32 0.0, %v683
      %v685 = vpop.f32.mrf.mxu0
      %v686 = vpop.f32.mrf.mxu0
      %v687 = vadd.f32 0.0, %v686
      %v688 = vpop.f32.mrf.mxu0
      %689 = vmatprep.mubr.bf16.mxu0 0
      %690 = vmatmul.mubr.bf16.gmra.mxu0 %v493
      %v691 = vpop.f32.mrf.mxu0
      %v692 = vadd.f32 0.0, %v691
      %v693 = vpop.f32.mrf.mxu0
      %v694 = vpop.f32.mrf.mxu0
      %v695 = vadd.f32 0.0, %v694
      %v696 = vpop.f32.mrf.mxu0
      %697 = vmatprep.mubr.bf16.mxu0 0
      %698 = vmatmul.mubr.bf16.gmra.mxu0 %v494
      %v699 = vpop.f32.mrf.mxu0
      %v700 = vadd.f32 0.0, %v699
      %v701 = vpop.f32.mrf.mxu0
      %v702 = vpop.f32.mrf.mxu0
      %v703 = vadd.f32 0.0, %v702
      %v704 = vpop.f32.mrf.mxu0
      %705 = vmatprep.mubr.bf16.mxu0 0
      %706 = vmatmul.mubr.bf16.gmra.mxu0 %v495
      %v707 = vpop.f32.mrf.mxu0
      %v708 = vadd.f32 0.0, %v707
      %v709 = vpop.f32.mrf.mxu0
      %v710 = vpop.f32.mrf.mxu0
      %v711 = vadd.f32 0.0, %v710
      %v712 = vpop.f32.mrf.mxu0
      %713 = vmatprep.mubr.bf16.mxu0 0
      %714 = vmatmul.mubr.bf16.gmra.mxu0 %v496
      %v715 = vpop.f32.mrf.mxu0
      %v716 = vadd.f32 0.0, %v715
      %v717 = vpop.f32.mrf.mxu0
      %v718 = vpop.f32.mrf.mxu0
      %v719 = vadd.f32 0.0, %v718
      %v720 = vpop.f32.mrf.mxu0
      %721 = vdwg.mxu0
      %v722 = vadd.f32 %v337, %v596
      %v723 = vadd.f32 %v338, %v599
      %v724 = vadd.f32 %v339, %v604
      %v725 = vadd.f32 %v340, %v607
      %v726 = vadd.f32 %v341, %v612
      %v727 = vadd.f32 %v342, %v615
      %v728 = vadd.f32 %v343, %v620
      %v729 = vadd.f32 %v344, %v623
      %v730 = vadd.f32 %v345, %v628
      %v731 = vadd.f32 %v346, %v631
      %v732 = vadd.f32 %v347, %v636
      %v733 = vadd.f32 %v348, %v639
      %v734 = vadd.f32 %v349, %v644
      %v735 = vadd.f32 %v350, %v647
      %v736 = vadd.f32 %v351, %v652
      %v737 = vadd.f32 %v352, %v655
      %v738 = vadd.f32 %v353, %v660
      %v739 = vadd.f32 %v354, %v663
      %v740 = vadd.f32 %v355, %v668
      %v741 = vadd.f32 %v356, %v671
      %v742 = vadd.f32 %v357, %v676
      %v743 = vadd.f32 %v358, %v679
      %v744 = vadd.f32 %v359, %v684
      %v745 = vadd.f32 %v360, %v687
      %v746 = vadd.f32 %v361, %v692
      %v747 = vadd.f32 %v362, %v695
      %v748 = vadd.f32 %v363, %v700
      %v749 = vadd.f32 %v364, %v703
      %v750 = vadd.f32 %v365, %v708
      %v751 = vadd.f32 %v366, %v711
      %v752 = vadd.f32 %v367, %v716
      %v753 = vadd.f32 %v368, %v719
      %754 = vst [vmem:[#allocation2] sm:$0xff] %v722
      %755 = vst [vmem:[#allocation2 + $0x8] sm:$0xff] %v723
      %756 = vst [vmem:[#allocation2 + $0x10] sm:$0xff] %v724
      %757 = vst [vmem:[#allocation2 + $0x18] sm:$0xff] %v725
      %758 = vst [vmem:[#allocation2 + $0x20] sm:$0xff] %v726
      %759 = vst [vmem:[#allocation2 + $0x28] sm:$0xff] %v727
      %760 = vst [vmem:[#allocation2 + $0x30] sm:$0xff] %v728
      %761 = vst [vmem:[#allocation2 + $0x38] sm:$0xff] %v729
      %762 = vst [vmem:[#allocation2 + $0x40] sm:$0xff] %v730
      %763 = vst [vmem:[#allocation2 + $0x48] sm:$0xff] %v731
      %764 = vst [vmem:[#allocation2 + $0x50] sm:$0xff] %v732
      %765 = vst [vmem:[#allocation2 + $0x58] sm:$0xff] %v733
      %766 = vst [vmem:[#allocation2 + $0x60] sm:$0xff] %v734
      %767 = vst [vmem:[#allocation2 + $0x68] sm:$0xff] %v735
      %768 = vst [vmem:[#allocation2 + $0x70] sm:$0xff] %v736
      %769 = vst [vmem:[#allocation2 + $0x78] sm:$0xff] %v737
      %770 = vst [vmem:[#allocation2 + $0x80] sm:$0xff] %v738
      %771 = vst [vmem:[#allocation2 + $0x88] sm:$0xff] %v739
      %772 = vst [vmem:[#allocation2 + $0x90] sm:$0xff] %v740
      %773 = vst [vmem:[#allocation2 + $0x98] sm:$0xff] %v741
      %774 = vst [vmem:[#allocation2 + $0xa0] sm:$0xff] %v742
      %775 = vst [vmem:[#allocation2 + $0xa8] sm:$0xff] %v743
      %776 = vst [vmem:[#allocation2 + $0xb0] sm:$0xff] %v744
      %777 = vst [vmem:[#allocation2 + $0xb8] sm:$0xff] %v745
      %778 = vst [vmem:[#allocation2 + $0xc0] sm:$0xff] %v746
      %779 = vst [vmem:[#allocation2 + $0xc8] sm:$0xff] %v747
      %780 = vst [vmem:[#allocation2 + $0xd0] sm:$0xff] %v748
      %781 = vst [vmem:[#allocation2 + $0xd8] sm:$0xff] %v749
      %782 = vst [vmem:[#allocation2 + $0xe0] sm:$0xff] %v750
      %783 = vst [vmem:[#allocation2 + $0xe8] sm:$0xff] %v751
      %784 = vst [vmem:[#allocation2 + $0xf0] sm:$0xff] %v752
      %785 = vst [vmem:[#allocation2 + $0xf8] sm:$0xff] %v753
      // Predicated region
      $region41: #{forward.42} parent=35 // pred_check
        %p786 = pneg %p301
      $region42: #{forward.42} parent=35 // pred_check_branch
        %788 = sbr.rel (%p786) target = $region44
      $region43: #{forward.42} parent=35 // pred_region
        %v789 = vld [vmem:[#allocation2] sm:$0xff]
        %v790 = vld [vmem:[#allocation2 + $0x8] sm:$0xff]
        %v791 = vld [vmem:[#allocation2 + $0x10] sm:$0xff]
        %v792 = vld [vmem:[#allocation2 + $0x18] sm:$0xff]
        %v793 = vld [vmem:[#allocation2 + $0x20] sm:$0xff]
        %v794 = vld [vmem:[#allocation2 + $0x28] sm:$0xff]
        %v795 = vld [vmem:[#allocation2 + $0x30] sm:$0xff]
        %v796 = vld [vmem:[#allocation2 + $0x38] sm:$0xff]
        %v797 = vld [vmem:[#allocation2 + $0x40] sm:$0xff]
        %v798 = vld [vmem:[#allocation2 + $0x48] sm:$0xff]
        %v799 = vld [vmem:[#allocation2 + $0x50] sm:$0xff]
        %v800 = vld [vmem:[#allocation2 + $0x58] sm:$0xff]
        %v801 = vld [vmem:[#allocation2 + $0x60] sm:$0xff]
        %v802 = vld [vmem:[#allocation2 + $0x68] sm:$0xff]
        %v803 = vld [vmem:[#allocation2 + $0x70] sm:$0xff]
        %v804 = vld [vmem:[#allocation2 + $0x78] sm:$0xff]
        %v805 = vld [vmem:[#allocation2 + $0x80] sm:$0xff]
        %v806 = vld [vmem:[#allocation2 + $0x88] sm:$0xff]
        %v807 = vld [vmem:[#allocation2 + $0x90] sm:$0xff]
        %v808 = vld [vmem:[#allocation2 + $0x98] sm:$0xff]
        %v809 = vld [vmem:[#allocation2 + $0xa0] sm:$0xff]
        %v810 = vld [vmem:[#allocation2 + $0xa8] sm:$0xff]
        %v811 = vld [vmem:[#allocation2 + $0xb0] sm:$0xff]
        %v812 = vld [vmem:[#allocation2 + $0xb8] sm:$0xff]
        %v813 = vld [vmem:[#allocation2 + $0xc0] sm:$0xff]
        %v814 = vld [vmem:[#allocation2 + $0xc8] sm:$0xff]
        %v815 = vld [vmem:[#allocation2 + $0xd0] sm:$0xff]
        %v816 = vld [vmem:[#allocation2 + $0xd8] sm:$0xff]
        %v817 = vld [vmem:[#allocation2 + $0xe0] sm:$0xff]
        %v818 = vld [vmem:[#allocation2 + $0xe8] sm:$0xff]
        %v819 = vld [vmem:[#allocation2 + $0xf0] sm:$0xff]
        %v820 = vld [vmem:[#allocation2 + $0xf8] sm:$0xff]
        %v821 = vld [vmem:[%s287] sm:$0x1]
        %v823 = vlaneseq
        %v824 = vshrl.u32 %v823, 7
        %v825 = vsub.s32 0, %v824
        %v826 = vrot.slane %v821, %v825
        %v828 = vmul.f32 %v789, %v826
        %v829 = vmul.f32 %v790, %v826
        %v830 = vmul.f32 %v791, %v826
        %v831 = vmul.f32 %v792, %v826
        %v832 = vmul.f32 %v793, %v826
        %v833 = vmul.f32 %v794, %v826
        %v834 = vmul.f32 %v795, %v826
        %v835 = vmul.f32 %v796, %v826
        %v836 = vmul.f32 %v797, %v826
        %v837 = vmul.f32 %v798, %v826
        %v838 = vmul.f32 %v799, %v826
        %v839 = vmul.f32 %v800, %v826
        %v840 = vmul.f32 %v801, %v826
        %v841 = vmul.f32 %v802, %v826
        %v842 = vmul.f32 %v803, %v826
        %v843 = vmul.f32 %v804, %v826
        %v844 = vmul.f32 %v805, %v826
        %v845 = vmul.f32 %v806, %v826
        %v846 = vmul.f32 %v807, %v826
        %v847 = vmul.f32 %v808, %v826
        %v848 = vmul.f32 %v809, %v826
        %v849 = vmul.f32 %v810, %v826
        %v850 = vmul.f32 %v811, %v826
        %v851 = vmul.f32 %v812, %v826
        %v852 = vmul.f32 %v813, %v826
        %v853 = vmul.f32 %v814, %v826
        %v854 = vmul.f32 %v815, %v826
        %v855 = vmul.f32 %v816, %v826
        %v856 = vmul.f32 %v817, %v826
        %v857 = vmul.f32 %v818, %v826
        %v858 = vmul.f32 %v819, %v826
        %v859 = vmul.f32 %v820, %v826
        %v860 = vld [vmem:[%s290] sm:$0x1]
        %v862 = vlaneseq
        %v863 = vshrl.u32 %v862, 7
        %v864 = vsub.s32 0, %v863
        %v865 = vrot.slane %v860, %v864
        %v867 = vadd.f32 %v828, %v865
        %v868 = vadd.f32 %v829, %v865
        %v869 = vadd.f32 %v830, %v865
        %v870 = vadd.f32 %v831, %v865
        %v871 = vadd.f32 %v832, %v865
        %v872 = vadd.f32 %v833, %v865
        %v873 = vadd.f32 %v834, %v865
        %v874 = vadd.f32 %v835, %v865
        %v875 = vadd.f32 %v836, %v865
        %v876 = vadd.f32 %v837, %v865
        %v877 = vadd.f32 %v838, %v865
        %v878 = vadd.f32 %v839, %v865
        %v879 = vadd.f32 %v840, %v865
        %v880 = vadd.f32 %v841, %v865
        %v881 = vadd.f32 %v842, %v865
        %v882 = vadd.f32 %v843, %v865
        %v883 = vadd.f32 %v844, %v865
        %v884 = vadd.f32 %v845, %v865
        %v885 = vadd.f32 %v846, %v865
        %v886 = vadd.f32 %v847, %v865
        %v887 = vadd.f32 %v848, %v865
        %v888 = vadd.f32 %v849, %v865
        %v889 = vadd.f32 %v850, %v865
        %v890 = vadd.f32 %v851, %v865
        %v891 = vadd.f32 %v852, %v865
        %v892 = vadd.f32 %v853, %v865
        %v893 = vadd.f32 %v854, %v865
        %v894 = vadd.f32 %v855, %v865
        %v895 = vadd.f32 %v856, %v865
        %v896 = vadd.f32 %v857, %v865
        %v897 = vadd.f32 %v858, %v865
        %v898 = vadd.f32 %v859, %v865
        %v899 = vmax.f32 %v867, 0.0
        %v900 = vmax.f32 %v868, 0.0
        %v901 = vmax.f32 %v869, 0.0
        %v902 = vmax.f32 %v870, 0.0
        %v903 = vmax.f32 %v871, 0.0
        %v904 = vmax.f32 %v872, 0.0
        %v905 = vmax.f32 %v873, 0.0
        %v906 = vmax.f32 %v874, 0.0
        %v907 = vmax.f32 %v875, 0.0
        %v908 = vmax.f32 %v876, 0.0
        %v909 = vmax.f32 %v877, 0.0
        %v910 = vmax.f32 %v878, 0.0
        %v911 = vmax.f32 %v879, 0.0
        %v912 = vmax.f32 %v880, 0.0
        %v913 = vmax.f32 %v881, 0.0
        %v914 = vmax.f32 %v882, 0.0
        %v915 = vmax.f32 %v883, 0.0
        %v916 = vmax.f32 %v884, 0.0
        %v917 = vmax.f32 %v885, 0.0
        %v918 = vmax.f32 %v886, 0.0
        %v919 = vmax.f32 %v887, 0.0
        %v920 = vmax.f32 %v888, 0.0
        %v921 = vmax.f32 %v889, 0.0
        %v922 = vmax.f32 %v890, 0.0
        %v923 = vmax.f32 %v891, 0.0
        %v924 = vmax.f32 %v892, 0.0
        %v925 = vmax.f32 %v893, 0.0
        %v926 = vmax.f32 %v894, 0.0
        %v927 = vmax.f32 %v895, 0.0
        %v928 = vmax.f32 %v896, 0.0
        %v929 = vmax.f32 %v897, 0.0
        %v930 = vmax.f32 %v898, 0.0
        %931 = vst [vmem:[%s298] sm:$0xff] %v899
        %932 = vst [vmem:[%s298 + $0x8] sm:$0xff] %v900
        %933 = vst [vmem:[%s298 + $0x10] sm:$0xff] %v901
        %934 = vst [vmem:[%s298 + $0x18] sm:$0xff] %v902
        %935 = vst [vmem:[%s298 + $0x20] sm:$0xff] %v903
        %936 = vst [vmem:[%s298 + $0x28] sm:$0xff] %v904
        %937 = vst [vmem:[%s298 + $0x30] sm:$0xff] %v905
        %938 = vst [vmem:[%s298 + $0x38] sm:$0xff] %v906
        %939 = vst [vmem:[%s298 + $0x40] sm:$0xff] %v907
        %940 = vst [vmem:[%s298 + $0x48] sm:$0xff] %v908
        %941 = vst [vmem:[%s298 + $0x50] sm:$0xff] %v909
        %942 = vst [vmem:[%s298 + $0x58] sm:$0xff] %v910
        %943 = vst [vmem:[%s298 + $0x60] sm:$0xff] %v911
        %944 = vst [vmem:[%s298 + $0x68] sm:$0xff] %v912
        %945 = vst [vmem:[%s298 + $0x70] sm:$0xff] %v913
        %946 = vst [vmem:[%s298 + $0x78] sm:$0xff] %v914
        %947 = vst [vmem:[%s298 + $0x80] sm:$0xff] %v915
        %948 = vst [vmem:[%s298 + $0x88] sm:$0xff] %v916
        %949 = vst [vmem:[%s298 + $0x90] sm:$0xff] %v917
        %950 = vst [vmem:[%s298 + $0x98] sm:$0xff] %v918
        %951 = vst [vmem:[%s298 + $0xa0] sm:$0xff] %v919
        %952 = vst [vmem:[%s298 + $0xa8] sm:$0xff] %v920
        %953 = vst [vmem:[%s298 + $0xb0] sm:$0xff] %v921
        %954 = vst [vmem:[%s298 + $0xb8] sm:$0xff] %v922
        %955 = vst [vmem:[%s298 + $0xc0] sm:$0xff] %v923
        %956 = vst [vmem:[%s298 + $0xc8] sm:$0xff] %v924
        %957 = vst [vmem:[%s298 + $0xd0] sm:$0xff] %v925
        %958 = vst [vmem:[%s298 + $0xd8] sm:$0xff] %v926
        %959 = vst [vmem:[%s298 + $0xe0] sm:$0xff] %v927
        %960 = vst [vmem:[%s298 + $0xe8] sm:$0xff] %v928
        %961 = vst [vmem:[%s298 + $0xf0] sm:$0xff] %v929
        %962 = vst [vmem:[%s298 + $0xf8] sm:$0xff] %v930
      $region44: #{forward.42} parent=35 // pred_fallthru
        _
      %s963 = smul.u32 32, %s20
      %p964 = scmp.lt.s32.totalorder %s963, 383
      %s965 = scalar_select %p964, %s963, 383
      %p966 = scmp.lt.s32.totalorder %s21, 0
      %s967 = scalar_select %p966, %s21, 0
      %s968 = sadd.s32 %s967, %s965
      %s969 = smul.addr %s968, 8
      %s970 = scalar_lea.vmem %s4, %s969
      // Predicated region
      $region45: #{forward.42} parent=35 // pred_check
        %p971 = pneg %p162
      $region46: #{forward.42} parent=35 // pred_check_branch
        %973 = sbr.rel (%p971) target = $region48
      $region47: #{forward.42} parent=35 // pred_region
        %s974 = smul.u32 32, %s20
      $region48: #{forward.42} parent=35 // pred_fallthru
        _
    $region36: #{forward.42} parent=5 // pred_fallthru
      _
    %p975 = scmp.le.s32.totalorder 2, %s10
    // Predicated region
    $region49: #{forward.42} parent=5 // pred_check
      %p976 = pneg %p975
    $region50: #{forward.42} parent=5 // pred_check_branch
      %978 = sbr.rel (%p976) target = $region52
    $region51: #{forward.42} parent=5 // pred_region
      %s979 = ssub.s32 %s10, 2
      // Predicated region
      $region53: #{forward.42} parent=51 // pred_check
        %p980 = pneg %p168
      $region54: #{forward.42} parent=51 // pred_check_branch
        %982 = sbr.rel (%p980) target = $region56
      $region55: #{forward.42} parent=51 // pred_region
        %s983 = smul.u32 32, %s23
        %p984 = scmp.lt.s32.totalorder %s983, 383
        %s985 = scalar_select %p984, %s983, 383
        %p986 = scmp.lt.s32.totalorder %s24, 0
        %s987 = scalar_select %p986, %s24, 0
        %s988 = sadd.s32 %s987, %s985
        %s989 = smul.addr %s988, 8
        %s990 = scalar_lea.vmem %s4, %s989
      $region56: #{forward.42} parent=51 // pred_fallthru
        _
    $region52: #{forward.42} parent=5 // pred_fallthru
      _
  $region6: #{forward.42} parent=0 // loop_footer
    %s14 = sadd.s32 1, %s10
  $region7: #{forward.42} parent=0 // loop_footer_branch
    %9 = sbr.rel target = $region3
  $region8: #{forward.42} parent=0 // loop_exit
    _

// kernel: forward.43
$region0: #{forward.43}
  #allocation0 [shape = 'u32[]', space=smem, size = 0x4, offset = 0x4, fixed_abs, tag = 'smem constant byte address 0x4 - core index']
  #allocation1 [shape = 'u32[144,128]{1,0:T(1,128)}', space=vmem, size = 0x12000, scoped, tag = 'internal scratch']
  #allocation2 [shape = 'f32[256,128]{1,0:T(8,128)}', space=vmem, size = 0x20000, scoped, tag = 'scratch operand']
  %s0 = inlined_call_operand.vmem [shape: bf16[2816,128], index: 0, kind: input, shape index: {}]
  %s1 = inlined_call_operand.vmem [shape: bf16[128,128], index: 1, kind: input, shape index: {}]
  %s2 = inlined_call_operand.vmem [shape: f32[1,128], index: 2, kind: input, shape index: {}]
  %s3 = inlined_call_operand.vmem [shape: f32[1,128], index: 3, kind: input, shape index: {}]
  %s4 = inlined_call_operand.vmem [shape: f32[2816,128], index: 4, kind: output, shape index: {}]
  %s5 = sld [smem:[#allocation0]]
  $region57: #{forward.43} parent=0
    _
  %s7 = ssub.s32 1, %s5
  %s8 = scalar_select 0, %s7, %s5
  loop: start=0, step=1, limit=13
  $region2: #{forward.43} parent=0 // loop_pre_header
    _
  $region3: #{forward.43} parent=0 // loop_header
    %s10 = sphi 0, %s14
    %p11 = scmp.ge.s32.totalorder %s10, 13
    %s17 = sphi 0, %s36
    %s18 = sphi 0, %s32
    %s19 = sphi 0, %s28
    %s20 = sphi 0, %s17
    %s21 = sphi 0, %s18
    %s22 = sphi 0, %s19
    %s23 = sphi 0, %s20
    %s24 = sphi 0, %s21
    %s25 = sphi 0, %s22
    %s41 = sphi 0, %s43
    %s44 = sphi 0, %s41
    %s45 = sphi 0, %s44
    %s61 = sphi 0, %s45
    %s69 = sphi 0, %s71
    %s72 = sphi 0, %s69
    %s73 = sphi 0, %s72
    %s89 = sphi 0, %s73
    %s95 = sphi 0, %s97
    %s98 = sphi 0, %s95
    %s99 = sphi 0, %s98
    %s115 = sphi 0, %s99
    %s121 = sphi 0, %s123
    %s124 = sphi 0, %s121
    %s125 = sphi 0, %s124
    %s141 = sphi 0, %s125
    %s149 = sphi 0, %s151
    %s152 = sphi 0, %s149
    %s153 = sphi 0, %s152
    %s169 = sphi 0, %s153
  $region4: #{forward.43} parent=0 // loop_header_branch
    %13 = sbr.rel (%p11) target = $region8
  $region5: #{forward.43} parent=0 // loop_body
    %s15 = ssub.s32 %s10, 1
    %s16 = ssub.s32 %s10, 2
    %s26 = sadd.s32 1, %s19
    %p27 = scmp.ge.s32.totalorder %s26, 1
    %s28 = scalar_select %p27, 0, %s26
    %s29 = sadd.s32 1, %s18
    %s30 = scalar_select %p27, %s29, %s18
    %p31 = scmp.ge.s32.totalorder %s30, 1
    %s32 = scalar_select %p31, 0, %s30
    %s33 = sadd.s32 1, %s17
    %s34 = scalar_select %p31, %s33, %s17
    %p35 = scmp.ge.s32.totalorder %s34, 11
    %s36 = scalar_select %p35, 0, %s34
    %s37 = ssub.s32 %s17, %s36
    %s38 = ssub.s32 %s19, %s28
    %s39 = sor.u32 %s37, %s38
    %p40 = scmp.eq.s32.totalorder %s39, 0
    %s42 = sadd.s32 %s41, 1
    %s43 = scalar_select %p40, %s41, %s42
    %p46 = pneg %p40
    %p47 = scmp.eq.s32.totalorder %s10, 10
    %p48 = por %p46, %p47
    %p49 = scmp.ne.s32.totalorder %s41, %s44
    %p50 = scmp.eq.s32.totalorder %s10, 0
    %p51 = por %p49, %p50
    %p52 = scmp.ne.s32.totalorder %s41, %s44
    %p53 = scmp.eq.s32.totalorder %s15, 10
    %p54 = por %p52, %p53
    %p55 = scmp.ne.s32.totalorder %s44, %s45
    %p56 = scmp.eq.s32.totalorder %s15, 0
    %p57 = por %p55, %p56
    %p58 = scmp.ne.s32.totalorder %s44, %s45
    %p59 = scmp.eq.s32.totalorder %s16, 10
    %p60 = por %p58, %p59
    %p62 = scmp.ne.s32.totalorder %s45, %s61
    %p63 = scmp.eq.s32.totalorder %s16, 0
    %p64 = por %p62, %p63
    %s65 = ssub.s32 %s19, %s28
    %s66 = ssub.s32 %s18, %s32
    %s67 = sor.u32 %s65, %s66
    %p68 = scmp.eq.s32.totalorder %s67, 0
    %s70 = sadd.s32 %s69, 1
    %s71 = scalar_select %p68, %s69, %s70
    %p74 = pneg %p68
    %p75 = scmp.eq.s32.totalorder %s10, 10
    %p76 = por %p74, %p75
    %p77 = scmp.ne.s32.totalorder %s69, %s72
    %p78 = scmp.eq.s32.totalorder %s10, 0
    %p79 = por %p77, %p78
    %p80 = scmp.ne.s32.totalorder %s69, %s72
    %p81 = scmp.eq.s32.totalorder %s15, 10
    %p82 = por %p80, %p81
    %p83 = scmp.ne.s32.totalorder %s72, %s73
    %p84 = scmp.eq.s32.totalorder %s15, 0
    %p85 = por %p83, %p84
    %p86 = scmp.ne.s32.totalorder %s72, %s73
    %p87 = scmp.eq.s32.totalorder %s16, 10
    %p88 = por %p86, %p87
    %p90 = scmp.ne.s32.totalorder %s73, %s89
    %p91 = scmp.eq.s32.totalorder %s16, 0
    %p92 = por %p90, %p91
    %s93 = ssub.s32 %s18, %s32
    %p94 = scmp.eq.s32.totalorder %s93, 0
    %s96 = sadd.s32 %s95, 1
    %s97 = scalar_select %p94, %s95, %s96
    %p100 = pneg %p94
    %p101 = scmp.eq.s32.totalorder %s10, 10
    %p102 = por %p100, %p101
    %p103 = scmp.ne.s32.totalorder %s95, %s98
    %p104 = scmp.eq.s32.totalorder %s10, 0
    %p105 = por %p103, %p104
    %p106 = scmp.ne.s32.totalorder %s95, %s98
    %p107 = scmp.eq.s32.totalorder %s15, 10
    %p108 = por %p106, %p107
    %p109 = scmp.ne.s32.totalorder %s98, %s99
    %p110 = scmp.eq.s32.totalorder %s15, 0
    %p111 = por %p109, %p110
    %p112 = scmp.ne.s32.totalorder %s98, %s99
    %p113 = scmp.eq.s32.totalorder %s16, 10
    %p114 = por %p112, %p113
    %p116 = scmp.ne.s32.totalorder %s99, %s115
    %p117 = scmp.eq.s32.totalorder %s16, 0
    %p118 = por %p116, %p117
    %s119 = ssub.s32 %s18, %s32
    %p120 = scmp.eq.s32.totalorder %s119, 0
    %s122 = sadd.s32 %s121, 1
    %s123 = scalar_select %p120, %s121, %s122
    %p126 = pneg %p120
    %p127 = scmp.eq.s32.totalorder %s10, 10
    %p128 = por %p126, %p127
    %p129 = scmp.ne.s32.totalorder %s121, %s124
    %p130 = scmp.eq.s32.totalorder %s10, 0
    %p131 = por %p129, %p130
    %p132 = scmp.ne.s32.totalorder %s121, %s124
    %p133 = scmp.eq.s32.totalorder %s15, 10
    %p134 = por %p132, %p133
    %p135 = scmp.ne.s32.totalorder %s124, %s125
    %p136 = scmp.eq.s32.totalorder %s15, 0
    %p137 = por %p135, %p136
    %p138 = scmp.ne.s32.totalorder %s124, %s125
    %p139 = scmp.eq.s32.totalorder %s16, 10
    %p140 = por %p138, %p139
    %p142 = scmp.ne.s32.totalorder %s125, %s141
    %p143 = scmp.eq.s32.totalorder %s16, 0
    %p144 = por %p142, %p143
    %s145 = ssub.s32 %s17, %s36
    %s146 = ssub.s32 %s18, %s32
    %s147 = sor.u32 %s145, %s146
    %p148 = scmp.eq.s32.totalorder %s147, 0
    %s150 = sadd.s32 %s149, 1
    %s151 = scalar_select %p148, %s149, %s150
    %p154 = pneg %p148
    %p155 = scmp.eq.s32.totalorder %s10, 10
    %p156 = por %p154, %p155
    %p157 = scmp.ne.s32.totalorder %s149, %s152
    %p158 = scmp.eq.s32.totalorder %s10, 0
    %p159 = por %p157, %p158
    %p160 = scmp.ne.s32.totalorder %s149, %s152
    %p161 = scmp.eq.s32.totalorder %s15, 10
    %p162 = por %p160, %p161
    %p163 = scmp.ne.s32.totalorder %s152, %s153
    %p164 = scmp.eq.s32.totalorder %s15, 0
    %p165 = por %p163, %p164
    %p166 = scmp.ne.s32.totalorder %s152, %s153
    %p167 = scmp.eq.s32.totalorder %s16, 10
    %p168 = por %p166, %p167
    %p170 = scmp.ne.s32.totalorder %s153, %s169
    %p171 = scmp.eq.s32.totalorder %s16, 0
    %p172 = por %p170, %p171
    %p173 = scmp.le.s32.totalorder 1, %s10
    %p174 = scmp.lt.s32.totalorder %s10, 12
    %p175 = pnand %p173, %p174
    %p176 = pneg %p175
    // Predicated region
    $region9: #{forward.43} parent=5 // pred_check
      _
    $region10: #{forward.43} parent=5 // pred_check_branch
      %178 = sbr.rel (%p175) target = $region12
    $region11: #{forward.43} parent=5 // pred_region
      %s179 = ssub.s32 %s10, 1
      // Predicated region
      $region13: #{forward.43} parent=11 // pred_check
        %p180 = pneg %p85
      $region14: #{forward.43} parent=11 // pred_check_branch
        %182 = sbr.rel (%p180) target = $region16
      $region15: #{forward.43} parent=11 // pred_region
        %s183 = smul.u32 16, %s22
        %p184 = scmp.lt.s32.totalorder %s183, 15
        %s185 = scalar_select %p184, %s183, 15
        %p186 = scmp.lt.s32.totalorder %s21, 0
        %s187 = scalar_select %p186, %s21, 0
        %s188 = sadd.s32 %s187, %s185
        %s189 = smul.addr %s188, 4
        %s190 = scalar_lea.vmem %s1, %s189
        %s191 = smul.u32 16, %s22
      $region16: #{forward.43} parent=11 // pred_fallthru
        _
      // Predicated region
      $region17: #{forward.43} parent=11 // pred_check
        %p192 = pneg %p111
      $region18: #{forward.43} parent=11 // pred_check_branch
        %194 = sbr.rel (%p192) target = $region20
      $region19: #{forward.43} parent=11 // pred_region
        %p195 = scmp.lt.s32.totalorder %s21, 0
        %s196 = scalar_select %p195, %s21, 0
        %s197 = scalar_lea.vmem %s2, %s196
      $region20: #{forward.43} parent=11 // pred_fallthru
        _
      // Predicated region
      $region21: #{forward.43} parent=11 // pred_check
        %p198 = pneg %p137
      $region22: #{forward.43} parent=11 // pred_check_branch
        %200 = sbr.rel (%p198) target = $region24
      $region23: #{forward.43} parent=11 // pred_region
        %p201 = scmp.lt.s32.totalorder %s21, 0
        %s202 = scalar_select %p201, %s21, 0
        %s203 = scalar_lea.vmem %s3, %s202
      $region24: #{forward.43} parent=11 // pred_fallthru
        _
    $region12: #{forward.43} parent=5 // pred_fallthru
      _
    %p204 = scmp.lt.s32.totalorder %s10, 11
    // Predicated region
    $region25: #{forward.43} parent=5 // pred_check
      %p205 = pneg %p204
    $region26: #{forward.43} parent=5 // pred_check_branch
      %207 = sbr.rel (%p205) target = $region28
    $region27: #{forward.43} parent=5 // pred_region
      // Predicated region
      $region29: #{forward.43} parent=27 // pred_check
        %p208 = pneg %p51
      $region30: #{forward.43} parent=27 // pred_check_branch
        %210 = sbr.rel (%p208) target = $region32
      $region31: #{forward.43} parent=27 // pred_region
        %s211 = smul.u32 32, %s17
        %p212 = scmp.lt.s32.totalorder %s211, 351
        %s213 = scalar_select %p212, %s211, 351
        %p214 = scmp.lt.s32.totalorder %s19, 0
        %s215 = scalar_select %p214, %s19, 0
        %s216 = sadd.s32 %s215, %s213
        %s217 = smul.addr %s216, 4
        %s218 = scalar_lea.vmem %s0, %s217
        %s219 = smul.u32 32, %s17
      $region32: #{forward.43} parent=27 // pred_fallthru
        _
    $region28: #{forward.43} parent=5 // pred_fallthru
      _
    %p220 = scmp.le.s32.totalorder 1, %s10
    %p221 = scmp.lt.s32.totalorder %s10, 12
    %p222 = pnand %p220, %p221
    %p223 = pneg %p222
    // Predicated region
    $region33: #{forward.43} parent=5 // pred_check
      _
    $region34: #{forward.43} parent=5 // pred_check_branch
      %225 = sbr.rel (%p222) target = $region36
    $region35: #{forward.43} parent=5 // pred_region
      %s226 = ssub.s32 %s10, 1
      %s227 = smul.u32 32, %s20
      %p228 = scmp.lt.s32.totalorder %s227, 351
      %s229 = scalar_select %p228, %s227, 351
      %p230 = scmp.lt.s32.totalorder %s22, 0
      %s231 = scalar_select %p230, %s22, 0
      %s232 = sadd.s32 %s231, %s229
      %s233 = smul.addr %s232, 4
      %s234 = scalar_lea.vmem %s0, %s233
      %p235 = pneg %p57
      %p236 = pneg %p54
      %s237 = smul.u32 16, %s22
      %p238 = scmp.lt.s32.totalorder %s237, 15
      %s239 = scalar_select %p238, %s237, 15
      %p240 = scmp.lt.s32.totalorder %s21, 0
      %s241 = scalar_select %p240, %s21, 0
      %s242 = sadd.s32 %s241, %s239
      %s243 = smul.addr %s242, 4
      %s244 = scalar_lea.vmem %s1, %s243
      %p245 = pneg %p85
      %p246 = pneg %p82
      %p247 = scmp.lt.s32.totalorder %s21, 0
      %s248 = scalar_select %p247, %s21, 0
      %s249 = scalar_lea.vmem %s2, %s248
      %p250 = pneg %p111
      %p251 = pneg %p108
      %p252 = scmp.lt.s32.totalorder %s21, 0
      %s253 = scalar_select %p252, %s21, 0
      %s254 = scalar_lea.vmem %s3, %s253
      %p255 = pneg %p137
      %p256 = pneg %p134
      %p257 = pneg %p165
      %p258 = pneg %p162
      %s259 = smul.u32 32, %s20
      %p260 = scmp.lt.s32.totalorder %s259, 351
      %s261 = scalar_select %p260, %s259, 351
      %p262 = scmp.lt.s32.totalorder %s21, 0
      %s263 = scalar_select %p262, %s21, 0
      %s264 = sadd.s32 %s263, %s261
      %s265 = smul.addr %s264, 8
      %s266 = scalar_lea.vmem %s4, %s265
      %s267 = smul.u32 32, %s20
      %p268 = scmp.lt.s32.totalorder %s267, 351
      %s269 = scalar_select %p268, %s267, 351
      %p270 = scmp.lt.s32.totalorder %s22, 0
      %s271 = scalar_select %p270, %s22, 0
      %s272 = sadd.s32 %s271, %s269
      %s273 = smul.addr %s272, 4
      %s274 = scalar_lea.vmem %s0, %s273
      %s275 = smul.u32 32, %s20
      %s276 = smul.u32 16, %s22
      %p277 = scmp.lt.s32.totalorder %s276, 15
      %s278 = scalar_select %p277, %s276, 15
      %p279 = scmp.lt.s32.totalorder %s21, 0
      %s280 = scalar_select %p279, %s21, 0
      %s281 = sadd.s32 %s280, %s278
      %s282 = smul.addr %s281, 4
      %s283 = scalar_lea.vmem %s1, %s282
      %s284 = smul.u32 16, %s22
      %p285 = scmp.lt.s32.totalorder %s21, 0
      %s286 = scalar_select %p285, %s21, 0
      %s287 = scalar_lea.vmem %s2, %s286
      %p288 = scmp.lt.s32.totalorder %s21, 0
      %s289 = scalar_select %p288, %s21, 0
      %s290 = scalar_lea.vmem %s3, %s289
      %s291 = smul.u32 32, %s20
      %p292 = scmp.lt.s32.totalorder %s291, 351
      %s293 = scalar_select %p292, %s291, 351
      %p294 = scmp.lt.s32.totalorder %s21, 0
      %s295 = scalar_select %p294, %s21, 0
      %s296 = sadd.s32 %s295, %s293
      %s297 = smul.addr %s296, 8
      %s298 = scalar_lea.vmem %s4, %s297
      %s299 = smul.u32 32, %s20
      %p301 = scmp.eq.s32.totalorder %s22, 0
      // Predicated region
      $region37: #{forward.43} parent=35 // pred_check
        %p302 = pneg %p301
      $region38: #{forward.43} parent=35 // pred_check_branch
        %304 = sbr.rel (%p302) target = $region40
      $region39: #{forward.43} parent=35 // pred_region
        %305 = vst [vmem:[#allocation2] sm:$0xff] 0.0
        %306 = vst [vmem:[#allocation2 + $0x8] sm:$0xff] 0.0
        %307 = vst [vmem:[#allocation2 + $0x10] sm:$0xff] 0.0
        %308 = vst [vmem:[#allocation2 + $0x18] sm:$0xff] 0.0
        %309 = vst [vmem:[#allocation2 + $0x20] sm:$0xff] 0.0
        %310 = vst [vmem:[#allocation2 + $0x28] sm:$0xff] 0.0
        %311 = vst [vmem:[#allocation2 + $0x30] sm:$0xff] 0.0
        %312 = vst [vmem:[#allocation2 + $0x38] sm:$0xff] 0.0
        %313 = vst [vmem:[#allocation2 + $0x40] sm:$0xff] 0.0
        %314 = vst [vmem:[#allocation2 + $0x48] sm:$0xff] 0.0
        %315 = vst [vmem:[#allocation2 + $0x50] sm:$0xff] 0.0
        %316 = vst [vmem:[#allocation2 + $0x58] sm:$0xff] 0.0
        %317 = vst [vmem:[#allocation2 + $0x60] sm:$0xff] 0.0
        %318 = vst [vmem:[#allocation2 + $0x68] sm:$0xff] 0.0
        %319 = vst [vmem:[#allocation2 + $0x70] sm:$0xff] 0.0
        %320 = vst [vmem:[#allocation2 + $0x78] sm:$0xff] 0.0
        %321 = vst [vmem:[#allocation2 + $0x80] sm:$0xff] 0.0
        %322 = vst [vmem:[#allocation2 + $0x88] sm:$0xff] 0.0
        %323 = vst [vmem:[#allocation2 + $0x90] sm:$0xff] 0.0
        %324 = vst [vmem:[#allocation2 + $0x98] sm:$0xff] 0.0
        %325 = vst [vmem:[#allocation2 + $0xa0] sm:$0xff] 0.0
        %326 = vst [vmem:[#allocation2 + $0xa8] sm:$0xff] 0.0
        %327 = vst [vmem:[#allocation2 + $0xb0] sm:$0xff] 0.0
        %328 = vst [vmem:[#allocation2 + $0xb8] sm:$0xff] 0.0
        %329 = vst [vmem:[#allocation2 + $0xc0] sm:$0xff] 0.0
        %330 = vst [vmem:[#allocation2 + $0xc8] sm:$0xff] 0.0
        %331 = vst [vmem:[#allocation2 + $0xd0] sm:$0xff] 0.0
        %332 = vst [vmem:[#allocation2 + $0xd8] sm:$0xff] 0.0
        %333 = vst [vmem:[#allocation2 + $0xe0] sm:$0xff] 0.0
        %334 = vst [vmem:[#allocation2 + $0xe8] sm:$0xff] 0.0
        %335 = vst [vmem:[#allocation2 + $0xf0] sm:$0xff] 0.0
        %336 = vst [vmem:[#allocation2 + $0xf8] sm:$0xff] 0.0
      $region40: #{forward.43} parent=35 // pred_fallthru
        _
      %v337 = vld [vmem:[#allocation2] sm:$0xff]
      %v338 = vld [vmem:[#allocation2 + $0x8] sm:$0xff]
      %v339 = vld [vmem:[#allocation2 + $0x10] sm:$0xff]
      %v340 = vld [vmem:[#allocation2 + $0x18] sm:$0xff]
      %v341 = vld [vmem:[#allocation2 + $0x20] sm:$0xff]
      %v342 = vld [vmem:[#allocation2 + $0x28] sm:$0xff]
      %v343 = vld [vmem:[#allocation2 + $0x30] sm:$0xff]
      %v344 = vld [vmem:[#allocation2 + $0x38] sm:$0xff]
      %v345 = vld [vmem:[#allocation2 + $0x40] sm:$0xff]
      %v346 = vld [vmem:[#allocation2 + $0x48] sm:$0xff]
      %v347 = vld [vmem:[#allocation2 + $0x50] sm:$0xff]
      %v348 = vld [vmem:[#allocation2 + $0x58] sm:$0xff]
      %v349 = vld [vmem:[#allocation2 + $0x60] sm:$0xff]
      %v350 = vld [vmem:[#allocation2 + $0x68] sm:$0xff]
      %v351 = vld [vmem:[#allocation2 + $0x70] sm:$0xff]
      %v352 = vld [vmem:[#allocation2 + $0x78] sm:$0xff]
      %v353 = vld [vmem:[#allocation2 + $0x80] sm:$0xff]
      %v354 = vld [vmem:[#allocation2 + $0x88] sm:$0xff]
      %v355 = vld [vmem:[#allocation2 + $0x90] sm:$0xff]
      %v356 = vld [vmem:[#allocation2 + $0x98] sm:$0xff]
      %v357 = vld [vmem:[#allocation2 + $0xa0] sm:$0xff]
      %v358 = vld [vmem:[#allocation2 + $0xa8] sm:$0xff]
      %v359 = vld [vmem:[#allocation2 + $0xb0] sm:$0xff]
      %v360 = vld [vmem:[#allocation2 + $0xb8] sm:$0xff]
      %v361 = vld [vmem:[#allocation2 + $0xc0] sm:$0xff]
      %v362 = vld [vmem:[#allocation2 + $0xc8] sm:$0xff]
      %v363 = vld [vmem:[#allocation2 + $0xd0] sm:$0xff]
      %v364 = vld [vmem:[#allocation2 + $0xd8] sm:$0xff]
      %v365 = vld [vmem:[#allocation2 + $0xe0] sm:$0xff]
      %v366 = vld [vmem:[#allocation2 + $0xe8] sm:$0xff]
      %v367 = vld [vmem:[#allocation2 + $0xf0] sm:$0xff]
      %v368 = vld [vmem:[#allocation2 + $0xf8] sm:$0xff]
      %v369 = vld [vmem:[%s274] sm:$0xf]
      %v370 = vld [vmem:[%s274 + $0x4] sm:$0xf]
      %v371 = vld [vmem:[%s274 + $0x8] sm:$0xf]
      %v372 = vld [vmem:[%s274 + $0xc] sm:$0xf]
      %v373 = vld [vmem:[%s274 + $0x10] sm:$0xf]
      %v374 = vld [vmem:[%s274 + $0x14] sm:$0xf]
      %v375 = vld [vmem:[%s274 + $0x18] sm:$0xf]
      %v376 = vld [vmem:[%s274 + $0x1c] sm:$0xf]
      %v377 = vld [vmem:[%s274 + $0x20] sm:$0xf]
      %v378 = vld [vmem:[%s274 + $0x24] sm:$0xf]
      %v379 = vld [vmem:[%s274 + $0x28] sm:$0xf]
      %v380 = vld [vmem:[%s274 + $0x2c] sm:$0xf]
      %v381 = vld [vmem:[%s274 + $0x30] sm:$0xf]
      %v382 = vld [vmem:[%s274 + $0x34] sm:$0xf]
      %v383 = vld [vmem:[%s274 + $0x38] sm:$0xf]
      %v384 = vld [vmem:[%s274 + $0x3c] sm:$0xf]
      %v385 = vld [vmem:[%s274 + $0x40] sm:$0xf]
      %v386 = vld [vmem:[%s274 + $0x44] sm:$0xf]
      %v387 = vld [vmem:[%s274 + $0x48] sm:$0xf]
      %v388 = vld [vmem:[%s274 + $0x4c] sm:$0xf]
      %v389 = vld [vmem:[%s274 + $0x50] sm:$0xf]
      %v390 = vld [vmem:[%s274 + $0x54] sm:$0xf]
      %v391 = vld [vmem:[%s274 + $0x58] sm:$0xf]
      %v392 = vld [vmem:[%s274 + $0x5c] sm:$0xf]
      %v393 = vld [vmem:[%s274 + $0x60] sm:$0xf]
      %v394 = vld [vmem:[%s274 + $0x64] sm:$0xf]
      %v395 = vld [vmem:[%s274 + $0x68] sm:$0xf]
      %v396 = vld [vmem:[%s274 + $0x6c] sm:$0xf]
      %v397 = vld [vmem:[%s274 + $0x70] sm:$0xf]
      %v398 = vld [vmem:[%s274 + $0x74] sm:$0xf]
      %v399 = vld [vmem:[%s274 + $0x78] sm:$0xf]
      %v400 = vld [vmem:[%s274 + $0x7c] sm:$0xf]
      %v401 = vld [vmem:[%s283] sm:$0xf]
      %v402 = vld [vmem:[%s283 + $0x4] sm:$0xf]
      %v403 = vld [vmem:[%s283 + $0x8] sm:$0xf]
      %v404 = vld [vmem:[%s283 + $0xc] sm:$0xf]
      %v405 = vld [vmem:[%s283 + $0x10] sm:$0xf]
      %v406 = vld [vmem:[%s283 + $0x14] sm:$0xf]
      %v407 = vld [vmem:[%s283 + $0x18] sm:$0xf]
      %v408 = vld [vmem:[%s283 + $0x1c] sm:$0xf]
      %v409 = vld [vmem:[%s283 + $0x20] sm:$0xf]
      %v410 = vld [vmem:[%s283 + $0x24] sm:$0xf]
      %v411 = vld [vmem:[%s283 + $0x28] sm:$0xf]
      %v412 = vld [vmem:[%s283 + $0x2c] sm:$0xf]
      %v413 = vld [vmem:[%s283 + $0x30] sm:$0xf]
      %v414 = vld [vmem:[%s283 + $0x34] sm:$0xf]
      %v415 = vld [vmem:[%s283 + $0x38] sm:$0xf]
      %v416 = vld [vmem:[%s283 + $0x3c] sm:$0xf]
      %v449 = vunpack.c.l.b16 %v369
      %v450 = vunpack.c.l.b16 %v370
      %v451 = vunpack.c.l.b16 %v371
      %v452 = vunpack.c.l.b16 %v372
      %v453 = vunpack.c.l.b16 %v373
      %v454 = vunpack.c.l.b16 %v374
      %v455 = vunpack.c.l.b16 %v375
      %v456 = vunpack.c.l.b16 %v376
      %v457 = vunpack.c.l.b16 %v377
      %v458 = vunpack.c.l.b16 %v378
      %v459 = vunpack.c.l.b16 %v379
      %v460 = vunpack.c.l.b16 %v380
      %v461 = vunpack.c.l.b16 %v381
      %v462 = vunpack.c.l.b16 %v382
      %v463 = vunpack.c.l.b16 %v383
      %v464 = vunpack.c.l.b16 %v384
      %v465 = vunpack.c.l.b16 %v385
      %v466 = vunpack.c.l.b16 %v386
      %v467 = vunpack.c.l.b16 %v387
      %v468 = vunpack.c.l.b16 %v388
      %v469 = vunpack.c.l.b16 %v389
      %v470 = vunpack.c.l.b16 %v390
      %v471 = vunpack.c.l.b16 %v391
      %v472 = vunpack.c.l.b16 %v392
      %v473 = vunpack.c.l.b16 %v393
      %v474 = vunpack.c.l.b16 %v394
      %v475 = vunpack.c.l.b16 %v395
      %v476 = vunpack.c.l.b16 %v396
      %v477 = vunpack.c.l.b16 %v397
      %v478 = vunpack.c.l.b16 %v398
      %v479 = vunpack.c.l.b16 %v399
      %v480 = vunpack.c.l.b16 %v400
      %v481 = vpack.c.b16 %v450, %v449
      %v482 = vpack.c.b16 %v452, %v451
      %v483 = vpack.c.b16 %v454, %v453
      %v484 = vpack.c.b16 %v456, %v455
      %v485 = vpack.c.b16 %v458, %v457
      %v486 = vpack.c.b16 %v460, %v459
      %v487 = vpack.c.b16 %v462, %v461
      %v488 = vpack.c.b16 %v464, %v463
      %v489 = vpack.c.b16 %v466, %v465
      %v490 = vpack.c.b16 %v468, %v467
      %v491 = vpack.c.b16 %v470, %v469
      %v492 = vpack.c.b16 %v472, %v471
      %v493 = vpack.c.b16 %v474, %v473
      %v494 = vpack.c.b16 %v476, %v475
      %v495 = vpack.c.b16 %v478, %v477
      %v496 = vpack.c.b16 %v480, %v479
      %v529 = vunpack.c.l.b16 %v401
      %v530 = vunpack.c.l.b16 %v402
      %v531 = vunpack.c.l.b16 %v403
      %v532 = vunpack.c.l.b16 %v404
      %v533 = vunpack.c.l.b16 %v405
      %v534 = vunpack.c.l.b16 %v406
      %v535 = vunpack.c.l.b16 %v407
      %v536 = vunpack.c.l.b16 %v408
      %v537 = vunpack.c.l.b16 %v409
      %v538 = vunpack.c.l.b16 %v410
      %v539 = vunpack.c.l.b16 %v411
      %v540 = vunpack.c.l.b16 %v412
      %v541 = vunpack.c.l.b16 %v413
      %v542 = vunpack.c.l.b16 %v414
      %v543 = vunpack.c.l.b16 %v415
      %v544 = vunpack.c.l.b16 %v416
      %v545 = vpack.c.b16 %v530, %v529
      %v546 = vpack.c.b16 %v532, %v531
      %v547 = vpack.c.b16 %v534, %v533
      %v548 = vpack.c.b16 %v536, %v535
      %v549 = vpack.c.b16 %v538, %v537
      %v550 = vpack.c.b16 %v540, %v539
      %v551 = vpack.c.b16 %v542, %v541
      %v552 = vpack.c.b16 %v544, %v543
      %561 = vmatprep.subr.bf16.mxu0 0
      %562 = vmatpush1.bf16.msra.mxu0 %v552
      %563 = vmatprep.subr.bf16.mxu0 0
      %564 = vmatpush1.bf16.msra.mxu0 %v551
      %565 = vmatprep.subr.bf16.mxu0 0
      %566 = vmatpush1.bf16.msra.mxu0 %v550
      %567 = vmatprep.subr.bf16.mxu0 0
      %568 = vmatpush1.bf16.msra.mxu0 %v549
      %569 = vmatprep.subr.bf16.mxu0 0
      %570 = vmatpush1.bf16.msra.mxu0 %v548
      %571 = vmatprep.subr.bf16.mxu0 0
      %572 = vmatpush1.bf16.msra.mxu0 %v547
      %573 = vmatprep.subr.bf16.mxu0 0
      %574 = vmatpush1.bf16.msra.mxu0 %v546
      %575 = vmatprep.subr.bf16.mxu0 0
      %576 = vmatpush1.bf16.msra.mxu0 %v545
      %577 = vmatprep.subr.bf16.mxu0 0
      %578 = vmatpush2.bf16.msra.mxu0 0
      %579 = vmatprep.subr.bf16.mxu0 0
      %580 = vmatpush2.bf16.msra.mxu0 0
      %581 = vmatprep.subr.bf16.mxu0 0
      %582 = vmatpush2.bf16.msra.mxu0 0
      %583 = vmatprep.subr.bf16.mxu0 0
      %584 = vmatpush2.bf16.msra.mxu0 0
      %585 = vmatprep.subr.bf16.mxu0 0
      %586 = vmatpush2.bf16.msra.mxu0 0
      %587 = vmatprep.subr.bf16.mxu0 0
      %588 = vmatpush2.bf16.msra.mxu0 0
      %589 = vmatprep.subr.bf16.mxu0 0
      %590 = vmatpush2.bf16.msra.mxu0 0
      %591 = vmatprep.subr.bf16.mxu0 0
      %592 = vmatpush2.bf16.msra.mxu0 0
      %593 = vmatprep.mubr.bf16.mxu0 0
      %594 = vmatmul.mubr.bf16.gmra.mxu0 %v481
      %v595 = vpop.f32.mrf.mxu0
      %v596 = vadd.f32 0.0, %v595
      %v597 = vpop.f32.mrf.mxu0
      %v598 = vpop.f32.mrf.mxu0
      %v599 = vadd.f32 0.0, %v598
      %v600 = vpop.f32.mrf.mxu0
      %601 = vmatprep.mubr.bf16.mxu0 0
      %602 = vmatmul.mubr.bf16.gmra.mxu0 %v482
      %v603 = vpop.f32.mrf.mxu0
      %v604 = vadd.f32 0.0, %v603
      %v605 = vpop.f32.mrf.mxu0
      %v606 = vpop.f32.mrf.mxu0
      %v607 = vadd.f32 0.0, %v606
      %v608 = vpop.f32.mrf.mxu0
      %609 = vmatprep.mubr.bf16.mxu0 0
      %610 = vmatmul.mubr.bf16.gmra.mxu0 %v483
      %v611 = vpop.f32.mrf.mxu0
      %v612 = vadd.f32 0.0, %v611
      %v613 = vpop.f32.mrf.mxu0
      %v614 = vpop.f32.mrf.mxu0
      %v615 = vadd.f32 0.0, %v614
      %v616 = vpop.f32.mrf.mxu0
      %617 = vmatprep.mubr.bf16.mxu0 0
      %618 = vmatmul.mubr.bf16.gmra.mxu0 %v484
      %v619 = vpop.f32.mrf.mxu0
      %v620 = vadd.f32 0.0, %v619
      %v621 = vpop.f32.mrf.mxu0
      %v622 = vpop.f32.mrf.mxu0
      %v623 = vadd.f32 0.0, %v622
      %v624 = vpop.f32.mrf.mxu0
      %625 = vmatprep.mubr.bf16.mxu0 0
      %626 = vmatmul.mubr.bf16.gmra.mxu0 %v485
      %v627 = vpop.f32.mrf.mxu0
      %v628 = vadd.f32 0.0, %v627
      %v629 = vpop.f32.mrf.mxu0
      %v630 = vpop.f32.mrf.mxu0
      %v631 = vadd.f32 0.0, %v630
      %v632 = vpop.f32.mrf.mxu0
      %633 = vmatprep.mubr.bf16.mxu0 0
      %634 = vmatmul.mubr.bf16.gmra.mxu0 %v486
      %v635 = vpop.f32.mrf.mxu0
      %v636 = vadd.f32 0.0, %v635
      %v637 = vpop.f32.mrf.mxu0
      %v638 = vpop.f32.mrf.mxu0
      %v639 = vadd.f32 0.0, %v638
      %v640 = vpop.f32.mrf.mxu0
      %641 = vmatprep.mubr.bf16.mxu0 0
      %642 = vmatmul.mubr.bf16.gmra.mxu0 %v487
      %v643 = vpop.f32.mrf.mxu0
      %v644 = vadd.f32 0.0, %v643
      %v645 = vpop.f32.mrf.mxu0
      %v646 = vpop.f32.mrf.mxu0
      %v647 = vadd.f32 0.0, %v646
      %v648 = vpop.f32.mrf.mxu0
      %649 = vmatprep.mubr.bf16.mxu0 0
      %650 = vmatmul.mubr.bf16.gmra.mxu0 %v488
      %v651 = vpop.f32.mrf.mxu0
      %v652 = vadd.f32 0.0, %v651
      %v653 = vpop.f32.mrf.mxu0
      %v654 = vpop.f32.mrf.mxu0
      %v655 = vadd.f32 0.0, %v654
      %v656 = vpop.f32.mrf.mxu0
      %657 = vmatprep.mubr.bf16.mxu0 0
      %658 = vmatmul.mubr.bf16.gmra.mxu0 %v489
      %v659 = vpop.f32.mrf.mxu0
      %v660 = vadd.f32 0.0, %v659
      %v661 = vpop.f32.mrf.mxu0
      %v662 = vpop.f32.mrf.mxu0
      %v663 = vadd.f32 0.0, %v662
      %v664 = vpop.f32.mrf.mxu0
      %665 = vmatprep.mubr.bf16.mxu0 0
      %666 = vmatmul.mubr.bf16.gmra.mxu0 %v490
      %v667 = vpop.f32.mrf.mxu0
      %v668 = vadd.f32 0.0, %v667
      %v669 = vpop.f32.mrf.mxu0
      %v670 = vpop.f32.mrf.mxu0
      %v671 = vadd.f32 0.0, %v670
      %v672 = vpop.f32.mrf.mxu0
      %673 = vmatprep.mubr.bf16.mxu0 0
      %674 = vmatmul.mubr.bf16.gmra.mxu0 %v491
      %v675 = vpop.f32.mrf.mxu0
      %v676 = vadd.f32 0.0, %v675
      %v677 = vpop.f32.mrf.mxu0
      %v678 = vpop.f32.mrf.mxu0
      %v679 = vadd.f32 0.0, %v678
      %v680 = vpop.f32.mrf.mxu0
      %681 = vmatprep.mubr.bf16.mxu0 0
      %682 = vmatmul.mubr.bf16.gmra.mxu0 %v492
      %v683 = vpop.f32.mrf.mxu0
      %v684 = vadd.f32 0.0, %v683
      %v685 = vpop.f32.mrf.mxu0
      %v686 = vpop.f32.mrf.mxu0
      %v687 = vadd.f32 0.0, %v686
      %v688 = vpop.f32.mrf.mxu0
      %689 = vmatprep.mubr.bf16.mxu0 0
      %690 = vmatmul.mubr.bf16.gmra.mxu0 %v493
      %v691 = vpop.f32.mrf.mxu0
      %v692 = vadd.f32 0.0, %v691
      %v693 = vpop.f32.mrf.mxu0
      %v694 = vpop.f32.mrf.mxu0
      %v695 = vadd.f32 0.0, %v694
      %v696 = vpop.f32.mrf.mxu0
      %697 = vmatprep.mubr.bf16.mxu0 0
      %698 = vmatmul.mubr.bf16.gmra.mxu0 %v494
      %v699 = vpop.f32.mrf.mxu0
      %v700 = vadd.f32 0.0, %v699
      %v701 = vpop.f32.mrf.mxu0
      %v702 = vpop.f32.mrf.mxu0
      %v703 = vadd.f32 0.0, %v702
      %v704 = vpop.f32.mrf.mxu0
      %705 = vmatprep.mubr.bf16.mxu0 0
      %706 = vmatmul.mubr.bf16.gmra.mxu0 %v495
      %v707 = vpop.f32.mrf.mxu0
      %v708 = vadd.f32 0.0, %v707
      %v709 = vpop.f32.mrf.mxu0
      %v710 = vpop.f32.mrf.mxu0
      %v711 = vadd.f32 0.0, %v710
      %v712 = vpop.f32.mrf.mxu0
      %713 = vmatprep.mubr.bf16.mxu0 0
      %714 = vmatmul.mubr.bf16.gmra.mxu0 %v496
      %v715 = vpop.f32.mrf.mxu0
      %v716 = vadd.f32 0.0, %v715
      %v717 = vpop.f32.mrf.mxu0
      %v718 = vpop.f32.mrf.mxu0
      %v719 = vadd.f32 0.0, %v718
      %v720 = vpop.f32.mrf.mxu0
      %721 = vdwg.mxu0
      %v722 = vadd.f32 %v337, %v596
      %v723 = vadd.f32 %v338, %v599
      %v724 = vadd.f32 %v339, %v604
      %v725 = vadd.f32 %v340, %v607
      %v726 = vadd.f32 %v341, %v612
      %v727 = vadd.f32 %v342, %v615
      %v728 = vadd.f32 %v343, %v620
      %v729 = vadd.f32 %v344, %v623
      %v730 = vadd.f32 %v345, %v628
      %v731 = vadd.f32 %v346, %v631
      %v732 = vadd.f32 %v347, %v636
      %v733 = vadd.f32 %v348, %v639
      %v734 = vadd.f32 %v349, %v644
      %v735 = vadd.f32 %v350, %v647
      %v736 = vadd.f32 %v351, %v652
      %v737 = vadd.f32 %v352, %v655
      %v738 = vadd.f32 %v353, %v660
      %v739 = vadd.f32 %v354, %v663
      %v740 = vadd.f32 %v355, %v668
      %v741 = vadd.f32 %v356, %v671
      %v742 = vadd.f32 %v357, %v676
      %v743 = vadd.f32 %v358, %v679
      %v744 = vadd.f32 %v359, %v684
      %v745 = vadd.f32 %v360, %v687
      %v746 = vadd.f32 %v361, %v692
      %v747 = vadd.f32 %v362, %v695
      %v748 = vadd.f32 %v363, %v700
      %v749 = vadd.f32 %v364, %v703
      %v750 = vadd.f32 %v365, %v708
      %v751 = vadd.f32 %v366, %v711
      %v752 = vadd.f32 %v367, %v716
      %v753 = vadd.f32 %v368, %v719
      %754 = vst [vmem:[#allocation2] sm:$0xff] %v722
      %755 = vst [vmem:[#allocation2 + $0x8] sm:$0xff] %v723
      %756 = vst [vmem:[#allocation2 + $0x10] sm:$0xff] %v724
      %757 = vst [vmem:[#allocation2 + $0x18] sm:$0xff] %v725
      %758 = vst [vmem:[#allocation2 + $0x20] sm:$0xff] %v726
      %759 = vst [vmem:[#allocation2 + $0x28] sm:$0xff] %v727
      %760 = vst [vmem:[#allocation2 + $0x30] sm:$0xff] %v728
      %761 = vst [vmem:[#allocation2 + $0x38] sm:$0xff] %v729
      %762 = vst [vmem:[#allocation2 + $0x40] sm:$0xff] %v730
      %763 = vst [vmem:[#allocation2 + $0x48] sm:$0xff] %v731
      %764 = vst [vmem:[#allocation2 + $0x50] sm:$0xff] %v732
      %765 = vst [vmem:[#allocation2 + $0x58] sm:$0xff] %v733
      %766 = vst [vmem:[#allocation2 + $0x60] sm:$0xff] %v734
      %767 = vst [vmem:[#allocation2 + $0x68] sm:$0xff] %v735
      %768 = vst [vmem:[#allocation2 + $0x70] sm:$0xff] %v736
      %769 = vst [vmem:[#allocation2 + $0x78] sm:$0xff] %v737
      %770 = vst [vmem:[#allocation2 + $0x80] sm:$0xff] %v738
      %771 = vst [vmem:[#allocation2 + $0x88] sm:$0xff] %v739
      %772 = vst [vmem:[#allocation2 + $0x90] sm:$0xff] %v740
      %773 = vst [vmem:[#allocation2 + $0x98] sm:$0xff] %v741
      %774 = vst [vmem:[#allocation2 + $0xa0] sm:$0xff] %v742
      %775 = vst [vmem:[#allocation2 + $0xa8] sm:$0xff] %v743
      %776 = vst [vmem:[#allocation2 + $0xb0] sm:$0xff] %v744
      %777 = vst [vmem:[#allocation2 + $0xb8] sm:$0xff] %v745
      %778 = vst [vmem:[#allocation2 + $0xc0] sm:$0xff] %v746
      %779 = vst [vmem:[#allocation2 + $0xc8] sm:$0xff] %v747
      %780 = vst [vmem:[#allocation2 + $0xd0] sm:$0xff] %v748
      %781 = vst [vmem:[#allocation2 + $0xd8] sm:$0xff] %v749
      %782 = vst [vmem:[#allocation2 + $0xe0] sm:$0xff] %v750
      %783 = vst [vmem:[#allocation2 + $0xe8] sm:$0xff] %v751
      %784 = vst [vmem:[#allocation2 + $0xf0] sm:$0xff] %v752
      %785 = vst [vmem:[#allocation2 + $0xf8] sm:$0xff] %v753
      // Predicated region
      $region41: #{forward.43} parent=35 // pred_check
        %p786 = pneg %p301
      $region42: #{forward.43} parent=35 // pred_check_branch
        %788 = sbr.rel (%p786) target = $region44
      $region43: #{forward.43} parent=35 // pred_region
        %v789 = vld [vmem:[#allocation2] sm:$0xff]
        %v790 = vld [vmem:[#allocation2 + $0x8] sm:$0xff]
        %v791 = vld [vmem:[#allocation2 + $0x10] sm:$0xff]
        %v792 = vld [vmem:[#allocation2 + $0x18] sm:$0xff]
        %v793 = vld [vmem:[#allocation2 + $0x20] sm:$0xff]
        %v794 = vld [vmem:[#allocation2 + $0x28] sm:$0xff]
        %v795 = vld [vmem:[#allocation2 + $0x30] sm:$0xff]
        %v796 = vld [vmem:[#allocation2 + $0x38] sm:$0xff]
        %v797 = vld [vmem:[#allocation2 + $0x40] sm:$0xff]
        %v798 = vld [vmem:[#allocation2 + $0x48] sm:$0xff]
        %v799 = vld [vmem:[#allocation2 + $0x50] sm:$0xff]
        %v800 = vld [vmem:[#allocation2 + $0x58] sm:$0xff]
        %v801 = vld [vmem:[#allocation2 + $0x60] sm:$0xff]
        %v802 = vld [vmem:[#allocation2 + $0x68] sm:$0xff]
        %v803 = vld [vmem:[#allocation2 + $0x70] sm:$0xff]
        %v804 = vld [vmem:[#allocation2 + $0x78] sm:$0xff]
        %v805 = vld [vmem:[#allocation2 + $0x80] sm:$0xff]
        %v806 = vld [vmem:[#allocation2 + $0x88] sm:$0xff]
        %v807 = vld [vmem:[#allocation2 + $0x90] sm:$0xff]
        %v808 = vld [vmem:[#allocation2 + $0x98] sm:$0xff]
        %v809 = vld [vmem:[#allocation2 + $0xa0] sm:$0xff]
        %v810 = vld [vmem:[#allocation2 + $0xa8] sm:$0xff]
        %v811 = vld [vmem:[#allocation2 + $0xb0] sm:$0xff]
        %v812 = vld [vmem:[#allocation2 + $0xb8] sm:$0xff]
        %v813 = vld [vmem:[#allocation2 + $0xc0] sm:$0xff]
        %v814 = vld [vmem:[#allocation2 + $0xc8] sm:$0xff]
        %v815 = vld [vmem:[#allocation2 + $0xd0] sm:$0xff]
        %v816 = vld [vmem:[#allocation2 + $0xd8] sm:$0xff]
        %v817 = vld [vmem:[#allocation2 + $0xe0] sm:$0xff]
        %v818 = vld [vmem:[#allocation2 + $0xe8] sm:$0xff]
        %v819 = vld [vmem:[#allocation2 + $0xf0] sm:$0xff]
        %v820 = vld [vmem:[#allocation2 + $0xf8] sm:$0xff]
        %v821 = vld [vmem:[%s287] sm:$0x1]
        %v823 = vlaneseq
        %v824 = vshrl.u32 %v823, 7
        %v825 = vsub.s32 0, %v824
        %v826 = vrot.slane %v821, %v825
        %v828 = vmul.f32 %v789, %v826
        %v829 = vmul.f32 %v790, %v826
        %v830 = vmul.f32 %v791, %v826
        %v831 = vmul.f32 %v792, %v826
        %v832 = vmul.f32 %v793, %v826
        %v833 = vmul.f32 %v794, %v826
        %v834 = vmul.f32 %v795, %v826
        %v835 = vmul.f32 %v796, %v826
        %v836 = vmul.f32 %v797, %v826
        %v837 = vmul.f32 %v798, %v826
        %v838 = vmul.f32 %v799, %v826
        %v839 = vmul.f32 %v800, %v826
        %v840 = vmul.f32 %v801, %v826
        %v841 = vmul.f32 %v802, %v826
        %v842 = vmul.f32 %v803, %v826
        %v843 = vmul.f32 %v804, %v826
        %v844 = vmul.f32 %v805, %v826
        %v845 = vmul.f32 %v806, %v826
        %v846 = vmul.f32 %v807, %v826
        %v847 = vmul.f32 %v808, %v826
        %v848 = vmul.f32 %v809, %v826
        %v849 = vmul.f32 %v810, %v826
        %v850 = vmul.f32 %v811, %v826
        %v851 = vmul.f32 %v812, %v826
        %v852 = vmul.f32 %v813, %v826
        %v853 = vmul.f32 %v814, %v826
        %v854 = vmul.f32 %v815, %v826
        %v855 = vmul.f32 %v816, %v826
        %v856 = vmul.f32 %v817, %v826
        %v857 = vmul.f32 %v818, %v826
        %v858 = vmul.f32 %v819, %v826
        %v859 = vmul.f32 %v820, %v826
        %v860 = vld [vmem:[%s290] sm:$0x1]
        %v862 = vlaneseq
        %v863 = vshrl.u32 %v862, 7
        %v864 = vsub.s32 0, %v863
        %v865 = vrot.slane %v860, %v864
        %v867 = vadd.f32 %v828, %v865
        %v868 = vadd.f32 %v829, %v865
        %v869 = vadd.f32 %v830, %v865
        %v870 = vadd.f32 %v831, %v865
        %v871 = vadd.f32 %v832, %v865
        %v872 = vadd.f32 %v833, %v865
        %v873 = vadd.f32 %v834, %v865
        %v874 = vadd.f32 %v835, %v865
        %v875 = vadd.f32 %v836, %v865
        %v876 = vadd.f32 %v837, %v865
        %v877 = vadd.f32 %v838, %v865
        %v878 = vadd.f32 %v839, %v865
        %v879 = vadd.f32 %v840, %v865
        %v880 = vadd.f32 %v841, %v865
        %v881 = vadd.f32 %v842, %v865
        %v882 = vadd.f32 %v843, %v865
        %v883 = vadd.f32 %v844, %v865
        %v884 = vadd.f32 %v845, %v865
        %v885 = vadd.f32 %v846, %v865
        %v886 = vadd.f32 %v847, %v865
        %v887 = vadd.f32 %v848, %v865
        %v888 = vadd.f32 %v849, %v865
        %v889 = vadd.f32 %v850, %v865
        %v890 = vadd.f32 %v851, %v865
        %v891 = vadd.f32 %v852, %v865
        %v892 = vadd.f32 %v853, %v865
        %v893 = vadd.f32 %v854, %v865
        %v894 = vadd.f32 %v855, %v865
        %v895 = vadd.f32 %v856, %v865
        %v896 = vadd.f32 %v857, %v865
        %v897 = vadd.f32 %v858, %v865
        %v898 = vadd.f32 %v859, %v865
        %v899 = vmax.f32 %v867, 0.0
        %v900 = vmax.f32 %v868, 0.0
        %v901 = vmax.f32 %v869, 0.0
        %v902 = vmax.f32 %v870, 0.0
        %v903 = vmax.f32 %v871, 0.0
        %v904 = vmax.f32 %v872, 0.0
        %v905 = vmax.f32 %v873, 0.0
        %v906 = vmax.f32 %v874, 0.0
        %v907 = vmax.f32 %v875, 0.0
        %v908 = vmax.f32 %v876, 0.0
        %v909 = vmax.f32 %v877, 0.0
        %v910 = vmax.f32 %v878, 0.0
        %v911 = vmax.f32 %v879, 0.0
        %v912 = vmax.f32 %v880, 0.0
        %v913 = vmax.f32 %v881, 0.0
        %v914 = vmax.f32 %v882, 0.0
        %v915 = vmax.f32 %v883, 0.0
        %v916 = vmax.f32 %v884, 0.0
        %v917 = vmax.f32 %v885, 0.0
        %v918 = vmax.f32 %v886, 0.0
        %v919 = vmax.f32 %v887, 0.0
        %v920 = vmax.f32 %v888, 0.0
        %v921 = vmax.f32 %v889, 0.0
        %v922 = vmax.f32 %v890, 0.0
        %v923 = vmax.f32 %v891, 0.0
        %v924 = vmax.f32 %v892, 0.0
        %v925 = vmax.f32 %v893, 0.0
        %v926 = vmax.f32 %v894, 0.0
        %v927 = vmax.f32 %v895, 0.0
        %v928 = vmax.f32 %v896, 0.0
        %v929 = vmax.f32 %v897, 0.0
        %v930 = vmax.f32 %v898, 0.0
        %931 = vst [vmem:[%s298] sm:$0xff] %v899
        %932 = vst [vmem:[%s298 + $0x8] sm:$0xff] %v900
        %933 = vst [vmem:[%s298 + $0x10] sm:$0xff] %v901
        %934 = vst [vmem:[%s298 + $0x18] sm:$0xff] %v902
        %935 = vst [vmem:[%s298 + $0x20] sm:$0xff] %v903
        %936 = vst [vmem:[%s298 + $0x28] sm:$0xff] %v904
        %937 = vst [vmem:[%s298 + $0x30] sm:$0xff] %v905
        %938 = vst [vmem:[%s298 + $0x38] sm:$0xff] %v906
        %939 = vst [vmem:[%s298 + $0x40] sm:$0xff] %v907
        %940 = vst [vmem:[%s298 + $0x48] sm:$0xff] %v908
        %941 = vst [vmem:[%s298 + $0x50] sm:$0xff] %v909
        %942 = vst [vmem:[%s298 + $0x58] sm:$0xff] %v910
        %943 = vst [vmem:[%s298 + $0x60] sm:$0xff] %v911
        %944 = vst [vmem:[%s298 + $0x68] sm:$0xff] %v912
        %945 = vst [vmem:[%s298 + $0x70] sm:$0xff] %v913
        %946 = vst [vmem:[%s298 + $0x78] sm:$0xff] %v914
        %947 = vst [vmem:[%s298 + $0x80] sm:$0xff] %v915
        %948 = vst [vmem:[%s298 + $0x88] sm:$0xff] %v916
        %949 = vst [vmem:[%s298 + $0x90] sm:$0xff] %v917
        %950 = vst [vmem:[%s298 + $0x98] sm:$0xff] %v918
        %951 = vst [vmem:[%s298 + $0xa0] sm:$0xff] %v919
        %952 = vst [vmem:[%s298 + $0xa8] sm:$0xff] %v920
        %953 = vst [vmem:[%s298 + $0xb0] sm:$0xff] %v921
        %954 = vst [vmem:[%s298 + $0xb8] sm:$0xff] %v922
        %955 = vst [vmem:[%s298 + $0xc0] sm:$0xff] %v923
        %956 = vst [vmem:[%s298 + $0xc8] sm:$0xff] %v924
        %957 = vst [vmem:[%s298 + $0xd0] sm:$0xff] %v925
        %958 = vst [vmem:[%s298 + $0xd8] sm:$0xff] %v926
        %959 = vst [vmem:[%s298 + $0xe0] sm:$0xff] %v927
        %960 = vst [vmem:[%s298 + $0xe8] sm:$0xff] %v928
        %961 = vst [vmem:[%s298 + $0xf0] sm:$0xff] %v929
        %962 = vst [vmem:[%s298 + $0xf8] sm:$0xff] %v930
      $region44: #{forward.43} parent=35 // pred_fallthru
        _
      %s963 = smul.u32 32, %s20
      %p964 = scmp.lt.s32.totalorder %s963, 351
      %s965 = scalar_select %p964, %s963, 351
      %p966 = scmp.lt.s32.totalorder %s21, 0
      %s967 = scalar_select %p966, %s21, 0
      %s968 = sadd.s32 %s967, %s965
      %s969 = smul.addr %s968, 8
      %s970 = scalar_lea.vmem %s4, %s969
      // Predicated region
      $region45: #{forward.43} parent=35 // pred_check
        %p971 = pneg %p162
      $region46: #{forward.43} parent=35 // pred_check_branch
        %973 = sbr.rel (%p971) target = $region48
      $region47: #{forward.43} parent=35 // pred_region
        %s974 = smul.u32 32, %s20
      $region48: #{forward.43} parent=35 // pred_fallthru
        _
    $region36: #{forward.43} parent=5 // pred_fallthru
      _
    %p975 = scmp.le.s32.totalorder 2, %s10
    // Predicated region
    $region49: #{forward.43} parent=5 // pred_check
      %p976 = pneg %p975
    $region50: #{forward.43} parent=5 // pred_check_branch
      %978 = sbr.rel (%p976) target = $region52
    $region51: #{forward.43} parent=5 // pred_region
      %s979 = ssub.s32 %s10, 2
      // Predicated region
      $region53: #{forward.43} parent=51 // pred_check
        %p980 = pneg %p168
      $region54: #{forward.43} parent=51 // pred_check_branch
        %982 = sbr.rel (%p980) target = $region56
      $region55: #{forward.43} parent=51 // pred_region
        %s983 = smul.u32 32, %s23
        %p984 = scmp.lt.s32.totalorder %s983, 351
        %s985 = scalar_select %p984, %s983, 351
        %p986 = scmp.lt.s32.totalorder %s24, 0
        %s987 = scalar_select %p986, %s24, 0
        %s988 = sadd.s32 %s987, %s985
        %s989 = smul.addr %s988, 8
        %s990 = scalar_lea.vmem %s4, %s989
      $region56: #{forward.43} parent=51 // pred_fallthru
        _
    $region52: #{forward.43} parent=5 // pred_fallthru
      _
  $region6: #{forward.43} parent=0 // loop_footer
    %s14 = sadd.s32 1, %s10
  $region7: #{forward.43} parent=0 // loop_footer_branch
    %9 = sbr.rel target = $region3
  $region8: #{forward.43} parent=0 // loop_exit
    _

// kernel: forward.45
$region0: #{forward.45}
  #allocation0 [shape = 'u32[]', space=smem, size = 0x4, offset = 0x4, fixed_abs, tag = 'smem constant byte address 0x4 - core index']
  #allocation1 [shape = 'u32[144,128]{1,0:T(1,128)}', space=vmem, size = 0x12000, scoped, tag = 'internal scratch']
  #allocation2 [shape = 'f32[256,128]{1,0:T(8,128)}', space=vmem, size = 0x20000, scoped, tag = 'scratch operand']
  %s0 = inlined_call_operand.vmem [shape: bf16[768,128], index: 0, kind: input, shape index: {}]
  %s1 = inlined_call_operand.vmem [shape: bf16[128,128], index: 1, kind: input, shape index: {}]
  %s2 = inlined_call_operand.vmem [shape: f32[1,128], index: 2, kind: input, shape index: {}]
  %s3 = inlined_call_operand.vmem [shape: f32[1,128], index: 3, kind: input, shape index: {}]
  %s4 = inlined_call_operand.vmem [shape: f32[768,128], index: 4, kind: output, shape index: {}]
  %s5 = sld [smem:[#allocation0]]
  $region57: #{forward.45} parent=0
    _
  %s7 = ssub.s32 1, %s5
  %s8 = scalar_select 0, %s7, %s5
  loop: start=0, step=1, limit=5
  $region2: #{forward.45} parent=0 // loop_pre_header
    _
  $region3: #{forward.45} parent=0 // loop_header
    %s10 = sphi 0, %s14
    %p11 = scmp.ge.s32.totalorder %s10, 5
    %s17 = sphi 0, %s36
    %s18 = sphi 0, %s32
    %s19 = sphi 0, %s28
    %s20 = sphi 0, %s17
    %s21 = sphi 0, %s18
    %s22 = sphi 0, %s19
    %s23 = sphi 0, %s20
    %s24 = sphi 0, %s21
    %s25 = sphi 0, %s22
    %s41 = sphi 0, %s43
    %s44 = sphi 0, %s41
    %s45 = sphi 0, %s44
    %s61 = sphi 0, %s45
    %s69 = sphi 0, %s71
    %s72 = sphi 0, %s69
    %s73 = sphi 0, %s72
    %s89 = sphi 0, %s73
    %s95 = sphi 0, %s97
    %s98 = sphi 0, %s95
    %s99 = sphi 0, %s98
    %s115 = sphi 0, %s99
    %s121 = sphi 0, %s123
    %s124 = sphi 0, %s121
    %s125 = sphi 0, %s124
    %s141 = sphi 0, %s125
    %s149 = sphi 0, %s151
    %s152 = sphi 0, %s149
    %s153 = sphi 0, %s152
    %s169 = sphi 0, %s153
  $region4: #{forward.45} parent=0 // loop_header_branch
    %13 = sbr.rel (%p11) target = $region8
  $region5: #{forward.45} parent=0 // loop_body
    %s15 = ssub.s32 %s10, 1
    %s16 = ssub.s32 %s10, 2
    %s26 = sadd.s32 1, %s19
    %p27 = scmp.ge.s32.totalorder %s26, 1
    %s28 = scalar_select %p27, 0, %s26
    %s29 = sadd.s32 1, %s18
    %s30 = scalar_select %p27, %s29, %s18
    %p31 = scmp.ge.s32.totalorder %s30, 1
    %s32 = scalar_select %p31, 0, %s30
    %s33 = sadd.s32 1, %s17
    %s34 = scalar_select %p31, %s33, %s17
    %p35 = scmp.ge.s32.totalorder %s34, 3
    %s36 = scalar_select %p35, 0, %s34
    %s37 = ssub.s32 %s17, %s36
    %s38 = ssub.s32 %s19, %s28
    %s39 = sor.u32 %s37, %s38
    %p40 = scmp.eq.s32.totalorder %s39, 0
    %s42 = sadd.s32 %s41, 1
    %s43 = scalar_select %p40, %s41, %s42
    %p46 = pneg %p40
    %p47 = scmp.eq.s32.totalorder %s10, 2
    %p48 = por %p46, %p47
    %p49 = scmp.ne.s32.totalorder %s41, %s44
    %p50 = scmp.eq.s32.totalorder %s10, 0
    %p51 = por %p49, %p50
    %p52 = scmp.ne.s32.totalorder %s41, %s44
    %p53 = scmp.eq.s32.totalorder %s15, 2
    %p54 = por %p52, %p53
    %p55 = scmp.ne.s32.totalorder %s44, %s45
    %p56 = scmp.eq.s32.totalorder %s15, 0
    %p57 = por %p55, %p56
    %p58 = scmp.ne.s32.totalorder %s44, %s45
    %p59 = scmp.eq.s32.totalorder %s16, 2
    %p60 = por %p58, %p59
    %p62 = scmp.ne.s32.totalorder %s45, %s61
    %p63 = scmp.eq.s32.totalorder %s16, 0
    %p64 = por %p62, %p63
    %s65 = ssub.s32 %s19, %s28
    %s66 = ssub.s32 %s18, %s32
    %s67 = sor.u32 %s65, %s66
    %p68 = scmp.eq.s32.totalorder %s67, 0
    %s70 = sadd.s32 %s69, 1
    %s71 = scalar_select %p68, %s69, %s70
    %p74 = pneg %p68
    %p75 = scmp.eq.s32.totalorder %s10, 2
    %p76 = por %p74, %p75
    %p77 = scmp.ne.s32.totalorder %s69, %s72
    %p78 = scmp.eq.s32.totalorder %s10, 0
    %p79 = por %p77, %p78
    %p80 = scmp.ne.s32.totalorder %s69, %s72
    %p81 = scmp.eq.s32.totalorder %s15, 2
    %p82 = por %p80, %p81
    %p83 = scmp.ne.s32.totalorder %s72, %s73
    %p84 = scmp.eq.s32.totalorder %s15, 0
    %p85 = por %p83, %p84
    %p86 = scmp.ne.s32.totalorder %s72, %s73
    %p87 = scmp.eq.s32.totalorder %s16, 2
    %p88 = por %p86, %p87
    %p90 = scmp.ne.s32.totalorder %s73, %s89
    %p91 = scmp.eq.s32.totalorder %s16, 0
    %p92 = por %p90, %p91
    %s93 = ssub.s32 %s18, %s32
    %p94 = scmp.eq.s32.totalorder %s93, 0
    %s96 = sadd.s32 %s95, 1
    %s97 = scalar_select %p94, %s95, %s96
    %p100 = pneg %p94
    %p101 = scmp.eq.s32.totalorder %s10, 2
    %p102 = por %p100, %p101
    %p103 = scmp.ne.s32.totalorder %s95, %s98
    %p104 = scmp.eq.s32.totalorder %s10, 0
    %p105 = por %p103, %p104
    %p106 = scmp.ne.s32.totalorder %s95, %s98
    %p107 = scmp.eq.s32.totalorder %s15, 2
    %p108 = por %p106, %p107
    %p109 = scmp.ne.s32.totalorder %s98, %s99
    %p110 = scmp.eq.s32.totalorder %s15, 0
    %p111 = por %p109, %p110
    %p112 = scmp.ne.s32.totalorder %s98, %s99
    %p113 = scmp.eq.s32.totalorder %s16, 2
    %p114 = por %p112, %p113
    %p116 = scmp.ne.s32.totalorder %s99, %s115
    %p117 = scmp.eq.s32.totalorder %s16, 0
    %p118 = por %p116, %p117
    %s119 = ssub.s32 %s18, %s32
    %p120 = scmp.eq.s32.totalorder %s119, 0
    %s122 = sadd.s32 %s121, 1
    %s123 = scalar_select %p120, %s121, %s122
    %p126 = pneg %p120
    %p127 = scmp.eq.s32.totalorder %s10, 2
    %p128 = por %p126, %p127
    %p129 = scmp.ne.s32.totalorder %s121, %s124
    %p130 = scmp.eq.s32.totalorder %s10, 0
    %p131 = por %p129, %p130
    %p132 = scmp.ne.s32.totalorder %s121, %s124
    %p133 = scmp.eq.s32.totalorder %s15, 2
    %p134 = por %p132, %p133
    %p135 = scmp.ne.s32.totalorder %s124, %s125
    %p136 = scmp.eq.s32.totalorder %s15, 0
    %p137 = por %p135, %p136
    %p138 = scmp.ne.s32.totalorder %s124, %s125
    %p139 = scmp.eq.s32.totalorder %s16, 2
    %p140 = por %p138, %p139
    %p142 = scmp.ne.s32.totalorder %s125, %s141
    %p143 = scmp.eq.s32.totalorder %s16, 0
    %p144 = por %p142, %p143
    %s145 = ssub.s32 %s17, %s36
    %s146 = ssub.s32 %s18, %s32
    %s147 = sor.u32 %s145, %s146
    %p148 = scmp.eq.s32.totalorder %s147, 0
    %s150 = sadd.s32 %s149, 1
    %s151 = scalar_select %p148, %s149, %s150
    %p154 = pneg %p148
    %p155 = scmp.eq.s32.totalorder %s10, 2
    %p156 = por %p154, %p155
    %p157 = scmp.ne.s32.totalorder %s149, %s152
    %p158 = scmp.eq.s32.totalorder %s10, 0
    %p159 = por %p157, %p158
    %p160 = scmp.ne.s32.totalorder %s149, %s152
    %p161 = scmp.eq.s32.totalorder %s15, 2
    %p162 = por %p160, %p161
    %p163 = scmp.ne.s32.totalorder %s152, %s153
    %p164 = scmp.eq.s32.totalorder %s15, 0
    %p165 = por %p163, %p164
    %p166 = scmp.ne.s32.totalorder %s152, %s153
    %p167 = scmp.eq.s32.totalorder %s16, 2
    %p168 = por %p166, %p167
    %p170 = scmp.ne.s32.totalorder %s153, %s169
    %p171 = scmp.eq.s32.totalorder %s16, 0
    %p172 = por %p170, %p171
    %p173 = scmp.le.s32.totalorder 1, %s10
    %p174 = scmp.lt.s32.totalorder %s10, 4
    %p175 = pnand %p173, %p174
    %p176 = pneg %p175
    // Predicated region
    $region9: #{forward.45} parent=5 // pred_check
      _
    $region10: #{forward.45} parent=5 // pred_check_branch
      %178 = sbr.rel (%p175) target = $region12
    $region11: #{forward.45} parent=5 // pred_region
      %s179 = ssub.s32 %s10, 1
      // Predicated region
      $region13: #{forward.45} parent=11 // pred_check
        %p180 = pneg %p85
      $region14: #{forward.45} parent=11 // pred_check_branch
        %182 = sbr.rel (%p180) target = $region16
      $region15: #{forward.45} parent=11 // pred_region
        %s183 = smul.u32 16, %s22
        %p184 = scmp.lt.s32.totalorder %s183, 15
        %s185 = scalar_select %p184, %s183, 15
        %p186 = scmp.lt.s32.totalorder %s21, 0
        %s187 = scalar_select %p186, %s21, 0
        %s188 = sadd.s32 %s187, %s185
        %s189 = smul.addr %s188, 4
        %s190 = scalar_lea.vmem %s1, %s189
        %s191 = smul.u32 16, %s22
      $region16: #{forward.45} parent=11 // pred_fallthru
        _
      // Predicated region
      $region17: #{forward.45} parent=11 // pred_check
        %p192 = pneg %p111
      $region18: #{forward.45} parent=11 // pred_check_branch
        %194 = sbr.rel (%p192) target = $region20
      $region19: #{forward.45} parent=11 // pred_region
        %p195 = scmp.lt.s32.totalorder %s21, 0
        %s196 = scalar_select %p195, %s21, 0
        %s197 = scalar_lea.vmem %s2, %s196
      $region20: #{forward.45} parent=11 // pred_fallthru
        _
      // Predicated region
      $region21: #{forward.45} parent=11 // pred_check
        %p198 = pneg %p137
      $region22: #{forward.45} parent=11 // pred_check_branch
        %200 = sbr.rel (%p198) target = $region24
      $region23: #{forward.45} parent=11 // pred_region
        %p201 = scmp.lt.s32.totalorder %s21, 0
        %s202 = scalar_select %p201, %s21, 0
        %s203 = scalar_lea.vmem %s3, %s202
      $region24: #{forward.45} parent=11 // pred_fallthru
        _
    $region12: #{forward.45} parent=5 // pred_fallthru
      _
    %p204 = scmp.lt.s32.totalorder %s10, 3
    // Predicated region
    $region25: #{forward.45} parent=5 // pred_check
      %p205 = pneg %p204
    $region26: #{forward.45} parent=5 // pred_check_branch
      %207 = sbr.rel (%p205) target = $region28
    $region27: #{forward.45} parent=5 // pred_region
      // Predicated region
      $region29: #{forward.45} parent=27 // pred_check
        %p208 = pneg %p51
      $region30: #{forward.45} parent=27 // pred_check_branch
        %210 = sbr.rel (%p208) target = $region32
      $region31: #{forward.45} parent=27 // pred_region
        %s211 = smul.u32 32, %s17
        %p212 = scmp.lt.s32.totalorder %s211, 95
        %s213 = scalar_select %p212, %s211, 95
        %p214 = scmp.lt.s32.totalorder %s19, 0
        %s215 = scalar_select %p214, %s19, 0
        %s216 = sadd.s32 %s215, %s213
        %s217 = smul.addr %s216, 4
        %s218 = scalar_lea.vmem %s0, %s217
        %s219 = smul.u32 32, %s17
      $region32: #{forward.45} parent=27 // pred_fallthru
        _
    $region28: #{forward.45} parent=5 // pred_fallthru
      _
    %p220 = scmp.le.s32.totalorder 1, %s10
    %p221 = scmp.lt.s32.totalorder %s10, 4
    %p222 = pnand %p220, %p221
    %p223 = pneg %p222
    // Predicated region
    $region33: #{forward.45} parent=5 // pred_check
      _
    $region34: #{forward.45} parent=5 // pred_check_branch
      %225 = sbr.rel (%p222) target = $region36
    $region35: #{forward.45} parent=5 // pred_region
      %s226 = ssub.s32 %s10, 1
      %s227 = smul.u32 32, %s20
      %p228 = scmp.lt.s32.totalorder %s227, 95
      %s229 = scalar_select %p228, %s227, 95
      %p230 = scmp.lt.s32.totalorder %s22, 0
      %s231 = scalar_select %p230, %s22, 0
      %s232 = sadd.s32 %s231, %s229
      %s233 = smul.addr %s232, 4
      %s234 = scalar_lea.vmem %s0, %s233
      %p235 = pneg %p57
      %p236 = pneg %p54
      %s237 = smul.u32 16, %s22
      %p238 = scmp.lt.s32.totalorder %s237, 15
      %s239 = scalar_select %p238, %s237, 15
      %p240 = scmp.lt.s32.totalorder %s21, 0
      %s241 = scalar_select %p240, %s21, 0
      %s242 = sadd.s32 %s241, %s239
      %s243 = smul.addr %s242, 4
      %s244 = scalar_lea.vmem %s1, %s243
      %p245 = pneg %p85
      %p246 = pneg %p82
      %p247 = scmp.lt.s32.totalorder %s21, 0
      %s248 = scalar_select %p247, %s21, 0
      %s249 = scalar_lea.vmem %s2, %s248
      %p250 = pneg %p111
      %p251 = pneg %p108
      %p252 = scmp.lt.s32.totalorder %s21, 0
      %s253 = scalar_select %p252, %s21, 0
      %s254 = scalar_lea.vmem %s3, %s253
      %p255 = pneg %p137
      %p256 = pneg %p134
      %p257 = pneg %p165
      %p258 = pneg %p162
      %s259 = smul.u32 32, %s20
      %p260 = scmp.lt.s32.totalorder %s259, 95
      %s261 = scalar_select %p260, %s259, 95
      %p262 = scmp.lt.s32.totalorder %s21, 0
      %s263 = scalar_select %p262, %s21, 0
      %s264 = sadd.s32 %s263, %s261
      %s265 = smul.addr %s264, 8
      %s266 = scalar_lea.vmem %s4, %s265
      %s267 = smul.u32 32, %s20
      %p268 = scmp.lt.s32.totalorder %s267, 95
      %s269 = scalar_select %p268, %s267, 95
      %p270 = scmp.lt.s32.totalorder %s22, 0
      %s271 = scalar_select %p270, %s22, 0
      %s272 = sadd.s32 %s271, %s269
      %s273 = smul.addr %s272, 4
      %s274 = scalar_lea.vmem %s0, %s273
      %s275 = smul.u32 32, %s20
      %s276 = smul.u32 16, %s22
      %p277 = scmp.lt.s32.totalorder %s276, 15
      %s278 = scalar_select %p277, %s276, 15
      %p279 = scmp.lt.s32.totalorder %s21, 0
      %s280 = scalar_select %p279, %s21, 0
      %s281 = sadd.s32 %s280, %s278
      %s282 = smul.addr %s281, 4
      %s283 = scalar_lea.vmem %s1, %s282
      %s284 = smul.u32 16, %s22
      %p285 = scmp.lt.s32.totalorder %s21, 0
      %s286 = scalar_select %p285, %s21, 0
      %s287 = scalar_lea.vmem %s2, %s286
      %p288 = scmp.lt.s32.totalorder %s21, 0
      %s289 = scalar_select %p288, %s21, 0
      %s290 = scalar_lea.vmem %s3, %s289
      %s291 = smul.u32 32, %s20
      %p292 = scmp.lt.s32.totalorder %s291, 95
      %s293 = scalar_select %p292, %s291, 95
      %p294 = scmp.lt.s32.totalorder %s21, 0
      %s295 = scalar_select %p294, %s21, 0
      %s296 = sadd.s32 %s295, %s293
      %s297 = smul.addr %s296, 8
      %s298 = scalar_lea.vmem %s4, %s297
      %s299 = smul.u32 32, %s20
      %p301 = scmp.eq.s32.totalorder %s22, 0
      // Predicated region
      $region37: #{forward.45} parent=35 // pred_check
        %p302 = pneg %p301
      $region38: #{forward.45} parent=35 // pred_check_branch
        %304 = sbr.rel (%p302) target = $region40
      $region39: #{forward.45} parent=35 // pred_region
        %305 = vst [vmem:[#allocation2] sm:$0xff] 0.0
        %306 = vst [vmem:[#allocation2 + $0x8] sm:$0xff] 0.0
        %307 = vst [vmem:[#allocation2 + $0x10] sm:$0xff] 0.0
        %308 = vst [vmem:[#allocation2 + $0x18] sm:$0xff] 0.0
        %309 = vst [vmem:[#allocation2 + $0x20] sm:$0xff] 0.0
        %310 = vst [vmem:[#allocation2 + $0x28] sm:$0xff] 0.0
        %311 = vst [vmem:[#allocation2 + $0x30] sm:$0xff] 0.0
        %312 = vst [vmem:[#allocation2 + $0x38] sm:$0xff] 0.0
        %313 = vst [vmem:[#allocation2 + $0x40] sm:$0xff] 0.0
        %314 = vst [vmem:[#allocation2 + $0x48] sm:$0xff] 0.0
        %315 = vst [vmem:[#allocation2 + $0x50] sm:$0xff] 0.0
        %316 = vst [vmem:[#allocation2 + $0x58] sm:$0xff] 0.0
        %317 = vst [vmem:[#allocation2 + $0x60] sm:$0xff] 0.0
        %318 = vst [vmem:[#allocation2 + $0x68] sm:$0xff] 0.0
        %319 = vst [vmem:[#allocation2 + $0x70] sm:$0xff] 0.0
        %320 = vst [vmem:[#allocation2 + $0x78] sm:$0xff] 0.0
        %321 = vst [vmem:[#allocation2 + $0x80] sm:$0xff] 0.0
        %322 = vst [vmem:[#allocation2 + $0x88] sm:$0xff] 0.0
        %323 = vst [vmem:[#allocation2 + $0x90] sm:$0xff] 0.0
        %324 = vst [vmem:[#allocation2 + $0x98] sm:$0xff] 0.0
        %325 = vst [vmem:[#allocation2 + $0xa0] sm:$0xff] 0.0
        %326 = vst [vmem:[#allocation2 + $0xa8] sm:$0xff] 0.0
        %327 = vst [vmem:[#allocation2 + $0xb0] sm:$0xff] 0.0
        %328 = vst [vmem:[#allocation2 + $0xb8] sm:$0xff] 0.0
        %329 = vst [vmem:[#allocation2 + $0xc0] sm:$0xff] 0.0
        %330 = vst [vmem:[#allocation2 + $0xc8] sm:$0xff] 0.0
        %331 = vst [vmem:[#allocation2 + $0xd0] sm:$0xff] 0.0
        %332 = vst [vmem:[#allocation2 + $0xd8] sm:$0xff] 0.0
        %333 = vst [vmem:[#allocation2 + $0xe0] sm:$0xff] 0.0
        %334 = vst [vmem:[#allocation2 + $0xe8] sm:$0xff] 0.0
        %335 = vst [vmem:[#allocation2 + $0xf0] sm:$0xff] 0.0
        %336 = vst [vmem:[#allocation2 + $0xf8] sm:$0xff] 0.0
      $region40: #{forward.45} parent=35 // pred_fallthru
        _
      %v337 = vld [vmem:[#allocation2] sm:$0xff]
      %v338 = vld [vmem:[#allocation2 + $0x8] sm:$0xff]
      %v339 = vld [vmem:[#allocation2 + $0x10] sm:$0xff]
      %v340 = vld [vmem:[#allocation2 + $0x18] sm:$0xff]
      %v341 = vld [vmem:[#allocation2 + $0x20] sm:$0xff]
      %v342 = vld [vmem:[#allocation2 + $0x28] sm:$0xff]
      %v343 = vld [vmem:[#allocation2 + $0x30] sm:$0xff]
      %v344 = vld [vmem:[#allocation2 + $0x38] sm:$0xff]
      %v345 = vld [vmem:[#allocation2 + $0x40] sm:$0xff]
      %v346 = vld [vmem:[#allocation2 + $0x48] sm:$0xff]
      %v347 = vld [vmem:[#allocation2 + $0x50] sm:$0xff]
      %v348 = vld [vmem:[#allocation2 + $0x58] sm:$0xff]
      %v349 = vld [vmem:[#allocation2 + $0x60] sm:$0xff]
      %v350 = vld [vmem:[#allocation2 + $0x68] sm:$0xff]
      %v351 = vld [vmem:[#allocation2 + $0x70] sm:$0xff]
      %v352 = vld [vmem:[#allocation2 + $0x78] sm:$0xff]
      %v353 = vld [vmem:[#allocation2 + $0x80] sm:$0xff]
      %v354 = vld [vmem:[#allocation2 + $0x88] sm:$0xff]
      %v355 = vld [vmem:[#allocation2 + $0x90] sm:$0xff]
      %v356 = vld [vmem:[#allocation2 + $0x98] sm:$0xff]
      %v357 = vld [vmem:[#allocation2 + $0xa0] sm:$0xff]
      %v358 = vld [vmem:[#allocation2 + $0xa8] sm:$0xff]
      %v359 = vld [vmem:[#allocation2 + $0xb0] sm:$0xff]
      %v360 = vld [vmem:[#allocation2 + $0xb8] sm:$0xff]
      %v361 = vld [vmem:[#allocation2 + $0xc0] sm:$0xff]
      %v362 = vld [vmem:[#allocation2 + $0xc8] sm:$0xff]
      %v363 = vld [vmem:[#allocation2 + $0xd0] sm:$0xff]
      %v364 = vld [vmem:[#allocation2 + $0xd8] sm:$0xff]
      %v365 = vld [vmem:[#allocation2 + $0xe0] sm:$0xff]
      %v366 = vld [vmem:[#allocation2 + $0xe8] sm:$0xff]
      %v367 = vld [vmem:[#allocation2 + $0xf0] sm:$0xff]
      %v368 = vld [vmem:[#allocation2 + $0xf8] sm:$0xff]
      %v369 = vld [vmem:[%s274] sm:$0xf]
      %v370 = vld [vmem:[%s274 + $0x4] sm:$0xf]
      %v371 = vld [vmem:[%s274 + $0x8] sm:$0xf]
      %v372 = vld [vmem:[%s274 + $0xc] sm:$0xf]
      %v373 = vld [vmem:[%s274 + $0x10] sm:$0xf]
      %v374 = vld [vmem:[%s274 + $0x14] sm:$0xf]
      %v375 = vld [vmem:[%s274 + $0x18] sm:$0xf]
      %v376 = vld [vmem:[%s274 + $0x1c] sm:$0xf]
      %v377 = vld [vmem:[%s274 + $0x20] sm:$0xf]
      %v378 = vld [vmem:[%s274 + $0x24] sm:$0xf]
      %v379 = vld [vmem:[%s274 + $0x28] sm:$0xf]
      %v380 = vld [vmem:[%s274 + $0x2c] sm:$0xf]
      %v381 = vld [vmem:[%s274 + $0x30] sm:$0xf]
      %v382 = vld [vmem:[%s274 + $0x34] sm:$0xf]
      %v383 = vld [vmem:[%s274 + $0x38] sm:$0xf]
      %v384 = vld [vmem:[%s274 + $0x3c] sm:$0xf]
      %v385 = vld [vmem:[%s274 + $0x40] sm:$0xf]
      %v386 = vld [vmem:[%s274 + $0x44] sm:$0xf]
      %v387 = vld [vmem:[%s274 + $0x48] sm:$0xf]
      %v388 = vld [vmem:[%s274 + $0x4c] sm:$0xf]
      %v389 = vld [vmem:[%s274 + $0x50] sm:$0xf]
      %v390 = vld [vmem:[%s274 + $0x54] sm:$0xf]
      %v391 = vld [vmem:[%s274 + $0x58] sm:$0xf]
      %v392 = vld [vmem:[%s274 + $0x5c] sm:$0xf]
      %v393 = vld [vmem:[%s274 + $0x60] sm:$0xf]
      %v394 = vld [vmem:[%s274 + $0x64] sm:$0xf]
      %v395 = vld [vmem:[%s274 + $0x68] sm:$0xf]
      %v396 = vld [vmem:[%s274 + $0x6c] sm:$0xf]
      %v397 = vld [vmem:[%s274 + $0x70] sm:$0xf]
      %v398 = vld [vmem:[%s274 + $0x74] sm:$0xf]
      %v399 = vld [vmem:[%s274 + $0x78] sm:$0xf]
      %v400 = vld [vmem:[%s274 + $0x7c] sm:$0xf]
      %v401 = vld [vmem:[%s283] sm:$0xf]
      %v402 = vld [vmem:[%s283 + $0x4] sm:$0xf]
      %v403 = vld [vmem:[%s283 + $0x8] sm:$0xf]
      %v404 = vld [vmem:[%s283 + $0xc] sm:$0xf]
      %v405 = vld [vmem:[%s283 + $0x10] sm:$0xf]
      %v406 = vld [vmem:[%s283 + $0x14] sm:$0xf]
      %v407 = vld [vmem:[%s283 + $0x18] sm:$0xf]
      %v408 = vld [vmem:[%s283 + $0x1c] sm:$0xf]
      %v409 = vld [vmem:[%s283 + $0x20] sm:$0xf]
      %v410 = vld [vmem:[%s283 + $0x24] sm:$0xf]
      %v411 = vld [vmem:[%s283 + $0x28] sm:$0xf]
      %v412 = vld [vmem:[%s283 + $0x2c] sm:$0xf]
      %v413 = vld [vmem:[%s283 + $0x30] sm:$0xf]
      %v414 = vld [vmem:[%s283 + $0x34] sm:$0xf]
      %v415 = vld [vmem:[%s283 + $0x38] sm:$0xf]
      %v416 = vld [vmem:[%s283 + $0x3c] sm:$0xf]
      %v449 = vunpack.c.l.b16 %v369
      %v450 = vunpack.c.l.b16 %v370
      %v451 = vunpack.c.l.b16 %v371
      %v452 = vunpack.c.l.b16 %v372
      %v453 = vunpack.c.l.b16 %v373
      %v454 = vunpack.c.l.b16 %v374
      %v455 = vunpack.c.l.b16 %v375
      %v456 = vunpack.c.l.b16 %v376
      %v457 = vunpack.c.l.b16 %v377
      %v458 = vunpack.c.l.b16 %v378
      %v459 = vunpack.c.l.b16 %v379
      %v460 = vunpack.c.l.b16 %v380
      %v461 = vunpack.c.l.b16 %v381
      %v462 = vunpack.c.l.b16 %v382
      %v463 = vunpack.c.l.b16 %v383
      %v464 = vunpack.c.l.b16 %v384
      %v465 = vunpack.c.l.b16 %v385
      %v466 = vunpack.c.l.b16 %v386
      %v467 = vunpack.c.l.b16 %v387
      %v468 = vunpack.c.l.b16 %v388
      %v469 = vunpack.c.l.b16 %v389
      %v470 = vunpack.c.l.b16 %v390
      %v471 = vunpack.c.l.b16 %v391
      %v472 = vunpack.c.l.b16 %v392
      %v473 = vunpack.c.l.b16 %v393
      %v474 = vunpack.c.l.b16 %v394
      %v475 = vunpack.c.l.b16 %v395
      %v476 = vunpack.c.l.b16 %v396
      %v477 = vunpack.c.l.b16 %v397
      %v478 = vunpack.c.l.b16 %v398
      %v479 = vunpack.c.l.b16 %v399
      %v480 = vunpack.c.l.b16 %v400
      %v481 = vpack.c.b16 %v450, %v449
      %v482 = vpack.c.b16 %v452, %v451
      %v483 = vpack.c.b16 %v454, %v453
      %v484 = vpack.c.b16 %v456, %v455
      %v485 = vpack.c.b16 %v458, %v457
      %v486 = vpack.c.b16 %v460, %v459
      %v487 = vpack.c.b16 %v462, %v461
      %v488 = vpack.c.b16 %v464, %v463
      %v489 = vpack.c.b16 %v466, %v465
      %v490 = vpack.c.b16 %v468, %v467
      %v491 = vpack.c.b16 %v470, %v469
      %v492 = vpack.c.b16 %v472, %v471
      %v493 = vpack.c.b16 %v474, %v473
      %v494 = vpack.c.b16 %v476, %v475
      %v495 = vpack.c.b16 %v478, %v477
      %v496 = vpack.c.b16 %v480, %v479
      %v529 = vunpack.c.l.b16 %v401
      %v530 = vunpack.c.l.b16 %v402
      %v531 = vunpack.c.l.b16 %v403
      %v532 = vunpack.c.l.b16 %v404
      %v533 = vunpack.c.l.b16 %v405
      %v534 = vunpack.c.l.b16 %v406
      %v535 = vunpack.c.l.b16 %v407
      %v536 = vunpack.c.l.b16 %v408
      %v537 = vunpack.c.l.b16 %v409
      %v538 = vunpack.c.l.b16 %v410
      %v539 = vunpack.c.l.b16 %v411
      %v540 = vunpack.c.l.b16 %v412
      %v541 = vunpack.c.l.b16 %v413
      %v542 = vunpack.c.l.b16 %v414
      %v543 = vunpack.c.l.b16 %v415
      %v544 = vunpack.c.l.b16 %v416
      %v545 = vpack.c.b16 %v530, %v529
      %v546 = vpack.c.b16 %v532, %v531
      %v547 = vpack.c.b16 %v534, %v533
      %v548 = vpack.c.b16 %v536, %v535
      %v549 = vpack.c.b16 %v538, %v537
      %v550 = vpack.c.b16 %v540, %v539
      %v551 = vpack.c.b16 %v542, %v541
      %v552 = vpack.c.b16 %v544, %v543
      %561 = vmatprep.subr.bf16.mxu0 0
      %562 = vmatpush1.bf16.msra.mxu0 %v552
      %563 = vmatprep.subr.bf16.mxu0 0
      %564 = vmatpush1.bf16.msra.mxu0 %v551
      %565 = vmatprep.subr.bf16.mxu0 0
      %566 = vmatpush1.bf16.msra.mxu0 %v550
      %567 = vmatprep.subr.bf16.mxu0 0
      %568 = vmatpush1.bf16.msra.mxu0 %v549
      %569 = vmatprep.subr.bf16.mxu0 0
      %570 = vmatpush1.bf16.msra.mxu0 %v548
      %571 = vmatprep.subr.bf16.mxu0 0
      %572 = vmatpush1.bf16.msra.mxu0 %v547
      %573 = vmatprep.subr.bf16.mxu0 0
      %574 = vmatpush1.bf16.msra.mxu0 %v546
      %575 = vmatprep.subr.bf16.mxu0 0
      %576 = vmatpush1.bf16.msra.mxu0 %v545
      %577 = vmatprep.subr.bf16.mxu0 0
      %578 = vmatpush2.bf16.msra.mxu0 0
      %579 = vmatprep.subr.bf16.mxu0 0
      %580 = vmatpush2.bf16.msra.mxu0 0
      %581 = vmatprep.subr.bf16.mxu0 0
      %582 = vmatpush2.bf16.msra.mxu0 0
      %583 = vmatprep.subr.bf16.mxu0 0
      %584 = vmatpush2.bf16.msra.mxu0 0
      %585 = vmatprep.subr.bf16.mxu0 0
      %586 = vmatpush2.bf16.msra.mxu0 0
      %587 = vmatprep.subr.bf16.mxu0 0
      %588 = vmatpush2.bf16.msra.mxu0 0
      %589 = vmatprep.subr.bf16.mxu0 0
      %590 = vmatpush2.bf16.msra.mxu0 0
      %591 = vmatprep.subr.bf16.mxu0 0
      %592 = vmatpush2.bf16.msra.mxu0 0
      %593 = vmatprep.mubr.bf16.mxu0 0
      %594 = vmatmul.mubr.bf16.gmra.mxu0 %v481
      %v595 = vpop.f32.mrf.mxu0
      %v596 = vadd.f32 0.0, %v595
      %v597 = vpop.f32.mrf.mxu0
      %v598 = vpop.f32.mrf.mxu0
      %v599 = vadd.f32 0.0, %v598
      %v600 = vpop.f32.mrf.mxu0
      %601 = vmatprep.mubr.bf16.mxu0 0
      %602 = vmatmul.mubr.bf16.gmra.mxu0 %v482
      %v603 = vpop.f32.mrf.mxu0
      %v604 = vadd.f32 0.0, %v603
      %v605 = vpop.f32.mrf.mxu0
      %v606 = vpop.f32.mrf.mxu0
      %v607 = vadd.f32 0.0, %v606
      %v608 = vpop.f32.mrf.mxu0
      %609 = vmatprep.mubr.bf16.mxu0 0
      %610 = vmatmul.mubr.bf16.gmra.mxu0 %v483
      %v611 = vpop.f32.mrf.mxu0
      %v612 = vadd.f32 0.0, %v611
      %v613 = vpop.f32.mrf.mxu0
      %v614 = vpop.f32.mrf.mxu0
      %v615 = vadd.f32 0.0, %v614
      %v616 = vpop.f32.mrf.mxu0
      %617 = vmatprep.mubr.bf16.mxu0 0
      %618 = vmatmul.mubr.bf16.gmra.mxu0 %v484
      %v619 = vpop.f32.mrf.mxu0
      %v620 = vadd.f32 0.0, %v619
      %v621 = vpop.f32.mrf.mxu0
      %v622 = vpop.f32.mrf.mxu0
      %v623 = vadd.f32 0.0, %v622
      %v624 = vpop.f32.mrf.mxu0
      %625 = vmatprep.mubr.bf16.mxu0 0
      %626 = vmatmul.mubr.bf16.gmra.mxu0 %v485
      %v627 = vpop.f32.mrf.mxu0
      %v628 = vadd.f32 0.0, %v627
      %v629 = vpop.f32.mrf.mxu0
      %v630 = vpop.f32.mrf.mxu0
      %v631 = vadd.f32 0.0, %v630
      %v632 = vpop.f32.mrf.mxu0
      %633 = vmatprep.mubr.bf16.mxu0 0
      %634 = vmatmul.mubr.bf16.gmra.mxu0 %v486
      %v635 = vpop.f32.mrf.mxu0
      %v636 = vadd.f32 0.0, %v635
      %v637 = vpop.f32.mrf.mxu0
      %v638 = vpop.f32.mrf.mxu0
      %v639 = vadd.f32 0.0, %v638
      %v640 = vpop.f32.mrf.mxu0
      %641 = vmatprep.mubr.bf16.mxu0 0
      %642 = vmatmul.mubr.bf16.gmra.mxu0 %v487
      %v643 = vpop.f32.mrf.mxu0
      %v644 = vadd.f32 0.0, %v643
      %v645 = vpop.f32.mrf.mxu0
      %v646 = vpop.f32.mrf.mxu0
      %v647 = vadd.f32 0.0, %v646
      %v648 = vpop.f32.mrf.mxu0
      %649 = vmatprep.mubr.bf16.mxu0 0
      %650 = vmatmul.mubr.bf16.gmra.mxu0 %v488
      %v651 = vpop.f32.mrf.mxu0
      %v652 = vadd.f32 0.0, %v651
      %v653 = vpop.f32.mrf.mxu0
      %v654 = vpop.f32.mrf.mxu0
      %v655 = vadd.f32 0.0, %v654
      %v656 = vpop.f32.mrf.mxu0
      %657 = vmatprep.mubr.bf16.mxu0 0
      %658 = vmatmul.mubr.bf16.gmra.mxu0 %v489
      %v659 = vpop.f32.mrf.mxu0
      %v660 = vadd.f32 0.0, %v659
      %v661 = vpop.f32.mrf.mxu0
      %v662 = vpop.f32.mrf.mxu0
      %v663 = vadd.f32 0.0, %v662
      %v664 = vpop.f32.mrf.mxu0
      %665 = vmatprep.mubr.bf16.mxu0 0
      %666 = vmatmul.mubr.bf16.gmra.mxu0 %v490
      %v667 = vpop.f32.mrf.mxu0
      %v668 = vadd.f32 0.0, %v667
      %v669 = vpop.f32.mrf.mxu0
      %v670 = vpop.f32.mrf.mxu0
      %v671 = vadd.f32 0.0, %v670
      %v672 = vpop.f32.mrf.mxu0
      %673 = vmatprep.mubr.bf16.mxu0 0
      %674 = vmatmul.mubr.bf16.gmra.mxu0 %v491
      %v675 = vpop.f32.mrf.mxu0
      %v676 = vadd.f32 0.0, %v675
      %v677 = vpop.f32.mrf.mxu0
      %v678 = vpop.f32.mrf.mxu0
      %v679 = vadd.f32 0.0, %v678
      %v680 = vpop.f32.mrf.mxu0
      %681 = vmatprep.mubr.bf16.mxu0 0
      %682 = vmatmul.mubr.bf16.gmra.mxu0 %v492
      %v683 = vpop.f32.mrf.mxu0
      %v684 = vadd.f32 0.0, %v683
      %v685 = vpop.f32.mrf.mxu0
      %v686 = vpop.f32.mrf.mxu0
      %v687 = vadd.f32 0.0, %v686
      %v688 = vpop.f32.mrf.mxu0
      %689 = vmatprep.mubr.bf16.mxu0 0
      %690 = vmatmul.mubr.bf16.gmra.mxu0 %v493
      %v691 = vpop.f32.mrf.mxu0
      %v692 = vadd.f32 0.0, %v691
      %v693 = vpop.f32.mrf.mxu0
      %v694 = vpop.f32.mrf.mxu0
      %v695 = vadd.f32 0.0, %v694
      %v696 = vpop.f32.mrf.mxu0
      %697 = vmatprep.mubr.bf16.mxu0 0
      %698 = vmatmul.mubr.bf16.gmra.mxu0 %v494
      %v699 = vpop.f32.mrf.mxu0
      %v700 = vadd.f32 0.0, %v699
      %v701 = vpop.f32.mrf.mxu0
      %v702 = vpop.f32.mrf.mxu0
      %v703 = vadd.f32 0.0, %v702
      %v704 = vpop.f32.mrf.mxu0
      %705 = vmatprep.mubr.bf16.mxu0 0
      %706 = vmatmul.mubr.bf16.gmra.mxu0 %v495
      %v707 = vpop.f32.mrf.mxu0
      %v708 = vadd.f32 0.0, %v707
      %v709 = vpop.f32.mrf.mxu0
      %v710 = vpop.f32.mrf.mxu0
      %v711 = vadd.f32 0.0, %v710
      %v712 = vpop.f32.mrf.mxu0
      %713 = vmatprep.mubr.bf16.mxu0 0
      %714 = vmatmul.mubr.bf16.gmra.mxu0 %v496
      %v715 = vpop.f32.mrf.mxu0
      %v716 = vadd.f32 0.0, %v715
      %v717 = vpop.f32.mrf.mxu0
      %v718 = vpop.f32.mrf.mxu0
      %v719 = vadd.f32 0.0, %v718
      %v720 = vpop.f32.mrf.mxu0
      %721 = vdwg.mxu0
      %v722 = vadd.f32 %v337, %v596
      %v723 = vadd.f32 %v338, %v599
      %v724 = vadd.f32 %v339, %v604
      %v725 = vadd.f32 %v340, %v607
      %v726 = vadd.f32 %v341, %v612
      %v727 = vadd.f32 %v342, %v615
      %v728 = vadd.f32 %v343, %v620
      %v729 = vadd.f32 %v344, %v623
      %v730 = vadd.f32 %v345, %v628
      %v731 = vadd.f32 %v346, %v631
      %v732 = vadd.f32 %v347, %v636
      %v733 = vadd.f32 %v348, %v639
      %v734 = vadd.f32 %v349, %v644
      %v735 = vadd.f32 %v350, %v647
      %v736 = vadd.f32 %v351, %v652
      %v737 = vadd.f32 %v352, %v655
      %v738 = vadd.f32 %v353, %v660
      %v739 = vadd.f32 %v354, %v663
      %v740 = vadd.f32 %v355, %v668
      %v741 = vadd.f32 %v356, %v671
      %v742 = vadd.f32 %v357, %v676
      %v743 = vadd.f32 %v358, %v679
      %v744 = vadd.f32 %v359, %v684
      %v745 = vadd.f32 %v360, %v687
      %v746 = vadd.f32 %v361, %v692
      %v747 = vadd.f32 %v362, %v695
      %v748 = vadd.f32 %v363, %v700
      %v749 = vadd.f32 %v364, %v703
      %v750 = vadd.f32 %v365, %v708
      %v751 = vadd.f32 %v366, %v711
      %v752 = vadd.f32 %v367, %v716
      %v753 = vadd.f32 %v368, %v719
      %754 = vst [vmem:[#allocation2] sm:$0xff] %v722
      %755 = vst [vmem:[#allocation2 + $0x8] sm:$0xff] %v723
      %756 = vst [vmem:[#allocation2 + $0x10] sm:$0xff] %v724
      %757 = vst [vmem:[#allocation2 + $0x18] sm:$0xff] %v725
      %758 = vst [vmem:[#allocation2 + $0x20] sm:$0xff] %v726
      %759 = vst [vmem:[#allocation2 + $0x28] sm:$0xff] %v727
      %760 = vst [vmem:[#allocation2 + $0x30] sm:$0xff] %v728
      %761 = vst [vmem:[#allocation2 + $0x38] sm:$0xff] %v729
      %762 = vst [vmem:[#allocation2 + $0x40] sm:$0xff] %v730
      %763 = vst [vmem:[#allocation2 + $0x48] sm:$0xff] %v731
      %764 = vst [vmem:[#allocation2 + $0x50] sm:$0xff] %v732
      %765 = vst [vmem:[#allocation2 + $0x58] sm:$0xff] %v733
      %766 = vst [vmem:[#allocation2 + $0x60] sm:$0xff] %v734
      %767 = vst [vmem:[#allocation2 + $0x68] sm:$0xff] %v735
      %768 = vst [vmem:[#allocation2 + $0x70] sm:$0xff] %v736
      %769 = vst [vmem:[#allocation2 + $0x78] sm:$0xff] %v737
      %770 = vst [vmem:[#allocation2 + $0x80] sm:$0xff] %v738
      %771 = vst [vmem:[#allocation2 + $0x88] sm:$0xff] %v739
      %772 = vst [vmem:[#allocation2 + $0x90] sm:$0xff] %v740
      %773 = vst [vmem:[#allocation2 + $0x98] sm:$0xff] %v741
      %774 = vst [vmem:[#allocation2 + $0xa0] sm:$0xff] %v742
      %775 = vst [vmem:[#allocation2 + $0xa8] sm:$0xff] %v743
      %776 = vst [vmem:[#allocation2 + $0xb0] sm:$0xff] %v744
      %777 = vst [vmem:[#allocation2 + $0xb8] sm:$0xff] %v745
      %778 = vst [vmem:[#allocation2 + $0xc0] sm:$0xff] %v746
      %779 = vst [vmem:[#allocation2 + $0xc8] sm:$0xff] %v747
      %780 = vst [vmem:[#allocation2 + $0xd0] sm:$0xff] %v748
      %781 = vst [vmem:[#allocation2 + $0xd8] sm:$0xff] %v749
      %782 = vst [vmem:[#allocation2 + $0xe0] sm:$0xff] %v750
      %783 = vst [vmem:[#allocation2 + $0xe8] sm:$0xff] %v751
      %784 = vst [vmem:[#allocation2 + $0xf0] sm:$0xff] %v752
      %785 = vst [vmem:[#allocation2 + $0xf8] sm:$0xff] %v753
      // Predicated region
      $region41: #{forward.45} parent=35 // pred_check
        %p786 = pneg %p301
      $region42: #{forward.45} parent=35 // pred_check_branch
        %788 = sbr.rel (%p786) target = $region44
      $region43: #{forward.45} parent=35 // pred_region
        %v789 = vld [vmem:[#allocation2] sm:$0xff]
        %v790 = vld [vmem:[#allocation2 + $0x8] sm:$0xff]
        %v791 = vld [vmem:[#allocation2 + $0x10] sm:$0xff]
        %v792 = vld [vmem:[#allocation2 + $0x18] sm:$0xff]
        %v793 = vld [vmem:[#allocation2 + $0x20] sm:$0xff]
        %v794 = vld [vmem:[#allocation2 + $0x28] sm:$0xff]
        %v795 = vld [vmem:[#allocation2 + $0x30] sm:$0xff]
        %v796 = vld [vmem:[#allocation2 + $0x38] sm:$0xff]
        %v797 = vld [vmem:[#allocation2 + $0x40] sm:$0xff]
        %v798 = vld [vmem:[#allocation2 + $0x48] sm:$0xff]
        %v799 = vld [vmem:[#allocation2 + $0x50] sm:$0xff]
        %v800 = vld [vmem:[#allocation2 + $0x58] sm:$0xff]
        %v801 = vld [vmem:[#allocation2 + $0x60] sm:$0xff]
        %v802 = vld [vmem:[#allocation2 + $0x68] sm:$0xff]
        %v803 = vld [vmem:[#allocation2 + $0x70] sm:$0xff]
        %v804 = vld [vmem:[#allocation2 + $0x78] sm:$0xff]
        %v805 = vld [vmem:[#allocation2 + $0x80] sm:$0xff]
        %v806 = vld [vmem:[#allocation2 + $0x88] sm:$0xff]
        %v807 = vld [vmem:[#allocation2 + $0x90] sm:$0xff]
        %v808 = vld [vmem:[#allocation2 + $0x98] sm:$0xff]
        %v809 = vld [vmem:[#allocation2 + $0xa0] sm:$0xff]
        %v810 = vld [vmem:[#allocation2 + $0xa8] sm:$0xff]
        %v811 = vld [vmem:[#allocation2 + $0xb0] sm:$0xff]
        %v812 = vld [vmem:[#allocation2 + $0xb8] sm:$0xff]
        %v813 = vld [vmem:[#allocation2 + $0xc0] sm:$0xff]
        %v814 = vld [vmem:[#allocation2 + $0xc8] sm:$0xff]
        %v815 = vld [vmem:[#allocation2 + $0xd0] sm:$0xff]
        %v816 = vld [vmem:[#allocation2 + $0xd8] sm:$0xff]
        %v817 = vld [vmem:[#allocation2 + $0xe0] sm:$0xff]
        %v818 = vld [vmem:[#allocation2 + $0xe8] sm:$0xff]
        %v819 = vld [vmem:[#allocation2 + $0xf0] sm:$0xff]
        %v820 = vld [vmem:[#allocation2 + $0xf8] sm:$0xff]
        %v821 = vld [vmem:[%s287] sm:$0x1]
        %v823 = vlaneseq
        %v824 = vshrl.u32 %v823, 7
        %v825 = vsub.s32 0, %v824
        %v826 = vrot.slane %v821, %v825
        %v828 = vmul.f32 %v789, %v826
        %v829 = vmul.f32 %v790, %v826
        %v830 = vmul.f32 %v791, %v826
        %v831 = vmul.f32 %v792, %v826
        %v832 = vmul.f32 %v793, %v826
        %v833 = vmul.f32 %v794, %v826
        %v834 = vmul.f32 %v795, %v826
        %v835 = vmul.f32 %v796, %v826
        %v836 = vmul.f32 %v797, %v826
        %v837 = vmul.f32 %v798, %v826
        %v838 = vmul.f32 %v799, %v826
        %v839 = vmul.f32 %v800, %v826
        %v840 = vmul.f32 %v801, %v826
        %v841 = vmul.f32 %v802, %v826
        %v842 = vmul.f32 %v803, %v826
        %v843 = vmul.f32 %v804, %v826
        %v844 = vmul.f32 %v805, %v826
        %v845 = vmul.f32 %v806, %v826
        %v846 = vmul.f32 %v807, %v826
        %v847 = vmul.f32 %v808, %v826
        %v848 = vmul.f32 %v809, %v826
        %v849 = vmul.f32 %v810, %v826
        %v850 = vmul.f32 %v811, %v826
        %v851 = vmul.f32 %v812, %v826
        %v852 = vmul.f32 %v813, %v826
        %v853 = vmul.f32 %v814, %v826
        %v854 = vmul.f32 %v815, %v826
        %v855 = vmul.f32 %v816, %v826
        %v856 = vmul.f32 %v817, %v826
        %v857 = vmul.f32 %v818, %v826
        %v858 = vmul.f32 %v819, %v826
        %v859 = vmul.f32 %v820, %v826
        %v860 = vld [vmem:[%s290] sm:$0x1]
        %v862 = vlaneseq
        %v863 = vshrl.u32 %v862, 7
        %v864 = vsub.s32 0, %v863
        %v865 = vrot.slane %v860, %v864
        %v867 = vadd.f32 %v828, %v865
        %v868 = vadd.f32 %v829, %v865
        %v869 = vadd.f32 %v830, %v865
        %v870 = vadd.f32 %v831, %v865
        %v871 = vadd.f32 %v832, %v865
        %v872 = vadd.f32 %v833, %v865
        %v873 = vadd.f32 %v834, %v865
        %v874 = vadd.f32 %v835, %v865
        %v875 = vadd.f32 %v836, %v865
        %v876 = vadd.f32 %v837, %v865
        %v877 = vadd.f32 %v838, %v865
        %v878 = vadd.f32 %v839, %v865
        %v879 = vadd.f32 %v840, %v865
        %v880 = vadd.f32 %v841, %v865
        %v881 = vadd.f32 %v842, %v865
        %v882 = vadd.f32 %v843, %v865
        %v883 = vadd.f32 %v844, %v865
        %v884 = vadd.f32 %v845, %v865
        %v885 = vadd.f32 %v846, %v865
        %v886 = vadd.f32 %v847, %v865
        %v887 = vadd.f32 %v848, %v865
        %v888 = vadd.f32 %v849, %v865
        %v889 = vadd.f32 %v850, %v865
        %v890 = vadd.f32 %v851, %v865
        %v891 = vadd.f32 %v852, %v865
        %v892 = vadd.f32 %v853, %v865
        %v893 = vadd.f32 %v854, %v865
        %v894 = vadd.f32 %v855, %v865
        %v895 = vadd.f32 %v856, %v865
        %v896 = vadd.f32 %v857, %v865
        %v897 = vadd.f32 %v858, %v865
        %v898 = vadd.f32 %v859, %v865
        %v899 = vmax.f32 %v867, 0.0
        %v900 = vmax.f32 %v868, 0.0
        %v901 = vmax.f32 %v869, 0.0
        %v902 = vmax.f32 %v870, 0.0
        %v903 = vmax.f32 %v871, 0.0
        %v904 = vmax.f32 %v872, 0.0
        %v905 = vmax.f32 %v873, 0.0
        %v906 = vmax.f32 %v874, 0.0
        %v907 = vmax.f32 %v875, 0.0
        %v908 = vmax.f32 %v876, 0.0
        %v909 = vmax.f32 %v877, 0.0
        %v910 = vmax.f32 %v878, 0.0
        %v911 = vmax.f32 %v879, 0.0
        %v912 = vmax.f32 %v880, 0.0
        %v913 = vmax.f32 %v881, 0.0
        %v914 = vmax.f32 %v882, 0.0
        %v915 = vmax.f32 %v883, 0.0
        %v916 = vmax.f32 %v884, 0.0
        %v917 = vmax.f32 %v885, 0.0
        %v918 = vmax.f32 %v886, 0.0
        %v919 = vmax.f32 %v887, 0.0
        %v920 = vmax.f32 %v888, 0.0
        %v921 = vmax.f32 %v889, 0.0
        %v922 = vmax.f32 %v890, 0.0
        %v923 = vmax.f32 %v891, 0.0
        %v924 = vmax.f32 %v892, 0.0
        %v925 = vmax.f32 %v893, 0.0
        %v926 = vmax.f32 %v894, 0.0
        %v927 = vmax.f32 %v895, 0.0
        %v928 = vmax.f32 %v896, 0.0
        %v929 = vmax.f32 %v897, 0.0
        %v930 = vmax.f32 %v898, 0.0
        %931 = vst [vmem:[%s298] sm:$0xff] %v899
        %932 = vst [vmem:[%s298 + $0x8] sm:$0xff] %v900
        %933 = vst [vmem:[%s298 + $0x10] sm:$0xff] %v901
        %934 = vst [vmem:[%s298 + $0x18] sm:$0xff] %v902
        %935 = vst [vmem:[%s298 + $0x20] sm:$0xff] %v903
        %936 = vst [vmem:[%s298 + $0x28] sm:$0xff] %v904
        %937 = vst [vmem:[%s298 + $0x30] sm:$0xff] %v905
        %938 = vst [vmem:[%s298 + $0x38] sm:$0xff] %v906
        %939 = vst [vmem:[%s298 + $0x40] sm:$0xff] %v907
        %940 = vst [vmem:[%s298 + $0x48] sm:$0xff] %v908
        %941 = vst [vmem:[%s298 + $0x50] sm:$0xff] %v909
        %942 = vst [vmem:[%s298 + $0x58] sm:$0xff] %v910
        %943 = vst [vmem:[%s298 + $0x60] sm:$0xff] %v911
        %944 = vst [vmem:[%s298 + $0x68] sm:$0xff] %v912
        %945 = vst [vmem:[%s298 + $0x70] sm:$0xff] %v913
        %946 = vst [vmem:[%s298 + $0x78] sm:$0xff] %v914
        %947 = vst [vmem:[%s298 + $0x80] sm:$0xff] %v915
        %948 = vst [vmem:[%s298 + $0x88] sm:$0xff] %v916
        %949 = vst [vmem:[%s298 + $0x90] sm:$0xff] %v917
        %950 = vst [vmem:[%s298 + $0x98] sm:$0xff] %v918
        %951 = vst [vmem:[%s298 + $0xa0] sm:$0xff] %v919
        %952 = vst [vmem:[%s298 + $0xa8] sm:$0xff] %v920
        %953 = vst [vmem:[%s298 + $0xb0] sm:$0xff] %v921
        %954 = vst [vmem:[%s298 + $0xb8] sm:$0xff] %v922
        %955 = vst [vmem:[%s298 + $0xc0] sm:$0xff] %v923
        %956 = vst [vmem:[%s298 + $0xc8] sm:$0xff] %v924
        %957 = vst [vmem:[%s298 + $0xd0] sm:$0xff] %v925
        %958 = vst [vmem:[%s298 + $0xd8] sm:$0xff] %v926
        %959 = vst [vmem:[%s298 + $0xe0] sm:$0xff] %v927
        %960 = vst [vmem:[%s298 + $0xe8] sm:$0xff] %v928
        %961 = vst [vmem:[%s298 + $0xf0] sm:$0xff] %v929
        %962 = vst [vmem:[%s298 + $0xf8] sm:$0xff] %v930
      $region44: #{forward.45} parent=35 // pred_fallthru
        _
      %s963 = smul.u32 32, %s20
      %p964 = scmp.lt.s32.totalorder %s963, 95
      %s965 = scalar_select %p964, %s963, 95
      %p966 = scmp.lt.s32.totalorder %s21, 0
      %s967 = scalar_select %p966, %s21, 0
      %s968 = sadd.s32 %s967, %s965
      %s969 = smul.addr %s968, 8
      %s970 = scalar_lea.vmem %s4, %s969
      // Predicated region
      $region45: #{forward.45} parent=35 // pred_check
        %p971 = pneg %p162
      $region46: #{forward.45} parent=35 // pred_check_branch
        %973 = sbr.rel (%p971) target = $region48
      $region47: #{forward.45} parent=35 // pred_region
        %s974 = smul.u32 32, %s20
      $region48: #{forward.45} parent=35 // pred_fallthru
        _
    $region36: #{forward.45} parent=5 // pred_fallthru
      _
    %p975 = scmp.le.s32.totalorder 2, %s10
    // Predicated region
    $region49: #{forward.45} parent=5 // pred_check
      %p976 = pneg %p975
    $region50: #{forward.45} parent=5 // pred_check_branch
      %978 = sbr.rel (%p976) target = $region52
    $region51: #{forward.45} parent=5 // pred_region
      %s979 = ssub.s32 %s10, 2
      // Predicated region
      $region53: #{forward.45} parent=51 // pred_check
        %p980 = pneg %p168
      $region54: #{forward.45} parent=51 // pred_check_branch
        %982 = sbr.rel (%p980) target = $region56
      $region55: #{forward.45} parent=51 // pred_region
        %s983 = smul.u32 32, %s23
        %p984 = scmp.lt.s32.totalorder %s983, 95
        %s985 = scalar_select %p984, %s983, 95
        %p986 = scmp.lt.s32.totalorder %s24, 0
        %s987 = scalar_select %p986, %s24, 0
        %s988 = sadd.s32 %s987, %s985
        %s989 = smul.addr %s988, 8
        %s990 = scalar_lea.vmem %s4, %s989
      $region56: #{forward.45} parent=51 // pred_fallthru
        _
    $region52: #{forward.45} parent=5 // pred_fallthru
      _
  $region6: #{forward.45} parent=0 // loop_footer
    %s14 = sadd.s32 1, %s10
  $region7: #{forward.45} parent=0 // loop_footer_branch
    %9 = sbr.rel target = $region3
  $region8: #{forward.45} parent=0 // loop_exit
    _

// kernel: forward.46
$region0: #{forward.46}
  #allocation0 [shape = 'u32[]', space=smem, size = 0x4, offset = 0x4, fixed_abs, tag = 'smem constant byte address 0x4 - core index']
  #allocation1 [shape = 'u32[144,128]{1,0:T(1,128)}', space=vmem, size = 0x12000, scoped, tag = 'internal scratch']
  #allocation2 [shape = 'f32[256,128]{1,0:T(8,128)}', space=vmem, size = 0x20000, scoped, tag = 'scratch operand']
  %s0 = inlined_call_operand.vmem [shape: bf16[512,128], index: 0, kind: input, shape index: {}]
  %s1 = inlined_call_operand.vmem [shape: bf16[128,128], index: 1, kind: input, shape index: {}]
  %s2 = inlined_call_operand.vmem [shape: f32[1,128], index: 2, kind: input, shape index: {}]
  %s3 = inlined_call_operand.vmem [shape: f32[1,128], index: 3, kind: input, shape index: {}]
  %s4 = inlined_call_operand.vmem [shape: f32[512,128], index: 4, kind: output, shape index: {}]
  %s5 = sld [smem:[#allocation0]]
  $region57: #{forward.46} parent=0
    _
  %s7 = ssub.s32 1, %s5
  %s8 = scalar_select 0, %s7, %s5
  loop: start=0, step=1, limit=4
  $region2: #{forward.46} parent=0 // loop_pre_header
    _
  $region3: #{forward.46} parent=0 // loop_header
    %s10 = sphi 0, %s14
    %p11 = scmp.ge.s32.totalorder %s10, 4
    %s17 = sphi 0, %s36
    %s18 = sphi 0, %s32
    %s19 = sphi 0, %s28
    %s20 = sphi 0, %s17
    %s21 = sphi 0, %s18
    %s22 = sphi 0, %s19
    %s23 = sphi 0, %s20
    %s24 = sphi 0, %s21
    %s25 = sphi 0, %s22
    %s41 = sphi 0, %s43
    %s44 = sphi 0, %s41
    %s45 = sphi 0, %s44
    %s61 = sphi 0, %s45
    %s69 = sphi 0, %s71
    %s72 = sphi 0, %s69
    %s73 = sphi 0, %s72
    %s89 = sphi 0, %s73
    %s95 = sphi 0, %s97
    %s98 = sphi 0, %s95
    %s99 = sphi 0, %s98
    %s115 = sphi 0, %s99
    %s121 = sphi 0, %s123
    %s124 = sphi 0, %s121
    %s125 = sphi 0, %s124
    %s141 = sphi 0, %s125
    %s149 = sphi 0, %s151
    %s152 = sphi 0, %s149
    %s153 = sphi 0, %s152
    %s169 = sphi 0, %s153
  $region4: #{forward.46} parent=0 // loop_header_branch
    %13 = sbr.rel (%p11) target = $region8
  $region5: #{forward.46} parent=0 // loop_body
    %s15 = ssub.s32 %s10, 1
    %s16 = ssub.s32 %s10, 2
    %s26 = sadd.s32 1, %s19
    %p27 = scmp.ge.s32.totalorder %s26, 1
    %s28 = scalar_select %p27, 0, %s26
    %s29 = sadd.s32 1, %s18
    %s30 = scalar_select %p27, %s29, %s18
    %p31 = scmp.ge.s32.totalorder %s30, 1
    %s32 = scalar_select %p31, 0, %s30
    %s33 = sadd.s32 1, %s17
    %s34 = scalar_select %p31, %s33, %s17
    %p35 = scmp.ge.s32.totalorder %s34, 2
    %s36 = scalar_select %p35, 0, %s34
    %s37 = ssub.s32 %s17, %s36
    %s38 = ssub.s32 %s19, %s28
    %s39 = sor.u32 %s37, %s38
    %p40 = scmp.eq.s32.totalorder %s39, 0
    %s42 = sadd.s32 %s41, 1
    %s43 = scalar_select %p40, %s41, %s42
    %p46 = pneg %p40
    %p47 = scmp.eq.s32.totalorder %s10, 1
    %p48 = por %p46, %p47
    %p49 = scmp.ne.s32.totalorder %s41, %s44
    %p50 = scmp.eq.s32.totalorder %s10, 0
    %p51 = por %p49, %p50
    %p52 = scmp.ne.s32.totalorder %s41, %s44
    %p53 = scmp.eq.s32.totalorder %s15, 1
    %p54 = por %p52, %p53
    %p55 = scmp.ne.s32.totalorder %s44, %s45
    %p56 = scmp.eq.s32.totalorder %s15, 0
    %p57 = por %p55, %p56
    %p58 = scmp.ne.s32.totalorder %s44, %s45
    %p59 = scmp.eq.s32.totalorder %s16, 1
    %p60 = por %p58, %p59
    %p62 = scmp.ne.s32.totalorder %s45, %s61
    %p63 = scmp.eq.s32.totalorder %s16, 0
    %p64 = por %p62, %p63
    %s65 = ssub.s32 %s19, %s28
    %s66 = ssub.s32 %s18, %s32
    %s67 = sor.u32 %s65, %s66
    %p68 = scmp.eq.s32.totalorder %s67, 0
    %s70 = sadd.s32 %s69, 1
    %s71 = scalar_select %p68, %s69, %s70
    %p74 = pneg %p68
    %p75 = scmp.eq.s32.totalorder %s10, 1
    %p76 = por %p74, %p75
    %p77 = scmp.ne.s32.totalorder %s69, %s72
    %p78 = scmp.eq.s32.totalorder %s10, 0
    %p79 = por %p77, %p78
    %p80 = scmp.ne.s32.totalorder %s69, %s72
    %p81 = scmp.eq.s32.totalorder %s15, 1
    %p82 = por %p80, %p81
    %p83 = scmp.ne.s32.totalorder %s72, %s73
    %p84 = scmp.eq.s32.totalorder %s15, 0
    %p85 = por %p83, %p84
    %p86 = scmp.ne.s32.totalorder %s72, %s73
    %p87 = scmp.eq.s32.totalorder %s16, 1
    %p88 = por %p86, %p87
    %p90 = scmp.ne.s32.totalorder %s73, %s89
    %p91 = scmp.eq.s32.totalorder %s16, 0
    %p92 = por %p90, %p91
    %s93 = ssub.s32 %s18, %s32
    %p94 = scmp.eq.s32.totalorder %s93, 0
    %s96 = sadd.s32 %s95, 1
    %s97 = scalar_select %p94, %s95, %s96
    %p100 = pneg %p94
    %p101 = scmp.eq.s32.totalorder %s10, 1
    %p102 = por %p100, %p101
    %p103 = scmp.ne.s32.totalorder %s95, %s98
    %p104 = scmp.eq.s32.totalorder %s10, 0
    %p105 = por %p103, %p104
    %p106 = scmp.ne.s32.totalorder %s95, %s98
    %p107 = scmp.eq.s32.totalorder %s15, 1
    %p108 = por %p106, %p107
    %p109 = scmp.ne.s32.totalorder %s98, %s99
    %p110 = scmp.eq.s32.totalorder %s15, 0
    %p111 = por %p109, %p110
    %p112 = scmp.ne.s32.totalorder %s98, %s99
    %p113 = scmp.eq.s32.totalorder %s16, 1
    %p114 = por %p112, %p113
    %p116 = scmp.ne.s32.totalorder %s99, %s115
    %p117 = scmp.eq.s32.totalorder %s16, 0
    %p118 = por %p116, %p117
    %s119 = ssub.s32 %s18, %s32
    %p120 = scmp.eq.s32.totalorder %s119, 0
    %s122 = sadd.s32 %s121, 1
    %s123 = scalar_select %p120, %s121, %s122
    %p126 = pneg %p120
    %p127 = scmp.eq.s32.totalorder %s10, 1
    %p128 = por %p126, %p127
    %p129 = scmp.ne.s32.totalorder %s121, %s124
    %p130 = scmp.eq.s32.totalorder %s10, 0
    %p131 = por %p129, %p130
    %p132 = scmp.ne.s32.totalorder %s121, %s124
    %p133 = scmp.eq.s32.totalorder %s15, 1
    %p134 = por %p132, %p133
    %p135 = scmp.ne.s32.totalorder %s124, %s125
    %p136 = scmp.eq.s32.totalorder %s15, 0
    %p137 = por %p135, %p136
    %p138 = scmp.ne.s32.totalorder %s124, %s125
    %p139 = scmp.eq.s32.totalorder %s16, 1
    %p140 = por %p138, %p139
    %p142 = scmp.ne.s32.totalorder %s125, %s141
    %p143 = scmp.eq.s32.totalorder %s16, 0
    %p144 = por %p142, %p143
    %s145 = ssub.s32 %s17, %s36
    %s146 = ssub.s32 %s18, %s32
    %s147 = sor.u32 %s145, %s146
    %p148 = scmp.eq.s32.totalorder %s147, 0
    %s150 = sadd.s32 %s149, 1
    %s151 = scalar_select %p148, %s149, %s150
    %p154 = pneg %p148
    %p155 = scmp.eq.s32.totalorder %s10, 1
    %p156 = por %p154, %p155
    %p157 = scmp.ne.s32.totalorder %s149, %s152
    %p158 = scmp.eq.s32.totalorder %s10, 0
    %p159 = por %p157, %p158
    %p160 = scmp.ne.s32.totalorder %s149, %s152
    %p161 = scmp.eq.s32.totalorder %s15, 1
    %p162 = por %p160, %p161
    %p163 = scmp.ne.s32.totalorder %s152, %s153
    %p164 = scmp.eq.s32.totalorder %s15, 0
    %p165 = por %p163, %p164
    %p166 = scmp.ne.s32.totalorder %s152, %s153
    %p167 = scmp.eq.s32.totalorder %s16, 1
    %p168 = por %p166, %p167
    %p170 = scmp.ne.s32.totalorder %s153, %s169
    %p171 = scmp.eq.s32.totalorder %s16, 0
    %p172 = por %p170, %p171
    %p173 = scmp.le.s32.totalorder 1, %s10
    %p174 = scmp.lt.s32.totalorder %s10, 3
    %p175 = pnand %p173, %p174
    %p176 = pneg %p175
    // Predicated region
    $region9: #{forward.46} parent=5 // pred_check
      _
    $region10: #{forward.46} parent=5 // pred_check_branch
      %178 = sbr.rel (%p175) target = $region12
    $region11: #{forward.46} parent=5 // pred_region
      %s179 = ssub.s32 %s10, 1
      // Predicated region
      $region13: #{forward.46} parent=11 // pred_check
        %p180 = pneg %p85
      $region14: #{forward.46} parent=11 // pred_check_branch
        %182 = sbr.rel (%p180) target = $region16
      $region15: #{forward.46} parent=11 // pred_region
        %s183 = smul.u32 16, %s22
        %p184 = scmp.lt.s32.totalorder %s183, 15
        %s185 = scalar_select %p184, %s183, 15
        %p186 = scmp.lt.s32.totalorder %s21, 0
        %s187 = scalar_select %p186, %s21, 0
        %s188 = sadd.s32 %s187, %s185
        %s189 = smul.addr %s188, 4
        %s190 = scalar_lea.vmem %s1, %s189
        %s191 = smul.u32 16, %s22
      $region16: #{forward.46} parent=11 // pred_fallthru
        _
      // Predicated region
      $region17: #{forward.46} parent=11 // pred_check
        %p192 = pneg %p111
      $region18: #{forward.46} parent=11 // pred_check_branch
        %194 = sbr.rel (%p192) target = $region20
      $region19: #{forward.46} parent=11 // pred_region
        %p195 = scmp.lt.s32.totalorder %s21, 0
        %s196 = scalar_select %p195, %s21, 0
        %s197 = scalar_lea.vmem %s2, %s196
      $region20: #{forward.46} parent=11 // pred_fallthru
        _
      // Predicated region
      $region21: #{forward.46} parent=11 // pred_check
        %p198 = pneg %p137
      $region22: #{forward.46} parent=11 // pred_check_branch
        %200 = sbr.rel (%p198) target = $region24
      $region23: #{forward.46} parent=11 // pred_region
        %p201 = scmp.lt.s32.totalorder %s21, 0
        %s202 = scalar_select %p201, %s21, 0
        %s203 = scalar_lea.vmem %s3, %s202
      $region24: #{forward.46} parent=11 // pred_fallthru
        _
    $region12: #{forward.46} parent=5 // pred_fallthru
      _
    %p204 = scmp.lt.s32.totalorder %s10, 2
    // Predicated region
    $region25: #{forward.46} parent=5 // pred_check
      %p205 = pneg %p204
    $region26: #{forward.46} parent=5 // pred_check_branch
      %207 = sbr.rel (%p205) target = $region28
    $region27: #{forward.46} parent=5 // pred_region
      // Predicated region
      $region29: #{forward.46} parent=27 // pred_check
        %p208 = pneg %p51
      $region30: #{forward.46} parent=27 // pred_check_branch
        %210 = sbr.rel (%p208) target = $region32
      $region31: #{forward.46} parent=27 // pred_region
        %s211 = smul.u32 32, %s17
        %p212 = scmp.lt.s32.totalorder %s211, 63
        %s213 = scalar_select %p212, %s211, 63
        %p214 = scmp.lt.s32.totalorder %s19, 0
        %s215 = scalar_select %p214, %s19, 0
        %s216 = sadd.s32 %s215, %s213
        %s217 = smul.addr %s216, 4
        %s218 = scalar_lea.vmem %s0, %s217
        %s219 = smul.u32 32, %s17
      $region32: #{forward.46} parent=27 // pred_fallthru
        _
    $region28: #{forward.46} parent=5 // pred_fallthru
      _
    %p220 = scmp.le.s32.totalorder 1, %s10
    %p221 = scmp.lt.s32.totalorder %s10, 3
    %p222 = pnand %p220, %p221
    %p223 = pneg %p222
    // Predicated region
    $region33: #{forward.46} parent=5 // pred_check
      _
    $region34: #{forward.46} parent=5 // pred_check_branch
      %225 = sbr.rel (%p222) target = $region36
    $region35: #{forward.46} parent=5 // pred_region
      %s226 = ssub.s32 %s10, 1
      %s227 = smul.u32 32, %s20
      %p228 = scmp.lt.s32.totalorder %s227, 63
      %s229 = scalar_select %p228, %s227, 63
      %p230 = scmp.lt.s32.totalorder %s22, 0
      %s231 = scalar_select %p230, %s22, 0
      %s232 = sadd.s32 %s231, %s229
      %s233 = smul.addr %s232, 4
      %s234 = scalar_lea.vmem %s0, %s233
      %p235 = pneg %p57
      %p236 = pneg %p54
      %s237 = smul.u32 16, %s22
      %p238 = scmp.lt.s32.totalorder %s237, 15
      %s239 = scalar_select %p238, %s237, 15
      %p240 = scmp.lt.s32.totalorder %s21, 0
      %s241 = scalar_select %p240, %s21, 0
      %s242 = sadd.s32 %s241, %s239
      %s243 = smul.addr %s242, 4
      %s244 = scalar_lea.vmem %s1, %s243
      %p245 = pneg %p85
      %p246 = pneg %p82
      %p247 = scmp.lt.s32.totalorder %s21, 0
      %s248 = scalar_select %p247, %s21, 0
      %s249 = scalar_lea.vmem %s2, %s248
      %p250 = pneg %p111
      %p251 = pneg %p108
      %p252 = scmp.lt.s32.totalorder %s21, 0
      %s253 = scalar_select %p252, %s21, 0
      %s254 = scalar_lea.vmem %s3, %s253
      %p255 = pneg %p137
      %p256 = pneg %p134
      %p257 = pneg %p165
      %p258 = pneg %p162
      %s259 = smul.u32 32, %s20
      %p260 = scmp.lt.s32.totalorder %s259, 63
      %s261 = scalar_select %p260, %s259, 63
      %p262 = scmp.lt.s32.totalorder %s21, 0
      %s263 = scalar_select %p262, %s21, 0
      %s264 = sadd.s32 %s263, %s261
      %s265 = smul.addr %s264, 8
      %s266 = scalar_lea.vmem %s4, %s265
      %s267 = smul.u32 32, %s20
      %p268 = scmp.lt.s32.totalorder %s267, 63
      %s269 = scalar_select %p268, %s267, 63
      %p270 = scmp.lt.s32.totalorder %s22, 0
      %s271 = scalar_select %p270, %s22, 0
      %s272 = sadd.s32 %s271, %s269
      %s273 = smul.addr %s272, 4
      %s274 = scalar_lea.vmem %s0, %s273
      %s275 = smul.u32 32, %s20
      %s276 = smul.u32 16, %s22
      %p277 = scmp.lt.s32.totalorder %s276, 15
      %s278 = scalar_select %p277, %s276, 15
      %p279 = scmp.lt.s32.totalorder %s21, 0
      %s280 = scalar_select %p279, %s21, 0
      %s281 = sadd.s32 %s280, %s278
      %s282 = smul.addr %s281, 4
      %s283 = scalar_lea.vmem %s1, %s282
      %s284 = smul.u32 16, %s22
      %p285 = scmp.lt.s32.totalorder %s21, 0
      %s286 = scalar_select %p285, %s21, 0
      %s287 = scalar_lea.vmem %s2, %s286
      %p288 = scmp.lt.s32.totalorder %s21, 0
      %s289 = scalar_select %p288, %s21, 0
      %s290 = scalar_lea.vmem %s3, %s289
      %s291 = smul.u32 32, %s20
      %p292 = scmp.lt.s32.totalorder %s291, 63
      %s293 = scalar_select %p292, %s291, 63
      %p294 = scmp.lt.s32.totalorder %s21, 0
      %s295 = scalar_select %p294, %s21, 0
      %s296 = sadd.s32 %s295, %s293
      %s297 = smul.addr %s296, 8
      %s298 = scalar_lea.vmem %s4, %s297
      %s299 = smul.u32 32, %s20
      %p301 = scmp.eq.s32.totalorder %s22, 0
      // Predicated region
      $region37: #{forward.46} parent=35 // pred_check
        %p302 = pneg %p301
      $region38: #{forward.46} parent=35 // pred_check_branch
        %304 = sbr.rel (%p302) target = $region40
      $region39: #{forward.46} parent=35 // pred_region
        %305 = vst [vmem:[#allocation2] sm:$0xff] 0.0
        %306 = vst [vmem:[#allocation2 + $0x8] sm:$0xff] 0.0
        %307 = vst [vmem:[#allocation2 + $0x10] sm:$0xff] 0.0
        %308 = vst [vmem:[#allocation2 + $0x18] sm:$0xff] 0.0
        %309 = vst [vmem:[#allocation2 + $0x20] sm:$0xff] 0.0
        %310 = vst [vmem:[#allocation2 + $0x28] sm:$0xff] 0.0
        %311 = vst [vmem:[#allocation2 + $0x30] sm:$0xff] 0.0
        %312 = vst [vmem:[#allocation2 + $0x38] sm:$0xff] 0.0
        %313 = vst [vmem:[#allocation2 + $0x40] sm:$0xff] 0.0
        %314 = vst [vmem:[#allocation2 + $0x48] sm:$0xff] 0.0
        %315 = vst [vmem:[#allocation2 + $0x50] sm:$0xff] 0.0
        %316 = vst [vmem:[#allocation2 + $0x58] sm:$0xff] 0.0
        %317 = vst [vmem:[#allocation2 + $0x60] sm:$0xff] 0.0
        %318 = vst [vmem:[#allocation2 + $0x68] sm:$0xff] 0.0
        %319 = vst [vmem:[#allocation2 + $0x70] sm:$0xff] 0.0
        %320 = vst [vmem:[#allocation2 + $0x78] sm:$0xff] 0.0
        %321 = vst [vmem:[#allocation2 + $0x80] sm:$0xff] 0.0
        %322 = vst [vmem:[#allocation2 + $0x88] sm:$0xff] 0.0
        %323 = vst [vmem:[#allocation2 + $0x90] sm:$0xff] 0.0
        %324 = vst [vmem:[#allocation2 + $0x98] sm:$0xff] 0.0
        %325 = vst [vmem:[#allocation2 + $0xa0] sm:$0xff] 0.0
        %326 = vst [vmem:[#allocation2 + $0xa8] sm:$0xff] 0.0
        %327 = vst [vmem:[#allocation2 + $0xb0] sm:$0xff] 0.0
        %328 = vst [vmem:[#allocation2 + $0xb8] sm:$0xff] 0.0
        %329 = vst [vmem:[#allocation2 + $0xc0] sm:$0xff] 0.0
        %330 = vst [vmem:[#allocation2 + $0xc8] sm:$0xff] 0.0
        %331 = vst [vmem:[#allocation2 + $0xd0] sm:$0xff] 0.0
        %332 = vst [vmem:[#allocation2 + $0xd8] sm:$0xff] 0.0
        %333 = vst [vmem:[#allocation2 + $0xe0] sm:$0xff] 0.0
        %334 = vst [vmem:[#allocation2 + $0xe8] sm:$0xff] 0.0
        %335 = vst [vmem:[#allocation2 + $0xf0] sm:$0xff] 0.0
        %336 = vst [vmem:[#allocation2 + $0xf8] sm:$0xff] 0.0
      $region40: #{forward.46} parent=35 // pred_fallthru
        _
      %v337 = vld [vmem:[#allocation2] sm:$0xff]
      %v338 = vld [vmem:[#allocation2 + $0x8] sm:$0xff]
      %v339 = vld [vmem:[#allocation2 + $0x10] sm:$0xff]
      %v340 = vld [vmem:[#allocation2 + $0x18] sm:$0xff]
      %v341 = vld [vmem:[#allocation2 + $0x20] sm:$0xff]
      %v342 = vld [vmem:[#allocation2 + $0x28] sm:$0xff]
      %v343 = vld [vmem:[#allocation2 + $0x30] sm:$0xff]
      %v344 = vld [vmem:[#allocation2 + $0x38] sm:$0xff]
      %v345 = vld [vmem:[#allocation2 + $0x40] sm:$0xff]
      %v346 = vld [vmem:[#allocation2 + $0x48] sm:$0xff]
      %v347 = vld [vmem:[#allocation2 + $0x50] sm:$0xff]
      %v348 = vld [vmem:[#allocation2 + $0x58] sm:$0xff]
      %v349 = vld [vmem:[#allocation2 + $0x60] sm:$0xff]
      %v350 = vld [vmem:[#allocation2 + $0x68] sm:$0xff]
      %v351 = vld [vmem:[#allocation2 + $0x70] sm:$0xff]
      %v352 = vld [vmem:[#allocation2 + $0x78] sm:$0xff]
      %v353 = vld [vmem:[#allocation2 + $0x80] sm:$0xff]
      %v354 = vld [vmem:[#allocation2 + $0x88] sm:$0xff]
      %v355 = vld [vmem:[#allocation2 + $0x90] sm:$0xff]
      %v356 = vld [vmem:[#allocation2 + $0x98] sm:$0xff]
      %v357 = vld [vmem:[#allocation2 + $0xa0] sm:$0xff]
      %v358 = vld [vmem:[#allocation2 + $0xa8] sm:$0xff]
      %v359 = vld [vmem:[#allocation2 + $0xb0] sm:$0xff]
      %v360 = vld [vmem:[#allocation2 + $0xb8] sm:$0xff]
      %v361 = vld [vmem:[#allocation2 + $0xc0] sm:$0xff]
      %v362 = vld [vmem:[#allocation2 + $0xc8] sm:$0xff]
      %v363 = vld [vmem:[#allocation2 + $0xd0] sm:$0xff]
      %v364 = vld [vmem:[#allocation2 + $0xd8] sm:$0xff]
      %v365 = vld [vmem:[#allocation2 + $0xe0] sm:$0xff]
      %v366 = vld [vmem:[#allocation2 + $0xe8] sm:$0xff]
      %v367 = vld [vmem:[#allocation2 + $0xf0] sm:$0xff]
      %v368 = vld [vmem:[#allocation2 + $0xf8] sm:$0xff]
      %v369 = vld [vmem:[%s274] sm:$0xf]
      %v370 = vld [vmem:[%s274 + $0x4] sm:$0xf]
      %v371 = vld [vmem:[%s274 + $0x8] sm:$0xf]
      %v372 = vld [vmem:[%s274 + $0xc] sm:$0xf]
      %v373 = vld [vmem:[%s274 + $0x10] sm:$0xf]
      %v374 = vld [vmem:[%s274 + $0x14] sm:$0xf]
      %v375 = vld [vmem:[%s274 + $0x18] sm:$0xf]
      %v376 = vld [vmem:[%s274 + $0x1c] sm:$0xf]
      %v377 = vld [vmem:[%s274 + $0x20] sm:$0xf]
      %v378 = vld [vmem:[%s274 + $0x24] sm:$0xf]
      %v379 = vld [vmem:[%s274 + $0x28] sm:$0xf]
      %v380 = vld [vmem:[%s274 + $0x2c] sm:$0xf]
      %v381 = vld [vmem:[%s274 + $0x30] sm:$0xf]
      %v382 = vld [vmem:[%s274 + $0x34] sm:$0xf]
      %v383 = vld [vmem:[%s274 + $0x38] sm:$0xf]
      %v384 = vld [vmem:[%s274 + $0x3c] sm:$0xf]
      %v385 = vld [vmem:[%s274 + $0x40] sm:$0xf]
      %v386 = vld [vmem:[%s274 + $0x44] sm:$0xf]
      %v387 = vld [vmem:[%s274 + $0x48] sm:$0xf]
      %v388 = vld [vmem:[%s274 + $0x4c] sm:$0xf]
      %v389 = vld [vmem:[%s274 + $0x50] sm:$0xf]
      %v390 = vld [vmem:[%s274 + $0x54] sm:$0xf]
      %v391 = vld [vmem:[%s274 + $0x58] sm:$0xf]
      %v392 = vld [vmem:[%s274 + $0x5c] sm:$0xf]
      %v393 = vld [vmem:[%s274 + $0x60] sm:$0xf]
      %v394 = vld [vmem:[%s274 + $0x64] sm:$0xf]
      %v395 = vld [vmem:[%s274 + $0x68] sm:$0xf]
      %v396 = vld [vmem:[%s274 + $0x6c] sm:$0xf]
      %v397 = vld [vmem:[%s274 + $0x70] sm:$0xf]
      %v398 = vld [vmem:[%s274 + $0x74] sm:$0xf]
      %v399 = vld [vmem:[%s274 + $0x78] sm:$0xf]
      %v400 = vld [vmem:[%s274 + $0x7c] sm:$0xf]
      %v401 = vld [vmem:[%s283] sm:$0xf]
      %v402 = vld [vmem:[%s283 + $0x4] sm:$0xf]
      %v403 = vld [vmem:[%s283 + $0x8] sm:$0xf]
      %v404 = vld [vmem:[%s283 + $0xc] sm:$0xf]
      %v405 = vld [vmem:[%s283 + $0x10] sm:$0xf]
      %v406 = vld [vmem:[%s283 + $0x14] sm:$0xf]
      %v407 = vld [vmem:[%s283 + $0x18] sm:$0xf]
      %v408 = vld [vmem:[%s283 + $0x1c] sm:$0xf]
      %v409 = vld [vmem:[%s283 + $0x20] sm:$0xf]
      %v410 = vld [vmem:[%s283 + $0x24] sm:$0xf]
      %v411 = vld [vmem:[%s283 + $0x28] sm:$0xf]
      %v412 = vld [vmem:[%s283 + $0x2c] sm:$0xf]
      %v413 = vld [vmem:[%s283 + $0x30] sm:$0xf]
      %v414 = vld [vmem:[%s283 + $0x34] sm:$0xf]
      %v415 = vld [vmem:[%s283 + $0x38] sm:$0xf]
      %v416 = vld [vmem:[%s283 + $0x3c] sm:$0xf]
      %v449 = vunpack.c.l.b16 %v369
      %v450 = vunpack.c.l.b16 %v370
      %v451 = vunpack.c.l.b16 %v371
      %v452 = vunpack.c.l.b16 %v372
      %v453 = vunpack.c.l.b16 %v373
      %v454 = vunpack.c.l.b16 %v374
      %v455 = vunpack.c.l.b16 %v375
      %v456 = vunpack.c.l.b16 %v376
      %v457 = vunpack.c.l.b16 %v377
      %v458 = vunpack.c.l.b16 %v378
      %v459 = vunpack.c.l.b16 %v379
      %v460 = vunpack.c.l.b16 %v380
      %v461 = vunpack.c.l.b16 %v381
      %v462 = vunpack.c.l.b16 %v382
      %v463 = vunpack.c.l.b16 %v383
      %v464 = vunpack.c.l.b16 %v384
      %v465 = vunpack.c.l.b16 %v385
      %v466 = vunpack.c.l.b16 %v386
      %v467 = vunpack.c.l.b16 %v387
      %v468 = vunpack.c.l.b16 %v388
      %v469 = vunpack.c.l.b16 %v389
      %v470 = vunpack.c.l.b16 %v390
      %v471 = vunpack.c.l.b16 %v391
      %v472 = vunpack.c.l.b16 %v392
      %v473 = vunpack.c.l.b16 %v393
      %v474 = vunpack.c.l.b16 %v394
      %v475 = vunpack.c.l.b16 %v395
      %v476 = vunpack.c.l.b16 %v396
      %v477 = vunpack.c.l.b16 %v397
      %v478 = vunpack.c.l.b16 %v398
      %v479 = vunpack.c.l.b16 %v399
      %v480 = vunpack.c.l.b16 %v400
      %v481 = vpack.c.b16 %v450, %v449
      %v482 = vpack.c.b16 %v452, %v451
      %v483 = vpack.c.b16 %v454, %v453
      %v484 = vpack.c.b16 %v456, %v455
      %v485 = vpack.c.b16 %v458, %v457
      %v486 = vpack.c.b16 %v460, %v459
      %v487 = vpack.c.b16 %v462, %v461
      %v488 = vpack.c.b16 %v464, %v463
      %v489 = vpack.c.b16 %v466, %v465
      %v490 = vpack.c.b16 %v468, %v467
      %v491 = vpack.c.b16 %v470, %v469
      %v492 = vpack.c.b16 %v472, %v471
      %v493 = vpack.c.b16 %v474, %v473
      %v494 = vpack.c.b16 %v476, %v475
      %v495 = vpack.c.b16 %v478, %v477
      %v496 = vpack.c.b16 %v480, %v479
      %v529 = vunpack.c.l.b16 %v401
      %v530 = vunpack.c.l.b16 %v402
      %v531 = vunpack.c.l.b16 %v403
      %v532 = vunpack.c.l.b16 %v404
      %v533 = vunpack.c.l.b16 %v405
      %v534 = vunpack.c.l.b16 %v406
      %v535 = vunpack.c.l.b16 %v407
      %v536 = vunpack.c.l.b16 %v408
      %v537 = vunpack.c.l.b16 %v409
      %v538 = vunpack.c.l.b16 %v410
      %v539 = vunpack.c.l.b16 %v411
      %v540 = vunpack.c.l.b16 %v412
      %v541 = vunpack.c.l.b16 %v413
      %v542 = vunpack.c.l.b16 %v414
      %v543 = vunpack.c.l.b16 %v415
      %v544 = vunpack.c.l.b16 %v416
      %v545 = vpack.c.b16 %v530, %v529
      %v546 = vpack.c.b16 %v532, %v531
      %v547 = vpack.c.b16 %v534, %v533
      %v548 = vpack.c.b16 %v536, %v535
      %v549 = vpack.c.b16 %v538, %v537
      %v550 = vpack.c.b16 %v540, %v539
      %v551 = vpack.c.b16 %v542, %v541
      %v552 = vpack.c.b16 %v544, %v543
      %561 = vmatprep.subr.bf16.mxu0 0
      %562 = vmatpush1.bf16.msra.mxu0 %v552
      %563 = vmatprep.subr.bf16.mxu0 0
      %564 = vmatpush1.bf16.msra.mxu0 %v551
      %565 = vmatprep.subr.bf16.mxu0 0
      %566 = vmatpush1.bf16.msra.mxu0 %v550
      %567 = vmatprep.subr.bf16.mxu0 0
      %568 = vmatpush1.bf16.msra.mxu0 %v549
      %569 = vmatprep.subr.bf16.mxu0 0
      %570 = vmatpush1.bf16.msra.mxu0 %v548
      %571 = vmatprep.subr.bf16.mxu0 0
      %572 = vmatpush1.bf16.msra.mxu0 %v547
      %573 = vmatprep.subr.bf16.mxu0 0
      %574 = vmatpush1.bf16.msra.mxu0 %v546
      %575 = vmatprep.subr.bf16.mxu0 0
      %576 = vmatpush1.bf16.msra.mxu0 %v545
      %577 = vmatprep.subr.bf16.mxu0 0
      %578 = vmatpush2.bf16.msra.mxu0 0
      %579 = vmatprep.subr.bf16.mxu0 0
      %580 = vmatpush2.bf16.msra.mxu0 0
      %581 = vmatprep.subr.bf16.mxu0 0
      %582 = vmatpush2.bf16.msra.mxu0 0
      %583 = vmatprep.subr.bf16.mxu0 0
      %584 = vmatpush2.bf16.msra.mxu0 0
      %585 = vmatprep.subr.bf16.mxu0 0
      %586 = vmatpush2.bf16.msra.mxu0 0
      %587 = vmatprep.subr.bf16.mxu0 0
      %588 = vmatpush2.bf16.msra.mxu0 0
      %589 = vmatprep.subr.bf16.mxu0 0
      %590 = vmatpush2.bf16.msra.mxu0 0
      %591 = vmatprep.subr.bf16.mxu0 0
      %592 = vmatpush2.bf16.msra.mxu0 0
      %593 = vmatprep.mubr.bf16.mxu0 0
      %594 = vmatmul.mubr.bf16.gmra.mxu0 %v481
      %v595 = vpop.f32.mrf.mxu0
      %v596 = vadd.f32 0.0, %v595
      %v597 = vpop.f32.mrf.mxu0
      %v598 = vpop.f32.mrf.mxu0
      %v599 = vadd.f32 0.0, %v598
      %v600 = vpop.f32.mrf.mxu0
      %601 = vmatprep.mubr.bf16.mxu0 0
      %602 = vmatmul.mubr.bf16.gmra.mxu0 %v482
      %v603 = vpop.f32.mrf.mxu0
      %v604 = vadd.f32 0.0, %v603
      %v605 = vpop.f32.mrf.mxu0
      %v606 = vpop.f32.mrf.mxu0
      %v607 = vadd.f32 0.0, %v606
      %v608 = vpop.f32.mrf.mxu0
      %609 = vmatprep.mubr.bf16.mxu0 0
      %610 = vmatmul.mubr.bf16.gmra.mxu0 %v483
      %v611 = vpop.f32.mrf.mxu0
      %v612 = vadd.f32 0.0, %v611
      %v613 = vpop.f32.mrf.mxu0
      %v614 = vpop.f32.mrf.mxu0
      %v615 = vadd.f32 0.0, %v614
      %v616 = vpop.f32.mrf.mxu0
      %617 = vmatprep.mubr.bf16.mxu0 0
      %618 = vmatmul.mubr.bf16.gmra.mxu0 %v484
      %v619 = vpop.f32.mrf.mxu0
      %v620 = vadd.f32 0.0, %v619
      %v621 = vpop.f32.mrf.mxu0
      %v622 = vpop.f32.mrf.mxu0
      %v623 = vadd.f32 0.0, %v622
      %v624 = vpop.f32.mrf.mxu0
      %625 = vmatprep.mubr.bf16.mxu0 0
      %626 = vmatmul.mubr.bf16.gmra.mxu0 %v485
      %v627 = vpop.f32.mrf.mxu0
      %v628 = vadd.f32 0.0, %v627
      %v629 = vpop.f32.mrf.mxu0
      %v630 = vpop.f32.mrf.mxu0
      %v631 = vadd.f32 0.0, %v630
      %v632 = vpop.f32.mrf.mxu0
      %633 = vmatprep.mubr.bf16.mxu0 0
      %634 = vmatmul.mubr.bf16.gmra.mxu0 %v486
      %v635 = vpop.f32.mrf.mxu0
      %v636 = vadd.f32 0.0, %v635
      %v637 = vpop.f32.mrf.mxu0
      %v638 = vpop.f32.mrf.mxu0
      %v639 = vadd.f32 0.0, %v638
      %v640 = vpop.f32.mrf.mxu0
      %641 = vmatprep.mubr.bf16.mxu0 0
      %642 = vmatmul.mubr.bf16.gmra.mxu0 %v487
      %v643 = vpop.f32.mrf.mxu0
      %v644 = vadd.f32 0.0, %v643
      %v645 = vpop.f32.mrf.mxu0
      %v646 = vpop.f32.mrf.mxu0
      %v647 = vadd.f32 0.0, %v646
      %v648 = vpop.f32.mrf.mxu0
      %649 = vmatprep.mubr.bf16.mxu0 0
      %650 = vmatmul.mubr.bf16.gmra.mxu0 %v488
      %v651 = vpop.f32.mrf.mxu0
      %v652 = vadd.f32 0.0, %v651
      %v653 = vpop.f32.mrf.mxu0
      %v654 = vpop.f32.mrf.mxu0
      %v655 = vadd.f32 0.0, %v654
      %v656 = vpop.f32.mrf.mxu0
      %657 = vmatprep.mubr.bf16.mxu0 0
      %658 = vmatmul.mubr.bf16.gmra.mxu0 %v489
      %v659 = vpop.f32.mrf.mxu0
      %v660 = vadd.f32 0.0, %v659
      %v661 = vpop.f32.mrf.mxu0
      %v662 = vpop.f32.mrf.mxu0
      %v663 = vadd.f32 0.0, %v662
      %v664 = vpop.f32.mrf.mxu0
      %665 = vmatprep.mubr.bf16.mxu0 0
      %666 = vmatmul.mubr.bf16.gmra.mxu0 %v490
      %v667 = vpop.f32.mrf.mxu0
      %v668 = vadd.f32 0.0, %v667
      %v669 = vpop.f32.mrf.mxu0
      %v670 = vpop.f32.mrf.mxu0
      %v671 = vadd.f32 0.0, %v670
      %v672 = vpop.f32.mrf.mxu0
      %673 = vmatprep.mubr.bf16.mxu0 0
      %674 = vmatmul.mubr.bf16.gmra.mxu0 %v491
      %v675 = vpop.f32.mrf.mxu0
      %v676 = vadd.f32 0.0, %v675
      %v677 = vpop.f32.mrf.mxu0
      %v678 = vpop.f32.mrf.mxu0
      %v679 = vadd.f32 0.0, %v678
      %v680 = vpop.f32.mrf.mxu0
      %681 = vmatprep.mubr.bf16.mxu0 0
      %682 = vmatmul.mubr.bf16.gmra.mxu0 %v492
      %v683 = vpop.f32.mrf.mxu0
      %v684 = vadd.f32 0.0, %v683
      %v685 = vpop.f32.mrf.mxu0
      %v686 = vpop.f32.mrf.mxu0
      %v687 = vadd.f32 0.0, %v686
      %v688 = vpop.f32.mrf.mxu0
      %689 = vmatprep.mubr.bf16.mxu0 0
      %690 = vmatmul.mubr.bf16.gmra.mxu0 %v493
      %v691 = vpop.f32.mrf.mxu0
      %v692 = vadd.f32 0.0, %v691
      %v693 = vpop.f32.mrf.mxu0
      %v694 = vpop.f32.mrf.mxu0
      %v695 = vadd.f32 0.0, %v694
      %v696 = vpop.f32.mrf.mxu0
      %697 = vmatprep.mubr.bf16.mxu0 0
      %698 = vmatmul.mubr.bf16.gmra.mxu0 %v494
      %v699 = vpop.f32.mrf.mxu0
      %v700 = vadd.f32 0.0, %v699
      %v701 = vpop.f32.mrf.mxu0
      %v702 = vpop.f32.mrf.mxu0
      %v703 = vadd.f32 0.0, %v702
      %v704 = vpop.f32.mrf.mxu0
      %705 = vmatprep.mubr.bf16.mxu0 0
      %706 = vmatmul.mubr.bf16.gmra.mxu0 %v495
      %v707 = vpop.f32.mrf.mxu0
      %v708 = vadd.f32 0.0, %v707
      %v709 = vpop.f32.mrf.mxu0
      %v710 = vpop.f32.mrf.mxu0
      %v711 = vadd.f32 0.0, %v710
      %v712 = vpop.f32.mrf.mxu0
      %713 = vmatprep.mubr.bf16.mxu0 0
      %714 = vmatmul.mubr.bf16.gmra.mxu0 %v496
      %v715 = vpop.f32.mrf.mxu0
      %v716 = vadd.f32 0.0, %v715
      %v717 = vpop.f32.mrf.mxu0
      %v718 = vpop.f32.mrf.mxu0
      %v719 = vadd.f32 0.0, %v718
      %v720 = vpop.f32.mrf.mxu0
      %721 = vdwg.mxu0
      %v722 = vadd.f32 %v337, %v596
      %v723 = vadd.f32 %v338, %v599
      %v724 = vadd.f32 %v339, %v604
      %v725 = vadd.f32 %v340, %v607
      %v726 = vadd.f32 %v341, %v612
      %v727 = vadd.f32 %v342, %v615
      %v728 = vadd.f32 %v343, %v620
      %v729 = vadd.f32 %v344, %v623
      %v730 = vadd.f32 %v345, %v628
      %v731 = vadd.f32 %v346, %v631
      %v732 = vadd.f32 %v347, %v636
      %v733 = vadd.f32 %v348, %v639
      %v734 = vadd.f32 %v349, %v644
      %v735 = vadd.f32 %v350, %v647
      %v736 = vadd.f32 %v351, %v652
      %v737 = vadd.f32 %v352, %v655
      %v738 = vadd.f32 %v353, %v660
      %v739 = vadd.f32 %v354, %v663
      %v740 = vadd.f32 %v355, %v668
      %v741 = vadd.f32 %v356, %v671
      %v742 = vadd.f32 %v357, %v676
      %v743 = vadd.f32 %v358, %v679
      %v744 = vadd.f32 %v359, %v684
      %v745 = vadd.f32 %v360, %v687
      %v746 = vadd.f32 %v361, %v692
      %v747 = vadd.f32 %v362, %v695
      %v748 = vadd.f32 %v363, %v700
      %v749 = vadd.f32 %v364, %v703
      %v750 = vadd.f32 %v365, %v708
      %v751 = vadd.f32 %v366, %v711
      %v752 = vadd.f32 %v367, %v716
      %v753 = vadd.f32 %v368, %v719
      %754 = vst [vmem:[#allocation2] sm:$0xff] %v722
      %755 = vst [vmem:[#allocation2 + $0x8] sm:$0xff] %v723
      %756 = vst [vmem:[#allocation2 + $0x10] sm:$0xff] %v724
      %757 = vst [vmem:[#allocation2 + $0x18] sm:$0xff] %v725
      %758 = vst [vmem:[#allocation2 + $0x20] sm:$0xff] %v726
      %759 = vst [vmem:[#allocation2 + $0x28] sm:$0xff] %v727
      %760 = vst [vmem:[#allocation2 + $0x30] sm:$0xff] %v728
      %761 = vst [vmem:[#allocation2 + $0x38] sm:$0xff] %v729
      %762 = vst [vmem:[#allocation2 + $0x40] sm:$0xff] %v730
      %763 = vst [vmem:[#allocation2 + $0x48] sm:$0xff] %v731
      %764 = vst [vmem:[#allocation2 + $0x50] sm:$0xff] %v732
      %765 = vst [vmem:[#allocation2 + $0x58] sm:$0xff] %v733
      %766 = vst [vmem:[#allocation2 + $0x60] sm:$0xff] %v734
      %767 = vst [vmem:[#allocation2 + $0x68] sm:$0xff] %v735
      %768 = vst [vmem:[#allocation2 + $0x70] sm:$0xff] %v736
      %769 = vst [vmem:[#allocation2 + $0x78] sm:$0xff] %v737
      %770 = vst [vmem:[#allocation2 + $0x80] sm:$0xff] %v738
      %771 = vst [vmem:[#allocation2 + $0x88] sm:$0xff] %v739
      %772 = vst [vmem:[#allocation2 + $0x90] sm:$0xff] %v740
      %773 = vst [vmem:[#allocation2 + $0x98] sm:$0xff] %v741
      %774 = vst [vmem:[#allocation2 + $0xa0] sm:$0xff] %v742
      %775 = vst [vmem:[#allocation2 + $0xa8] sm:$0xff] %v743
      %776 = vst [vmem:[#allocation2 + $0xb0] sm:$0xff] %v744
      %777 = vst [vmem:[#allocation2 + $0xb8] sm:$0xff] %v745
      %778 = vst [vmem:[#allocation2 + $0xc0] sm:$0xff] %v746
      %779 = vst [vmem:[#allocation2 + $0xc8] sm:$0xff] %v747
      %780 = vst [vmem:[#allocation2 + $0xd0] sm:$0xff] %v748
      %781 = vst [vmem:[#allocation2 + $0xd8] sm:$0xff] %v749
      %782 = vst [vmem:[#allocation2 + $0xe0] sm:$0xff] %v750
      %783 = vst [vmem:[#allocation2 + $0xe8] sm:$0xff] %v751
      %784 = vst [vmem:[#allocation2 + $0xf0] sm:$0xff] %v752
      %785 = vst [vmem:[#allocation2 + $0xf8] sm:$0xff] %v753
      // Predicated region
      $region41: #{forward.46} parent=35 // pred_check
        %p786 = pneg %p301
      $region42: #{forward.46} parent=35 // pred_check_branch
        %788 = sbr.rel (%p786) target = $region44
      $region43: #{forward.46} parent=35 // pred_region
        %v789 = vld [vmem:[#allocation2] sm:$0xff]
        %v790 = vld [vmem:[#allocation2 + $0x8] sm:$0xff]
        %v791 = vld [vmem:[#allocation2 + $0x10] sm:$0xff]
        %v792 = vld [vmem:[#allocation2 + $0x18] sm:$0xff]
        %v793 = vld [vmem:[#allocation2 + $0x20] sm:$0xff]
        %v794 = vld [vmem:[#allocation2 + $0x28] sm:$0xff]
        %v795 = vld [vmem:[#allocation2 + $0x30] sm:$0xff]
        %v796 = vld [vmem:[#allocation2 + $0x38] sm:$0xff]
        %v797 = vld [vmem:[#allocation2 + $0x40] sm:$0xff]
        %v798 = vld [vmem:[#allocation2 + $0x48] sm:$0xff]
        %v799 = vld [vmem:[#allocation2 + $0x50] sm:$0xff]
        %v800 = vld [vmem:[#allocation2 + $0x58] sm:$0xff]
        %v801 = vld [vmem:[#allocation2 + $0x60] sm:$0xff]
        %v802 = vld [vmem:[#allocation2 + $0x68] sm:$0xff]
        %v803 = vld [vmem:[#allocation2 + $0x70] sm:$0xff]
        %v804 = vld [vmem:[#allocation2 + $0x78] sm:$0xff]
        %v805 = vld [vmem:[#allocation2 + $0x80] sm:$0xff]
        %v806 = vld [vmem:[#allocation2 + $0x88] sm:$0xff]
        %v807 = vld [vmem:[#allocation2 + $0x90] sm:$0xff]
        %v808 = vld [vmem:[#allocation2 + $0x98] sm:$0xff]
        %v809 = vld [vmem:[#allocation2 + $0xa0] sm:$0xff]
        %v810 = vld [vmem:[#allocation2 + $0xa8] sm:$0xff]
        %v811 = vld [vmem:[#allocation2 + $0xb0] sm:$0xff]
        %v812 = vld [vmem:[#allocation2 + $0xb8] sm:$0xff]
        %v813 = vld [vmem:[#allocation2 + $0xc0] sm:$0xff]
        %v814 = vld [vmem:[#allocation2 + $0xc8] sm:$0xff]
        %v815 = vld [vmem:[#allocation2 + $0xd0] sm:$0xff]
        %v816 = vld [vmem:[#allocation2 + $0xd8] sm:$0xff]
        %v817 = vld [vmem:[#allocation2 + $0xe0] sm:$0xff]
        %v818 = vld [vmem:[#allocation2 + $0xe8] sm:$0xff]
        %v819 = vld [vmem:[#allocation2 + $0xf0] sm:$0xff]
        %v820 = vld [vmem:[#allocation2 + $0xf8] sm:$0xff]
        %v821 = vld [vmem:[%s287] sm:$0x1]
        %v823 = vlaneseq
        %v824 = vshrl.u32 %v823, 7
        %v825 = vsub.s32 0, %v824
        %v826 = vrot.slane %v821, %v825
        %v828 = vmul.f32 %v789, %v826
        %v829 = vmul.f32 %v790, %v826
        %v830 = vmul.f32 %v791, %v826
        %v831 = vmul.f32 %v792, %v826
        %v832 = vmul.f32 %v793, %v826
        %v833 = vmul.f32 %v794, %v826
        %v834 = vmul.f32 %v795, %v826
        %v835 = vmul.f32 %v796, %v826
        %v836 = vmul.f32 %v797, %v826
        %v837 = vmul.f32 %v798, %v826
        %v838 = vmul.f32 %v799, %v826
        %v839 = vmul.f32 %v800, %v826
        %v840 = vmul.f32 %v801, %v826
        %v841 = vmul.f32 %v802, %v826
        %v842 = vmul.f32 %v803, %v826
        %v843 = vmul.f32 %v804, %v826
        %v844 = vmul.f32 %v805, %v826
        %v845 = vmul.f32 %v806, %v826
        %v846 = vmul.f32 %v807, %v826
        %v847 = vmul.f32 %v808, %v826
        %v848 = vmul.f32 %v809, %v826
        %v849 = vmul.f32 %v810, %v826
        %v850 = vmul.f32 %v811, %v826
        %v851 = vmul.f32 %v812, %v826
        %v852 = vmul.f32 %v813, %v826
        %v853 = vmul.f32 %v814, %v826
        %v854 = vmul.f32 %v815, %v826
        %v855 = vmul.f32 %v816, %v826
        %v856 = vmul.f32 %v817, %v826
        %v857 = vmul.f32 %v818, %v826
        %v858 = vmul.f32 %v819, %v826
        %v859 = vmul.f32 %v820, %v826
        %v860 = vld [vmem:[%s290] sm:$0x1]
        %v862 = vlaneseq
        %v863 = vshrl.u32 %v862, 7
        %v864 = vsub.s32 0, %v863
        %v865 = vrot.slane %v860, %v864
        %v867 = vadd.f32 %v828, %v865
        %v868 = vadd.f32 %v829, %v865
        %v869 = vadd.f32 %v830, %v865
        %v870 = vadd.f32 %v831, %v865
        %v871 = vadd.f32 %v832, %v865
        %v872 = vadd.f32 %v833, %v865
        %v873 = vadd.f32 %v834, %v865
        %v874 = vadd.f32 %v835, %v865
        %v875 = vadd.f32 %v836, %v865
        %v876 = vadd.f32 %v837, %v865
        %v877 = vadd.f32 %v838, %v865
        %v878 = vadd.f32 %v839, %v865
        %v879 = vadd.f32 %v840, %v865
        %v880 = vadd.f32 %v841, %v865
        %v881 = vadd.f32 %v842, %v865
        %v882 = vadd.f32 %v843, %v865
        %v883 = vadd.f32 %v844, %v865
        %v884 = vadd.f32 %v845, %v865
        %v885 = vadd.f32 %v846, %v865
        %v886 = vadd.f32 %v847, %v865
        %v887 = vadd.f32 %v848, %v865
        %v888 = vadd.f32 %v849, %v865
        %v889 = vadd.f32 %v850, %v865
        %v890 = vadd.f32 %v851, %v865
        %v891 = vadd.f32 %v852, %v865
        %v892 = vadd.f32 %v853, %v865
        %v893 = vadd.f32 %v854, %v865
        %v894 = vadd.f32 %v855, %v865
        %v895 = vadd.f32 %v856, %v865
        %v896 = vadd.f32 %v857, %v865
        %v897 = vadd.f32 %v858, %v865
        %v898 = vadd.f32 %v859, %v865
        %v899 = vmax.f32 %v867, 0.0
        %v900 = vmax.f32 %v868, 0.0
        %v901 = vmax.f32 %v869, 0.0
        %v902 = vmax.f32 %v870, 0.0
        %v903 = vmax.f32 %v871, 0.0
        %v904 = vmax.f32 %v872, 0.0
        %v905 = vmax.f32 %v873, 0.0
        %v906 = vmax.f32 %v874, 0.0
        %v907 = vmax.f32 %v875, 0.0
        %v908 = vmax.f32 %v876, 0.0
        %v909 = vmax.f32 %v877, 0.0
        %v910 = vmax.f32 %v878, 0.0
        %v911 = vmax.f32 %v879, 0.0
        %v912 = vmax.f32 %v880, 0.0
        %v913 = vmax.f32 %v881, 0.0
        %v914 = vmax.f32 %v882, 0.0
        %v915 = vmax.f32 %v883, 0.0
        %v916 = vmax.f32 %v884, 0.0
        %v917 = vmax.f32 %v885, 0.0
        %v918 = vmax.f32 %v886, 0.0
        %v919 = vmax.f32 %v887, 0.0
        %v920 = vmax.f32 %v888, 0.0
        %v921 = vmax.f32 %v889, 0.0
        %v922 = vmax.f32 %v890, 0.0
        %v923 = vmax.f32 %v891, 0.0
        %v924 = vmax.f32 %v892, 0.0
        %v925 = vmax.f32 %v893, 0.0
        %v926 = vmax.f32 %v894, 0.0
        %v927 = vmax.f32 %v895, 0.0
        %v928 = vmax.f32 %v896, 0.0
        %v929 = vmax.f32 %v897, 0.0
        %v930 = vmax.f32 %v898, 0.0
        %931 = vst [vmem:[%s298] sm:$0xff] %v899
        %932 = vst [vmem:[%s298 + $0x8] sm:$0xff] %v900
        %933 = vst [vmem:[%s298 + $0x10] sm:$0xff] %v901
        %934 = vst [vmem:[%s298 + $0x18] sm:$0xff] %v902
        %935 = vst [vmem:[%s298 + $0x20] sm:$0xff] %v903
        %936 = vst [vmem:[%s298 + $0x28] sm:$0xff] %v904
        %937 = vst [vmem:[%s298 + $0x30] sm:$0xff] %v905
        %938 = vst [vmem:[%s298 + $0x38] sm:$0xff] %v906
        %939 = vst [vmem:[%s298 + $0x40] sm:$0xff] %v907
        %940 = vst [vmem:[%s298 + $0x48] sm:$0xff] %v908
        %941 = vst [vmem:[%s298 + $0x50] sm:$0xff] %v909
        %942 = vst [vmem:[%s298 + $0x58] sm:$0xff] %v910
        %943 = vst [vmem:[%s298 + $0x60] sm:$0xff] %v911
        %944 = vst [vmem:[%s298 + $0x68] sm:$0xff] %v912
        %945 = vst [vmem:[%s298 + $0x70] sm:$0xff] %v913
        %946 = vst [vmem:[%s298 + $0x78] sm:$0xff] %v914
        %947 = vst [vmem:[%s298 + $0x80] sm:$0xff] %v915
        %948 = vst [vmem:[%s298 + $0x88] sm:$0xff] %v916
        %949 = vst [vmem:[%s298 + $0x90] sm:$0xff] %v917
        %950 = vst [vmem:[%s298 + $0x98] sm:$0xff] %v918
        %951 = vst [vmem:[%s298 + $0xa0] sm:$0xff] %v919
        %952 = vst [vmem:[%s298 + $0xa8] sm:$0xff] %v920
        %953 = vst [vmem:[%s298 + $0xb0] sm:$0xff] %v921
        %954 = vst [vmem:[%s298 + $0xb8] sm:$0xff] %v922
        %955 = vst [vmem:[%s298 + $0xc0] sm:$0xff] %v923
        %956 = vst [vmem:[%s298 + $0xc8] sm:$0xff] %v924
        %957 = vst [vmem:[%s298 + $0xd0] sm:$0xff] %v925
        %958 = vst [vmem:[%s298 + $0xd8] sm:$0xff] %v926
        %959 = vst [vmem:[%s298 + $0xe0] sm:$0xff] %v927
        %960 = vst [vmem:[%s298 + $0xe8] sm:$0xff] %v928
        %961 = vst [vmem:[%s298 + $0xf0] sm:$0xff] %v929
        %962 = vst [vmem:[%s298 + $0xf8] sm:$0xff] %v930
      $region44: #{forward.46} parent=35 // pred_fallthru
        _
      %s963 = smul.u32 32, %s20
      %p964 = scmp.lt.s32.totalorder %s963, 63
      %s965 = scalar_select %p964, %s963, 63
      %p966 = scmp.lt.s32.totalorder %s21, 0
      %s967 = scalar_select %p966, %s21, 0
      %s968 = sadd.s32 %s967, %s965
      %s969 = smul.addr %s968, 8
      %s970 = scalar_lea.vmem %s4, %s969
      // Predicated region
      $region45: #{forward.46} parent=35 // pred_check
        %p971 = pneg %p162
      $region46: #{forward.46} parent=35 // pred_check_branch
        %973 = sbr.rel (%p971) target = $region48
      $region47: #{forward.46} parent=35 // pred_region
        %s974 = smul.u32 32, %s20
      $region48: #{forward.46} parent=35 // pred_fallthru
        _
    $region36: #{forward.46} parent=5 // pred_fallthru
      _
    %p975 = scmp.le.s32.totalorder 2, %s10
    // Predicated region
    $region49: #{forward.46} parent=5 // pred_check
      %p976 = pneg %p975
    $region50: #{forward.46} parent=5 // pred_check_branch
      %978 = sbr.rel (%p976) target = $region52
    $region51: #{forward.46} parent=5 // pred_region
      %s979 = ssub.s32 %s10, 2
      // Predicated region
      $region53: #{forward.46} parent=51 // pred_check
        %p980 = pneg %p168
      $region54: #{forward.46} parent=51 // pred_check_branch
        %982 = sbr.rel (%p980) target = $region56
      $region55: #{forward.46} parent=51 // pred_region
        %s983 = smul.u32 32, %s23
        %p984 = scmp.lt.s32.totalorder %s983, 63
        %s985 = scalar_select %p984, %s983, 63
        %p986 = scmp.lt.s32.totalorder %s24, 0
        %s987 = scalar_select %p986, %s24, 0
        %s988 = sadd.s32 %s987, %s985
        %s989 = smul.addr %s988, 8
        %s990 = scalar_lea.vmem %s4, %s989
      $region56: #{forward.46} parent=51 // pred_fallthru
        _
    $region52: #{forward.46} parent=5 // pred_fallthru
      _
  $region6: #{forward.46} parent=0 // loop_footer
    %s14 = sadd.s32 1, %s10
  $region7: #{forward.46} parent=0 // loop_footer_branch
    %9 = sbr.rel target = $region3
  $region8: #{forward.46} parent=0 // loop_exit
    _

// kernel: forward.47
$region0: #{forward.47}
  #allocation0 [shape = 'u32[]', space=smem, size = 0x4, offset = 0x4, fixed_abs, tag = 'smem constant byte address 0x4 - core index']
  #allocation1 [shape = 'u32[144,128]{1,0:T(1,128)}', space=vmem, size = 0x12000, scoped, tag = 'internal scratch']
  #allocation2 [shape = 'f32[112,128]{1,0:T(8,128)}', space=vmem, size = 0xe000, scoped, tag = 'scratch operand']
  %s0 = inlined_call_operand.vmem [shape: bf16[112,256], index: 0, kind: input, shape index: {}]
  %s1 = inlined_call_operand.vmem [shape: bf16[256,128], index: 1, kind: input, shape index: {}]
  %s2 = inlined_call_operand.vmem [shape: f32[1,128], index: 2, kind: input, shape index: {}]
  %s3 = inlined_call_operand.vmem [shape: f32[1,128], index: 3, kind: input, shape index: {}]
  %s4 = inlined_call_operand.vmem [shape: f32[112,128], index: 4, kind: output, shape index: {}]
  %s5 = sld [smem:[#allocation0]]
  $region34: #{forward.47} parent=0
    _
  %s7 = ssub.s32 1, %s5
  %s8 = scalar_select 0, %s7, %s5
  // Predicated region
  $region2: #{forward.47} parent=0 // pred_check
    _
  $region3: #{forward.47} parent=0 // pred_check_branch
    %10 = sbr.rel (0) target = $region5
  $region4: #{forward.47} parent=0 // pred_region
    _
  $region5: #{forward.47} parent=0 // pred_fallthru
    _
  // Predicated region
  $region6: #{forward.47} parent=0 // pred_check
    _
  $region7: #{forward.47} parent=0 // pred_check_branch
    %12 = sbr.rel (0) target = $region9
  $region8: #{forward.47} parent=0 // pred_region
    _
  $region9: #{forward.47} parent=0 // pred_fallthru
    _
  // Predicated region
  $region10: #{forward.47} parent=0 // pred_check
    _
  $region11: #{forward.47} parent=0 // pred_check_branch
    %14 = sbr.rel (0) target = $region13
  $region12: #{forward.47} parent=0 // pred_region
    _
  $region13: #{forward.47} parent=0 // pred_fallthru
    _
  // Predicated region
  $region14: #{forward.47} parent=0 // pred_check
    _
  $region15: #{forward.47} parent=0 // pred_check_branch
    %16 = sbr.rel (0) target = $region17
  $region16: #{forward.47} parent=0 // pred_region
    _
  $region17: #{forward.47} parent=0 // pred_fallthru
    _
  %p18 = scmp.eq.s32.totalorder 0, 0
  // Predicated region
  $region18: #{forward.47} parent=0 // pred_check
    %p19 = pneg %p18
  $region19: #{forward.47} parent=0 // pred_check_branch
    %21 = sbr.rel (%p19) target = $region21
  $region20: #{forward.47} parent=0 // pred_region
    %22 = vst [vmem:[#allocation2] sm:$0xff] 0.0
    %23 = vst [vmem:[#allocation2 + $0x8] sm:$0xff] 0.0
    %24 = vst [vmem:[#allocation2 + $0x10] sm:$0xff] 0.0
    %25 = vst [vmem:[#allocation2 + $0x18] sm:$0xff] 0.0
    %26 = vst [vmem:[#allocation2 + $0x20] sm:$0xff] 0.0
    %27 = vst [vmem:[#allocation2 + $0x28] sm:$0xff] 0.0
    %28 = vst [vmem:[#allocation2 + $0x30] sm:$0xff] 0.0
    %29 = vst [vmem:[#allocation2 + $0x38] sm:$0xff] 0.0
    %30 = vst [vmem:[#allocation2 + $0x40] sm:$0xff] 0.0
    %31 = vst [vmem:[#allocation2 + $0x48] sm:$0xff] 0.0
    %32 = vst [vmem:[#allocation2 + $0x50] sm:$0xff] 0.0
    %33 = vst [vmem:[#allocation2 + $0x58] sm:$0xff] 0.0
    %34 = vst [vmem:[#allocation2 + $0x60] sm:$0xff] 0.0
    %35 = vst [vmem:[#allocation2 + $0x68] sm:$0xff] 0.0
  $region21: #{forward.47} parent=0 // pred_fallthru
    _
  %v36 = vld [vmem:[#allocation2] sm:$0xff]
  %v37 = vld [vmem:[#allocation2 + $0x8] sm:$0xff]
  %v38 = vld [vmem:[#allocation2 + $0x10] sm:$0xff]
  %v39 = vld [vmem:[#allocation2 + $0x18] sm:$0xff]
  %v40 = vld [vmem:[#allocation2 + $0x20] sm:$0xff]
  %v41 = vld [vmem:[#allocation2 + $0x28] sm:$0xff]
  %v42 = vld [vmem:[#allocation2 + $0x30] sm:$0xff]
  %v43 = vld [vmem:[#allocation2 + $0x38] sm:$0xff]
  %v44 = vld [vmem:[#allocation2 + $0x40] sm:$0xff]
  %v45 = vld [vmem:[#allocation2 + $0x48] sm:$0xff]
  %v46 = vld [vmem:[#allocation2 + $0x50] sm:$0xff]
  %v47 = vld [vmem:[#allocation2 + $0x58] sm:$0xff]
  %v48 = vld [vmem:[#allocation2 + $0x60] sm:$0xff]
  %v49 = vld [vmem:[#allocation2 + $0x68] sm:$0xff]
  %v50 = vld [vmem:[%s0] sm:$0xff]
  %v51 = vld [vmem:[%s0 + $0x8] sm:$0xff]
  %v52 = vld [vmem:[%s0 + $0x10] sm:$0xff]
  %v53 = vld [vmem:[%s0 + $0x18] sm:$0xff]
  %v54 = vld [vmem:[%s0 + $0x20] sm:$0xff]
  %v55 = vld [vmem:[%s0 + $0x28] sm:$0xff]
  %v56 = vld [vmem:[%s0 + $0x30] sm:$0xff]
  %v57 = vld [vmem:[%s0 + $0x38] sm:$0xff]
  %v58 = vld [vmem:[%s0 + $0x40] sm:$0xff]
  %v59 = vld [vmem:[%s0 + $0x48] sm:$0xff]
  %v60 = vld [vmem:[%s0 + $0x50] sm:$0xff]
  %v61 = vld [vmem:[%s0 + $0x58] sm:$0xff]
  %v62 = vld [vmem:[%s0 + $0x60] sm:$0xff]
  %v63 = vld [vmem:[%s0 + $0x68] sm:$0xff]
  %v64 = vld [vmem:[%s1] sm:$0xf]
  %v65 = vld [vmem:[%s1 + $0x4] sm:$0xf]
  %v66 = vld [vmem:[%s1 + $0x8] sm:$0xf]
  %v67 = vld [vmem:[%s1 + $0xc] sm:$0xf]
  %v68 = vld [vmem:[%s1 + $0x10] sm:$0xf]
  %v69 = vld [vmem:[%s1 + $0x14] sm:$0xf]
  %v70 = vld [vmem:[%s1 + $0x18] sm:$0xf]
  %v71 = vld [vmem:[%s1 + $0x1c] sm:$0xf]
  %v72 = vld [vmem:[%s1 + $0x20] sm:$0xf]
  %v73 = vld [vmem:[%s1 + $0x24] sm:$0xf]
  %v74 = vld [vmem:[%s1 + $0x28] sm:$0xf]
  %v75 = vld [vmem:[%s1 + $0x2c] sm:$0xf]
  %v76 = vld [vmem:[%s1 + $0x30] sm:$0xf]
  %v77 = vld [vmem:[%s1 + $0x34] sm:$0xf]
  %v78 = vld [vmem:[%s1 + $0x38] sm:$0xf]
  %v79 = vld [vmem:[%s1 + $0x3c] sm:$0xf]
  %v80 = vld [vmem:[%s1 + $0x40] sm:$0xf]
  %v81 = vld [vmem:[%s1 + $0x44] sm:$0xf]
  %v82 = vld [vmem:[%s1 + $0x48] sm:$0xf]
  %v83 = vld [vmem:[%s1 + $0x4c] sm:$0xf]
  %v84 = vld [vmem:[%s1 + $0x50] sm:$0xf]
  %v85 = vld [vmem:[%s1 + $0x54] sm:$0xf]
  %v86 = vld [vmem:[%s1 + $0x58] sm:$0xf]
  %v87 = vld [vmem:[%s1 + $0x5c] sm:$0xf]
  %v88 = vld [vmem:[%s1 + $0x60] sm:$0xf]
  %v89 = vld [vmem:[%s1 + $0x64] sm:$0xf]
  %v90 = vld [vmem:[%s1 + $0x68] sm:$0xf]
  %v91 = vld [vmem:[%s1 + $0x6c] sm:$0xf]
  %v92 = vld [vmem:[%s1 + $0x70] sm:$0xf]
  %v93 = vld [vmem:[%s1 + $0x74] sm:$0xf]
  %v94 = vld [vmem:[%s1 + $0x78] sm:$0xf]
  %v95 = vld [vmem:[%s1 + $0x7c] sm:$0xf]
  %v110 = vunpack.c.l.b16 %v50
  %v111 = vunpack.c.h.b16 %v50
  %v112 = vunpack.c.l.b16 %v51
  %v113 = vunpack.c.h.b16 %v51
  %v114 = vunpack.c.l.b16 %v52
  %v115 = vunpack.c.h.b16 %v52
  %v116 = vunpack.c.l.b16 %v53
  %v117 = vunpack.c.h.b16 %v53
  %v118 = vunpack.c.l.b16 %v54
  %v119 = vunpack.c.h.b16 %v54
  %v120 = vunpack.c.l.b16 %v55
  %v121 = vunpack.c.h.b16 %v55
  %v122 = vunpack.c.l.b16 %v56
  %v123 = vunpack.c.h.b16 %v56
  %v124 = vunpack.c.l.b16 %v57
  %v125 = vunpack.c.h.b16 %v57
  %v126 = vunpack.c.l.b16 %v58
  %v127 = vunpack.c.h.b16 %v58
  %v128 = vunpack.c.l.b16 %v59
  %v129 = vunpack.c.h.b16 %v59
  %v130 = vunpack.c.l.b16 %v60
  %v131 = vunpack.c.h.b16 %v60
  %v132 = vunpack.c.l.b16 %v61
  %v133 = vunpack.c.h.b16 %v61
  %v134 = vunpack.c.l.b16 %v62
  %v135 = vunpack.c.h.b16 %v62
  %v136 = vunpack.c.l.b16 %v63
  %v137 = vunpack.c.h.b16 %v63
  %v138 = vpack.c.b16 %v112, %v110
  %v139 = vpack.c.b16 %v113, %v111
  %v140 = vpack.c.b16 %v116, %v114
  %v141 = vpack.c.b16 %v117, %v115
  %v142 = vpack.c.b16 %v120, %v118
  %v143 = vpack.c.b16 %v121, %v119
  %v144 = vpack.c.b16 %v124, %v122
  %v145 = vpack.c.b16 %v125, %v123
  %v146 = vpack.c.b16 %v128, %v126
  %v147 = vpack.c.b16 %v129, %v127
  %v148 = vpack.c.b16 %v132, %v130
  %v149 = vpack.c.b16 %v133, %v131
  %v150 = vpack.c.b16 %v136, %v134
  %v151 = vpack.c.b16 %v137, %v135
  %v198 = vunpack.c.l.b16 %v64
  %v199 = vunpack.c.l.b16 %v65
  %v200 = vunpack.c.l.b16 %v66
  %v201 = vunpack.c.l.b16 %v67
  %v202 = vunpack.c.l.b16 %v68
  %v203 = vunpack.c.l.b16 %v69
  %v204 = vunpack.c.l.b16 %v70
  %v205 = vunpack.c.l.b16 %v71
  %v206 = vunpack.c.l.b16 %v72
  %v207 = vunpack.c.l.b16 %v73
  %v208 = vunpack.c.l.b16 %v74
  %v209 = vunpack.c.l.b16 %v75
  %v210 = vunpack.c.l.b16 %v76
  %v211 = vunpack.c.l.b16 %v77
  %v212 = vunpack.c.l.b16 %v78
  %v213 = vunpack.c.l.b16 %v79
  %v214 = vunpack.c.l.b16 %v80
  %v215 = vunpack.c.l.b16 %v81
  %v216 = vunpack.c.l.b16 %v82
  %v217 = vunpack.c.l.b16 %v83
  %v218 = vunpack.c.l.b16 %v84
  %v219 = vunpack.c.l.b16 %v85
  %v220 = vunpack.c.l.b16 %v86
  %v221 = vunpack.c.l.b16 %v87
  %v222 = vunpack.c.l.b16 %v88
  %v223 = vunpack.c.l.b16 %v89
  %v224 = vunpack.c.l.b16 %v90
  %v225 = vunpack.c.l.b16 %v91
  %v226 = vunpack.c.l.b16 %v92
  %v227 = vunpack.c.l.b16 %v93
  %v228 = vunpack.c.l.b16 %v94
  %v229 = vunpack.c.l.b16 %v95
  %v230 = vpack.c.b16 %v199, %v198
  %v231 = vpack.c.b16 %v201, %v200
  %v232 = vpack.c.b16 %v203, %v202
  %v233 = vpack.c.b16 %v205, %v204
  %v234 = vpack.c.b16 %v207, %v206
  %v235 = vpack.c.b16 %v209, %v208
  %v236 = vpack.c.b16 %v211, %v210
  %v237 = vpack.c.b16 %v213, %v212
  %v238 = vpack.c.b16 %v215, %v214
  %v239 = vpack.c.b16 %v217, %v216
  %v240 = vpack.c.b16 %v219, %v218
  %v241 = vpack.c.b16 %v221, %v220
  %v242 = vpack.c.b16 %v223, %v222
  %v243 = vpack.c.b16 %v225, %v224
  %v244 = vpack.c.b16 %v227, %v226
  %v245 = vpack.c.b16 %v229, %v228
  %262 = vmatprep.subr.bf16.mxu0 0
  %263 = vmatpush1.bf16.msra.mxu0 %v237
  %264 = vmatprep.subr.bf16.mxu0 0
  %265 = vmatpush1.bf16.msra.mxu0 %v236
  %266 = vmatprep.subr.bf16.mxu0 0
  %267 = vmatpush1.bf16.msra.mxu0 %v235
  %268 = vmatprep.subr.bf16.mxu0 0
  %269 = vmatpush1.bf16.msra.mxu0 %v234
  %270 = vmatprep.subr.bf16.mxu0 0
  %271 = vmatpush1.bf16.msra.mxu0 %v233
  %272 = vmatprep.subr.bf16.mxu0 0
  %273 = vmatpush1.bf16.msra.mxu0 %v232
  %274 = vmatprep.subr.bf16.mxu0 0
  %275 = vmatpush1.bf16.msra.mxu0 %v231
  %276 = vmatprep.subr.bf16.mxu0 0
  %277 = vmatpush1.bf16.msra.mxu0 %v230
  %278 = vmatprep.subr.bf16.mxu0 0
  %279 = vmatpush2.bf16.msra.mxu0 %v245
  %280 = vmatprep.subr.bf16.mxu0 0
  %281 = vmatpush2.bf16.msra.mxu0 %v244
  %282 = vmatprep.subr.bf16.mxu0 0
  %283 = vmatpush2.bf16.msra.mxu0 %v243
  %284 = vmatprep.subr.bf16.mxu0 0
  %285 = vmatpush2.bf16.msra.mxu0 %v242
  %286 = vmatprep.subr.bf16.mxu0 0
  %287 = vmatpush2.bf16.msra.mxu0 %v241
  %288 = vmatprep.subr.bf16.mxu0 0
  %289 = vmatpush2.bf16.msra.mxu0 %v240
  %290 = vmatprep.subr.bf16.mxu0 0
  %291 = vmatpush2.bf16.msra.mxu0 %v239
  %292 = vmatprep.subr.bf16.mxu0 0
  %293 = vmatpush2.bf16.msra.mxu0 %v238
  %294 = vmatprep.mubr.bf16.mxu0 %v139
  %295 = vmatmul.mubr.bf16.gmra.mxu0 %v138
  %v296 = vpop.f32.mrf.mxu0
  %v297 = vadd.f32 0.0, %v296
  %v298 = vpop.f32.mrf.mxu0
  %v299 = vpop.f32.mrf.mxu0
  %v300 = vadd.f32 0.0, %v299
  %v301 = vpop.f32.mrf.mxu0
  %302 = vmatprep.mubr.bf16.mxu0 %v141
  %303 = vmatmul.mubr.bf16.gmra.mxu0 %v140
  %v304 = vpop.f32.mrf.mxu0
  %v305 = vadd.f32 0.0, %v304
  %v306 = vpop.f32.mrf.mxu0
  %v307 = vpop.f32.mrf.mxu0
  %v308 = vadd.f32 0.0, %v307
  %v309 = vpop.f32.mrf.mxu0
  %310 = vmatprep.mubr.bf16.mxu0 %v143
  %311 = vmatmul.mubr.bf16.gmra.mxu0 %v142
  %v312 = vpop.f32.mrf.mxu0
  %v313 = vadd.f32 0.0, %v312
  %v314 = vpop.f32.mrf.mxu0
  %v315 = vpop.f32.mrf.mxu0
  %v316 = vadd.f32 0.0, %v315
  %v317 = vpop.f32.mrf.mxu0
  %318 = vmatprep.mubr.bf16.mxu0 %v145
  %319 = vmatmul.mubr.bf16.gmra.mxu0 %v144
  %v320 = vpop.f32.mrf.mxu0
  %v321 = vadd.f32 0.0, %v320
  %v322 = vpop.f32.mrf.mxu0
  %v323 = vpop.f32.mrf.mxu0
  %v324 = vadd.f32 0.0, %v323
  %v325 = vpop.f32.mrf.mxu0
  %326 = vmatprep.mubr.bf16.mxu0 %v147
  %327 = vmatmul.mubr.bf16.gmra.mxu0 %v146
  %v328 = vpop.f32.mrf.mxu0
  %v329 = vadd.f32 0.0, %v328
  %v330 = vpop.f32.mrf.mxu0
  %v331 = vpop.f32.mrf.mxu0
  %v332 = vadd.f32 0.0, %v331
  %v333 = vpop.f32.mrf.mxu0
  %334 = vmatprep.mubr.bf16.mxu0 %v149
  %335 = vmatmul.mubr.bf16.gmra.mxu0 %v148
  %v336 = vpop.f32.mrf.mxu0
  %v337 = vadd.f32 0.0, %v336
  %v338 = vpop.f32.mrf.mxu0
  %v339 = vpop.f32.mrf.mxu0
  %v340 = vadd.f32 0.0, %v339
  %v341 = vpop.f32.mrf.mxu0
  %342 = vmatprep.mubr.bf16.mxu0 %v151
  %343 = vmatmul.mubr.bf16.gmra.mxu0 %v150
  %v344 = vpop.f32.mrf.mxu0
  %v345 = vadd.f32 0.0, %v344
  %v346 = vpop.f32.mrf.mxu0
  %v347 = vpop.f32.mrf.mxu0
  %v348 = vadd.f32 0.0, %v347
  %v349 = vpop.f32.mrf.mxu0
  %350 = vdwg.mxu0
  %v351 = vadd.f32 %v36, %v297
  %v352 = vadd.f32 %v37, %v300
  %v353 = vadd.f32 %v38, %v305
  %v354 = vadd.f32 %v39, %v308
  %v355 = vadd.f32 %v40, %v313
  %v356 = vadd.f32 %v41, %v316
  %v357 = vadd.f32 %v42, %v321
  %v358 = vadd.f32 %v43, %v324
  %v359 = vadd.f32 %v44, %v329
  %v360 = vadd.f32 %v45, %v332
  %v361 = vadd.f32 %v46, %v337
  %v362 = vadd.f32 %v47, %v340
  %v363 = vadd.f32 %v48, %v345
  %v364 = vadd.f32 %v49, %v348
  %365 = vst [vmem:[#allocation2] sm:$0xff] %v351
  %366 = vst [vmem:[#allocation2 + $0x8] sm:$0xff] %v352
  %367 = vst [vmem:[#allocation2 + $0x10] sm:$0xff] %v353
  %368 = vst [vmem:[#allocation2 + $0x18] sm:$0xff] %v354
  %369 = vst [vmem:[#allocation2 + $0x20] sm:$0xff] %v355
  %370 = vst [vmem:[#allocation2 + $0x28] sm:$0xff] %v356
  %371 = vst [vmem:[#allocation2 + $0x30] sm:$0xff] %v357
  %372 = vst [vmem:[#allocation2 + $0x38] sm:$0xff] %v358
  %373 = vst [vmem:[#allocation2 + $0x40] sm:$0xff] %v359
  %374 = vst [vmem:[#allocation2 + $0x48] sm:$0xff] %v360
  %375 = vst [vmem:[#allocation2 + $0x50] sm:$0xff] %v361
  %376 = vst [vmem:[#allocation2 + $0x58] sm:$0xff] %v362
  %377 = vst [vmem:[#allocation2 + $0x60] sm:$0xff] %v363
  %378 = vst [vmem:[#allocation2 + $0x68] sm:$0xff] %v364
  // Predicated region
  $region22: #{forward.47} parent=0 // pred_check
    %p379 = pneg %p18
  $region23: #{forward.47} parent=0 // pred_check_branch
    %381 = sbr.rel (%p379) target = $region25
  $region24: #{forward.47} parent=0 // pred_region
    %v382 = vld [vmem:[#allocation2] sm:$0xff]
    %v383 = vld [vmem:[#allocation2 + $0x8] sm:$0xff]
    %v384 = vld [vmem:[#allocation2 + $0x10] sm:$0xff]
    %v385 = vld [vmem:[#allocation2 + $0x18] sm:$0xff]
    %v386 = vld [vmem:[#allocation2 + $0x20] sm:$0xff]
    %v387 = vld [vmem:[#allocation2 + $0x28] sm:$0xff]
    %v388 = vld [vmem:[#allocation2 + $0x30] sm:$0xff]
    %v389 = vld [vmem:[#allocation2 + $0x38] sm:$0xff]
    %v390 = vld [vmem:[#allocation2 + $0x40] sm:$0xff]
    %v391 = vld [vmem:[#allocation2 + $0x48] sm:$0xff]
    %v392 = vld [vmem:[#allocation2 + $0x50] sm:$0xff]
    %v393 = vld [vmem:[#allocation2 + $0x58] sm:$0xff]
    %v394 = vld [vmem:[#allocation2 + $0x60] sm:$0xff]
    %v395 = vld [vmem:[#allocation2 + $0x68] sm:$0xff]
    %v396 = vld [vmem:[%s2] sm:$0x1]
    %v398 = vlaneseq
    %v399 = vshrl.u32 %v398, 7
    %v400 = vsub.s32 0, %v399
    %v401 = vrot.slane %v396, %v400
    %v403 = vmul.f32 %v382, %v401
    %v404 = vmul.f32 %v383, %v401
    %v405 = vmul.f32 %v384, %v401
    %v406 = vmul.f32 %v385, %v401
    %v407 = vmul.f32 %v386, %v401
    %v408 = vmul.f32 %v387, %v401
    %v409 = vmul.f32 %v388, %v401
    %v410 = vmul.f32 %v389, %v401
    %v411 = vmul.f32 %v390, %v401
    %v412 = vmul.f32 %v391, %v401
    %v413 = vmul.f32 %v392, %v401
    %v414 = vmul.f32 %v393, %v401
    %v415 = vmul.f32 %v394, %v401
    %v416 = vmul.f32 %v395, %v401
    %v417 = vld [vmem:[%s3] sm:$0x1]
    %v419 = vlaneseq
    %v420 = vshrl.u32 %v419, 7
    %v421 = vsub.s32 0, %v420
    %v422 = vrot.slane %v417, %v421
    %v424 = vadd.f32 %v403, %v422
    %v425 = vadd.f32 %v404, %v422
    %v426 = vadd.f32 %v405, %v422
    %v427 = vadd.f32 %v406, %v422
    %v428 = vadd.f32 %v407, %v422
    %v429 = vadd.f32 %v408, %v422
    %v430 = vadd.f32 %v409, %v422
    %v431 = vadd.f32 %v410, %v422
    %v432 = vadd.f32 %v411, %v422
    %v433 = vadd.f32 %v412, %v422
    %v434 = vadd.f32 %v413, %v422
    %v435 = vadd.f32 %v414, %v422
    %v436 = vadd.f32 %v415, %v422
    %v437 = vadd.f32 %v416, %v422
    %v438 = vmax.f32 %v424, 0.0
    %v439 = vmax.f32 %v425, 0.0
    %v440 = vmax.f32 %v426, 0.0
    %v441 = vmax.f32 %v427, 0.0
    %v442 = vmax.f32 %v428, 0.0
    %v443 = vmax.f32 %v429, 0.0
    %v444 = vmax.f32 %v430, 0.0
    %v445 = vmax.f32 %v431, 0.0
    %v446 = vmax.f32 %v432, 0.0
    %v447 = vmax.f32 %v433, 0.0
    %v448 = vmax.f32 %v434, 0.0
    %v449 = vmax.f32 %v435, 0.0
    %v450 = vmax.f32 %v436, 0.0
    %v451 = vmax.f32 %v437, 0.0
    %452 = vst [vmem:[%s4] sm:$0xff] %v438
    %453 = vst [vmem:[%s4 + $0x8] sm:$0xff] %v439
    %454 = vst [vmem:[%s4 + $0x10] sm:$0xff] %v440
    %455 = vst [vmem:[%s4 + $0x18] sm:$0xff] %v441
    %456 = vst [vmem:[%s4 + $0x20] sm:$0xff] %v442
    %457 = vst [vmem:[%s4 + $0x28] sm:$0xff] %v443
    %458 = vst [vmem:[%s4 + $0x30] sm:$0xff] %v444
    %459 = vst [vmem:[%s4 + $0x38] sm:$0xff] %v445
    %460 = vst [vmem:[%s4 + $0x40] sm:$0xff] %v446
    %461 = vst [vmem:[%s4 + $0x48] sm:$0xff] %v447
    %462 = vst [vmem:[%s4 + $0x50] sm:$0xff] %v448
    %463 = vst [vmem:[%s4 + $0x58] sm:$0xff] %v449
    %464 = vst [vmem:[%s4 + $0x60] sm:$0xff] %v450
    %465 = vst [vmem:[%s4 + $0x68] sm:$0xff] %v451
  $region25: #{forward.47} parent=0 // pred_fallthru
    _
  // Predicated region
  $region26: #{forward.47} parent=0 // pred_check
    _
  $region27: #{forward.47} parent=0 // pred_check_branch
    %467 = sbr.rel (0) target = $region29
  $region28: #{forward.47} parent=0 // pred_region
    _
  $region29: #{forward.47} parent=0 // pred_fallthru
    _
  // Predicated region
  $region30: #{forward.47} parent=0 // pred_check
    _
  $region31: #{forward.47} parent=0 // pred_check_branch
    %469 = sbr.rel (0) target = $region33
  $region32: #{forward.47} parent=0 // pred_region
    _
  $region33: #{forward.47} parent=0 // pred_fallthru
    _

// kernel: forward.48
$region0: #{forward.48}
  #allocation0 [shape = 'u32[]', space=smem, size = 0x4, offset = 0x4, fixed_abs, tag = 'smem constant byte address 0x4 - core index']
  #allocation1 [shape = 'u32[144,128]{1,0:T(1,128)}', space=vmem, size = 0x12000, scoped, tag = 'internal scratch']
  #allocation2 [shape = 'f32[112,128]{1,0:T(8,128)}', space=vmem, size = 0xe000, scoped, tag = 'scratch operand']
  %s0 = inlined_call_operand.vmem [shape: bf16[112,128], index: 0, kind: input, shape index: {}]
  %s1 = inlined_call_operand.vmem [shape: bf16[128,128], index: 1, kind: input, shape index: {}]
  %s2 = inlined_call_operand.vmem [shape: f32[1,128], index: 2, kind: input, shape index: {}]
  %s3 = inlined_call_operand.vmem [shape: f32[1,128], index: 3, kind: input, shape index: {}]
  %s4 = inlined_call_operand.vmem [shape: f32[112,128], index: 4, kind: output, shape index: {}]
  %s5 = sld [smem:[#allocation0]]
  $region34: #{forward.48} parent=0
    _
  %s7 = ssub.s32 1, %s5
  %s8 = scalar_select 0, %s7, %s5
  // Predicated region
  $region2: #{forward.48} parent=0 // pred_check
    _
  $region3: #{forward.48} parent=0 // pred_check_branch
    %10 = sbr.rel (0) target = $region5
  $region4: #{forward.48} parent=0 // pred_region
    _
  $region5: #{forward.48} parent=0 // pred_fallthru
    _
  // Predicated region
  $region6: #{forward.48} parent=0 // pred_check
    _
  $region7: #{forward.48} parent=0 // pred_check_branch
    %12 = sbr.rel (0) target = $region9
  $region8: #{forward.48} parent=0 // pred_region
    _
  $region9: #{forward.48} parent=0 // pred_fallthru
    _
  // Predicated region
  $region10: #{forward.48} parent=0 // pred_check
    _
  $region11: #{forward.48} parent=0 // pred_check_branch
    %14 = sbr.rel (0) target = $region13
  $region12: #{forward.48} parent=0 // pred_region
    _
  $region13: #{forward.48} parent=0 // pred_fallthru
    _
  // Predicated region
  $region14: #{forward.48} parent=0 // pred_check
    _
  $region15: #{forward.48} parent=0 // pred_check_branch
    %16 = sbr.rel (0) target = $region17
  $region16: #{forward.48} parent=0 // pred_region
    _
  $region17: #{forward.48} parent=0 // pred_fallthru
    _
  %p18 = scmp.eq.s32.totalorder 0, 0
  // Predicated region
  $region18: #{forward.48} parent=0 // pred_check
    %p19 = pneg %p18
  $region19: #{forward.48} parent=0 // pred_check_branch
    %21 = sbr.rel (%p19) target = $region21
  $region20: #{forward.48} parent=0 // pred_region
    %22 = vst [vmem:[#allocation2] sm:$0xff] 0.0
    %23 = vst [vmem:[#allocation2 + $0x8] sm:$0xff] 0.0
    %24 = vst [vmem:[#allocation2 + $0x10] sm:$0xff] 0.0
    %25 = vst [vmem:[#allocation2 + $0x18] sm:$0xff] 0.0
    %26 = vst [vmem:[#allocation2 + $0x20] sm:$0xff] 0.0
    %27 = vst [vmem:[#allocation2 + $0x28] sm:$0xff] 0.0
    %28 = vst [vmem:[#allocation2 + $0x30] sm:$0xff] 0.0
    %29 = vst [vmem:[#allocation2 + $0x38] sm:$0xff] 0.0
    %30 = vst [vmem:[#allocation2 + $0x40] sm:$0xff] 0.0
    %31 = vst [vmem:[#allocation2 + $0x48] sm:$0xff] 0.0
    %32 = vst [vmem:[#allocation2 + $0x50] sm:$0xff] 0.0
    %33 = vst [vmem:[#allocation2 + $0x58] sm:$0xff] 0.0
    %34 = vst [vmem:[#allocation2 + $0x60] sm:$0xff] 0.0
    %35 = vst [vmem:[#allocation2 + $0x68] sm:$0xff] 0.0
  $region21: #{forward.48} parent=0 // pred_fallthru
    _
  %v36 = vld [vmem:[#allocation2] sm:$0xff]
  %v37 = vld [vmem:[#allocation2 + $0x8] sm:$0xff]
  %v38 = vld [vmem:[#allocation2 + $0x10] sm:$0xff]
  %v39 = vld [vmem:[#allocation2 + $0x18] sm:$0xff]
  %v40 = vld [vmem:[#allocation2 + $0x20] sm:$0xff]
  %v41 = vld [vmem:[#allocation2 + $0x28] sm:$0xff]
  %v42 = vld [vmem:[#allocation2 + $0x30] sm:$0xff]
  %v43 = vld [vmem:[#allocation2 + $0x38] sm:$0xff]
  %v44 = vld [vmem:[#allocation2 + $0x40] sm:$0xff]
  %v45 = vld [vmem:[#allocation2 + $0x48] sm:$0xff]
  %v46 = vld [vmem:[#allocation2 + $0x50] sm:$0xff]
  %v47 = vld [vmem:[#allocation2 + $0x58] sm:$0xff]
  %v48 = vld [vmem:[#allocation2 + $0x60] sm:$0xff]
  %v49 = vld [vmem:[#allocation2 + $0x68] sm:$0xff]
  %v50 = vld [vmem:[%s0] sm:$0xf]
  %v51 = vld [vmem:[%s0 + $0x4] sm:$0xf]
  %v52 = vld [vmem:[%s0 + $0x8] sm:$0xf]
  %v53 = vld [vmem:[%s0 + $0xc] sm:$0xf]
  %v54 = vld [vmem:[%s0 + $0x10] sm:$0xf]
  %v55 = vld [vmem:[%s0 + $0x14] sm:$0xf]
  %v56 = vld [vmem:[%s0 + $0x18] sm:$0xf]
  %v57 = vld [vmem:[%s0 + $0x1c] sm:$0xf]
  %v58 = vld [vmem:[%s0 + $0x20] sm:$0xf]
  %v59 = vld [vmem:[%s0 + $0x24] sm:$0xf]
  %v60 = vld [vmem:[%s0 + $0x28] sm:$0xf]
  %v61 = vld [vmem:[%s0 + $0x2c] sm:$0xf]
  %v62 = vld [vmem:[%s0 + $0x30] sm:$0xf]
  %v63 = vld [vmem:[%s0 + $0x34] sm:$0xf]
  %v64 = vld [vmem:[%s1] sm:$0xf]
  %v65 = vld [vmem:[%s1 + $0x4] sm:$0xf]
  %v66 = vld [vmem:[%s1 + $0x8] sm:$0xf]
  %v67 = vld [vmem:[%s1 + $0xc] sm:$0xf]
  %v68 = vld [vmem:[%s1 + $0x10] sm:$0xf]
  %v69 = vld [vmem:[%s1 + $0x14] sm:$0xf]
  %v70 = vld [vmem:[%s1 + $0x18] sm:$0xf]
  %v71 = vld [vmem:[%s1 + $0x1c] sm:$0xf]
  %v72 = vld [vmem:[%s1 + $0x20] sm:$0xf]
  %v73 = vld [vmem:[%s1 + $0x24] sm:$0xf]
  %v74 = vld [vmem:[%s1 + $0x28] sm:$0xf]
  %v75 = vld [vmem:[%s1 + $0x2c] sm:$0xf]
  %v76 = vld [vmem:[%s1 + $0x30] sm:$0xf]
  %v77 = vld [vmem:[%s1 + $0x34] sm:$0xf]
  %v78 = vld [vmem:[%s1 + $0x38] sm:$0xf]
  %v79 = vld [vmem:[%s1 + $0x3c] sm:$0xf]
  %v94 = vunpack.c.l.b16 %v50
  %v95 = vunpack.c.l.b16 %v51
  %v96 = vunpack.c.l.b16 %v52
  %v97 = vunpack.c.l.b16 %v53
  %v98 = vunpack.c.l.b16 %v54
  %v99 = vunpack.c.l.b16 %v55
  %v100 = vunpack.c.l.b16 %v56
  %v101 = vunpack.c.l.b16 %v57
  %v102 = vunpack.c.l.b16 %v58
  %v103 = vunpack.c.l.b16 %v59
  %v104 = vunpack.c.l.b16 %v60
  %v105 = vunpack.c.l.b16 %v61
  %v106 = vunpack.c.l.b16 %v62
  %v107 = vunpack.c.l.b16 %v63
  %v108 = vpack.c.b16 %v95, %v94
  %v109 = vpack.c.b16 %v97, %v96
  %v110 = vpack.c.b16 %v99, %v98
  %v111 = vpack.c.b16 %v101, %v100
  %v112 = vpack.c.b16 %v103, %v102
  %v113 = vpack.c.b16 %v105, %v104
  %v114 = vpack.c.b16 %v107, %v106
  %v138 = vunpack.c.l.b16 %v64
  %v139 = vunpack.c.l.b16 %v65
  %v140 = vunpack.c.l.b16 %v66
  %v141 = vunpack.c.l.b16 %v67
  %v142 = vunpack.c.l.b16 %v68
  %v143 = vunpack.c.l.b16 %v69
  %v144 = vunpack.c.l.b16 %v70
  %v145 = vunpack.c.l.b16 %v71
  %v146 = vunpack.c.l.b16 %v72
  %v147 = vunpack.c.l.b16 %v73
  %v148 = vunpack.c.l.b16 %v74
  %v149 = vunpack.c.l.b16 %v75
  %v150 = vunpack.c.l.b16 %v76
  %v151 = vunpack.c.l.b16 %v77
  %v152 = vunpack.c.l.b16 %v78
  %v153 = vunpack.c.l.b16 %v79
  %v154 = vpack.c.b16 %v139, %v138
  %v155 = vpack.c.b16 %v141, %v140
  %v156 = vpack.c.b16 %v143, %v142
  %v157 = vpack.c.b16 %v145, %v144
  %v158 = vpack.c.b16 %v147, %v146
  %v159 = vpack.c.b16 %v149, %v148
  %v160 = vpack.c.b16 %v151, %v150
  %v161 = vpack.c.b16 %v153, %v152
  %170 = vmatprep.subr.bf16.mxu0 0
  %171 = vmatpush1.bf16.msra.mxu0 %v161
  %172 = vmatprep.subr.bf16.mxu0 0
  %173 = vmatpush1.bf16.msra.mxu0 %v160
  %174 = vmatprep.subr.bf16.mxu0 0
  %175 = vmatpush1.bf16.msra.mxu0 %v159
  %176 = vmatprep.subr.bf16.mxu0 0
  %177 = vmatpush1.bf16.msra.mxu0 %v158
  %178 = vmatprep.subr.bf16.mxu0 0
  %179 = vmatpush1.bf16.msra.mxu0 %v157
  %180 = vmatprep.subr.bf16.mxu0 0
  %181 = vmatpush1.bf16.msra.mxu0 %v156
  %182 = vmatprep.subr.bf16.mxu0 0
  %183 = vmatpush1.bf16.msra.mxu0 %v155
  %184 = vmatprep.subr.bf16.mxu0 0
  %185 = vmatpush1.bf16.msra.mxu0 %v154
  %186 = vmatprep.subr.bf16.mxu0 0
  %187 = vmatpush2.bf16.msra.mxu0 0
  %188 = vmatprep.subr.bf16.mxu0 0
  %189 = vmatpush2.bf16.msra.mxu0 0
  %190 = vmatprep.subr.bf16.mxu0 0
  %191 = vmatpush2.bf16.msra.mxu0 0
  %192 = vmatprep.subr.bf16.mxu0 0
  %193 = vmatpush2.bf16.msra.mxu0 0
  %194 = vmatprep.subr.bf16.mxu0 0
  %195 = vmatpush2.bf16.msra.mxu0 0
  %196 = vmatprep.subr.bf16.mxu0 0
  %197 = vmatpush2.bf16.msra.mxu0 0
  %198 = vmatprep.subr.bf16.mxu0 0
  %199 = vmatpush2.bf16.msra.mxu0 0
  %200 = vmatprep.subr.bf16.mxu0 0
  %201 = vmatpush2.bf16.msra.mxu0 0
  %202 = vmatprep.mubr.bf16.mxu0 0
  %203 = vmatmul.mubr.bf16.gmra.mxu0 %v108
  %v204 = vpop.f32.mrf.mxu0
  %v205 = vadd.f32 0.0, %v204
  %v206 = vpop.f32.mrf.mxu0
  %v207 = vpop.f32.mrf.mxu0
  %v208 = vadd.f32 0.0, %v207
  %v209 = vpop.f32.mrf.mxu0
  %210 = vmatprep.mubr.bf16.mxu0 0
  %211 = vmatmul.mubr.bf16.gmra.mxu0 %v109
  %v212 = vpop.f32.mrf.mxu0
  %v213 = vadd.f32 0.0, %v212
  %v214 = vpop.f32.mrf.mxu0
  %v215 = vpop.f32.mrf.mxu0
  %v216 = vadd.f32 0.0, %v215
  %v217 = vpop.f32.mrf.mxu0
  %218 = vmatprep.mubr.bf16.mxu0 0
  %219 = vmatmul.mubr.bf16.gmra.mxu0 %v110
  %v220 = vpop.f32.mrf.mxu0
  %v221 = vadd.f32 0.0, %v220
  %v222 = vpop.f32.mrf.mxu0
  %v223 = vpop.f32.mrf.mxu0
  %v224 = vadd.f32 0.0, %v223
  %v225 = vpop.f32.mrf.mxu0
  %226 = vmatprep.mubr.bf16.mxu0 0
  %227 = vmatmul.mubr.bf16.gmra.mxu0 %v111
  %v228 = vpop.f32.mrf.mxu0
  %v229 = vadd.f32 0.0, %v228
  %v230 = vpop.f32.mrf.mxu0
  %v231 = vpop.f32.mrf.mxu0
  %v232 = vadd.f32 0.0, %v231
  %v233 = vpop.f32.mrf.mxu0
  %234 = vmatprep.mubr.bf16.mxu0 0
  %235 = vmatmul.mubr.bf16.gmra.mxu0 %v112
  %v236 = vpop.f32.mrf.mxu0
  %v237 = vadd.f32 0.0, %v236
  %v238 = vpop.f32.mrf.mxu0
  %v239 = vpop.f32.mrf.mxu0
  %v240 = vadd.f32 0.0, %v239
  %v241 = vpop.f32.mrf.mxu0
  %242 = vmatprep.mubr.bf16.mxu0 0
  %243 = vmatmul.mubr.bf16.gmra.mxu0 %v113
  %v244 = vpop.f32.mrf.mxu0
  %v245 = vadd.f32 0.0, %v244
  %v246 = vpop.f32.mrf.mxu0
  %v247 = vpop.f32.mrf.mxu0
  %v248 = vadd.f32 0.0, %v247
  %v249 = vpop.f32.mrf.mxu0
  %250 = vmatprep.mubr.bf16.mxu0 0
  %251 = vmatmul.mubr.bf16.gmra.mxu0 %v114
  %v252 = vpop.f32.mrf.mxu0
  %v253 = vadd.f32 0.0, %v252
  %v254 = vpop.f32.mrf.mxu0
  %v255 = vpop.f32.mrf.mxu0
  %v256 = vadd.f32 0.0, %v255
  %v257 = vpop.f32.mrf.mxu0
  %258 = vdwg.mxu0
  %v259 = vadd.f32 %v36, %v205
  %v260 = vadd.f32 %v37, %v208
  %v261 = vadd.f32 %v38, %v213
  %v262 = vadd.f32 %v39, %v216
  %v263 = vadd.f32 %v40, %v221
  %v264 = vadd.f32 %v41, %v224
  %v265 = vadd.f32 %v42, %v229
  %v266 = vadd.f32 %v43, %v232
  %v267 = vadd.f32 %v44, %v237
  %v268 = vadd.f32 %v45, %v240
  %v269 = vadd.f32 %v46, %v245
  %v270 = vadd.f32 %v47, %v248
  %v271 = vadd.f32 %v48, %v253
  %v272 = vadd.f32 %v49, %v256
  %273 = vst [vmem:[#allocation2] sm:$0xff] %v259
  %274 = vst [vmem:[#allocation2 + $0x8] sm:$0xff] %v260
  %275 = vst [vmem:[#allocation2 + $0x10] sm:$0xff] %v261
  %276 = vst [vmem:[#allocation2 + $0x18] sm:$0xff] %v262
  %277 = vst [vmem:[#allocation2 + $0x20] sm:$0xff] %v263
  %278 = vst [vmem:[#allocation2 + $0x28] sm:$0xff] %v264
  %279 = vst [vmem:[#allocation2 + $0x30] sm:$0xff] %v265
  %280 = vst [vmem:[#allocation2 + $0x38] sm:$0xff] %v266
  %281 = vst [vmem:[#allocation2 + $0x40] sm:$0xff] %v267
  %282 = vst [vmem:[#allocation2 + $0x48] sm:$0xff] %v268
  %283 = vst [vmem:[#allocation2 + $0x50] sm:$0xff] %v269
  %284 = vst [vmem:[#allocation2 + $0x58] sm:$0xff] %v270
  %285 = vst [vmem:[#allocation2 + $0x60] sm:$0xff] %v271
  %286 = vst [vmem:[#allocation2 + $0x68] sm:$0xff] %v272
  // Predicated region
  $region22: #{forward.48} parent=0 // pred_check
    %p287 = pneg %p18
  $region23: #{forward.48} parent=0 // pred_check_branch
    %289 = sbr.rel (%p287) target = $region25
  $region24: #{forward.48} parent=0 // pred_region
    %v290 = vld [vmem:[#allocation2] sm:$0xff]
    %v291 = vld [vmem:[#allocation2 + $0x8] sm:$0xff]
    %v292 = vld [vmem:[#allocation2 + $0x10] sm:$0xff]
    %v293 = vld [vmem:[#allocation2 + $0x18] sm:$0xff]
    %v294 = vld [vmem:[#allocation2 + $0x20] sm:$0xff]
    %v295 = vld [vmem:[#allocation2 + $0x28] sm:$0xff]
    %v296 = vld [vmem:[#allocation2 + $0x30] sm:$0xff]
    %v297 = vld [vmem:[#allocation2 + $0x38] sm:$0xff]
    %v298 = vld [vmem:[#allocation2 + $0x40] sm:$0xff]
    %v299 = vld [vmem:[#allocation2 + $0x48] sm:$0xff]
    %v300 = vld [vmem:[#allocation2 + $0x50] sm:$0xff]
    %v301 = vld [vmem:[#allocation2 + $0x58] sm:$0xff]
    %v302 = vld [vmem:[#allocation2 + $0x60] sm:$0xff]
    %v303 = vld [vmem:[#allocation2 + $0x68] sm:$0xff]
    %v304 = vld [vmem:[%s2] sm:$0x1]
    %v306 = vlaneseq
    %v307 = vshrl.u32 %v306, 7
    %v308 = vsub.s32 0, %v307
    %v309 = vrot.slane %v304, %v308
    %v311 = vmul.f32 %v290, %v309
    %v312 = vmul.f32 %v291, %v309
    %v313 = vmul.f32 %v292, %v309
    %v314 = vmul.f32 %v293, %v309
    %v315 = vmul.f32 %v294, %v309
    %v316 = vmul.f32 %v295, %v309
    %v317 = vmul.f32 %v296, %v309
    %v318 = vmul.f32 %v297, %v309
    %v319 = vmul.f32 %v298, %v309
    %v320 = vmul.f32 %v299, %v309
    %v321 = vmul.f32 %v300, %v309
    %v322 = vmul.f32 %v301, %v309
    %v323 = vmul.f32 %v302, %v309
    %v324 = vmul.f32 %v303, %v309
    %v325 = vld [vmem:[%s3] sm:$0x1]
    %v327 = vlaneseq
    %v328 = vshrl.u32 %v327, 7
    %v329 = vsub.s32 0, %v328
    %v330 = vrot.slane %v325, %v329
    %v332 = vadd.f32 %v311, %v330
    %v333 = vadd.f32 %v312, %v330
    %v334 = vadd.f32 %v313, %v330
    %v335 = vadd.f32 %v314, %v330
    %v336 = vadd.f32 %v315, %v330
    %v337 = vadd.f32 %v316, %v330
    %v338 = vadd.f32 %v317, %v330
    %v339 = vadd.f32 %v318, %v330
    %v340 = vadd.f32 %v319, %v330
    %v341 = vadd.f32 %v320, %v330
    %v342 = vadd.f32 %v321, %v330
    %v343 = vadd.f32 %v322, %v330
    %v344 = vadd.f32 %v323, %v330
    %v345 = vadd.f32 %v324, %v330
    %v346 = vmax.f32 %v332, 0.0
    %v347 = vmax.f32 %v333, 0.0
    %v348 = vmax.f32 %v334, 0.0
    %v349 = vmax.f32 %v335, 0.0
    %v350 = vmax.f32 %v336, 0.0
    %v351 = vmax.f32 %v337, 0.0
    %v352 = vmax.f32 %v338, 0.0
    %v353 = vmax.f32 %v339, 0.0
    %v354 = vmax.f32 %v340, 0.0
    %v355 = vmax.f32 %v341, 0.0
    %v356 = vmax.f32 %v342, 0.0
    %v357 = vmax.f32 %v343, 0.0
    %v358 = vmax.f32 %v344, 0.0
    %v359 = vmax.f32 %v345, 0.0
    %360 = vst [vmem:[%s4] sm:$0xff] %v346
    %361 = vst [vmem:[%s4 + $0x8] sm:$0xff] %v347
    %362 = vst [vmem:[%s4 + $0x10] sm:$0xff] %v348
    %363 = vst [vmem:[%s4 + $0x18] sm:$0xff] %v349
    %364 = vst [vmem:[%s4 + $0x20] sm:$0xff] %v350
    %365 = vst [vmem:[%s4 + $0x28] sm:$0xff] %v351
    %366 = vst [vmem:[%s4 + $0x30] sm:$0xff] %v352
    %367 = vst [vmem:[%s4 + $0x38] sm:$0xff] %v353
    %368 = vst [vmem:[%s4 + $0x40] sm:$0xff] %v354
    %369 = vst [vmem:[%s4 + $0x48] sm:$0xff] %v355
    %370 = vst [vmem:[%s4 + $0x50] sm:$0xff] %v356
    %371 = vst [vmem:[%s4 + $0x58] sm:$0xff] %v357
    %372 = vst [vmem:[%s4 + $0x60] sm:$0xff] %v358
    %373 = vst [vmem:[%s4 + $0x68] sm:$0xff] %v359
  $region25: #{forward.48} parent=0 // pred_fallthru
    _
  // Predicated region
  $region26: #{forward.48} parent=0 // pred_check
    _
  $region27: #{forward.48} parent=0 // pred_check_branch
    %375 = sbr.rel (0) target = $region29
  $region28: #{forward.48} parent=0 // pred_region
    _
  $region29: #{forward.48} parent=0 // pred_fallthru
    _
  // Predicated region
  $region30: #{forward.48} parent=0 // pred_check
    _
  $region31: #{forward.48} parent=0 // pred_check_branch
    %377 = sbr.rel (0) target = $region33
  $region32: #{forward.48} parent=0 // pred_region
    _
  $region33: #{forward.48} parent=0 // pred_fallthru
    _

// kernel: forward.52
$region0: #{forward.52}
  #allocation0 [shape = 'u32[]', space=smem, size = 0x4, offset = 0x4, fixed_abs, tag = 'smem constant byte address 0x4 - core index']
  #allocation1 [shape = 'u32[144,128]{1,0:T(1,128)}', space=vmem, size = 0x12000, scoped, tag = 'internal scratch']
  #allocation2 [shape = 'f32[112,128]{1,0:T(8,128)}', space=vmem, size = 0xe000, scoped, tag = 'scratch operand']
  %s0 = inlined_call_operand.vmem [shape: bf16[112,128], index: 0, kind: input, shape index: {}]
  %s1 = inlined_call_operand.vmem [shape: bf16[128,128], index: 1, kind: input, shape index: {}]
  %s2 = inlined_call_operand.vmem [shape: f32[1,128], index: 2, kind: input, shape index: {}]
  %s3 = inlined_call_operand.vmem [shape: f32[1,128], index: 3, kind: input, shape index: {}]
  %s4 = inlined_call_operand.vmem [shape: f32[112,128], index: 4, kind: input, shape index: {}]
  %s5 = inlined_call_operand.vmem [shape: f32[112,128], index: 5, kind: output, shape index: {}]
  %s6 = sld [smem:[#allocation0]]
  $region38: #{forward.52} parent=0
    _
  %s8 = ssub.s32 1, %s6
  %s9 = scalar_select 0, %s8, %s6
  // Predicated region
  $region2: #{forward.52} parent=0 // pred_check
    _
  $region3: #{forward.52} parent=0 // pred_check_branch
    %11 = sbr.rel (0) target = $region5
  $region4: #{forward.52} parent=0 // pred_region
    _
  $region5: #{forward.52} parent=0 // pred_fallthru
    _
  // Predicated region
  $region6: #{forward.52} parent=0 // pred_check
    _
  $region7: #{forward.52} parent=0 // pred_check_branch
    %13 = sbr.rel (0) target = $region9
  $region8: #{forward.52} parent=0 // pred_region
    _
  $region9: #{forward.52} parent=0 // pred_fallthru
    _
  // Predicated region
  $region10: #{forward.52} parent=0 // pred_check
    _
  $region11: #{forward.52} parent=0 // pred_check_branch
    %15 = sbr.rel (0) target = $region13
  $region12: #{forward.52} parent=0 // pred_region
    _
  $region13: #{forward.52} parent=0 // pred_fallthru
    _
  // Predicated region
  $region14: #{forward.52} parent=0 // pred_check
    _
  $region15: #{forward.52} parent=0 // pred_check_branch
    %17 = sbr.rel (0) target = $region17
  $region16: #{forward.52} parent=0 // pred_region
    _
  $region17: #{forward.52} parent=0 // pred_fallthru
    _
  // Predicated region
  $region18: #{forward.52} parent=0 // pred_check
    _
  $region19: #{forward.52} parent=0 // pred_check_branch
    %19 = sbr.rel (0) target = $region21
  $region20: #{forward.52} parent=0 // pred_region
    _
  $region21: #{forward.52} parent=0 // pred_fallthru
    _
  %p21 = scmp.eq.s32.totalorder 0, 0
  // Predicated region
  $region22: #{forward.52} parent=0 // pred_check
    %p22 = pneg %p21
  $region23: #{forward.52} parent=0 // pred_check_branch
    %24 = sbr.rel (%p22) target = $region25
  $region24: #{forward.52} parent=0 // pred_region
    %25 = vst [vmem:[#allocation2] sm:$0xff] 0.0
    %26 = vst [vmem:[#allocation2 + $0x8] sm:$0xff] 0.0
    %27 = vst [vmem:[#allocation2 + $0x10] sm:$0xff] 0.0
    %28 = vst [vmem:[#allocation2 + $0x18] sm:$0xff] 0.0
    %29 = vst [vmem:[#allocation2 + $0x20] sm:$0xff] 0.0
    %30 = vst [vmem:[#allocation2 + $0x28] sm:$0xff] 0.0
    %31 = vst [vmem:[#allocation2 + $0x30] sm:$0xff] 0.0
    %32 = vst [vmem:[#allocation2 + $0x38] sm:$0xff] 0.0
    %33 = vst [vmem:[#allocation2 + $0x40] sm:$0xff] 0.0
    %34 = vst [vmem:[#allocation2 + $0x48] sm:$0xff] 0.0
    %35 = vst [vmem:[#allocation2 + $0x50] sm:$0xff] 0.0
    %36 = vst [vmem:[#allocation2 + $0x58] sm:$0xff] 0.0
    %37 = vst [vmem:[#allocation2 + $0x60] sm:$0xff] 0.0
    %38 = vst [vmem:[#allocation2 + $0x68] sm:$0xff] 0.0
  $region25: #{forward.52} parent=0 // pred_fallthru
    _
  %v39 = vld [vmem:[#allocation2] sm:$0xff]
  %v40 = vld [vmem:[#allocation2 + $0x8] sm:$0xff]
  %v41 = vld [vmem:[#allocation2 + $0x10] sm:$0xff]
  %v42 = vld [vmem:[#allocation2 + $0x18] sm:$0xff]
  %v43 = vld [vmem:[#allocation2 + $0x20] sm:$0xff]
  %v44 = vld [vmem:[#allocation2 + $0x28] sm:$0xff]
  %v45 = vld [vmem:[#allocation2 + $0x30] sm:$0xff]
  %v46 = vld [vmem:[#allocation2 + $0x38] sm:$0xff]
  %v47 = vld [vmem:[#allocation2 + $0x40] sm:$0xff]
  %v48 = vld [vmem:[#allocation2 + $0x48] sm:$0xff]
  %v49 = vld [vmem:[#allocation2 + $0x50] sm:$0xff]
  %v50 = vld [vmem:[#allocation2 + $0x58] sm:$0xff]
  %v51 = vld [vmem:[#allocation2 + $0x60] sm:$0xff]
  %v52 = vld [vmem:[#allocation2 + $0x68] sm:$0xff]
  %v53 = vld [vmem:[%s0] sm:$0xf]
  %v54 = vld [vmem:[%s0 + $0x4] sm:$0xf]
  %v55 = vld [vmem:[%s0 + $0x8] sm:$0xf]
  %v56 = vld [vmem:[%s0 + $0xc] sm:$0xf]
  %v57 = vld [vmem:[%s0 + $0x10] sm:$0xf]
  %v58 = vld [vmem:[%s0 + $0x14] sm:$0xf]
  %v59 = vld [vmem:[%s0 + $0x18] sm:$0xf]
  %v60 = vld [vmem:[%s0 + $0x1c] sm:$0xf]
  %v61 = vld [vmem:[%s0 + $0x20] sm:$0xf]
  %v62 = vld [vmem:[%s0 + $0x24] sm:$0xf]
  %v63 = vld [vmem:[%s0 + $0x28] sm:$0xf]
  %v64 = vld [vmem:[%s0 + $0x2c] sm:$0xf]
  %v65 = vld [vmem:[%s0 + $0x30] sm:$0xf]
  %v66 = vld [vmem:[%s0 + $0x34] sm:$0xf]
  %v67 = vld [vmem:[%s1] sm:$0xf]
  %v68 = vld [vmem:[%s1 + $0x4] sm:$0xf]
  %v69 = vld [vmem:[%s1 + $0x8] sm:$0xf]
  %v70 = vld [vmem:[%s1 + $0xc] sm:$0xf]
  %v71 = vld [vmem:[%s1 + $0x10] sm:$0xf]
  %v72 = vld [vmem:[%s1 + $0x14] sm:$0xf]
  %v73 = vld [vmem:[%s1 + $0x18] sm:$0xf]
  %v74 = vld [vmem:[%s1 + $0x1c] sm:$0xf]
  %v75 = vld [vmem:[%s1 + $0x20] sm:$0xf]
  %v76 = vld [vmem:[%s1 + $0x24] sm:$0xf]
  %v77 = vld [vmem:[%s1 + $0x28] sm:$0xf]
  %v78 = vld [vmem:[%s1 + $0x2c] sm:$0xf]
  %v79 = vld [vmem:[%s1 + $0x30] sm:$0xf]
  %v80 = vld [vmem:[%s1 + $0x34] sm:$0xf]
  %v81 = vld [vmem:[%s1 + $0x38] sm:$0xf]
  %v82 = vld [vmem:[%s1 + $0x3c] sm:$0xf]
  %v97 = vunpack.c.l.b16 %v53
  %v98 = vunpack.c.l.b16 %v54
  %v99 = vunpack.c.l.b16 %v55
  %v100 = vunpack.c.l.b16 %v56
  %v101 = vunpack.c.l.b16 %v57
  %v102 = vunpack.c.l.b16 %v58
  %v103 = vunpack.c.l.b16 %v59
  %v104 = vunpack.c.l.b16 %v60
  %v105 = vunpack.c.l.b16 %v61
  %v106 = vunpack.c.l.b16 %v62
  %v107 = vunpack.c.l.b16 %v63
  %v108 = vunpack.c.l.b16 %v64
  %v109 = vunpack.c.l.b16 %v65
  %v110 = vunpack.c.l.b16 %v66
  %v111 = vpack.c.b16 %v98, %v97
  %v112 = vpack.c.b16 %v100, %v99
  %v113 = vpack.c.b16 %v102, %v101
  %v114 = vpack.c.b16 %v104, %v103
  %v115 = vpack.c.b16 %v106, %v105
  %v116 = vpack.c.b16 %v108, %v107
  %v117 = vpack.c.b16 %v110, %v109
  %v141 = vunpack.c.l.b16 %v67
  %v142 = vunpack.c.l.b16 %v68
  %v143 = vunpack.c.l.b16 %v69
  %v144 = vunpack.c.l.b16 %v70
  %v145 = vunpack.c.l.b16 %v71
  %v146 = vunpack.c.l.b16 %v72
  %v147 = vunpack.c.l.b16 %v73
  %v148 = vunpack.c.l.b16 %v74
  %v149 = vunpack.c.l.b16 %v75
  %v150 = vunpack.c.l.b16 %v76
  %v151 = vunpack.c.l.b16 %v77
  %v152 = vunpack.c.l.b16 %v78
  %v153 = vunpack.c.l.b16 %v79
  %v154 = vunpack.c.l.b16 %v80
  %v155 = vunpack.c.l.b16 %v81
  %v156 = vunpack.c.l.b16 %v82
  %v157 = vpack.c.b16 %v142, %v141
  %v158 = vpack.c.b16 %v144, %v143
  %v159 = vpack.c.b16 %v146, %v145
  %v160 = vpack.c.b16 %v148, %v147
  %v161 = vpack.c.b16 %v150, %v149
  %v162 = vpack.c.b16 %v152, %v151
  %v163 = vpack.c.b16 %v154, %v153
  %v164 = vpack.c.b16 %v156, %v155
  %173 = vmatprep.subr.bf16.mxu0 0
  %174 = vmatpush1.bf16.msra.mxu0 %v164
  %175 = vmatprep.subr.bf16.mxu0 0
  %176 = vmatpush1.bf16.msra.mxu0 %v163
  %177 = vmatprep.subr.bf16.mxu0 0
  %178 = vmatpush1.bf16.msra.mxu0 %v162
  %179 = vmatprep.subr.bf16.mxu0 0
  %180 = vmatpush1.bf16.msra.mxu0 %v161
  %181 = vmatprep.subr.bf16.mxu0 0
  %182 = vmatpush1.bf16.msra.mxu0 %v160
  %183 = vmatprep.subr.bf16.mxu0 0
  %184 = vmatpush1.bf16.msra.mxu0 %v159
  %185 = vmatprep.subr.bf16.mxu0 0
  %186 = vmatpush1.bf16.msra.mxu0 %v158
  %187 = vmatprep.subr.bf16.mxu0 0
  %188 = vmatpush1.bf16.msra.mxu0 %v157
  %189 = vmatprep.subr.bf16.mxu0 0
  %190 = vmatpush2.bf16.msra.mxu0 0
  %191 = vmatprep.subr.bf16.mxu0 0
  %192 = vmatpush2.bf16.msra.mxu0 0
  %193 = vmatprep.subr.bf16.mxu0 0
  %194 = vmatpush2.bf16.msra.mxu0 0
  %195 = vmatprep.subr.bf16.mxu0 0
  %196 = vmatpush2.bf16.msra.mxu0 0
  %197 = vmatprep.subr.bf16.mxu0 0
  %198 = vmatpush2.bf16.msra.mxu0 0
  %199 = vmatprep.subr.bf16.mxu0 0
  %200 = vmatpush2.bf16.msra.mxu0 0
  %201 = vmatprep.subr.bf16.mxu0 0
  %202 = vmatpush2.bf16.msra.mxu0 0
  %203 = vmatprep.subr.bf16.mxu0 0
  %204 = vmatpush2.bf16.msra.mxu0 0
  %205 = vmatprep.mubr.bf16.mxu0 0
  %206 = vmatmul.mubr.bf16.gmra.mxu0 %v111
  %v207 = vpop.f32.mrf.mxu0
  %v208 = vadd.f32 0.0, %v207
  %v209 = vpop.f32.mrf.mxu0
  %v210 = vpop.f32.mrf.mxu0
  %v211 = vadd.f32 0.0, %v210
  %v212 = vpop.f32.mrf.mxu0
  %213 = vmatprep.mubr.bf16.mxu0 0
  %214 = vmatmul.mubr.bf16.gmra.mxu0 %v112
  %v215 = vpop.f32.mrf.mxu0
  %v216 = vadd.f32 0.0, %v215
  %v217 = vpop.f32.mrf.mxu0
  %v218 = vpop.f32.mrf.mxu0
  %v219 = vadd.f32 0.0, %v218
  %v220 = vpop.f32.mrf.mxu0
  %221 = vmatprep.mubr.bf16.mxu0 0
  %222 = vmatmul.mubr.bf16.gmra.mxu0 %v113
  %v223 = vpop.f32.mrf.mxu0
  %v224 = vadd.f32 0.0, %v223
  %v225 = vpop.f32.mrf.mxu0
  %v226 = vpop.f32.mrf.mxu0
  %v227 = vadd.f32 0.0, %v226
  %v228 = vpop.f32.mrf.mxu0
  %229 = vmatprep.mubr.bf16.mxu0 0
  %230 = vmatmul.mubr.bf16.gmra.mxu0 %v114
  %v231 = vpop.f32.mrf.mxu0
  %v232 = vadd.f32 0.0, %v231
  %v233 = vpop.f32.mrf.mxu0
  %v234 = vpop.f32.mrf.mxu0
  %v235 = vadd.f32 0.0, %v234
  %v236 = vpop.f32.mrf.mxu0
  %237 = vmatprep.mubr.bf16.mxu0 0
  %238 = vmatmul.mubr.bf16.gmra.mxu0 %v115
  %v239 = vpop.f32.mrf.mxu0
  %v240 = vadd.f32 0.0, %v239
  %v241 = vpop.f32.mrf.mxu0
  %v242 = vpop.f32.mrf.mxu0
  %v243 = vadd.f32 0.0, %v242
  %v244 = vpop.f32.mrf.mxu0
  %245 = vmatprep.mubr.bf16.mxu0 0
  %246 = vmatmul.mubr.bf16.gmra.mxu0 %v116
  %v247 = vpop.f32.mrf.mxu0
  %v248 = vadd.f32 0.0, %v247
  %v249 = vpop.f32.mrf.mxu0
  %v250 = vpop.f32.mrf.mxu0
  %v251 = vadd.f32 0.0, %v250
  %v252 = vpop.f32.mrf.mxu0
  %253 = vmatprep.mubr.bf16.mxu0 0
  %254 = vmatmul.mubr.bf16.gmra.mxu0 %v117
  %v255 = vpop.f32.mrf.mxu0
  %v256 = vadd.f32 0.0, %v255
  %v257 = vpop.f32.mrf.mxu0
  %v258 = vpop.f32.mrf.mxu0
  %v259 = vadd.f32 0.0, %v258
  %v260 = vpop.f32.mrf.mxu0
  %261 = vdwg.mxu0
  %v262 = vadd.f32 %v39, %v208
  %v263 = vadd.f32 %v40, %v211
  %v264 = vadd.f32 %v41, %v216
  %v265 = vadd.f32 %v42, %v219
  %v266 = vadd.f32 %v43, %v224
  %v267 = vadd.f32 %v44, %v227
  %v268 = vadd.f32 %v45, %v232
  %v269 = vadd.f32 %v46, %v235
  %v270 = vadd.f32 %v47, %v240
  %v271 = vadd.f32 %v48, %v243
  %v272 = vadd.f32 %v49, %v248
  %v273 = vadd.f32 %v50, %v251
  %v274 = vadd.f32 %v51, %v256
  %v275 = vadd.f32 %v52, %v259
  %276 = vst [vmem:[#allocation2] sm:$0xff] %v262
  %277 = vst [vmem:[#allocation2 + $0x8] sm:$0xff] %v263
  %278 = vst [vmem:[#allocation2 + $0x10] sm:$0xff] %v264
  %279 = vst [vmem:[#allocation2 + $0x18] sm:$0xff] %v265
  %280 = vst [vmem:[#allocation2 + $0x20] sm:$0xff] %v266
  %281 = vst [vmem:[#allocation2 + $0x28] sm:$0xff] %v267
  %282 = vst [vmem:[#allocation2 + $0x30] sm:$0xff] %v268
  %283 = vst [vmem:[#allocation2 + $0x38] sm:$0xff] %v269
  %284 = vst [vmem:[#allocation2 + $0x40] sm:$0xff] %v270
  %285 = vst [vmem:[#allocation2 + $0x48] sm:$0xff] %v271
  %286 = vst [vmem:[#allocation2 + $0x50] sm:$0xff] %v272
  %287 = vst [vmem:[#allocation2 + $0x58] sm:$0xff] %v273
  %288 = vst [vmem:[#allocation2 + $0x60] sm:$0xff] %v274
  %289 = vst [vmem:[#allocation2 + $0x68] sm:$0xff] %v275
  // Predicated region
  $region26: #{forward.52} parent=0 // pred_check
    %p290 = pneg %p21
  $region27: #{forward.52} parent=0 // pred_check_branch
    %292 = sbr.rel (%p290) target = $region29
  $region28: #{forward.52} parent=0 // pred_region
    %v293 = vld [vmem:[#allocation2] sm:$0xff]
    %v294 = vld [vmem:[#allocation2 + $0x8] sm:$0xff]
    %v295 = vld [vmem:[#allocation2 + $0x10] sm:$0xff]
    %v296 = vld [vmem:[#allocation2 + $0x18] sm:$0xff]
    %v297 = vld [vmem:[#allocation2 + $0x20] sm:$0xff]
    %v298 = vld [vmem:[#allocation2 + $0x28] sm:$0xff]
    %v299 = vld [vmem:[#allocation2 + $0x30] sm:$0xff]
    %v300 = vld [vmem:[#allocation2 + $0x38] sm:$0xff]
    %v301 = vld [vmem:[#allocation2 + $0x40] sm:$0xff]
    %v302 = vld [vmem:[#allocation2 + $0x48] sm:$0xff]
    %v303 = vld [vmem:[#allocation2 + $0x50] sm:$0xff]
    %v304 = vld [vmem:[#allocation2 + $0x58] sm:$0xff]
    %v305 = vld [vmem:[#allocation2 + $0x60] sm:$0xff]
    %v306 = vld [vmem:[#allocation2 + $0x68] sm:$0xff]
    %v307 = vld [vmem:[%s2] sm:$0x1]
    %v309 = vlaneseq
    %v310 = vshrl.u32 %v309, 7
    %v311 = vsub.s32 0, %v310
    %v312 = vrot.slane %v307, %v311
    %v314 = vmul.f32 %v293, %v312
    %v315 = vmul.f32 %v294, %v312
    %v316 = vmul.f32 %v295, %v312
    %v317 = vmul.f32 %v296, %v312
    %v318 = vmul.f32 %v297, %v312
    %v319 = vmul.f32 %v298, %v312
    %v320 = vmul.f32 %v299, %v312
    %v321 = vmul.f32 %v300, %v312
    %v322 = vmul.f32 %v301, %v312
    %v323 = vmul.f32 %v302, %v312
    %v324 = vmul.f32 %v303, %v312
    %v325 = vmul.f32 %v304, %v312
    %v326 = vmul.f32 %v305, %v312
    %v327 = vmul.f32 %v306, %v312
    %v328 = vld [vmem:[%s3] sm:$0x1]
    %v330 = vlaneseq
    %v331 = vshrl.u32 %v330, 7
    %v332 = vsub.s32 0, %v331
    %v333 = vrot.slane %v328, %v332
    %v335 = vadd.f32 %v314, %v333
    %v336 = vadd.f32 %v315, %v333
    %v337 = vadd.f32 %v316, %v333
    %v338 = vadd.f32 %v317, %v333
    %v339 = vadd.f32 %v318, %v333
    %v340 = vadd.f32 %v319, %v333
    %v341 = vadd.f32 %v320, %v333
    %v342 = vadd.f32 %v321, %v333
    %v343 = vadd.f32 %v322, %v333
    %v344 = vadd.f32 %v323, %v333
    %v345 = vadd.f32 %v324, %v333
    %v346 = vadd.f32 %v325, %v333
    %v347 = vadd.f32 %v326, %v333
    %v348 = vadd.f32 %v327, %v333
    %v349 = vld [vmem:[%s4] sm:$0xff]
    %v350 = vld [vmem:[%s4 + $0x8] sm:$0xff]
    %v351 = vld [vmem:[%s4 + $0x10] sm:$0xff]
    %v352 = vld [vmem:[%s4 + $0x18] sm:$0xff]
    %v353 = vld [vmem:[%s4 + $0x20] sm:$0xff]
    %v354 = vld [vmem:[%s4 + $0x28] sm:$0xff]
    %v355 = vld [vmem:[%s4 + $0x30] sm:$0xff]
    %v356 = vld [vmem:[%s4 + $0x38] sm:$0xff]
    %v357 = vld [vmem:[%s4 + $0x40] sm:$0xff]
    %v358 = vld [vmem:[%s4 + $0x48] sm:$0xff]
    %v359 = vld [vmem:[%s4 + $0x50] sm:$0xff]
    %v360 = vld [vmem:[%s4 + $0x58] sm:$0xff]
    %v361 = vld [vmem:[%s4 + $0x60] sm:$0xff]
    %v362 = vld [vmem:[%s4 + $0x68] sm:$0xff]
    %v363 = vmul.f32 %v335, 0.17
    %v364 = vmul.f32 %v336, 0.17
    %v365 = vmul.f32 %v337, 0.17
    %v366 = vmul.f32 %v338, 0.17
    %v367 = vmul.f32 %v339, 0.17
    %v368 = vmul.f32 %v340, 0.17
    %v369 = vmul.f32 %v341, 0.17
    %v370 = vmul.f32 %v342, 0.17
    %v371 = vmul.f32 %v343, 0.17
    %v372 = vmul.f32 %v344, 0.17
    %v373 = vmul.f32 %v345, 0.17
    %v374 = vmul.f32 %v346, 0.17
    %v375 = vmul.f32 %v347, 0.17
    %v376 = vmul.f32 %v348, 0.17
    %v377 = vadd.f32 %v349, %v363
    %v378 = vadd.f32 %v350, %v364
    %v379 = vadd.f32 %v351, %v365
    %v380 = vadd.f32 %v352, %v366
    %v381 = vadd.f32 %v353, %v367
    %v382 = vadd.f32 %v354, %v368
    %v383 = vadd.f32 %v355, %v369
    %v384 = vadd.f32 %v356, %v370
    %v385 = vadd.f32 %v357, %v371
    %v386 = vadd.f32 %v358, %v372
    %v387 = vadd.f32 %v359, %v373
    %v388 = vadd.f32 %v360, %v374
    %v389 = vadd.f32 %v361, %v375
    %v390 = vadd.f32 %v362, %v376
    %v391 = vmax.f32 %v377, 0.0
    %v392 = vmax.f32 %v378, 0.0
    %v393 = vmax.f32 %v379, 0.0
    %v394 = vmax.f32 %v380, 0.0
    %v395 = vmax.f32 %v381, 0.0
    %v396 = vmax.f32 %v382, 0.0
    %v397 = vmax.f32 %v383, 0.0
    %v398 = vmax.f32 %v384, 0.0
    %v399 = vmax.f32 %v385, 0.0
    %v400 = vmax.f32 %v386, 0.0
    %v401 = vmax.f32 %v387, 0.0
    %v402 = vmax.f32 %v388, 0.0
    %v403 = vmax.f32 %v389, 0.0
    %v404 = vmax.f32 %v390, 0.0
    %405 = vst [vmem:[%s5] sm:$0xff] %v391
    %406 = vst [vmem:[%s5 + $0x8] sm:$0xff] %v392
    %407 = vst [vmem:[%s5 + $0x10] sm:$0xff] %v393
    %408 = vst [vmem:[%s5 + $0x18] sm:$0xff] %v394
    %409 = vst [vmem:[%s5 + $0x20] sm:$0xff] %v395
    %410 = vst [vmem:[%s5 + $0x28] sm:$0xff] %v396
    %411 = vst [vmem:[%s5 + $0x30] sm:$0xff] %v397
    %412 = vst [vmem:[%s5 + $0x38] sm:$0xff] %v398
    %413 = vst [vmem:[%s5 + $0x40] sm:$0xff] %v399
    %414 = vst [vmem:[%s5 + $0x48] sm:$0xff] %v400
    %415 = vst [vmem:[%s5 + $0x50] sm:$0xff] %v401
    %416 = vst [vmem:[%s5 + $0x58] sm:$0xff] %v402
    %417 = vst [vmem:[%s5 + $0x60] sm:$0xff] %v403
    %418 = vst [vmem:[%s5 + $0x68] sm:$0xff] %v404
  $region29: #{forward.52} parent=0 // pred_fallthru
    _
  // Predicated region
  $region30: #{forward.52} parent=0 // pred_check
    _
  $region31: #{forward.52} parent=0 // pred_check_branch
    %420 = sbr.rel (0) target = $region33
  $region32: #{forward.52} parent=0 // pred_region
    _
  $region33: #{forward.52} parent=0 // pred_fallthru
    _
  // Predicated region
  $region34: #{forward.52} parent=0 // pred_check
    _
  $region35: #{forward.52} parent=0 // pred_check_branch
    %422 = sbr.rel (0) target = $region37
  $region36: #{forward.52} parent=0 // pred_region
    _
  $region37: #{forward.52} parent=0 // pred_fallthru
    _

// kernel: forward.58
$region0: #{forward.58}
  #allocation0 [shape = 'u32[]', space=smem, size = 0x4, offset = 0x4, fixed_abs, tag = 'smem constant byte address 0x4 - core index']
  #allocation1 [shape = 'u32[144,128]{1,0:T(1,128)}', space=vmem, size = 0x12000, scoped, tag = 'internal scratch']
  #allocation2 [shape = 'f32[32,128]{1,0:T(8,128)}', space=vmem, size = 0x4000, scoped, tag = 'scratch operand']
  %s0 = inlined_call_operand.vmem [shape: bf16[32,384], index: 0, kind: input, shape index: {}]
  %s1 = inlined_call_operand.vmem [shape: bf16[384,128], index: 1, kind: input, shape index: {}]
  %s2 = inlined_call_operand.vmem [shape: f32[1,128], index: 2, kind: input, shape index: {}]
  %s3 = inlined_call_operand.vmem [shape: f32[1,128], index: 3, kind: input, shape index: {}]
  %s4 = inlined_call_operand.vmem [shape: f32[32,128], index: 4, kind: output, shape index: {}]
  %s5 = sld [smem:[#allocation0]]
  $region34: #{forward.58} parent=0
    _
  %s7 = ssub.s32 1, %s5
  %s8 = scalar_select 0, %s7, %s5
  // Predicated region
  $region2: #{forward.58} parent=0 // pred_check
    _
  $region3: #{forward.58} parent=0 // pred_check_branch
    %10 = sbr.rel (0) target = $region5
  $region4: #{forward.58} parent=0 // pred_region
    _
  $region5: #{forward.58} parent=0 // pred_fallthru
    _
  // Predicated region
  $region6: #{forward.58} parent=0 // pred_check
    _
  $region7: #{forward.58} parent=0 // pred_check_branch
    %12 = sbr.rel (0) target = $region9
  $region8: #{forward.58} parent=0 // pred_region
    _
  $region9: #{forward.58} parent=0 // pred_fallthru
    _
  // Predicated region
  $region10: #{forward.58} parent=0 // pred_check
    _
  $region11: #{forward.58} parent=0 // pred_check_branch
    %14 = sbr.rel (0) target = $region13
  $region12: #{forward.58} parent=0 // pred_region
    _
  $region13: #{forward.58} parent=0 // pred_fallthru
    _
  // Predicated region
  $region14: #{forward.58} parent=0 // pred_check
    _
  $region15: #{forward.58} parent=0 // pred_check_branch
    %16 = sbr.rel (0) target = $region17
  $region16: #{forward.58} parent=0 // pred_region
    _
  $region17: #{forward.58} parent=0 // pred_fallthru
    _
  %p18 = scmp.eq.s32.totalorder 0, 0
  // Predicated region
  $region18: #{forward.58} parent=0 // pred_check
    %p19 = pneg %p18
  $region19: #{forward.58} parent=0 // pred_check_branch
    %21 = sbr.rel (%p19) target = $region21
  $region20: #{forward.58} parent=0 // pred_region
    %22 = vst [vmem:[#allocation2] sm:$0xff] 0.0
    %23 = vst [vmem:[#allocation2 + $0x8] sm:$0xff] 0.0
    %24 = vst [vmem:[#allocation2 + $0x10] sm:$0xff] 0.0
    %25 = vst [vmem:[#allocation2 + $0x18] sm:$0xff] 0.0
  $region21: #{forward.58} parent=0 // pred_fallthru
    _
  %v26 = vld [vmem:[#allocation2] sm:$0xff]
  %v27 = vld [vmem:[#allocation2 + $0x8] sm:$0xff]
  %v28 = vld [vmem:[#allocation2 + $0x10] sm:$0xff]
  %v29 = vld [vmem:[#allocation2 + $0x18] sm:$0xff]
  %v30 = vld [vmem:[%s0] sm:$0xff]
  %v31 = vld [vmem:[%s0 + $0x8] sm:$0xf]
  %v32 = vld [vmem:[%s0 + $0xc] sm:$0xff]
  %v33 = vld [vmem:[%s0 + $0x14] sm:$0xf]
  %v34 = vld [vmem:[%s0 + $0x18] sm:$0xff]
  %v35 = vld [vmem:[%s0 + $0x20] sm:$0xf]
  %v36 = vld [vmem:[%s0 + $0x24] sm:$0xff]
  %v37 = vld [vmem:[%s0 + $0x2c] sm:$0xf]
  %v38 = vld [vmem:[%s1] sm:$0xf]
  %v39 = vld [vmem:[%s1 + $0x4] sm:$0xf]
  %v40 = vld [vmem:[%s1 + $0x8] sm:$0xf]
  %v41 = vld [vmem:[%s1 + $0xc] sm:$0xf]
  %v42 = vld [vmem:[%s1 + $0x10] sm:$0xf]
  %v43 = vld [vmem:[%s1 + $0x14] sm:$0xf]
  %v44 = vld [vmem:[%s1 + $0x18] sm:$0xf]
  %v45 = vld [vmem:[%s1 + $0x1c] sm:$0xf]
  %v46 = vld [vmem:[%s1 + $0x20] sm:$0xf]
  %v47 = vld [vmem:[%s1 + $0x24] sm:$0xf]
  %v48 = vld [vmem:[%s1 + $0x28] sm:$0xf]
  %v49 = vld [vmem:[%s1 + $0x2c] sm:$0xf]
  %v50 = vld [vmem:[%s1 + $0x30] sm:$0xf]
  %v51 = vld [vmem:[%s1 + $0x34] sm:$0xf]
  %v52 = vld [vmem:[%s1 + $0x38] sm:$0xf]
  %v53 = vld [vmem:[%s1 + $0x3c] sm:$0xf]
  %v54 = vld [vmem:[%s1 + $0x40] sm:$0xf]
  %v55 = vld [vmem:[%s1 + $0x44] sm:$0xf]
  %v56 = vld [vmem:[%s1 + $0x48] sm:$0xf]
  %v57 = vld [vmem:[%s1 + $0x4c] sm:$0xf]
  %v58 = vld [vmem:[%s1 + $0x50] sm:$0xf]
  %v59 = vld [vmem:[%s1 + $0x54] sm:$0xf]
  %v60 = vld [vmem:[%s1 + $0x58] sm:$0xf]
  %v61 = vld [vmem:[%s1 + $0x5c] sm:$0xf]
  %v62 = vld [vmem:[%s1 + $0x60] sm:$0xf]
  %v63 = vld [vmem:[%s1 + $0x64] sm:$0xf]
  %v64 = vld [vmem:[%s1 + $0x68] sm:$0xf]
  %v65 = vld [vmem:[%s1 + $0x6c] sm:$0xf]
  %v66 = vld [vmem:[%s1 + $0x70] sm:$0xf]
  %v67 = vld [vmem:[%s1 + $0x74] sm:$0xf]
  %v68 = vld [vmem:[%s1 + $0x78] sm:$0xf]
  %v69 = vld [vmem:[%s1 + $0x7c] sm:$0xf]
  %v70 = vld [vmem:[%s1 + $0x80] sm:$0xf]
  %v71 = vld [vmem:[%s1 + $0x84] sm:$0xf]
  %v72 = vld [vmem:[%s1 + $0x88] sm:$0xf]
  %v73 = vld [vmem:[%s1 + $0x8c] sm:$0xf]
  %v74 = vld [vmem:[%s1 + $0x90] sm:$0xf]
  %v75 = vld [vmem:[%s1 + $0x94] sm:$0xf]
  %v76 = vld [vmem:[%s1 + $0x98] sm:$0xf]
  %v77 = vld [vmem:[%s1 + $0x9c] sm:$0xf]
  %v78 = vld [vmem:[%s1 + $0xa0] sm:$0xf]
  %v79 = vld [vmem:[%s1 + $0xa4] sm:$0xf]
  %v80 = vld [vmem:[%s1 + $0xa8] sm:$0xf]
  %v81 = vld [vmem:[%s1 + $0xac] sm:$0xf]
  %v82 = vld [vmem:[%s1 + $0xb0] sm:$0xf]
  %v83 = vld [vmem:[%s1 + $0xb4] sm:$0xf]
  %v84 = vld [vmem:[%s1 + $0xb8] sm:$0xf]
  %v85 = vld [vmem:[%s1 + $0xbc] sm:$0xf]
  %v94 = vunpack.c.l.b16 %v30
  %v95 = vunpack.c.h.b16 %v30
  %v96 = vunpack.c.l.b16 %v31
  %v97 = vunpack.c.l.b16 %v32
  %v98 = vunpack.c.h.b16 %v32
  %v99 = vunpack.c.l.b16 %v33
  %v100 = vunpack.c.l.b16 %v34
  %v101 = vunpack.c.h.b16 %v34
  %v102 = vunpack.c.l.b16 %v35
  %v103 = vunpack.c.l.b16 %v36
  %v104 = vunpack.c.h.b16 %v36
  %v105 = vunpack.c.l.b16 %v37
  %v106 = vpack.c.b16 %v97, %v94
  %v107 = vpack.c.b16 %v98, %v95
  %v108 = vpack.c.b16 %v99, %v96
  %v109 = vpack.c.b16 %v103, %v100
  %v110 = vpack.c.b16 %v104, %v101
  %v111 = vpack.c.b16 %v105, %v102
  %v166 = vunpack.c.l.b16 %v38
  %v167 = vunpack.c.l.b16 %v39
  %v168 = vunpack.c.l.b16 %v40
  %v169 = vunpack.c.l.b16 %v41
  %v170 = vunpack.c.l.b16 %v42
  %v171 = vunpack.c.l.b16 %v43
  %v172 = vunpack.c.l.b16 %v44
  %v173 = vunpack.c.l.b16 %v45
  %v174 = vunpack.c.l.b16 %v46
  %v175 = vunpack.c.l.b16 %v47
  %v176 = vunpack.c.l.b16 %v48
  %v177 = vunpack.c.l.b16 %v49
  %v178 = vunpack.c.l.b16 %v50
  %v179 = vunpack.c.l.b16 %v51
  %v180 = vunpack.c.l.b16 %v52
  %v181 = vunpack.c.l.b16 %v53
  %v182 = vunpack.c.l.b16 %v54
  %v183 = vunpack.c.l.b16 %v55
  %v184 = vunpack.c.l.b16 %v56
  %v185 = vunpack.c.l.b16 %v57
  %v186 = vunpack.c.l.b16 %v58
  %v187 = vunpack.c.l.b16 %v59
  %v188 = vunpack.c.l.b16 %v60
  %v189 = vunpack.c.l.b16 %v61
  %v190 = vunpack.c.l.b16 %v62
  %v191 = vunpack.c.l.b16 %v63
  %v192 = vunpack.c.l.b16 %v64
  %v193 = vunpack.c.l.b16 %v65
  %v194 = vunpack.c.l.b16 %v66
  %v195 = vunpack.c.l.b16 %v67
  %v196 = vunpack.c.l.b16 %v68
  %v197 = vunpack.c.l.b16 %v69
  %v198 = vunpack.c.l.b16 %v70
  %v199 = vunpack.c.l.b16 %v71
  %v200 = vunpack.c.l.b16 %v72
  %v201 = vunpack.c.l.b16 %v73
  %v202 = vunpack.c.l.b16 %v74
  %v203 = vunpack.c.l.b16 %v75
  %v204 = vunpack.c.l.b16 %v76
  %v205 = vunpack.c.l.b16 %v77
  %v206 = vunpack.c.l.b16 %v78
  %v207 = vunpack.c.l.b16 %v79
  %v208 = vunpack.c.l.b16 %v80
  %v209 = vunpack.c.l.b16 %v81
  %v210 = vunpack.c.l.b16 %v82
  %v211 = vunpack.c.l.b16 %v83
  %v212 = vunpack.c.l.b16 %v84
  %v213 = vunpack.c.l.b16 %v85
  %v214 = vpack.c.b16 %v167, %v166
  %v215 = vpack.c.b16 %v169, %v168
  %v216 = vpack.c.b16 %v171, %v170
  %v217 = vpack.c.b16 %v173, %v172
  %v218 = vpack.c.b16 %v175, %v174
  %v219 = vpack.c.b16 %v177, %v176
  %v220 = vpack.c.b16 %v179, %v178
  %v221 = vpack.c.b16 %v181, %v180
  %v222 = vpack.c.b16 %v183, %v182
  %v223 = vpack.c.b16 %v185, %v184
  %v224 = vpack.c.b16 %v187, %v186
  %v225 = vpack.c.b16 %v189, %v188
  %v226 = vpack.c.b16 %v191, %v190
  %v227 = vpack.c.b16 %v193, %v192
  %v228 = vpack.c.b16 %v195, %v194
  %v229 = vpack.c.b16 %v197, %v196
  %v230 = vpack.c.b16 %v199, %v198
  %v231 = vpack.c.b16 %v201, %v200
  %v232 = vpack.c.b16 %v203, %v202
  %v233 = vpack.c.b16 %v205, %v204
  %v234 = vpack.c.b16 %v207, %v206
  %v235 = vpack.c.b16 %v209, %v208
  %v236 = vpack.c.b16 %v211, %v210
  %v237 = vpack.c.b16 %v213, %v212
  %262 = vmatprep.subr.bf16.mxu0 0
  %263 = vmatpush1.bf16.msra.mxu0 %v221
  %264 = vmatprep.subr.bf16.mxu0 0
  %265 = vmatpush1.bf16.msra.mxu0 %v220
  %266 = vmatprep.subr.bf16.mxu0 0
  %267 = vmatpush1.bf16.msra.mxu0 %v219
  %268 = vmatprep.subr.bf16.mxu0 0
  %269 = vmatpush1.bf16.msra.mxu0 %v218
  %270 = vmatprep.subr.bf16.mxu0 0
  %271 = vmatpush1.bf16.msra.mxu0 %v217
  %272 = vmatprep.subr.bf16.mxu0 0
  %273 = vmatpush1.bf16.msra.mxu0 %v216
  %274 = vmatprep.subr.bf16.mxu0 0
  %275 = vmatpush1.bf16.msra.mxu0 %v215
  %276 = vmatprep.subr.bf16.mxu0 0
  %277 = vmatpush1.bf16.msra.mxu0 %v214
  %278 = vmatprep.subr.bf16.mxu0 0
  %279 = vmatpush2.bf16.msra.mxu0 %v229
  %280 = vmatprep.subr.bf16.mxu0 0
  %281 = vmatpush2.bf16.msra.mxu0 %v228
  %282 = vmatprep.subr.bf16.mxu0 0
  %283 = vmatpush2.bf16.msra.mxu0 %v227
  %284 = vmatprep.subr.bf16.mxu0 0
  %285 = vmatpush2.bf16.msra.mxu0 %v226
  %286 = vmatprep.subr.bf16.mxu0 0
  %287 = vmatpush2.bf16.msra.mxu0 %v225
  %288 = vmatprep.subr.bf16.mxu0 0
  %289 = vmatpush2.bf16.msra.mxu0 %v224
  %290 = vmatprep.subr.bf16.mxu0 0
  %291 = vmatpush2.bf16.msra.mxu0 %v223
  %292 = vmatprep.subr.bf16.mxu0 0
  %293 = vmatpush2.bf16.msra.mxu0 %v222
  %294 = vmatprep.mubr.bf16.mxu0 %v107
  %295 = vmatmul.mubr.bf16.gmra.mxu0 %v106
  %v296 = vpop.f32.mrf.mxu0
  %v297 = vadd.f32 0.0, %v296
  %v298 = vpop.f32.mrf.mxu0
  %v299 = vpop.f32.mrf.mxu0
  %v300 = vadd.f32 0.0, %v299
  %v301 = vpop.f32.mrf.mxu0
  %302 = vmatprep.mubr.bf16.mxu0 %v110
  %303 = vmatmul.mubr.bf16.gmra.mxu0 %v109
  %v304 = vpop.f32.mrf.mxu0
  %v305 = vadd.f32 0.0, %v304
  %v306 = vpop.f32.mrf.mxu0
  %v307 = vpop.f32.mrf.mxu0
  %v308 = vadd.f32 0.0, %v307
  %v309 = vpop.f32.mrf.mxu0
  %310 = vdwg.mxu0
  %311 = vmatprep.subr.bf16.mxu0 0
  %312 = vmatpush1.bf16.msra.mxu0 %v237
  %313 = vmatprep.subr.bf16.mxu0 0
  %314 = vmatpush1.bf16.msra.mxu0 %v236
  %315 = vmatprep.subr.bf16.mxu0 0
  %316 = vmatpush1.bf16.msra.mxu0 %v235
  %317 = vmatprep.subr.bf16.mxu0 0
  %318 = vmatpush1.bf16.msra.mxu0 %v234
  %319 = vmatprep.subr.bf16.mxu0 0
  %320 = vmatpush1.bf16.msra.mxu0 %v233
  %321 = vmatprep.subr.bf16.mxu0 0
  %322 = vmatpush1.bf16.msra.mxu0 %v232
  %323 = vmatprep.subr.bf16.mxu0 0
  %324 = vmatpush1.bf16.msra.mxu0 %v231
  %325 = vmatprep.subr.bf16.mxu0 0
  %326 = vmatpush1.bf16.msra.mxu0 %v230
  %327 = vmatprep.subr.bf16.mxu0 0
  %328 = vmatpush2.bf16.msra.mxu0 0
  %329 = vmatprep.subr.bf16.mxu0 0
  %330 = vmatpush2.bf16.msra.mxu0 0
  %331 = vmatprep.subr.bf16.mxu0 0
  %332 = vmatpush2.bf16.msra.mxu0 0
  %333 = vmatprep.subr.bf16.mxu0 0
  %334 = vmatpush2.bf16.msra.mxu0 0
  %335 = vmatprep.subr.bf16.mxu0 0
  %336 = vmatpush2.bf16.msra.mxu0 0
  %337 = vmatprep.subr.bf16.mxu0 0
  %338 = vmatpush2.bf16.msra.mxu0 0
  %339 = vmatprep.subr.bf16.mxu0 0
  %340 = vmatpush2.bf16.msra.mxu0 0
  %341 = vmatprep.subr.bf16.mxu0 0
  %342 = vmatpush2.bf16.msra.mxu0 0
  %343 = vmatprep.mubr.bf16.mxu0 0
  %344 = vmatmul.mubr.bf16.gmra.mxu0 %v108
  %v345 = vpop.f32.mrf.mxu0
  %v346 = vadd.f32 %v297, %v345
  %v347 = vpop.f32.mrf.mxu0
  %v348 = vpop.f32.mrf.mxu0
  %v349 = vadd.f32 %v300, %v348
  %v350 = vpop.f32.mrf.mxu0
  %351 = vmatprep.mubr.bf16.mxu0 0
  %352 = vmatmul.mubr.bf16.gmra.mxu0 %v111
  %v353 = vpop.f32.mrf.mxu0
  %v354 = vadd.f32 %v305, %v353
  %v355 = vpop.f32.mrf.mxu0
  %v356 = vpop.f32.mrf.mxu0
  %v357 = vadd.f32 %v308, %v356
  %v358 = vpop.f32.mrf.mxu0
  %359 = vdwg.mxu0
  %v360 = vadd.f32 %v26, %v346
  %v361 = vadd.f32 %v27, %v349
  %v362 = vadd.f32 %v28, %v354
  %v363 = vadd.f32 %v29, %v357
  %364 = vst [vmem:[#allocation2] sm:$0xff] %v360
  %365 = vst [vmem:[#allocation2 + $0x8] sm:$0xff] %v361
  %366 = vst [vmem:[#allocation2 + $0x10] sm:$0xff] %v362
  %367 = vst [vmem:[#allocation2 + $0x18] sm:$0xff] %v363
  // Predicated region
  $region22: #{forward.58} parent=0 // pred_check
    %p368 = pneg %p18
  $region23: #{forward.58} parent=0 // pred_check_branch
    %370 = sbr.rel (%p368) target = $region25
  $region24: #{forward.58} parent=0 // pred_region
    %v371 = vld [vmem:[#allocation2] sm:$0xff]
    %v372 = vld [vmem:[#allocation2 + $0x8] sm:$0xff]
    %v373 = vld [vmem:[#allocation2 + $0x10] sm:$0xff]
    %v374 = vld [vmem:[#allocation2 + $0x18] sm:$0xff]
    %v375 = vld [vmem:[%s2] sm:$0x1]
    %v377 = vlaneseq
    %v378 = vshrl.u32 %v377, 7
    %v379 = vsub.s32 0, %v378
    %v380 = vrot.slane %v375, %v379
    %v382 = vmul.f32 %v371, %v380
    %v383 = vmul.f32 %v372, %v380
    %v384 = vmul.f32 %v373, %v380
    %v385 = vmul.f32 %v374, %v380
    %v386 = vld [vmem:[%s3] sm:$0x1]
    %v388 = vlaneseq
    %v389 = vshrl.u32 %v388, 7
    %v390 = vsub.s32 0, %v389
    %v391 = vrot.slane %v386, %v390
    %v393 = vadd.f32 %v382, %v391
    %v394 = vadd.f32 %v383, %v391
    %v395 = vadd.f32 %v384, %v391
    %v396 = vadd.f32 %v385, %v391
    %v397 = vmax.f32 %v393, 0.0
    %v398 = vmax.f32 %v394, 0.0
    %v399 = vmax.f32 %v395, 0.0
    %v400 = vmax.f32 %v396, 0.0
    %401 = vst [vmem:[%s4] sm:$0xff] %v397
    %402 = vst [vmem:[%s4 + $0x8] sm:$0xff] %v398
    %403 = vst [vmem:[%s4 + $0x10] sm:$0xff] %v399
    %404 = vst [vmem:[%s4 + $0x18] sm:$0xff] %v400
  $region25: #{forward.58} parent=0 // pred_fallthru
    _
  // Predicated region
  $region26: #{forward.58} parent=0 // pred_check
    _
  $region27: #{forward.58} parent=0 // pred_check_branch
    %406 = sbr.rel (0) target = $region29
  $region28: #{forward.58} parent=0 // pred_region
    _
  $region29: #{forward.58} parent=0 // pred_fallthru
    _
  // Predicated region
  $region30: #{forward.58} parent=0 // pred_check
    _
  $region31: #{forward.58} parent=0 // pred_check_branch
    %408 = sbr.rel (0) target = $region33
  $region32: #{forward.58} parent=0 // pred_region
    _
  $region33: #{forward.58} parent=0 // pred_fallthru
    _

// kernel: forward.61
$region0: #{forward.61}
  #allocation0 [shape = 'u32[]', space=smem, size = 0x4, offset = 0x4, fixed_abs, tag = 'smem constant byte address 0x4 - core index']
  #allocation1 [shape = 'u32[144,128]{1,0:T(1,128)}', space=vmem, size = 0x12000, scoped, tag = 'internal scratch']
  #allocation2 [shape = 'f32[32,128]{1,0:T(8,128)}', space=vmem, size = 0x4000, scoped, tag = 'scratch operand']
  %s0 = inlined_call_operand.vmem [shape: bf16[32,256], index: 0, kind: input, shape index: {}]
  %s1 = inlined_call_operand.vmem [shape: bf16[256,128], index: 1, kind: input, shape index: {}]
  %s2 = inlined_call_operand.vmem [shape: f32[1,128], index: 2, kind: input, shape index: {}]
  %s3 = inlined_call_operand.vmem [shape: f32[1,128], index: 3, kind: input, shape index: {}]
  %s4 = inlined_call_operand.vmem [shape: f32[32,128], index: 4, kind: output, shape index: {}]
  %s5 = sld [smem:[#allocation0]]
  $region34: #{forward.61} parent=0
    _
  %s7 = ssub.s32 1, %s5
  %s8 = scalar_select 0, %s7, %s5
  // Predicated region
  $region2: #{forward.61} parent=0 // pred_check
    _
  $region3: #{forward.61} parent=0 // pred_check_branch
    %10 = sbr.rel (0) target = $region5
  $region4: #{forward.61} parent=0 // pred_region
    _
  $region5: #{forward.61} parent=0 // pred_fallthru
    _
  // Predicated region
  $region6: #{forward.61} parent=0 // pred_check
    _
  $region7: #{forward.61} parent=0 // pred_check_branch
    %12 = sbr.rel (0) target = $region9
  $region8: #{forward.61} parent=0 // pred_region
    _
  $region9: #{forward.61} parent=0 // pred_fallthru
    _
  // Predicated region
  $region10: #{forward.61} parent=0 // pred_check
    _
  $region11: #{forward.61} parent=0 // pred_check_branch
    %14 = sbr.rel (0) target = $region13
  $region12: #{forward.61} parent=0 // pred_region
    _
  $region13: #{forward.61} parent=0 // pred_fallthru
    _
  // Predicated region
  $region14: #{forward.61} parent=0 // pred_check
    _
  $region15: #{forward.61} parent=0 // pred_check_branch
    %16 = sbr.rel (0) target = $region17
  $region16: #{forward.61} parent=0 // pred_region
    _
  $region17: #{forward.61} parent=0 // pred_fallthru
    _
  %p18 = scmp.eq.s32.totalorder 0, 0
  // Predicated region
  $region18: #{forward.61} parent=0 // pred_check
    %p19 = pneg %p18
  $region19: #{forward.61} parent=0 // pred_check_branch
    %21 = sbr.rel (%p19) target = $region21
  $region20: #{forward.61} parent=0 // pred_region
    %22 = vst [vmem:[#allocation2] sm:$0xff] 0.0
    %23 = vst [vmem:[#allocation2 + $0x8] sm:$0xff] 0.0
    %24 = vst [vmem:[#allocation2 + $0x10] sm:$0xff] 0.0
    %25 = vst [vmem:[#allocation2 + $0x18] sm:$0xff] 0.0
  $region21: #{forward.61} parent=0 // pred_fallthru
    _
  %v26 = vld [vmem:[#allocation2] sm:$0xff]
  %v27 = vld [vmem:[#allocation2 + $0x8] sm:$0xff]
  %v28 = vld [vmem:[#allocation2 + $0x10] sm:$0xff]
  %v29 = vld [vmem:[#allocation2 + $0x18] sm:$0xff]
  %v30 = vld [vmem:[%s0] sm:$0xff]
  %v31 = vld [vmem:[%s0 + $0x8] sm:$0xff]
  %v32 = vld [vmem:[%s0 + $0x10] sm:$0xff]
  %v33 = vld [vmem:[%s0 + $0x18] sm:$0xff]
  %v34 = vld [vmem:[%s1] sm:$0xf]
  %v35 = vld [vmem:[%s1 + $0x4] sm:$0xf]
  %v36 = vld [vmem:[%s1 + $0x8] sm:$0xf]
  %v37 = vld [vmem:[%s1 + $0xc] sm:$0xf]
  %v38 = vld [vmem:[%s1 + $0x10] sm:$0xf]
  %v39 = vld [vmem:[%s1 + $0x14] sm:$0xf]
  %v40 = vld [vmem:[%s1 + $0x18] sm:$0xf]
  %v41 = vld [vmem:[%s1 + $0x1c] sm:$0xf]
  %v42 = vld [vmem:[%s1 + $0x20] sm:$0xf]
  %v43 = vld [vmem:[%s1 + $0x24] sm:$0xf]
  %v44 = vld [vmem:[%s1 + $0x28] sm:$0xf]
  %v45 = vld [vmem:[%s1 + $0x2c] sm:$0xf]
  %v46 = vld [vmem:[%s1 + $0x30] sm:$0xf]
  %v47 = vld [vmem:[%s1 + $0x34] sm:$0xf]
  %v48 = vld [vmem:[%s1 + $0x38] sm:$0xf]
  %v49 = vld [vmem:[%s1 + $0x3c] sm:$0xf]
  %v50 = vld [vmem:[%s1 + $0x40] sm:$0xf]
  %v51 = vld [vmem:[%s1 + $0x44] sm:$0xf]
  %v52 = vld [vmem:[%s1 + $0x48] sm:$0xf]
  %v53 = vld [vmem:[%s1 + $0x4c] sm:$0xf]
  %v54 = vld [vmem:[%s1 + $0x50] sm:$0xf]
  %v55 = vld [vmem:[%s1 + $0x54] sm:$0xf]
  %v56 = vld [vmem:[%s1 + $0x58] sm:$0xf]
  %v57 = vld [vmem:[%s1 + $0x5c] sm:$0xf]
  %v58 = vld [vmem:[%s1 + $0x60] sm:$0xf]
  %v59 = vld [vmem:[%s1 + $0x64] sm:$0xf]
  %v60 = vld [vmem:[%s1 + $0x68] sm:$0xf]
  %v61 = vld [vmem:[%s1 + $0x6c] sm:$0xf]
  %v62 = vld [vmem:[%s1 + $0x70] sm:$0xf]
  %v63 = vld [vmem:[%s1 + $0x74] sm:$0xf]
  %v64 = vld [vmem:[%s1 + $0x78] sm:$0xf]
  %v65 = vld [vmem:[%s1 + $0x7c] sm:$0xf]
  %v70 = vunpack.c.l.b16 %v30
  %v71 = vunpack.c.h.b16 %v30
  %v72 = vunpack.c.l.b16 %v31
  %v73 = vunpack.c.h.b16 %v31
  %v74 = vunpack.c.l.b16 %v32
  %v75 = vunpack.c.h.b16 %v32
  %v76 = vunpack.c.l.b16 %v33
  %v77 = vunpack.c.h.b16 %v33
  %v78 = vpack.c.b16 %v72, %v70
  %v79 = vpack.c.b16 %v73, %v71
  %v80 = vpack.c.b16 %v76, %v74
  %v81 = vpack.c.b16 %v77, %v75
  %v118 = vunpack.c.l.b16 %v34
  %v119 = vunpack.c.l.b16 %v35
  %v120 = vunpack.c.l.b16 %v36
  %v121 = vunpack.c.l.b16 %v37
  %v122 = vunpack.c.l.b16 %v38
  %v123 = vunpack.c.l.b16 %v39
  %v124 = vunpack.c.l.b16 %v40
  %v125 = vunpack.c.l.b16 %v41
  %v126 = vunpack.c.l.b16 %v42
  %v127 = vunpack.c.l.b16 %v43
  %v128 = vunpack.c.l.b16 %v44
  %v129 = vunpack.c.l.b16 %v45
  %v130 = vunpack.c.l.b16 %v46
  %v131 = vunpack.c.l.b16 %v47
  %v132 = vunpack.c.l.b16 %v48
  %v133 = vunpack.c.l.b16 %v49
  %v134 = vunpack.c.l.b16 %v50
  %v135 = vunpack.c.l.b16 %v51
  %v136 = vunpack.c.l.b16 %v52
  %v137 = vunpack.c.l.b16 %v53
  %v138 = vunpack.c.l.b16 %v54
  %v139 = vunpack.c.l.b16 %v55
  %v140 = vunpack.c.l.b16 %v56
  %v141 = vunpack.c.l.b16 %v57
  %v142 = vunpack.c.l.b16 %v58
  %v143 = vunpack.c.l.b16 %v59
  %v144 = vunpack.c.l.b16 %v60
  %v145 = vunpack.c.l.b16 %v61
  %v146 = vunpack.c.l.b16 %v62
  %v147 = vunpack.c.l.b16 %v63
  %v148 = vunpack.c.l.b16 %v64
  %v149 = vunpack.c.l.b16 %v65
  %v150 = vpack.c.b16 %v119, %v118
  %v151 = vpack.c.b16 %v121, %v120
  %v152 = vpack.c.b16 %v123, %v122
  %v153 = vpack.c.b16 %v125, %v124
  %v154 = vpack.c.b16 %v127, %v126
  %v155 = vpack.c.b16 %v129, %v128
  %v156 = vpack.c.b16 %v131, %v130
  %v157 = vpack.c.b16 %v133, %v132
  %v158 = vpack.c.b16 %v135, %v134
  %v159 = vpack.c.b16 %v137, %v136
  %v160 = vpack.c.b16 %v139, %v138
  %v161 = vpack.c.b16 %v141, %v140
  %v162 = vpack.c.b16 %v143, %v142
  %v163 = vpack.c.b16 %v145, %v144
  %v164 = vpack.c.b16 %v147, %v146
  %v165 = vpack.c.b16 %v149, %v148
  %182 = vmatprep.subr.bf16.mxu0 0
  %183 = vmatpush1.bf16.msra.mxu0 %v157
  %184 = vmatprep.subr.bf16.mxu0 0
  %185 = vmatpush1.bf16.msra.mxu0 %v156
  %186 = vmatprep.subr.bf16.mxu0 0
  %187 = vmatpush1.bf16.msra.mxu0 %v155
  %188 = vmatprep.subr.bf16.mxu0 0
  %189 = vmatpush1.bf16.msra.mxu0 %v154
  %190 = vmatprep.subr.bf16.mxu0 0
  %191 = vmatpush1.bf16.msra.mxu0 %v153
  %192 = vmatprep.subr.bf16.mxu0 0
  %193 = vmatpush1.bf16.msra.mxu0 %v152
  %194 = vmatprep.subr.bf16.mxu0 0
  %195 = vmatpush1.bf16.msra.mxu0 %v151
  %196 = vmatprep.subr.bf16.mxu0 0
  %197 = vmatpush1.bf16.msra.mxu0 %v150
  %198 = vmatprep.subr.bf16.mxu0 0
  %199 = vmatpush2.bf16.msra.mxu0 %v165
  %200 = vmatprep.subr.bf16.mxu0 0
  %201 = vmatpush2.bf16.msra.mxu0 %v164
  %202 = vmatprep.subr.bf16.mxu0 0
  %203 = vmatpush2.bf16.msra.mxu0 %v163
  %204 = vmatprep.subr.bf16.mxu0 0
  %205 = vmatpush2.bf16.msra.mxu0 %v162
  %206 = vmatprep.subr.bf16.mxu0 0
  %207 = vmatpush2.bf16.msra.mxu0 %v161
  %208 = vmatprep.subr.bf16.mxu0 0
  %209 = vmatpush2.bf16.msra.mxu0 %v160
  %210 = vmatprep.subr.bf16.mxu0 0
  %211 = vmatpush2.bf16.msra.mxu0 %v159
  %212 = vmatprep.subr.bf16.mxu0 0
  %213 = vmatpush2.bf16.msra.mxu0 %v158
  %214 = vmatprep.mubr.bf16.mxu0 %v79
  %215 = vmatmul.mubr.bf16.gmra.mxu0 %v78
  %v216 = vpop.f32.mrf.mxu0
  %v217 = vadd.f32 0.0, %v216
  %v218 = vpop.f32.mrf.mxu0
  %v219 = vpop.f32.mrf.mxu0
  %v220 = vadd.f32 0.0, %v219
  %v221 = vpop.f32.mrf.mxu0
  %222 = vmatprep.mubr.bf16.mxu0 %v81
  %223 = vmatmul.mubr.bf16.gmra.mxu0 %v80
  %v224 = vpop.f32.mrf.mxu0
  %v225 = vadd.f32 0.0, %v224
  %v226 = vpop.f32.mrf.mxu0
  %v227 = vpop.f32.mrf.mxu0
  %v228 = vadd.f32 0.0, %v227
  %v229 = vpop.f32.mrf.mxu0
  %230 = vdwg.mxu0
  %v231 = vadd.f32 %v26, %v217
  %v232 = vadd.f32 %v27, %v220
  %v233 = vadd.f32 %v28, %v225
  %v234 = vadd.f32 %v29, %v228
  %235 = vst [vmem:[#allocation2] sm:$0xff] %v231
  %236 = vst [vmem:[#allocation2 + $0x8] sm:$0xff] %v232
  %237 = vst [vmem:[#allocation2 + $0x10] sm:$0xff] %v233
  %238 = vst [vmem:[#allocation2 + $0x18] sm:$0xff] %v234
  // Predicated region
  $region22: #{forward.61} parent=0 // pred_check
    %p239 = pneg %p18
  $region23: #{forward.61} parent=0 // pred_check_branch
    %241 = sbr.rel (%p239) target = $region25
  $region24: #{forward.61} parent=0 // pred_region
    %v242 = vld [vmem:[#allocation2] sm:$0xff]
    %v243 = vld [vmem:[#allocation2 + $0x8] sm:$0xff]
    %v244 = vld [vmem:[#allocation2 + $0x10] sm:$0xff]
    %v245 = vld [vmem:[#allocation2 + $0x18] sm:$0xff]
    %v246 = vld [vmem:[%s2] sm:$0x1]
    %v248 = vlaneseq
    %v249 = vshrl.u32 %v248, 7
    %v250 = vsub.s32 0, %v249
    %v251 = vrot.slane %v246, %v250
    %v253 = vmul.f32 %v242, %v251
    %v254 = vmul.f32 %v243, %v251
    %v255 = vmul.f32 %v244, %v251
    %v256 = vmul.f32 %v245, %v251
    %v257 = vld [vmem:[%s3] sm:$0x1]
    %v259 = vlaneseq
    %v260 = vshrl.u32 %v259, 7
    %v261 = vsub.s32 0, %v260
    %v262 = vrot.slane %v257, %v261
    %v264 = vadd.f32 %v253, %v262
    %v265 = vadd.f32 %v254, %v262
    %v266 = vadd.f32 %v255, %v262
    %v267 = vadd.f32 %v256, %v262
    %v268 = vmax.f32 %v264, 0.0
    %v269 = vmax.f32 %v265, 0.0
    %v270 = vmax.f32 %v266, 0.0
    %v271 = vmax.f32 %v267, 0.0
    %272 = vst [vmem:[%s4] sm:$0xff] %v268
    %273 = vst [vmem:[%s4 + $0x8] sm:$0xff] %v269
    %274 = vst [vmem:[%s4 + $0x10] sm:$0xff] %v270
    %275 = vst [vmem:[%s4 + $0x18] sm:$0xff] %v271
  $region25: #{forward.61} parent=0 // pred_fallthru
    _
  // Predicated region
  $region26: #{forward.61} parent=0 // pred_check
    _
  $region27: #{forward.61} parent=0 // pred_check_branch
    %277 = sbr.rel (0) target = $region29
  $region28: #{forward.61} parent=0 // pred_region
    _
  $region29: #{forward.61} parent=0 // pred_fallthru
    _
  // Predicated region
  $region30: #{forward.61} parent=0 // pred_check
    _
  $region31: #{forward.61} parent=0 // pred_check_branch
    %279 = sbr.rel (0) target = $region33
  $region32: #{forward.61} parent=0 // pred_region
    _
  $region33: #{forward.61} parent=0 // pred_fallthru
    _

// kernel: forward.62
$region0: #{forward.62}
  #allocation0 [shape = 'u32[]', space=smem, size = 0x4, offset = 0x4, fixed_abs, tag = 'smem constant byte address 0x4 - core index']
  #allocation1 [shape = 'u32[144,128]{1,0:T(1,128)}', space=vmem, size = 0x12000, scoped, tag = 'internal scratch']
  #allocation2 [shape = 'f32[32,128]{1,0:T(8,128)}', space=vmem, size = 0x4000, scoped, tag = 'scratch operand']
  %s0 = inlined_call_operand.vmem [shape: bf16[32,128], index: 0, kind: input, shape index: {}]
  %s1 = inlined_call_operand.vmem [shape: bf16[128,128], index: 1, kind: input, shape index: {}]
  %s2 = inlined_call_operand.vmem [shape: f32[1,128], index: 2, kind: input, shape index: {}]
  %s3 = inlined_call_operand.vmem [shape: f32[1,128], index: 3, kind: input, shape index: {}]
  %s4 = inlined_call_operand.vmem [shape: f32[32,128], index: 4, kind: output, shape index: {}]
  %s5 = sld [smem:[#allocation0]]
  $region34: #{forward.62} parent=0
    _
  %s7 = ssub.s32 1, %s5
  %s8 = scalar_select 0, %s7, %s5
  // Predicated region
  $region2: #{forward.62} parent=0 // pred_check
    _
  $region3: #{forward.62} parent=0 // pred_check_branch
    %10 = sbr.rel (0) target = $region5
  $region4: #{forward.62} parent=0 // pred_region
    _
  $region5: #{forward.62} parent=0 // pred_fallthru
    _
  // Predicated region
  $region6: #{forward.62} parent=0 // pred_check
    _
  $region7: #{forward.62} parent=0 // pred_check_branch
    %12 = sbr.rel (0) target = $region9
  $region8: #{forward.62} parent=0 // pred_region
    _
  $region9: #{forward.62} parent=0 // pred_fallthru
    _
  // Predicated region
  $region10: #{forward.62} parent=0 // pred_check
    _
  $region11: #{forward.62} parent=0 // pred_check_branch
    %14 = sbr.rel (0) target = $region13
  $region12: #{forward.62} parent=0 // pred_region
    _
  $region13: #{forward.62} parent=0 // pred_fallthru
    _
  // Predicated region
  $region14: #{forward.62} parent=0 // pred_check
    _
  $region15: #{forward.62} parent=0 // pred_check_branch
    %16 = sbr.rel (0) target = $region17
  $region16: #{forward.62} parent=0 // pred_region
    _
  $region17: #{forward.62} parent=0 // pred_fallthru
    _
  %p18 = scmp.eq.s32.totalorder 0, 0
  // Predicated region
  $region18: #{forward.62} parent=0 // pred_check
    %p19 = pneg %p18
  $region19: #{forward.62} parent=0 // pred_check_branch
    %21 = sbr.rel (%p19) target = $region21
  $region20: #{forward.62} parent=0 // pred_region
    %22 = vst [vmem:[#allocation2] sm:$0xff] 0.0
    %23 = vst [vmem:[#allocation2 + $0x8] sm:$0xff] 0.0
    %24 = vst [vmem:[#allocation2 + $0x10] sm:$0xff] 0.0
    %25 = vst [vmem:[#allocation2 + $0x18] sm:$0xff] 0.0
  $region21: #{forward.62} parent=0 // pred_fallthru
    _
  %v26 = vld [vmem:[#allocation2] sm:$0xff]
  %v27 = vld [vmem:[#allocation2 + $0x8] sm:$0xff]
  %v28 = vld [vmem:[#allocation2 + $0x10] sm:$0xff]
  %v29 = vld [vmem:[#allocation2 + $0x18] sm:$0xff]
  %v30 = vld [vmem:[%s0] sm:$0xf]
  %v31 = vld [vmem:[%s0 + $0x4] sm:$0xf]
  %v32 = vld [vmem:[%s0 + $0x8] sm:$0xf]
  %v33 = vld [vmem:[%s0 + $0xc] sm:$0xf]
  %v34 = vld [vmem:[%s1] sm:$0xf]
  %v35 = vld [vmem:[%s1 + $0x4] sm:$0xf]
  %v36 = vld [vmem:[%s1 + $0x8] sm:$0xf]
  %v37 = vld [vmem:[%s1 + $0xc] sm:$0xf]
  %v38 = vld [vmem:[%s1 + $0x10] sm:$0xf]
  %v39 = vld [vmem:[%s1 + $0x14] sm:$0xf]
  %v40 = vld [vmem:[%s1 + $0x18] sm:$0xf]
  %v41 = vld [vmem:[%s1 + $0x1c] sm:$0xf]
  %v42 = vld [vmem:[%s1 + $0x20] sm:$0xf]
  %v43 = vld [vmem:[%s1 + $0x24] sm:$0xf]
  %v44 = vld [vmem:[%s1 + $0x28] sm:$0xf]
  %v45 = vld [vmem:[%s1 + $0x2c] sm:$0xf]
  %v46 = vld [vmem:[%s1 + $0x30] sm:$0xf]
  %v47 = vld [vmem:[%s1 + $0x34] sm:$0xf]
  %v48 = vld [vmem:[%s1 + $0x38] sm:$0xf]
  %v49 = vld [vmem:[%s1 + $0x3c] sm:$0xf]
  %v54 = vunpack.c.l.b16 %v30
  %v55 = vunpack.c.l.b16 %v31
  %v56 = vunpack.c.l.b16 %v32
  %v57 = vunpack.c.l.b16 %v33
  %v58 = vpack.c.b16 %v55, %v54
  %v59 = vpack.c.b16 %v57, %v56
  %v78 = vunpack.c.l.b16 %v34
  %v79 = vunpack.c.l.b16 %v35
  %v80 = vunpack.c.l.b16 %v36
  %v81 = vunpack.c.l.b16 %v37
  %v82 = vunpack.c.l.b16 %v38
  %v83 = vunpack.c.l.b16 %v39
  %v84 = vunpack.c.l.b16 %v40
  %v85 = vunpack.c.l.b16 %v41
  %v86 = vunpack.c.l.b16 %v42
  %v87 = vunpack.c.l.b16 %v43
  %v88 = vunpack.c.l.b16 %v44
  %v89 = vunpack.c.l.b16 %v45
  %v90 = vunpack.c.l.b16 %v46
  %v91 = vunpack.c.l.b16 %v47
  %v92 = vunpack.c.l.b16 %v48
  %v93 = vunpack.c.l.b16 %v49
  %v94 = vpack.c.b16 %v79, %v78
  %v95 = vpack.c.b16 %v81, %v80
  %v96 = vpack.c.b16 %v83, %v82
  %v97 = vpack.c.b16 %v85, %v84
  %v98 = vpack.c.b16 %v87, %v86
  %v99 = vpack.c.b16 %v89, %v88
  %v100 = vpack.c.b16 %v91, %v90
  %v101 = vpack.c.b16 %v93, %v92
  %110 = vmatprep.subr.bf16.mxu0 0
  %111 = vmatpush1.bf16.msra.mxu0 %v101
  %112 = vmatprep.subr.bf16.mxu0 0
  %113 = vmatpush1.bf16.msra.mxu0 %v100
  %114 = vmatprep.subr.bf16.mxu0 0
  %115 = vmatpush1.bf16.msra.mxu0 %v99
  %116 = vmatprep.subr.bf16.mxu0 0
  %117 = vmatpush1.bf16.msra.mxu0 %v98
  %118 = vmatprep.subr.bf16.mxu0 0
  %119 = vmatpush1.bf16.msra.mxu0 %v97
  %120 = vmatprep.subr.bf16.mxu0 0
  %121 = vmatpush1.bf16.msra.mxu0 %v96
  %122 = vmatprep.subr.bf16.mxu0 0
  %123 = vmatpush1.bf16.msra.mxu0 %v95
  %124 = vmatprep.subr.bf16.mxu0 0
  %125 = vmatpush1.bf16.msra.mxu0 %v94
  %126 = vmatprep.subr.bf16.mxu0 0
  %127 = vmatpush2.bf16.msra.mxu0 0
  %128 = vmatprep.subr.bf16.mxu0 0
  %129 = vmatpush2.bf16.msra.mxu0 0
  %130 = vmatprep.subr.bf16.mxu0 0
  %131 = vmatpush2.bf16.msra.mxu0 0
  %132 = vmatprep.subr.bf16.mxu0 0
  %133 = vmatpush2.bf16.msra.mxu0 0
  %134 = vmatprep.subr.bf16.mxu0 0
  %135 = vmatpush2.bf16.msra.mxu0 0
  %136 = vmatprep.subr.bf16.mxu0 0
  %137 = vmatpush2.bf16.msra.mxu0 0
  %138 = vmatprep.subr.bf16.mxu0 0
  %139 = vmatpush2.bf16.msra.mxu0 0
  %140 = vmatprep.subr.bf16.mxu0 0
  %141 = vmatpush2.bf16.msra.mxu0 0
  %142 = vmatprep.mubr.bf16.mxu0 0
  %143 = vmatmul.mubr.bf16.gmra.mxu0 %v58
  %v144 = vpop.f32.mrf.mxu0
  %v145 = vadd.f32 0.0, %v144
  %v146 = vpop.f32.mrf.mxu0
  %v147 = vpop.f32.mrf.mxu0
  %v148 = vadd.f32 0.0, %v147
  %v149 = vpop.f32.mrf.mxu0
  %150 = vmatprep.mubr.bf16.mxu0 0
  %151 = vmatmul.mubr.bf16.gmra.mxu0 %v59
  %v152 = vpop.f32.mrf.mxu0
  %v153 = vadd.f32 0.0, %v152
  %v154 = vpop.f32.mrf.mxu0
  %v155 = vpop.f32.mrf.mxu0
  %v156 = vadd.f32 0.0, %v155
  %v157 = vpop.f32.mrf.mxu0
  %158 = vdwg.mxu0
  %v159 = vadd.f32 %v26, %v145
  %v160 = vadd.f32 %v27, %v148
  %v161 = vadd.f32 %v28, %v153
  %v162 = vadd.f32 %v29, %v156
  %163 = vst [vmem:[#allocation2] sm:$0xff] %v159
  %164 = vst [vmem:[#allocation2 + $0x8] sm:$0xff] %v160
  %165 = vst [vmem:[#allocation2 + $0x10] sm:$0xff] %v161
  %166 = vst [vmem:[#allocation2 + $0x18] sm:$0xff] %v162
  // Predicated region
  $region22: #{forward.62} parent=0 // pred_check
    %p167 = pneg %p18
  $region23: #{forward.62} parent=0 // pred_check_branch
    %169 = sbr.rel (%p167) target = $region25
  $region24: #{forward.62} parent=0 // pred_region
    %v170 = vld [vmem:[#allocation2] sm:$0xff]
    %v171 = vld [vmem:[#allocation2 + $0x8] sm:$0xff]
    %v172 = vld [vmem:[#allocation2 + $0x10] sm:$0xff]
    %v173 = vld [vmem:[#allocation2 + $0x18] sm:$0xff]
    %v174 = vld [vmem:[%s2] sm:$0x1]
    %v176 = vlaneseq
    %v177 = vshrl.u32 %v176, 7
    %v178 = vsub.s32 0, %v177
    %v179 = vrot.slane %v174, %v178
    %v181 = vmul.f32 %v170, %v179
    %v182 = vmul.f32 %v171, %v179
    %v183 = vmul.f32 %v172, %v179
    %v184 = vmul.f32 %v173, %v179
    %v185 = vld [vmem:[%s3] sm:$0x1]
    %v187 = vlaneseq
    %v188 = vshrl.u32 %v187, 7
    %v189 = vsub.s32 0, %v188
    %v190 = vrot.slane %v185, %v189
    %v192 = vadd.f32 %v181, %v190
    %v193 = vadd.f32 %v182, %v190
    %v194 = vadd.f32 %v183, %v190
    %v195 = vadd.f32 %v184, %v190
    %v196 = vmax.f32 %v192, 0.0
    %v197 = vmax.f32 %v193, 0.0
    %v198 = vmax.f32 %v194, 0.0
    %v199 = vmax.f32 %v195, 0.0
    %200 = vst [vmem:[%s4] sm:$0xff] %v196
    %201 = vst [vmem:[%s4 + $0x8] sm:$0xff] %v197
    %202 = vst [vmem:[%s4 + $0x10] sm:$0xff] %v198
    %203 = vst [vmem:[%s4 + $0x18] sm:$0xff] %v199
  $region25: #{forward.62} parent=0 // pred_fallthru
    _
  // Predicated region
  $region26: #{forward.62} parent=0 // pred_check
    _
  $region27: #{forward.62} parent=0 // pred_check_branch
    %205 = sbr.rel (0) target = $region29
  $region28: #{forward.62} parent=0 // pred_region
    _
  $region29: #{forward.62} parent=0 // pred_fallthru
    _
  // Predicated region
  $region30: #{forward.62} parent=0 // pred_check
    _
  $region31: #{forward.62} parent=0 // pred_check_branch
    %207 = sbr.rel (0) target = $region33
  $region32: #{forward.62} parent=0 // pred_region
    _
  $region33: #{forward.62} parent=0 // pred_fallthru
    _

// kernel: forward.65
$region0: #{forward.65}
  #allocation0 [shape = 'u32[]', space=smem, size = 0x4, offset = 0x4, fixed_abs, tag = 'smem constant byte address 0x4 - core index']
  #allocation1 [shape = 'u32[144,128]{1,0:T(1,128)}', space=vmem, size = 0x12000, scoped, tag = 'internal scratch']
  #allocation2 [shape = 'f32[32,128]{1,0:T(8,128)}', space=vmem, size = 0x4000, scoped, tag = 'scratch operand']
  %s0 = inlined_call_operand.vmem [shape: bf16[32,128], index: 0, kind: input, shape index: {}]
  %s1 = inlined_call_operand.vmem [shape: bf16[128,128], index: 1, kind: input, shape index: {}]
  %s2 = inlined_call_operand.vmem [shape: f32[1,128], index: 2, kind: input, shape index: {}]
  %s3 = inlined_call_operand.vmem [shape: f32[1,128], index: 3, kind: input, shape index: {}]
  %s4 = inlined_call_operand.vmem [shape: f32[32,128], index: 4, kind: input, shape index: {}]
  %s5 = inlined_call_operand.vmem [shape: f32[32,128], index: 5, kind: output, shape index: {}]
  %s6 = sld [smem:[#allocation0]]
  $region38: #{forward.65} parent=0
    _
  %s8 = ssub.s32 1, %s6
  %s9 = scalar_select 0, %s8, %s6
  // Predicated region
  $region2: #{forward.65} parent=0 // pred_check
    _
  $region3: #{forward.65} parent=0 // pred_check_branch
    %11 = sbr.rel (0) target = $region5
  $region4: #{forward.65} parent=0 // pred_region
    _
  $region5: #{forward.65} parent=0 // pred_fallthru
    _
  // Predicated region
  $region6: #{forward.65} parent=0 // pred_check
    _
  $region7: #{forward.65} parent=0 // pred_check_branch
    %13 = sbr.rel (0) target = $region9
  $region8: #{forward.65} parent=0 // pred_region
    _
  $region9: #{forward.65} parent=0 // pred_fallthru
    _
  // Predicated region
  $region10: #{forward.65} parent=0 // pred_check
    _
  $region11: #{forward.65} parent=0 // pred_check_branch
    %15 = sbr.rel (0) target = $region13
  $region12: #{forward.65} parent=0 // pred_region
    _
  $region13: #{forward.65} parent=0 // pred_fallthru
    _
  // Predicated region
  $region14: #{forward.65} parent=0 // pred_check
    _
  $region15: #{forward.65} parent=0 // pred_check_branch
    %17 = sbr.rel (0) target = $region17
  $region16: #{forward.65} parent=0 // pred_region
    _
  $region17: #{forward.65} parent=0 // pred_fallthru
    _
  // Predicated region
  $region18: #{forward.65} parent=0 // pred_check
    _
  $region19: #{forward.65} parent=0 // pred_check_branch
    %19 = sbr.rel (0) target = $region21
  $region20: #{forward.65} parent=0 // pred_region
    _
  $region21: #{forward.65} parent=0 // pred_fallthru
    _
  %p21 = scmp.eq.s32.totalorder 0, 0
  // Predicated region
  $region22: #{forward.65} parent=0 // pred_check
    %p22 = pneg %p21
  $region23: #{forward.65} parent=0 // pred_check_branch
    %24 = sbr.rel (%p22) target = $region25
  $region24: #{forward.65} parent=0 // pred_region
    %25 = vst [vmem:[#allocation2] sm:$0xff] 0.0
    %26 = vst [vmem:[#allocation2 + $0x8] sm:$0xff] 0.0
    %27 = vst [vmem:[#allocation2 + $0x10] sm:$0xff] 0.0
    %28 = vst [vmem:[#allocation2 + $0x18] sm:$0xff] 0.0
  $region25: #{forward.65} parent=0 // pred_fallthru
    _
  %v29 = vld [vmem:[#allocation2] sm:$0xff]
  %v30 = vld [vmem:[#allocation2 + $0x8] sm:$0xff]
  %v31 = vld [vmem:[#allocation2 + $0x10] sm:$0xff]
  %v32 = vld [vmem:[#allocation2 + $0x18] sm:$0xff]
  %v33 = vld [vmem:[%s0] sm:$0xf]
  %v34 = vld [vmem:[%s0 + $0x4] sm:$0xf]
  %v35 = vld [vmem:[%s0 + $0x8] sm:$0xf]
  %v36 = vld [vmem:[%s0 + $0xc] sm:$0xf]
  %v37 = vld [vmem:[%s1] sm:$0xf]
  %v38 = vld [vmem:[%s1 + $0x4] sm:$0xf]
  %v39 = vld [vmem:[%s1 + $0x8] sm:$0xf]
  %v40 = vld [vmem:[%s1 + $0xc] sm:$0xf]
  %v41 = vld [vmem:[%s1 + $0x10] sm:$0xf]
  %v42 = vld [vmem:[%s1 + $0x14] sm:$0xf]
  %v43 = vld [vmem:[%s1 + $0x18] sm:$0xf]
  %v44 = vld [vmem:[%s1 + $0x1c] sm:$0xf]
  %v45 = vld [vmem:[%s1 + $0x20] sm:$0xf]
  %v46 = vld [vmem:[%s1 + $0x24] sm:$0xf]
  %v47 = vld [vmem:[%s1 + $0x28] sm:$0xf]
  %v48 = vld [vmem:[%s1 + $0x2c] sm:$0xf]
  %v49 = vld [vmem:[%s1 + $0x30] sm:$0xf]
  %v50 = vld [vmem:[%s1 + $0x34] sm:$0xf]
  %v51 = vld [vmem:[%s1 + $0x38] sm:$0xf]
  %v52 = vld [vmem:[%s1 + $0x3c] sm:$0xf]
  %v57 = vunpack.c.l.b16 %v33
  %v58 = vunpack.c.l.b16 %v34
  %v59 = vunpack.c.l.b16 %v35
  %v60 = vunpack.c.l.b16 %v36
  %v61 = vpack.c.b16 %v58, %v57
  %v62 = vpack.c.b16 %v60, %v59
  %v81 = vunpack.c.l.b16 %v37
  %v82 = vunpack.c.l.b16 %v38
  %v83 = vunpack.c.l.b16 %v39
  %v84 = vunpack.c.l.b16 %v40
  %v85 = vunpack.c.l.b16 %v41
  %v86 = vunpack.c.l.b16 %v42
  %v87 = vunpack.c.l.b16 %v43
  %v88 = vunpack.c.l.b16 %v44
  %v89 = vunpack.c.l.b16 %v45
  %v90 = vunpack.c.l.b16 %v46
  %v91 = vunpack.c.l.b16 %v47
  %v92 = vunpack.c.l.b16 %v48
  %v93 = vunpack.c.l.b16 %v49
  %v94 = vunpack.c.l.b16 %v50
  %v95 = vunpack.c.l.b16 %v51
  %v96 = vunpack.c.l.b16 %v52
  %v97 = vpack.c.b16 %v82, %v81
  %v98 = vpack.c.b16 %v84, %v83
  %v99 = vpack.c.b16 %v86, %v85
  %v100 = vpack.c.b16 %v88, %v87
  %v101 = vpack.c.b16 %v90, %v89
  %v102 = vpack.c.b16 %v92, %v91
  %v103 = vpack.c.b16 %v94, %v93
  %v104 = vpack.c.b16 %v96, %v95
  %113 = vmatprep.subr.bf16.mxu0 0
  %114 = vmatpush1.bf16.msra.mxu0 %v104
  %115 = vmatprep.subr.bf16.mxu0 0
  %116 = vmatpush1.bf16.msra.mxu0 %v103
  %117 = vmatprep.subr.bf16.mxu0 0
  %118 = vmatpush1.bf16.msra.mxu0 %v102
  %119 = vmatprep.subr.bf16.mxu0 0
  %120 = vmatpush1.bf16.msra.mxu0 %v101
  %121 = vmatprep.subr.bf16.mxu0 0
  %122 = vmatpush1.bf16.msra.mxu0 %v100
  %123 = vmatprep.subr.bf16.mxu0 0
  %124 = vmatpush1.bf16.msra.mxu0 %v99
  %125 = vmatprep.subr.bf16.mxu0 0
  %126 = vmatpush1.bf16.msra.mxu0 %v98
  %127 = vmatprep.subr.bf16.mxu0 0
  %128 = vmatpush1.bf16.msra.mxu0 %v97
  %129 = vmatprep.subr.bf16.mxu0 0
  %130 = vmatpush2.bf16.msra.mxu0 0
  %131 = vmatprep.subr.bf16.mxu0 0
  %132 = vmatpush2.bf16.msra.mxu0 0
  %133 = vmatprep.subr.bf16.mxu0 0
  %134 = vmatpush2.bf16.msra.mxu0 0
  %135 = vmatprep.subr.bf16.mxu0 0
  %136 = vmatpush2.bf16.msra.mxu0 0
  %137 = vmatprep.subr.bf16.mxu0 0
  %138 = vmatpush2.bf16.msra.mxu0 0
  %139 = vmatprep.subr.bf16.mxu0 0
  %140 = vmatpush2.bf16.msra.mxu0 0
  %141 = vmatprep.subr.bf16.mxu0 0
  %142 = vmatpush2.bf16.msra.mxu0 0
  %143 = vmatprep.subr.bf16.mxu0 0
  %144 = vmatpush2.bf16.msra.mxu0 0
  %145 = vmatprep.mubr.bf16.mxu0 0
  %146 = vmatmul.mubr.bf16.gmra.mxu0 %v61
  %v147 = vpop.f32.mrf.mxu0
  %v148 = vadd.f32 0.0, %v147
  %v149 = vpop.f32.mrf.mxu0
  %v150 = vpop.f32.mrf.mxu0
  %v151 = vadd.f32 0.0, %v150
  %v152 = vpop.f32.mrf.mxu0
  %153 = vmatprep.mubr.bf16.mxu0 0
  %154 = vmatmul.mubr.bf16.gmra.mxu0 %v62
  %v155 = vpop.f32.mrf.mxu0
  %v156 = vadd.f32 0.0, %v155
  %v157 = vpop.f32.mrf.mxu0
  %v158 = vpop.f32.mrf.mxu0
  %v159 = vadd.f32 0.0, %v158
  %v160 = vpop.f32.mrf.mxu0
  %161 = vdwg.mxu0
  %v162 = vadd.f32 %v29, %v148
  %v163 = vadd.f32 %v30, %v151
  %v164 = vadd.f32 %v31, %v156
  %v165 = vadd.f32 %v32, %v159
  %166 = vst [vmem:[#allocation2] sm:$0xff] %v162
  %167 = vst [vmem:[#allocation2 + $0x8] sm:$0xff] %v163
  %168 = vst [vmem:[#allocation2 + $0x10] sm:$0xff] %v164
  %169 = vst [vmem:[#allocation2 + $0x18] sm:$0xff] %v165
  // Predicated region
  $region26: #{forward.65} parent=0 // pred_check
    %p170 = pneg %p21
  $region27: #{forward.65} parent=0 // pred_check_branch
    %172 = sbr.rel (%p170) target = $region29
  $region28: #{forward.65} parent=0 // pred_region
    %v173 = vld [vmem:[#allocation2] sm:$0xff]
    %v174 = vld [vmem:[#allocation2 + $0x8] sm:$0xff]
    %v175 = vld [vmem:[#allocation2 + $0x10] sm:$0xff]
    %v176 = vld [vmem:[#allocation2 + $0x18] sm:$0xff]
    %v177 = vld [vmem:[%s2] sm:$0x1]
    %v179 = vlaneseq
    %v180 = vshrl.u32 %v179, 7
    %v181 = vsub.s32 0, %v180
    %v182 = vrot.slane %v177, %v181
    %v184 = vmul.f32 %v173, %v182
    %v185 = vmul.f32 %v174, %v182
    %v186 = vmul.f32 %v175, %v182
    %v187 = vmul.f32 %v176, %v182
    %v188 = vld [vmem:[%s3] sm:$0x1]
    %v190 = vlaneseq
    %v191 = vshrl.u32 %v190, 7
    %v192 = vsub.s32 0, %v191
    %v193 = vrot.slane %v188, %v192
    %v195 = vadd.f32 %v184, %v193
    %v196 = vadd.f32 %v185, %v193
    %v197 = vadd.f32 %v186, %v193
    %v198 = vadd.f32 %v187, %v193
    %v199 = vld [vmem:[%s4] sm:$0xff]
    %v200 = vld [vmem:[%s4 + $0x8] sm:$0xff]
    %v201 = vld [vmem:[%s4 + $0x10] sm:$0xff]
    %v202 = vld [vmem:[%s4 + $0x18] sm:$0xff]
    %v203 = vmul.f32 %v195, 0.1
    %v204 = vmul.f32 %v196, 0.1
    %v205 = vmul.f32 %v197, 0.1
    %v206 = vmul.f32 %v198, 0.1
    %v207 = vadd.f32 %v199, %v203
    %v208 = vadd.f32 %v200, %v204
    %v209 = vadd.f32 %v201, %v205
    %v210 = vadd.f32 %v202, %v206
    %v211 = vmax.f32 %v207, 0.0
    %v212 = vmax.f32 %v208, 0.0
    %v213 = vmax.f32 %v209, 0.0
    %v214 = vmax.f32 %v210, 0.0
    %215 = vst [vmem:[%s5] sm:$0xff] %v211
    %216 = vst [vmem:[%s5 + $0x8] sm:$0xff] %v212
    %217 = vst [vmem:[%s5 + $0x10] sm:$0xff] %v213
    %218 = vst [vmem:[%s5 + $0x18] sm:$0xff] %v214
  $region29: #{forward.65} parent=0 // pred_fallthru
    _
  // Predicated region
  $region30: #{forward.65} parent=0 // pred_check
    _
  $region31: #{forward.65} parent=0 // pred_check_branch
    %220 = sbr.rel (0) target = $region33
  $region32: #{forward.65} parent=0 // pred_region
    _
  $region33: #{forward.65} parent=0 // pred_fallthru
    _
  // Predicated region
  $region34: #{forward.65} parent=0 // pred_check
    _
  $region35: #{forward.65} parent=0 // pred_check_branch
    %222 = sbr.rel (0) target = $region37
  $region36: #{forward.65} parent=0 // pred_region
    _
  $region37: #{forward.65} parent=0 // pred_fallthru
    _

// kernel: forward.71
$region0: #{forward.71}
  #allocation0 [shape = 'u32[]', space=smem, size = 0x4, offset = 0x4, fixed_abs, tag = 'smem constant byte address 0x4 - core index']
  #allocation1 [shape = 'u32[144,128]{1,0:T(1,128)}', space=vmem, size = 0x12000, scoped, tag = 'internal scratch']
  #allocation2 [shape = 'f32[16,128]{1,0:T(8,128)}', space=vmem, size = 0x2000, scoped, tag = 'scratch operand']
  %s0 = inlined_call_operand.vmem [shape: bf16[16,384], index: 0, kind: input, shape index: {}]
  %s1 = inlined_call_operand.vmem [shape: bf16[384,128], index: 1, kind: input, shape index: {}]
  %s2 = inlined_call_operand.vmem [shape: f32[1,128], index: 2, kind: input, shape index: {}]
  %s3 = inlined_call_operand.vmem [shape: f32[1,128], index: 3, kind: input, shape index: {}]
  %s4 = inlined_call_operand.vmem [shape: f32[16,128], index: 4, kind: output, shape index: {}]
  %s5 = sld [smem:[#allocation0]]
  $region34: #{forward.71} parent=0
    _
  %s7 = ssub.s32 1, %s5
  %s8 = scalar_select 0, %s7, %s5
  // Predicated region
  $region2: #{forward.71} parent=0 // pred_check
    _
  $region3: #{forward.71} parent=0 // pred_check_branch
    %10 = sbr.rel (0) target = $region5
  $region4: #{forward.71} parent=0 // pred_region
    _
  $region5: #{forward.71} parent=0 // pred_fallthru
    _
  // Predicated region
  $region6: #{forward.71} parent=0 // pred_check
    _
  $region7: #{forward.71} parent=0 // pred_check_branch
    %12 = sbr.rel (0) target = $region9
  $region8: #{forward.71} parent=0 // pred_region
    _
  $region9: #{forward.71} parent=0 // pred_fallthru
    _
  // Predicated region
  $region10: #{forward.71} parent=0 // pred_check
    _
  $region11: #{forward.71} parent=0 // pred_check_branch
    %14 = sbr.rel (0) target = $region13
  $region12: #{forward.71} parent=0 // pred_region
    _
  $region13: #{forward.71} parent=0 // pred_fallthru
    _
  // Predicated region
  $region14: #{forward.71} parent=0 // pred_check
    _
  $region15: #{forward.71} parent=0 // pred_check_branch
    %16 = sbr.rel (0) target = $region17
  $region16: #{forward.71} parent=0 // pred_region
    _
  $region17: #{forward.71} parent=0 // pred_fallthru
    _
  %p18 = scmp.eq.s32.totalorder 0, 0
  // Predicated region
  $region18: #{forward.71} parent=0 // pred_check
    %p19 = pneg %p18
  $region19: #{forward.71} parent=0 // pred_check_branch
    %21 = sbr.rel (%p19) target = $region21
  $region20: #{forward.71} parent=0 // pred_region
    %22 = vst [vmem:[#allocation2] sm:$0xff] 0.0
    %23 = vst [vmem:[#allocation2 + $0x8] sm:$0xff] 0.0
  $region21: #{forward.71} parent=0 // pred_fallthru
    _
  %v24 = vld [vmem:[#allocation2] sm:$0xff]
  %v25 = vld [vmem:[#allocation2 + $0x8] sm:$0xff]
  %v26 = vld [vmem:[%s0] sm:$0xff]
  %v27 = vld [vmem:[%s0 + $0x8] sm:$0xf]
  %v28 = vld [vmem:[%s0 + $0xc] sm:$0xff]
  %v29 = vld [vmem:[%s0 + $0x14] sm:$0xf]
  %v30 = vld [vmem:[%s1] sm:$0xf]
  %v31 = vld [vmem:[%s1 + $0x4] sm:$0xf]
  %v32 = vld [vmem:[%s1 + $0x8] sm:$0xf]
  %v33 = vld [vmem:[%s1 + $0xc] sm:$0xf]
  %v34 = vld [vmem:[%s1 + $0x10] sm:$0xf]
  %v35 = vld [vmem:[%s1 + $0x14] sm:$0xf]
  %v36 = vld [vmem:[%s1 + $0x18] sm:$0xf]
  %v37 = vld [vmem:[%s1 + $0x1c] sm:$0xf]
  %v38 = vld [vmem:[%s1 + $0x20] sm:$0xf]
  %v39 = vld [vmem:[%s1 + $0x24] sm:$0xf]
  %v40 = vld [vmem:[%s1 + $0x28] sm:$0xf]
  %v41 = vld [vmem:[%s1 + $0x2c] sm:$0xf]
  %v42 = vld [vmem:[%s1 + $0x30] sm:$0xf]
  %v43 = vld [vmem:[%s1 + $0x34] sm:$0xf]
  %v44 = vld [vmem:[%s1 + $0x38] sm:$0xf]
  %v45 = vld [vmem:[%s1 + $0x3c] sm:$0xf]
  %v46 = vld [vmem:[%s1 + $0x40] sm:$0xf]
  %v47 = vld [vmem:[%s1 + $0x44] sm:$0xf]
  %v48 = vld [vmem:[%s1 + $0x48] sm:$0xf]
  %v49 = vld [vmem:[%s1 + $0x4c] sm:$0xf]
  %v50 = vld [vmem:[%s1 + $0x50] sm:$0xf]
  %v51 = vld [vmem:[%s1 + $0x54] sm:$0xf]
  %v52 = vld [vmem:[%s1 + $0x58] sm:$0xf]
  %v53 = vld [vmem:[%s1 + $0x5c] sm:$0xf]
  %v54 = vld [vmem:[%s1 + $0x60] sm:$0xf]
  %v55 = vld [vmem:[%s1 + $0x64] sm:$0xf]
  %v56 = vld [vmem:[%s1 + $0x68] sm:$0xf]
  %v57 = vld [vmem:[%s1 + $0x6c] sm:$0xf]
  %v58 = vld [vmem:[%s1 + $0x70] sm:$0xf]
  %v59 = vld [vmem:[%s1 + $0x74] sm:$0xf]
  %v60 = vld [vmem:[%s1 + $0x78] sm:$0xf]
  %v61 = vld [vmem:[%s1 + $0x7c] sm:$0xf]
  %v62 = vld [vmem:[%s1 + $0x80] sm:$0xf]
  %v63 = vld [vmem:[%s1 + $0x84] sm:$0xf]
  %v64 = vld [vmem:[%s1 + $0x88] sm:$0xf]
  %v65 = vld [vmem:[%s1 + $0x8c] sm:$0xf]
  %v66 = vld [vmem:[%s1 + $0x90] sm:$0xf]
  %v67 = vld [vmem:[%s1 + $0x94] sm:$0xf]
  %v68 = vld [vmem:[%s1 + $0x98] sm:$0xf]
  %v69 = vld [vmem:[%s1 + $0x9c] sm:$0xf]
  %v70 = vld [vmem:[%s1 + $0xa0] sm:$0xf]
  %v71 = vld [vmem:[%s1 + $0xa4] sm:$0xf]
  %v72 = vld [vmem:[%s1 + $0xa8] sm:$0xf]
  %v73 = vld [vmem:[%s1 + $0xac] sm:$0xf]
  %v74 = vld [vmem:[%s1 + $0xb0] sm:$0xf]
  %v75 = vld [vmem:[%s1 + $0xb4] sm:$0xf]
  %v76 = vld [vmem:[%s1 + $0xb8] sm:$0xf]
  %v77 = vld [vmem:[%s1 + $0xbc] sm:$0xf]
  %v82 = vunpack.c.l.b16 %v26
  %v83 = vunpack.c.h.b16 %v26
  %v84 = vunpack.c.l.b16 %v27
  %v85 = vunpack.c.l.b16 %v28
  %v86 = vunpack.c.h.b16 %v28
  %v87 = vunpack.c.l.b16 %v29
  %v88 = vpack.c.b16 %v85, %v82
  %v89 = vpack.c.b16 %v86, %v83
  %v90 = vpack.c.b16 %v87, %v84
  %v142 = vunpack.c.l.b16 %v30
  %v143 = vunpack.c.l.b16 %v31
  %v144 = vunpack.c.l.b16 %v32
  %v145 = vunpack.c.l.b16 %v33
  %v146 = vunpack.c.l.b16 %v34
  %v147 = vunpack.c.l.b16 %v35
  %v148 = vunpack.c.l.b16 %v36
  %v149 = vunpack.c.l.b16 %v37
  %v150 = vunpack.c.l.b16 %v38
  %v151 = vunpack.c.l.b16 %v39
  %v152 = vunpack.c.l.b16 %v40
  %v153 = vunpack.c.l.b16 %v41
  %v154 = vunpack.c.l.b16 %v42
  %v155 = vunpack.c.l.b16 %v43
  %v156 = vunpack.c.l.b16 %v44
  %v157 = vunpack.c.l.b16 %v45
  %v158 = vunpack.c.l.b16 %v46
  %v159 = vunpack.c.l.b16 %v47
  %v160 = vunpack.c.l.b16 %v48
  %v161 = vunpack.c.l.b16 %v49
  %v162 = vunpack.c.l.b16 %v50
  %v163 = vunpack.c.l.b16 %v51
  %v164 = vunpack.c.l.b16 %v52
  %v165 = vunpack.c.l.b16 %v53
  %v166 = vunpack.c.l.b16 %v54
  %v167 = vunpack.c.l.b16 %v55
  %v168 = vunpack.c.l.b16 %v56
  %v169 = vunpack.c.l.b16 %v57
  %v170 = vunpack.c.l.b16 %v58
  %v171 = vunpack.c.l.b16 %v59
  %v172 = vunpack.c.l.b16 %v60
  %v173 = vunpack.c.l.b16 %v61
  %v174 = vunpack.c.l.b16 %v62
  %v175 = vunpack.c.l.b16 %v63
  %v176 = vunpack.c.l.b16 %v64
  %v177 = vunpack.c.l.b16 %v65
  %v178 = vunpack.c.l.b16 %v66
  %v179 = vunpack.c.l.b16 %v67
  %v180 = vunpack.c.l.b16 %v68
  %v181 = vunpack.c.l.b16 %v69
  %v182 = vunpack.c.l.b16 %v70
  %v183 = vunpack.c.l.b16 %v71
  %v184 = vunpack.c.l.b16 %v72
  %v185 = vunpack.c.l.b16 %v73
  %v186 = vunpack.c.l.b16 %v74
  %v187 = vunpack.c.l.b16 %v75
  %v188 = vunpack.c.l.b16 %v76
  %v189 = vunpack.c.l.b16 %v77
  %v190 = vpack.c.b16 %v143, %v142
  %v191 = vpack.c.b16 %v145, %v144
  %v192 = vpack.c.b16 %v147, %v146
  %v193 = vpack.c.b16 %v149, %v148
  %v194 = vpack.c.b16 %v151, %v150
  %v195 = vpack.c.b16 %v153, %v152
  %v196 = vpack.c.b16 %v155, %v154
  %v197 = vpack.c.b16 %v157, %v156
  %v198 = vpack.c.b16 %v159, %v158
  %v199 = vpack.c.b16 %v161, %v160
  %v200 = vpack.c.b16 %v163, %v162
  %v201 = vpack.c.b16 %v165, %v164
  %v202 = vpack.c.b16 %v167, %v166
  %v203 = vpack.c.b16 %v169, %v168
  %v204 = vpack.c.b16 %v171, %v170
  %v205 = vpack.c.b16 %v173, %v172
  %v206 = vpack.c.b16 %v175, %v174
  %v207 = vpack.c.b16 %v177, %v176
  %v208 = vpack.c.b16 %v179, %v178
  %v209 = vpack.c.b16 %v181, %v180
  %v210 = vpack.c.b16 %v183, %v182
  %v211 = vpack.c.b16 %v185, %v184
  %v212 = vpack.c.b16 %v187, %v186
  %v213 = vpack.c.b16 %v189, %v188
  %238 = vmatprep.subr.bf16.mxu0 0
  %239 = vmatpush1.bf16.msra.mxu0 %v197
  %240 = vmatprep.subr.bf16.mxu0 0
  %241 = vmatpush1.bf16.msra.mxu0 %v196
  %242 = vmatprep.subr.bf16.mxu0 0
  %243 = vmatpush1.bf16.msra.mxu0 %v195
  %244 = vmatprep.subr.bf16.mxu0 0
  %245 = vmatpush1.bf16.msra.mxu0 %v194
  %246 = vmatprep.subr.bf16.mxu0 0
  %247 = vmatpush1.bf16.msra.mxu0 %v193
  %248 = vmatprep.subr.bf16.mxu0 0
  %249 = vmatpush1.bf16.msra.mxu0 %v192
  %250 = vmatprep.subr.bf16.mxu0 0
  %251 = vmatpush1.bf16.msra.mxu0 %v191
  %252 = vmatprep.subr.bf16.mxu0 0
  %253 = vmatpush1.bf16.msra.mxu0 %v190
  %254 = vmatprep.subr.bf16.mxu0 0
  %255 = vmatpush2.bf16.msra.mxu0 %v205
  %256 = vmatprep.subr.bf16.mxu0 0
  %257 = vmatpush2.bf16.msra.mxu0 %v204
  %258 = vmatprep.subr.bf16.mxu0 0
  %259 = vmatpush2.bf16.msra.mxu0 %v203
  %260 = vmatprep.subr.bf16.mxu0 0
  %261 = vmatpush2.bf16.msra.mxu0 %v202
  %262 = vmatprep.subr.bf16.mxu0 0
  %263 = vmatpush2.bf16.msra.mxu0 %v201
  %264 = vmatprep.subr.bf16.mxu0 0
  %265 = vmatpush2.bf16.msra.mxu0 %v200
  %266 = vmatprep.subr.bf16.mxu0 0
  %267 = vmatpush2.bf16.msra.mxu0 %v199
  %268 = vmatprep.subr.bf16.mxu0 0
  %269 = vmatpush2.bf16.msra.mxu0 %v198
  %270 = vmatprep.mubr.bf16.mxu0 %v89
  %271 = vmatmul.mubr.bf16.gmra.mxu0 %v88
  %v272 = vpop.f32.mrf.mxu0
  %v273 = vadd.f32 0.0, %v272
  %v274 = vpop.f32.mrf.mxu0
  %v275 = vpop.f32.mrf.mxu0
  %v276 = vadd.f32 0.0, %v275
  %v277 = vpop.f32.mrf.mxu0
  %278 = vdwg.mxu0
  %279 = vmatprep.subr.bf16.mxu0 0
  %280 = vmatpush1.bf16.msra.mxu0 %v213
  %281 = vmatprep.subr.bf16.mxu0 0
  %282 = vmatpush1.bf16.msra.mxu0 %v212
  %283 = vmatprep.subr.bf16.mxu0 0
  %284 = vmatpush1.bf16.msra.mxu0 %v211
  %285 = vmatprep.subr.bf16.mxu0 0
  %286 = vmatpush1.bf16.msra.mxu0 %v210
  %287 = vmatprep.subr.bf16.mxu0 0
  %288 = vmatpush1.bf16.msra.mxu0 %v209
  %289 = vmatprep.subr.bf16.mxu0 0
  %290 = vmatpush1.bf16.msra.mxu0 %v208
  %291 = vmatprep.subr.bf16.mxu0 0
  %292 = vmatpush1.bf16.msra.mxu0 %v207
  %293 = vmatprep.subr.bf16.mxu0 0
  %294 = vmatpush1.bf16.msra.mxu0 %v206
  %295 = vmatprep.subr.bf16.mxu0 0
  %296 = vmatpush2.bf16.msra.mxu0 0
  %297 = vmatprep.subr.bf16.mxu0 0
  %298 = vmatpush2.bf16.msra.mxu0 0
  %299 = vmatprep.subr.bf16.mxu0 0
  %300 = vmatpush2.bf16.msra.mxu0 0
  %301 = vmatprep.subr.bf16.mxu0 0
  %302 = vmatpush2.bf16.msra.mxu0 0
  %303 = vmatprep.subr.bf16.mxu0 0
  %304 = vmatpush2.bf16.msra.mxu0 0
  %305 = vmatprep.subr.bf16.mxu0 0
  %306 = vmatpush2.bf16.msra.mxu0 0
  %307 = vmatprep.subr.bf16.mxu0 0
  %308 = vmatpush2.bf16.msra.mxu0 0
  %309 = vmatprep.subr.bf16.mxu0 0
  %310 = vmatpush2.bf16.msra.mxu0 0
  %311 = vmatprep.mubr.bf16.mxu0 0
  %312 = vmatmul.mubr.bf16.gmra.mxu0 %v90
  %v313 = vpop.f32.mrf.mxu0
  %v314 = vadd.f32 %v273, %v313
  %v315 = vpop.f32.mrf.mxu0
  %v316 = vpop.f32.mrf.mxu0
  %v317 = vadd.f32 %v276, %v316
  %v318 = vpop.f32.mrf.mxu0
  %319 = vdwg.mxu0
  %v320 = vadd.f32 %v24, %v314
  %v321 = vadd.f32 %v25, %v317
  %322 = vst [vmem:[#allocation2] sm:$0xff] %v320
  %323 = vst [vmem:[#allocation2 + $0x8] sm:$0xff] %v321
  // Predicated region
  $region22: #{forward.71} parent=0 // pred_check
    %p324 = pneg %p18
  $region23: #{forward.71} parent=0 // pred_check_branch
    %326 = sbr.rel (%p324) target = $region25
  $region24: #{forward.71} parent=0 // pred_region
    %v327 = vld [vmem:[#allocation2] sm:$0xff]
    %v328 = vld [vmem:[#allocation2 + $0x8] sm:$0xff]
    %v329 = vld [vmem:[%s2] sm:$0x1]
    %v331 = vlaneseq
    %v332 = vshrl.u32 %v331, 7
    %v333 = vsub.s32 0, %v332
    %v334 = vrot.slane %v329, %v333
    %v336 = vmul.f32 %v327, %v334
    %v337 = vmul.f32 %v328, %v334
    %v338 = vld [vmem:[%s3] sm:$0x1]
    %v340 = vlaneseq
    %v341 = vshrl.u32 %v340, 7
    %v342 = vsub.s32 0, %v341
    %v343 = vrot.slane %v338, %v342
    %v345 = vadd.f32 %v336, %v343
    %v346 = vadd.f32 %v337, %v343
    %v347 = vmax.f32 %v345, 0.0
    %v348 = vmax.f32 %v346, 0.0
    %349 = vst [vmem:[%s4] sm:$0xff] %v347
    %350 = vst [vmem:[%s4 + $0x8] sm:$0xff] %v348
  $region25: #{forward.71} parent=0 // pred_fallthru
    _
  // Predicated region
  $region26: #{forward.71} parent=0 // pred_check
    _
  $region27: #{forward.71} parent=0 // pred_check_branch
    %352 = sbr.rel (0) target = $region29
  $region28: #{forward.71} parent=0 // pred_region
    _
  $region29: #{forward.71} parent=0 // pred_fallthru
    _
  // Predicated region
  $region30: #{forward.71} parent=0 // pred_check
    _
  $region31: #{forward.71} parent=0 // pred_check_branch
    %354 = sbr.rel (0) target = $region33
  $region32: #{forward.71} parent=0 // pred_region
    _
  $region33: #{forward.71} parent=0 // pred_fallthru
    _

// kernel: forward.75
$region0: #{forward.75}
  #allocation0 [shape = 'u32[]', space=smem, size = 0x4, offset = 0x4, fixed_abs, tag = 'smem constant byte address 0x4 - core index']
  #allocation1 [shape = 'u32[144,128]{1,0:T(1,128)}', space=vmem, size = 0x12000, scoped, tag = 'internal scratch']
  #allocation2 [shape = 'f32[16,128]{1,0:T(8,128)}', space=vmem, size = 0x2000, scoped, tag = 'scratch operand']
  %s0 = inlined_call_operand.vmem [shape: bf16[16,256], index: 0, kind: input, shape index: {}]
  %s1 = inlined_call_operand.vmem [shape: bf16[256,128], index: 1, kind: input, shape index: {}]
  %s2 = inlined_call_operand.vmem [shape: f32[1,128], index: 2, kind: input, shape index: {}]
  %s3 = inlined_call_operand.vmem [shape: f32[1,128], index: 3, kind: input, shape index: {}]
  %s4 = inlined_call_operand.vmem [shape: f32[16,128], index: 4, kind: output, shape index: {}]
  %s5 = sld [smem:[#allocation0]]
  $region34: #{forward.75} parent=0
    _
  %s7 = ssub.s32 1, %s5
  %s8 = scalar_select 0, %s7, %s5
  // Predicated region
  $region2: #{forward.75} parent=0 // pred_check
    _
  $region3: #{forward.75} parent=0 // pred_check_branch
    %10 = sbr.rel (0) target = $region5
  $region4: #{forward.75} parent=0 // pred_region
    _
  $region5: #{forward.75} parent=0 // pred_fallthru
    _
  // Predicated region
  $region6: #{forward.75} parent=0 // pred_check
    _
  $region7: #{forward.75} parent=0 // pred_check_branch
    %12 = sbr.rel (0) target = $region9
  $region8: #{forward.75} parent=0 // pred_region
    _
  $region9: #{forward.75} parent=0 // pred_fallthru
    _
  // Predicated region
  $region10: #{forward.75} parent=0 // pred_check
    _
  $region11: #{forward.75} parent=0 // pred_check_branch
    %14 = sbr.rel (0) target = $region13
  $region12: #{forward.75} parent=0 // pred_region
    _
  $region13: #{forward.75} parent=0 // pred_fallthru
    _
  // Predicated region
  $region14: #{forward.75} parent=0 // pred_check
    _
  $region15: #{forward.75} parent=0 // pred_check_branch
    %16 = sbr.rel (0) target = $region17
  $region16: #{forward.75} parent=0 // pred_region
    _
  $region17: #{forward.75} parent=0 // pred_fallthru
    _
  %p18 = scmp.eq.s32.totalorder 0, 0
  // Predicated region
  $region18: #{forward.75} parent=0 // pred_check
    %p19 = pneg %p18
  $region19: #{forward.75} parent=0 // pred_check_branch
    %21 = sbr.rel (%p19) target = $region21
  $region20: #{forward.75} parent=0 // pred_region
    %22 = vst [vmem:[#allocation2] sm:$0xff] 0.0
    %23 = vst [vmem:[#allocation2 + $0x8] sm:$0xff] 0.0
  $region21: #{forward.75} parent=0 // pred_fallthru
    _
  %v24 = vld [vmem:[#allocation2] sm:$0xff]
  %v25 = vld [vmem:[#allocation2 + $0x8] sm:$0xff]
  %v26 = vld [vmem:[%s0] sm:$0xff]
  %v27 = vld [vmem:[%s0 + $0x8] sm:$0xff]
  %v28 = vld [vmem:[%s1] sm:$0xf]
  %v29 = vld [vmem:[%s1 + $0x4] sm:$0xf]
  %v30 = vld [vmem:[%s1 + $0x8] sm:$0xf]
  %v31 = vld [vmem:[%s1 + $0xc] sm:$0xf]
  %v32 = vld [vmem:[%s1 + $0x10] sm:$0xf]
  %v33 = vld [vmem:[%s1 + $0x14] sm:$0xf]
  %v34 = vld [vmem:[%s1 + $0x18] sm:$0xf]
  %v35 = vld [vmem:[%s1 + $0x1c] sm:$0xf]
  %v36 = vld [vmem:[%s1 + $0x20] sm:$0xf]
  %v37 = vld [vmem:[%s1 + $0x24] sm:$0xf]
  %v38 = vld [vmem:[%s1 + $0x28] sm:$0xf]
  %v39 = vld [vmem:[%s1 + $0x2c] sm:$0xf]
  %v40 = vld [vmem:[%s1 + $0x30] sm:$0xf]
  %v41 = vld [vmem:[%s1 + $0x34] sm:$0xf]
  %v42 = vld [vmem:[%s1 + $0x38] sm:$0xf]
  %v43 = vld [vmem:[%s1 + $0x3c] sm:$0xf]
  %v44 = vld [vmem:[%s1 + $0x40] sm:$0xf]
  %v45 = vld [vmem:[%s1 + $0x44] sm:$0xf]
  %v46 = vld [vmem:[%s1 + $0x48] sm:$0xf]
  %v47 = vld [vmem:[%s1 + $0x4c] sm:$0xf]
  %v48 = vld [vmem:[%s1 + $0x50] sm:$0xf]
  %v49 = vld [vmem:[%s1 + $0x54] sm:$0xf]
  %v50 = vld [vmem:[%s1 + $0x58] sm:$0xf]
  %v51 = vld [vmem:[%s1 + $0x5c] sm:$0xf]
  %v52 = vld [vmem:[%s1 + $0x60] sm:$0xf]
  %v53 = vld [vmem:[%s1 + $0x64] sm:$0xf]
  %v54 = vld [vmem:[%s1 + $0x68] sm:$0xf]
  %v55 = vld [vmem:[%s1 + $0x6c] sm:$0xf]
  %v56 = vld [vmem:[%s1 + $0x70] sm:$0xf]
  %v57 = vld [vmem:[%s1 + $0x74] sm:$0xf]
  %v58 = vld [vmem:[%s1 + $0x78] sm:$0xf]
  %v59 = vld [vmem:[%s1 + $0x7c] sm:$0xf]
  %v62 = vunpack.c.l.b16 %v26
  %v63 = vunpack.c.h.b16 %v26
  %v64 = vunpack.c.l.b16 %v27
  %v65 = vunpack.c.h.b16 %v27
  %v66 = vpack.c.b16 %v64, %v62
  %v67 = vpack.c.b16 %v65, %v63
  %v102 = vunpack.c.l.b16 %v28
  %v103 = vunpack.c.l.b16 %v29
  %v104 = vunpack.c.l.b16 %v30
  %v105 = vunpack.c.l.b16 %v31
  %v106 = vunpack.c.l.b16 %v32
  %v107 = vunpack.c.l.b16 %v33
  %v108 = vunpack.c.l.b16 %v34
  %v109 = vunpack.c.l.b16 %v35
  %v110 = vunpack.c.l.b16 %v36
  %v111 = vunpack.c.l.b16 %v37
  %v112 = vunpack.c.l.b16 %v38
  %v113 = vunpack.c.l.b16 %v39
  %v114 = vunpack.c.l.b16 %v40
  %v115 = vunpack.c.l.b16 %v41
  %v116 = vunpack.c.l.b16 %v42
  %v117 = vunpack.c.l.b16 %v43
  %v118 = vunpack.c.l.b16 %v44
  %v119 = vunpack.c.l.b16 %v45
  %v120 = vunpack.c.l.b16 %v46
  %v121 = vunpack.c.l.b16 %v47
  %v122 = vunpack.c.l.b16 %v48
  %v123 = vunpack.c.l.b16 %v49
  %v124 = vunpack.c.l.b16 %v50
  %v125 = vunpack.c.l.b16 %v51
  %v126 = vunpack.c.l.b16 %v52
  %v127 = vunpack.c.l.b16 %v53
  %v128 = vunpack.c.l.b16 %v54
  %v129 = vunpack.c.l.b16 %v55
  %v130 = vunpack.c.l.b16 %v56
  %v131 = vunpack.c.l.b16 %v57
  %v132 = vunpack.c.l.b16 %v58
  %v133 = vunpack.c.l.b16 %v59
  %v134 = vpack.c.b16 %v103, %v102
  %v135 = vpack.c.b16 %v105, %v104
  %v136 = vpack.c.b16 %v107, %v106
  %v137 = vpack.c.b16 %v109, %v108
  %v138 = vpack.c.b16 %v111, %v110
  %v139 = vpack.c.b16 %v113, %v112
  %v140 = vpack.c.b16 %v115, %v114
  %v141 = vpack.c.b16 %v117, %v116
  %v142 = vpack.c.b16 %v119, %v118
  %v143 = vpack.c.b16 %v121, %v120
  %v144 = vpack.c.b16 %v123, %v122
  %v145 = vpack.c.b16 %v125, %v124
  %v146 = vpack.c.b16 %v127, %v126
  %v147 = vpack.c.b16 %v129, %v128
  %v148 = vpack.c.b16 %v131, %v130
  %v149 = vpack.c.b16 %v133, %v132
  %166 = vmatprep.subr.bf16.mxu0 0
  %167 = vmatpush1.bf16.msra.mxu0 %v141
  %168 = vmatprep.subr.bf16.mxu0 0
  %169 = vmatpush1.bf16.msra.mxu0 %v140
  %170 = vmatprep.subr.bf16.mxu0 0
  %171 = vmatpush1.bf16.msra.mxu0 %v139
  %172 = vmatprep.subr.bf16.mxu0 0
  %173 = vmatpush1.bf16.msra.mxu0 %v138
  %174 = vmatprep.subr.bf16.mxu0 0
  %175 = vmatpush1.bf16.msra.mxu0 %v137
  %176 = vmatprep.subr.bf16.mxu0 0
  %177 = vmatpush1.bf16.msra.mxu0 %v136
  %178 = vmatprep.subr.bf16.mxu0 0
  %179 = vmatpush1.bf16.msra.mxu0 %v135
  %180 = vmatprep.subr.bf16.mxu0 0
  %181 = vmatpush1.bf16.msra.mxu0 %v134
  %182 = vmatprep.subr.bf16.mxu0 0
  %183 = vmatpush2.bf16.msra.mxu0 %v149
  %184 = vmatprep.subr.bf16.mxu0 0
  %185 = vmatpush2.bf16.msra.mxu0 %v148
  %186 = vmatprep.subr.bf16.mxu0 0
  %187 = vmatpush2.bf16.msra.mxu0 %v147
  %188 = vmatprep.subr.bf16.mxu0 0
  %189 = vmatpush2.bf16.msra.mxu0 %v146
  %190 = vmatprep.subr.bf16.mxu0 0
  %191 = vmatpush2.bf16.msra.mxu0 %v145
  %192 = vmatprep.subr.bf16.mxu0 0
  %193 = vmatpush2.bf16.msra.mxu0 %v144
  %194 = vmatprep.subr.bf16.mxu0 0
  %195 = vmatpush2.bf16.msra.mxu0 %v143
  %196 = vmatprep.subr.bf16.mxu0 0
  %197 = vmatpush2.bf16.msra.mxu0 %v142
  %198 = vmatprep.mubr.bf16.mxu0 %v67
  %199 = vmatmul.mubr.bf16.gmra.mxu0 %v66
  %v200 = vpop.f32.mrf.mxu0
  %v201 = vadd.f32 0.0, %v200
  %v202 = vpop.f32.mrf.mxu0
  %v203 = vpop.f32.mrf.mxu0
  %v204 = vadd.f32 0.0, %v203
  %v205 = vpop.f32.mrf.mxu0
  %206 = vdwg.mxu0
  %v207 = vadd.f32 %v24, %v201
  %v208 = vadd.f32 %v25, %v204
  %209 = vst [vmem:[#allocation2] sm:$0xff] %v207
  %210 = vst [vmem:[#allocation2 + $0x8] sm:$0xff] %v208
  // Predicated region
  $region22: #{forward.75} parent=0 // pred_check
    %p211 = pneg %p18
  $region23: #{forward.75} parent=0 // pred_check_branch
    %213 = sbr.rel (%p211) target = $region25
  $region24: #{forward.75} parent=0 // pred_region
    %v214 = vld [vmem:[#allocation2] sm:$0xff]
    %v215 = vld [vmem:[#allocation2 + $0x8] sm:$0xff]
    %v216 = vld [vmem:[%s2] sm:$0x1]
    %v218 = vlaneseq
    %v219 = vshrl.u32 %v218, 7
    %v220 = vsub.s32 0, %v219
    %v221 = vrot.slane %v216, %v220
    %v223 = vmul.f32 %v214, %v221
    %v224 = vmul.f32 %v215, %v221
    %v225 = vld [vmem:[%s3] sm:$0x1]
    %v227 = vlaneseq
    %v228 = vshrl.u32 %v227, 7
    %v229 = vsub.s32 0, %v228
    %v230 = vrot.slane %v225, %v229
    %v232 = vadd.f32 %v223, %v230
    %v233 = vadd.f32 %v224, %v230
    %v234 = vmax.f32 %v232, 0.0
    %v235 = vmax.f32 %v233, 0.0
    %236 = vst [vmem:[%s4] sm:$0xff] %v234
    %237 = vst [vmem:[%s4 + $0x8] sm:$0xff] %v235
  $region25: #{forward.75} parent=0 // pred_fallthru
    _
  // Predicated region
  $region26: #{forward.75} parent=0 // pred_check
    _
  $region27: #{forward.75} parent=0 // pred_check_branch
    %239 = sbr.rel (0) target = $region29
  $region28: #{forward.75} parent=0 // pred_region
    _
  $region29: #{forward.75} parent=0 // pred_fallthru
    _
  // Predicated region
  $region30: #{forward.75} parent=0 // pred_check
    _
  $region31: #{forward.75} parent=0 // pred_check_branch
    %241 = sbr.rel (0) target = $region33
  $region32: #{forward.75} parent=0 // pred_region
    _
  $region33: #{forward.75} parent=0 // pred_fallthru
    _

// kernel: forward.76
$region0: #{forward.76}
  #allocation0 [shape = 'u32[]', space=smem, size = 0x4, offset = 0x4, fixed_abs, tag = 'smem constant byte address 0x4 - core index']
  #allocation1 [shape = 'u32[144,128]{1,0:T(1,128)}', space=vmem, size = 0x12000, scoped, tag = 'internal scratch']
  #allocation2 [shape = 'f32[16,128]{1,0:T(8,128)}', space=vmem, size = 0x2000, scoped, tag = 'scratch operand']
  %s0 = inlined_call_operand.vmem [shape: bf16[16,128], index: 0, kind: input, shape index: {}]
  %s1 = inlined_call_operand.vmem [shape: bf16[128,128], index: 1, kind: input, shape index: {}]
  %s2 = inlined_call_operand.vmem [shape: f32[1,128], index: 2, kind: input, shape index: {}]
  %s3 = inlined_call_operand.vmem [shape: f32[1,128], index: 3, kind: input, shape index: {}]
  %s4 = inlined_call_operand.vmem [shape: f32[16,128], index: 4, kind: output, shape index: {}]
  %s5 = sld [smem:[#allocation0]]
  $region34: #{forward.76} parent=0
    _
  %s7 = ssub.s32 1, %s5
  %s8 = scalar_select 0, %s7, %s5
  // Predicated region
  $region2: #{forward.76} parent=0 // pred_check
    _
  $region3: #{forward.76} parent=0 // pred_check_branch
    %10 = sbr.rel (0) target = $region5
  $region4: #{forward.76} parent=0 // pred_region
    _
  $region5: #{forward.76} parent=0 // pred_fallthru
    _
  // Predicated region
  $region6: #{forward.76} parent=0 // pred_check
    _
  $region7: #{forward.76} parent=0 // pred_check_branch
    %12 = sbr.rel (0) target = $region9
  $region8: #{forward.76} parent=0 // pred_region
    _
  $region9: #{forward.76} parent=0 // pred_fallthru
    _
  // Predicated region
  $region10: #{forward.76} parent=0 // pred_check
    _
  $region11: #{forward.76} parent=0 // pred_check_branch
    %14 = sbr.rel (0) target = $region13
  $region12: #{forward.76} parent=0 // pred_region
    _
  $region13: #{forward.76} parent=0 // pred_fallthru
    _
  // Predicated region
  $region14: #{forward.76} parent=0 // pred_check
    _
  $region15: #{forward.76} parent=0 // pred_check_branch
    %16 = sbr.rel (0) target = $region17
  $region16: #{forward.76} parent=0 // pred_region
    _
  $region17: #{forward.76} parent=0 // pred_fallthru
    _
  %p18 = scmp.eq.s32.totalorder 0, 0
  // Predicated region
  $region18: #{forward.76} parent=0 // pred_check
    %p19 = pneg %p18
  $region19: #{forward.76} parent=0 // pred_check_branch
    %21 = sbr.rel (%p19) target = $region21
  $region20: #{forward.76} parent=0 // pred_region
    %22 = vst [vmem:[#allocation2] sm:$0xff] 0.0
    %23 = vst [vmem:[#allocation2 + $0x8] sm:$0xff] 0.0
  $region21: #{forward.76} parent=0 // pred_fallthru
    _
  %v24 = vld [vmem:[#allocation2] sm:$0xff]
  %v25 = vld [vmem:[#allocation2 + $0x8] sm:$0xff]
  %v26 = vld [vmem:[%s0] sm:$0xf]
  %v27 = vld [vmem:[%s0 + $0x4] sm:$0xf]
  %v28 = vld [vmem:[%s1] sm:$0xf]
  %v29 = vld [vmem:[%s1 + $0x4] sm:$0xf]
  %v30 = vld [vmem:[%s1 + $0x8] sm:$0xf]
  %v31 = vld [vmem:[%s1 + $0xc] sm:$0xf]
  %v32 = vld [vmem:[%s1 + $0x10] sm:$0xf]
  %v33 = vld [vmem:[%s1 + $0x14] sm:$0xf]
  %v34 = vld [vmem:[%s1 + $0x18] sm:$0xf]
  %v35 = vld [vmem:[%s1 + $0x1c] sm:$0xf]
  %v36 = vld [vmem:[%s1 + $0x20] sm:$0xf]
  %v37 = vld [vmem:[%s1 + $0x24] sm:$0xf]
  %v38 = vld [vmem:[%s1 + $0x28] sm:$0xf]
  %v39 = vld [vmem:[%s1 + $0x2c] sm:$0xf]
  %v40 = vld [vmem:[%s1 + $0x30] sm:$0xf]
  %v41 = vld [vmem:[%s1 + $0x34] sm:$0xf]
  %v42 = vld [vmem:[%s1 + $0x38] sm:$0xf]
  %v43 = vld [vmem:[%s1 + $0x3c] sm:$0xf]
  %v46 = vunpack.c.l.b16 %v26
  %v47 = vunpack.c.l.b16 %v27
  %v48 = vpack.c.b16 %v47, %v46
  %v66 = vunpack.c.l.b16 %v28
  %v67 = vunpack.c.l.b16 %v29
  %v68 = vunpack.c.l.b16 %v30
  %v69 = vunpack.c.l.b16 %v31
  %v70 = vunpack.c.l.b16 %v32
  %v71 = vunpack.c.l.b16 %v33
  %v72 = vunpack.c.l.b16 %v34
  %v73 = vunpack.c.l.b16 %v35
  %v74 = vunpack.c.l.b16 %v36
  %v75 = vunpack.c.l.b16 %v37
  %v76 = vunpack.c.l.b16 %v38
  %v77 = vunpack.c.l.b16 %v39
  %v78 = vunpack.c.l.b16 %v40
  %v79 = vunpack.c.l.b16 %v41
  %v80 = vunpack.c.l.b16 %v42
  %v81 = vunpack.c.l.b16 %v43
  %v82 = vpack.c.b16 %v67, %v66
  %v83 = vpack.c.b16 %v69, %v68
  %v84 = vpack.c.b16 %v71, %v70
  %v85 = vpack.c.b16 %v73, %v72
  %v86 = vpack.c.b16 %v75, %v74
  %v87 = vpack.c.b16 %v77, %v76
  %v88 = vpack.c.b16 %v79, %v78
  %v89 = vpack.c.b16 %v81, %v80
  %98 = vmatprep.subr.bf16.mxu0 0
  %99 = vmatpush1.bf16.msra.mxu0 %v89
  %100 = vmatprep.subr.bf16.mxu0 0
  %101 = vmatpush1.bf16.msra.mxu0 %v88
  %102 = vmatprep.subr.bf16.mxu0 0
  %103 = vmatpush1.bf16.msra.mxu0 %v87
  %104 = vmatprep.subr.bf16.mxu0 0
  %105 = vmatpush1.bf16.msra.mxu0 %v86
  %106 = vmatprep.subr.bf16.mxu0 0
  %107 = vmatpush1.bf16.msra.mxu0 %v85
  %108 = vmatprep.subr.bf16.mxu0 0
  %109 = vmatpush1.bf16.msra.mxu0 %v84
  %110 = vmatprep.subr.bf16.mxu0 0
  %111 = vmatpush1.bf16.msra.mxu0 %v83
  %112 = vmatprep.subr.bf16.mxu0 0
  %113 = vmatpush1.bf16.msra.mxu0 %v82
  %114 = vmatprep.subr.bf16.mxu0 0
  %115 = vmatpush2.bf16.msra.mxu0 0
  %116 = vmatprep.subr.bf16.mxu0 0
  %117 = vmatpush2.bf16.msra.mxu0 0
  %118 = vmatprep.subr.bf16.mxu0 0
  %119 = vmatpush2.bf16.msra.mxu0 0
  %120 = vmatprep.subr.bf16.mxu0 0
  %121 = vmatpush2.bf16.msra.mxu0 0
  %122 = vmatprep.subr.bf16.mxu0 0
  %123 = vmatpush2.bf16.msra.mxu0 0
  %124 = vmatprep.subr.bf16.mxu0 0
  %125 = vmatpush2.bf16.msra.mxu0 0
  %126 = vmatprep.subr.bf16.mxu0 0
  %127 = vmatpush2.bf16.msra.mxu0 0
  %128 = vmatprep.subr.bf16.mxu0 0
  %129 = vmatpush2.bf16.msra.mxu0 0
  %130 = vmatprep.mubr.bf16.mxu0 0
  %131 = vmatmul.mubr.bf16.gmra.mxu0 %v48
  %v132 = vpop.f32.mrf.mxu0
  %v133 = vadd.f32 0.0, %v132
  %v134 = vpop.f32.mrf.mxu0
  %v135 = vpop.f32.mrf.mxu0
  %v136 = vadd.f32 0.0, %v135
  %v137 = vpop.f32.mrf.mxu0
  %138 = vdwg.mxu0
  %v139 = vadd.f32 %v24, %v133
  %v140 = vadd.f32 %v25, %v136
  %141 = vst [vmem:[#allocation2] sm:$0xff] %v139
  %142 = vst [vmem:[#allocation2 + $0x8] sm:$0xff] %v140
  // Predicated region
  $region22: #{forward.76} parent=0 // pred_check
    %p143 = pneg %p18
  $region23: #{forward.76} parent=0 // pred_check_branch
    %145 = sbr.rel (%p143) target = $region25
  $region24: #{forward.76} parent=0 // pred_region
    %v146 = vld [vmem:[#allocation2] sm:$0xff]
    %v147 = vld [vmem:[#allocation2 + $0x8] sm:$0xff]
    %v148 = vld [vmem:[%s2] sm:$0x1]
    %v150 = vlaneseq
    %v151 = vshrl.u32 %v150, 7
    %v152 = vsub.s32 0, %v151
    %v153 = vrot.slane %v148, %v152
    %v155 = vmul.f32 %v146, %v153
    %v156 = vmul.f32 %v147, %v153
    %v157 = vld [vmem:[%s3] sm:$0x1]
    %v159 = vlaneseq
    %v160 = vshrl.u32 %v159, 7
    %v161 = vsub.s32 0, %v160
    %v162 = vrot.slane %v157, %v161
    %v164 = vadd.f32 %v155, %v162
    %v165 = vadd.f32 %v156, %v162
    %v166 = vmax.f32 %v164, 0.0
    %v167 = vmax.f32 %v165, 0.0
    %168 = vst [vmem:[%s4] sm:$0xff] %v166
    %169 = vst [vmem:[%s4 + $0x8] sm:$0xff] %v167
  $region25: #{forward.76} parent=0 // pred_fallthru
    _
  // Predicated region
  $region26: #{forward.76} parent=0 // pred_check
    _
  $region27: #{forward.76} parent=0 // pred_check_branch
    %171 = sbr.rel (0) target = $region29
  $region28: #{forward.76} parent=0 // pred_region
    _
  $region29: #{forward.76} parent=0 // pred_fallthru
    _
  // Predicated region
  $region30: #{forward.76} parent=0 // pred_check
    _
  $region31: #{forward.76} parent=0 // pred_check_branch
    %173 = sbr.rel (0) target = $region33
  $region32: #{forward.76} parent=0 // pred_region
    _
  $region33: #{forward.76} parent=0 // pred_fallthru
    _

// kernel: forward.82
$region0: #{forward.82}
  #allocation0 [shape = 'u32[]', space=smem, size = 0x4, offset = 0x4, fixed_abs, tag = 'smem constant byte address 0x4 - core index']
  #allocation1 [shape = 'u32[144,128]{1,0:T(1,128)}', space=vmem, size = 0x12000, scoped, tag = 'internal scratch']
  #allocation2 [shape = 'f32[16,128]{1,0:T(8,128)}', space=vmem, size = 0x2000, scoped, tag = 'scratch operand']
  %s0 = inlined_call_operand.vmem [shape: bf16[16,128], index: 0, kind: input, shape index: {}]
  %s1 = inlined_call_operand.vmem [shape: bf16[128,256], index: 1, kind: input, shape index: {}]
  %s2 = inlined_call_operand.vmem [shape: f32[1,256], index: 2, kind: input, shape index: {}]
  %s3 = inlined_call_operand.vmem [shape: f32[1,256], index: 3, kind: input, shape index: {}]
  %s4 = inlined_call_operand.vmem [shape: f32[16,256], index: 4, kind: input, shape index: {}]
  %s5 = inlined_call_operand.vmem [shape: f32[16,256], index: 5, kind: output, shape index: {}]
  %s6 = sld [smem:[#allocation0]]
  $region174: #{forward.82} parent=0
    _
  %s8 = ssub.s32 1, %s6
  %s9 = scalar_select 0, %s8, %s6
  $region1: #{forward.82} parent=0
    #allocation3 [shape = 'u8[65536]{0}', space=vmem, size = 0x10000, scoped, tag = 'input window, operand 1']
    #allocation4 [shape = 'u8[16384]{0}', space=vmem, size = 0x4000, scoped, tag = 'input window, operand 4']
    #allocation5 [shape = 'u8[16384]{0}', space=vmem, size = 0x4000, scoped, tag = 'output window, operand 0']
    loop: start=0, step=1, limit=4
    $region2: #{forward.82} parent=1 // loop_pre_header
      _
    $region3: #{forward.82} parent=1 // loop_header
      %s11 = sphi 0, %s15
      %p12 = scmp.ge.s32.totalorder %s11, 4
      %s18 = sphi 0, %s37
      %s19 = sphi 0, %s33
      %s20 = sphi 0, %s29
      %s21 = sphi 0, %s18
      %s22 = sphi 0, %s19
      %s23 = sphi 0, %s20
      %s24 = sphi 0, %s21
      %s25 = sphi 0, %s22
      %s26 = sphi 0, %s23
      %s42 = sphi 0, %s44
      %s45 = sphi 0, %s42
      %s46 = sphi 0, %s45
      %s62 = sphi 0, %s46
      %s70 = sphi 0, %s72
      %s73 = sphi 0, %s70
      %s74 = sphi 0, %s73
      %s90 = sphi 0, %s74
      %s96 = sphi 0, %s98
      %s99 = sphi 0, %s96
      %s100 = sphi 0, %s99
      %s116 = sphi 0, %s100
      %s122 = sphi 0, %s124
      %s125 = sphi 0, %s122
      %s126 = sphi 0, %s125
      %s142 = sphi 0, %s126
      %s150 = sphi 0, %s152
      %s153 = sphi 0, %s150
      %s154 = sphi 0, %s153
      %s170 = sphi 0, %s154
      %s178 = sphi 0, %s180
      %s181 = sphi 0, %s178
      %s182 = sphi 0, %s181
      %s198 = sphi 0, %s182
    $region4: #{forward.82} parent=1 // loop_header_branch
      %14 = sbr.rel (%p12) target = $region8
    $region5: #{forward.82} parent=1 // loop_body
      %s16 = ssub.s32 %s11, 1
      %s17 = ssub.s32 %s11, 2
      %s27 = sadd.s32 1, %s20
      %p28 = scmp.ge.s32.totalorder %s27, 1
      %s29 = scalar_select %p28, 0, %s27
      %s30 = sadd.s32 1, %s19
      %s31 = scalar_select %p28, %s30, %s19
      %p32 = scmp.ge.s32.totalorder %s31, 2
      %s33 = scalar_select %p32, 0, %s31
      %s34 = sadd.s32 1, %s18
      %s35 = scalar_select %p32, %s34, %s18
      %p36 = scmp.ge.s32.totalorder %s35, 1
      %s37 = scalar_select %p36, 0, %s35
      %s38 = ssub.s32 %s18, %s37
      %s39 = ssub.s32 %s20, %s29
      %s40 = sor.u32 %s38, %s39
      %p41 = scmp.eq.s32.totalorder %s40, 0
      %s43 = sadd.s32 %s42, 1
      %s44 = scalar_select %p41, %s42, %s43
      %p47 = pneg %p41
      %p48 = scmp.eq.s32.totalorder %s11, 1
      %p49 = por %p47, %p48
      %p50 = scmp.ne.s32.totalorder %s42, %s45
      %p51 = scmp.eq.s32.totalorder %s11, 0
      %p52 = por %p50, %p51
      %p53 = scmp.ne.s32.totalorder %s42, %s45
      %p54 = scmp.eq.s32.totalorder %s16, 1
      %p55 = por %p53, %p54
      %p56 = scmp.ne.s32.totalorder %s45, %s46
      %p57 = scmp.eq.s32.totalorder %s16, 0
      %p58 = por %p56, %p57
      %p59 = scmp.ne.s32.totalorder %s45, %s46
      %p60 = scmp.eq.s32.totalorder %s17, 1
      %p61 = por %p59, %p60
      %p63 = scmp.ne.s32.totalorder %s46, %s62
      %p64 = scmp.eq.s32.totalorder %s17, 0
      %p65 = por %p63, %p64
      %s66 = ssub.s32 %s20, %s29
      %s67 = ssub.s32 %s19, %s33
      %s68 = sor.u32 %s66, %s67
      %p69 = scmp.eq.s32.totalorder %s68, 0
      %s71 = sadd.s32 %s70, 1
      %s72 = scalar_select %p69, %s70, %s71
      %p75 = pneg %p69
      %p76 = scmp.eq.s32.totalorder %s11, 1
      %p77 = por %p75, %p76
      %p78 = scmp.ne.s32.totalorder %s70, %s73
      %p79 = scmp.eq.s32.totalorder %s11, 0
      %p80 = por %p78, %p79
      %p81 = scmp.ne.s32.totalorder %s70, %s73
      %p82 = scmp.eq.s32.totalorder %s16, 1
      %p83 = por %p81, %p82
      %p84 = scmp.ne.s32.totalorder %s73, %s74
      %p85 = scmp.eq.s32.totalorder %s16, 0
      %p86 = por %p84, %p85
      %p87 = scmp.ne.s32.totalorder %s73, %s74
      %p88 = scmp.eq.s32.totalorder %s17, 1
      %p89 = por %p87, %p88
      %p91 = scmp.ne.s32.totalorder %s74, %s90
      %p92 = scmp.eq.s32.totalorder %s17, 0
      %p93 = por %p91, %p92
      %s94 = ssub.s32 %s19, %s33
      %p95 = scmp.eq.s32.totalorder %s94, 0
      %s97 = sadd.s32 %s96, 1
      %s98 = scalar_select %p95, %s96, %s97
      %p101 = pneg %p95
      %p102 = scmp.eq.s32.totalorder %s11, 1
      %p103 = por %p101, %p102
      %p104 = scmp.ne.s32.totalorder %s96, %s99
      %p105 = scmp.eq.s32.totalorder %s11, 0
      %p106 = por %p104, %p105
      %p107 = scmp.ne.s32.totalorder %s96, %s99
      %p108 = scmp.eq.s32.totalorder %s16, 1
      %p109 = por %p107, %p108
      %p110 = scmp.ne.s32.totalorder %s99, %s100
      %p111 = scmp.eq.s32.totalorder %s16, 0
      %p112 = por %p110, %p111
      %p113 = scmp.ne.s32.totalorder %s99, %s100
      %p114 = scmp.eq.s32.totalorder %s17, 1
      %p115 = por %p113, %p114
      %p117 = scmp.ne.s32.totalorder %s100, %s116
      %p118 = scmp.eq.s32.totalorder %s17, 0
      %p119 = por %p117, %p118
      %s120 = ssub.s32 %s19, %s33
      %p121 = scmp.eq.s32.totalorder %s120, 0
      %s123 = sadd.s32 %s122, 1
      %s124 = scalar_select %p121, %s122, %s123
      %p127 = pneg %p121
      %p128 = scmp.eq.s32.totalorder %s11, 1
      %p129 = por %p127, %p128
      %p130 = scmp.ne.s32.totalorder %s122, %s125
      %p131 = scmp.eq.s32.totalorder %s11, 0
      %p132 = por %p130, %p131
      %p133 = scmp.ne.s32.totalorder %s122, %s125
      %p134 = scmp.eq.s32.totalorder %s16, 1
      %p135 = por %p133, %p134
      %p136 = scmp.ne.s32.totalorder %s125, %s126
      %p137 = scmp.eq.s32.totalorder %s16, 0
      %p138 = por %p136, %p137
      %p139 = scmp.ne.s32.totalorder %s125, %s126
      %p140 = scmp.eq.s32.totalorder %s17, 1
      %p141 = por %p139, %p140
      %p143 = scmp.ne.s32.totalorder %s126, %s142
      %p144 = scmp.eq.s32.totalorder %s17, 0
      %p145 = por %p143, %p144
      %s146 = ssub.s32 %s18, %s37
      %s147 = ssub.s32 %s19, %s33
      %s148 = sor.u32 %s146, %s147
      %p149 = scmp.eq.s32.totalorder %s148, 0
      %s151 = sadd.s32 %s150, 1
      %s152 = scalar_select %p149, %s150, %s151
      %p155 = pneg %p149
      %p156 = scmp.eq.s32.totalorder %s11, 1
      %p157 = por %p155, %p156
      %p158 = scmp.ne.s32.totalorder %s150, %s153
      %p159 = scmp.eq.s32.totalorder %s11, 0
      %p160 = por %p158, %p159
      %p161 = scmp.ne.s32.totalorder %s150, %s153
      %p162 = scmp.eq.s32.totalorder %s16, 1
      %p163 = por %p161, %p162
      %p164 = scmp.ne.s32.totalorder %s153, %s154
      %p165 = scmp.eq.s32.totalorder %s16, 0
      %p166 = por %p164, %p165
      %p167 = scmp.ne.s32.totalorder %s153, %s154
      %p168 = scmp.eq.s32.totalorder %s17, 1
      %p169 = por %p167, %p168
      %p171 = scmp.ne.s32.totalorder %s154, %s170
      %p172 = scmp.eq.s32.totalorder %s17, 0
      %p173 = por %p171, %p172
      %s174 = ssub.s32 %s18, %s37
      %s175 = ssub.s32 %s19, %s33
      %s176 = sor.u32 %s174, %s175
      %p177 = scmp.eq.s32.totalorder %s176, 0
      %s179 = sadd.s32 %s178, 1
      %s180 = scalar_select %p177, %s178, %s179
      %p183 = pneg %p177
      %p184 = scmp.eq.s32.totalorder %s11, 1
      %p185 = por %p183, %p184
      %p186 = scmp.ne.s32.totalorder %s178, %s181
      %p187 = scmp.eq.s32.totalorder %s11, 0
      %p188 = por %p186, %p187
      %p189 = scmp.ne.s32.totalorder %s178, %s181
      %p190 = scmp.eq.s32.totalorder %s16, 1
      %p191 = por %p189, %p190
      %p192 = scmp.ne.s32.totalorder %s181, %s182
      %p193 = scmp.eq.s32.totalorder %s16, 0
      %p194 = por %p192, %p193
      %p195 = scmp.ne.s32.totalorder %s181, %s182
      %p196 = scmp.eq.s32.totalorder %s17, 1
      %p197 = por %p195, %p196
      %p199 = scmp.ne.s32.totalorder %s182, %s198
      %p200 = scmp.eq.s32.totalorder %s17, 0
      %p201 = por %p199, %p200
      %p202 = scmp.le.s32.totalorder 1, %s11
      %p203 = scmp.lt.s32.totalorder %s11, 3
      %p204 = pnand %p202, %p203
      %p205 = pneg %p204
      // Predicated region
      $region9: #{forward.82} parent=5 // pred_check
        _
      $region10: #{forward.82} parent=5 // pred_check_branch
        %207 = sbr.rel (%p204) target = $region12
      $region11: #{forward.82} parent=5 // pred_region
        %s208 = ssub.s32 %s11, 1
        // Predicated region
        $region13: #{forward.82} parent=11 // pred_check
          %p209 = pneg %p58
        $region14: #{forward.82} parent=11 // pred_check_branch
          %211 = sbr.rel (%p209) target = $region16
        $region15: #{forward.82} parent=11 // pred_region
          %s212 = smul.u32 2, %s21
          %p213 = scmp.lt.s32.totalorder %s212, 1
          %s214 = scalar_select %p213, %s212, 1
          %p215 = scmp.lt.s32.totalorder %s23, 0
          %s216 = scalar_select %p215, %s23, 0
          %s217 = sadd.s32 %s216, %s214
          %s218 = smul.addr %s217, 4
          %s219 = scalar_lea.vmem %s0, %s218
          %s220 = smul.u32 2, %s21
        $region16: #{forward.82} parent=11 // pred_fallthru
          _
      $region12: #{forward.82} parent=5 // pred_fallthru
        _
      %p221 = scmp.lt.s32.totalorder %s11, 2
      // Predicated region
      $region17: #{forward.82} parent=5 // pred_check
        %p222 = pneg %p221
      $region18: #{forward.82} parent=5 // pred_check_branch
        %224 = sbr.rel (%p222) target = $region20
      $region19: #{forward.82} parent=5 // pred_region
        // Predicated region
        $region21: #{forward.82} parent=19 // pred_check
          %p225 = pneg %p80
        $region22: #{forward.82} parent=19 // pred_check_branch
          %227 = sbr.rel (%p225) target = $region24
        $region23: #{forward.82} parent=19 // pred_region
          %s228 = sand.u32 %s70, 1
          %s229 = sand.u32 %s70, 1
          %s230 = smul.addr %s229, 64
          %s231 = scalar_lea.vmem [#allocation3], %s230
          %s232 = smul.u32 16, %s20
          %s233 = smul.addr %s232, 2
          %s234 = sadd.s32 %s19, %s233
          %s235 = smul.addr %s234, 4
          %s236 = scalar_lea.vmem %s1, %s235
          // Predicated region
          $region25: #{forward.82} parent=23 // pred_check
            _
          $region26: #{forward.82} parent=23 // pred_check_branch
            %238 = sbr.rel (0) target = $region28
          $region27: #{forward.82} parent=23 // pred_region
            // Predicated region
            $region29: #{forward.82} parent=27 // pred_check
              _
            $region30: #{forward.82} parent=27 // pred_check_branch
              %240 = sbr.rel target = $region32
            $region31: #{forward.82} parent=27 // pred_region
              // Predicated region
              $region44: #{forward.82} parent=31 // pred_check
                _
              $region45: #{forward.82} parent=31 // pred_check_branch
                %286 = sbr.rel (0) target = $region47
              $region46: #{forward.82} parent=31 // pred_region
                loop: start=0, step=1, limit=1
                $region48: #{forward.82} parent=46 // loop_pre_header
                  _
                $region49: #{forward.82} parent=46 // loop_header
                  %s288 = sphi 0, %s292
                  %p289 = scmp.ge.s32.totalorder %s288, 1
                  %s293 = sphi %s236, %s236
                  %s294 = sphi %s231, %s231
                $region50: #{forward.82} parent=46 // loop_header_branch
                  %291 = sbr.rel (%p289) target = $region54
                $region51: #{forward.82} parent=46 // loop_body
                  _
                $region52: #{forward.82} parent=46 // loop_footer
                  %s292 = sadd.s32 1, %s288
                $region53: #{forward.82} parent=46 // loop_footer_branch
                  %287 = sbr.rel target = $region49
                $region54: #{forward.82} parent=46 // loop_exit
                  _
                %s296 = ssub.s32 16, 1
                loop: start=0, step=1, limit=1
                $region55: #{forward.82} parent=46 // loop_pre_header
                  _
                $region56: #{forward.82} parent=46 // loop_header
                  %s298 = sphi 0, %s302
                  %p299 = scmp.ge.s32.totalorder %s298, 1
                  %s303 = sphi %s236, %s236
                  %s304 = sphi %s231, %s231
                $region57: #{forward.82} parent=46 // loop_header_branch
                  %301 = sbr.rel (%p299) target = $region61
                $region58: #{forward.82} parent=46 // loop_body
                  %v305 = vld [vmem:[%s303] sm:%s296]
                  %306 = vst [vmem:[%s304] sm:%s296] %v305
                  %v307 = vld [vmem:[%s303 + $0x8] sm:%s296]
                  %308 = vst [vmem:[%s304 + $0x4] sm:%s296] %v307
                  %v309 = vld [vmem:[%s303 + $0x10] sm:%s296]
                  %310 = vst [vmem:[%s304 + $0x8] sm:%s296] %v309
                  %v311 = vld [vmem:[%s303 + $0x18] sm:%s296]
                  %312 = vst [vmem:[%s304 + $0xc] sm:%s296] %v311
                  %v313 = vld [vmem:[%s303 + $0x20] sm:%s296]
                  %314 = vst [vmem:[%s304 + $0x10] sm:%s296] %v313
                  %v315 = vld [vmem:[%s303 + $0x28] sm:%s296]
                  %316 = vst [vmem:[%s304 + $0x14] sm:%s296] %v315
                  %v317 = vld [vmem:[%s303 + $0x30] sm:%s296]
                  %318 = vst [vmem:[%s304 + $0x18] sm:%s296] %v317
                  %v319 = vld [vmem:[%s303 + $0x38] sm:%s296]
                  %320 = vst [vmem:[%s304 + $0x1c] sm:%s296] %v319
                  %v321 = vld [vmem:[%s303 + $0x40] sm:%s296]
                  %322 = vst [vmem:[%s304 + $0x20] sm:%s296] %v321
                  %v323 = vld [vmem:[%s303 + $0x48] sm:%s296]
                  %324 = vst [vmem:[%s304 + $0x24] sm:%s296] %v323
                  %v325 = vld [vmem:[%s303 + $0x50] sm:%s296]
                  %326 = vst [vmem:[%s304 + $0x28] sm:%s296] %v325
                  %v327 = vld [vmem:[%s303 + $0x58] sm:%s296]
                  %328 = vst [vmem:[%s304 + $0x2c] sm:%s296] %v327
                  %v329 = vld [vmem:[%s303 + $0x60] sm:%s296]
                  %330 = vst [vmem:[%s304 + $0x30] sm:%s296] %v329
                  %v331 = vld [vmem:[%s303 + $0x68] sm:%s296]
                  %332 = vst [vmem:[%s304 + $0x34] sm:%s296] %v331
                  %v333 = vld [vmem:[%s303 + $0x70] sm:%s296]
                  %334 = vst [vmem:[%s304 + $0x38] sm:%s296] %v333
                  %v335 = vld [vmem:[%s303 + $0x78] sm:%s296]
                  %336 = vst [vmem:[%s304 + $0x3c] sm:%s296] %v335
                $region59: #{forward.82} parent=46 // loop_footer
                  %s302 = sadd.s32 1, %s298
                $region60: #{forward.82} parent=46 // loop_footer_branch
                  %297 = sbr.rel target = $region56
                $region61: #{forward.82} parent=46 // loop_exit
                  _
              $region47: #{forward.82} parent=31 // pred_fallthru
                _
            $region32: #{forward.82} parent=27 // pred_fallthru
              _
            // Predicated region
            $region33: #{forward.82} parent=27 // pred_check
              _
            $region34: #{forward.82} parent=27 // pred_check_branch
              %242 = sbr.rel (0) target = $region36
            $region35: #{forward.82} parent=27 // pred_region
              %s244 = ssub.s32 16, 1
              loop: start=0, step=1, limit=1
              $region37: #{forward.82} parent=35 // loop_pre_header
                _
              $region38: #{forward.82} parent=35 // loop_header
                %s246 = sphi 0, %s250
                %p247 = scmp.ge.s32.totalorder %s246, 1
                %s251 = sphi %s236, %s236
                %s252 = sphi %s231, %s231
              $region39: #{forward.82} parent=35 // loop_header_branch
                %249 = sbr.rel (%p247) target = $region43
              $region40: #{forward.82} parent=35 // loop_body
                %v253 = vld [vmem:[%s251] sm:%s244]
                %254 = vst [vmem:[%s252] sm:%s244] %v253
                %v255 = vld [vmem:[%s251 + $0x8] sm:%s244]
                %256 = vst [vmem:[%s252 + $0x4] sm:%s244] %v255
                %v257 = vld [vmem:[%s251 + $0x10] sm:%s244]
                %258 = vst [vmem:[%s252 + $0x8] sm:%s244] %v257
                %v259 = vld [vmem:[%s251 + $0x18] sm:%s244]
                %260 = vst [vmem:[%s252 + $0xc] sm:%s244] %v259
                %v261 = vld [vmem:[%s251 + $0x20] sm:%s244]
                %262 = vst [vmem:[%s252 + $0x10] sm:%s244] %v261
                %v263 = vld [vmem:[%s251 + $0x28] sm:%s244]
                %264 = vst [vmem:[%s252 + $0x14] sm:%s244] %v263
                %v265 = vld [vmem:[%s251 + $0x30] sm:%s244]
                %266 = vst [vmem:[%s252 + $0x18] sm:%s244] %v265
                %v267 = vld [vmem:[%s251 + $0x38] sm:%s244]
                %268 = vst [vmem:[%s252 + $0x1c] sm:%s244] %v267
                %v269 = vld [vmem:[%s251 + $0x40] sm:%s244]
                %270 = vst [vmem:[%s252 + $0x20] sm:%s244] %v269
                %v271 = vld [vmem:[%s251 + $0x48] sm:%s244]
                %272 = vst [vmem:[%s252 + $0x24] sm:%s244] %v271
                %v273 = vld [vmem:[%s251 + $0x50] sm:%s244]
                %274 = vst [vmem:[%s252 + $0x28] sm:%s244] %v273
                %v275 = vld [vmem:[%s251 + $0x58] sm:%s244]
                %276 = vst [vmem:[%s252 + $0x2c] sm:%s244] %v275
                %v277 = vld [vmem:[%s251 + $0x60] sm:%s244]
                %278 = vst [vmem:[%s252 + $0x30] sm:%s244] %v277
                %v279 = vld [vmem:[%s251 + $0x68] sm:%s244]
                %280 = vst [vmem:[%s252 + $0x34] sm:%s244] %v279
                %v281 = vld [vmem:[%s251 + $0x70] sm:%s244]
                %282 = vst [vmem:[%s252 + $0x38] sm:%s244] %v281
                %v283 = vld [vmem:[%s251 + $0x78] sm:%s244]
                %284 = vst [vmem:[%s252 + $0x3c] sm:%s244] %v283
              $region41: #{forward.82} parent=35 // loop_footer
                %s250 = sadd.s32 1, %s246
              $region42: #{forward.82} parent=35 // loop_footer_branch
                %245 = sbr.rel target = $region38
              $region43: #{forward.82} parent=35 // loop_exit
                _
            $region36: #{forward.82} parent=27 // pred_fallthru
              _
          $region28: #{forward.82} parent=23 // pred_fallthru
            _
          %337 = vnop
        $region24: #{forward.82} parent=19 // pred_fallthru
          _
        // Predicated region
        $region62: #{forward.82} parent=19 // pred_check
          %p338 = pneg %p106
        $region63: #{forward.82} parent=19 // pred_check_branch
          %340 = sbr.rel (%p338) target = $region65
        $region64: #{forward.82} parent=19 // pred_region
          %p341 = scmp.lt.s32.totalorder %s19, 1
          %s342 = scalar_select %p341, %s19, 1
          %s343 = scalar_lea.vmem %s2, %s342
        $region65: #{forward.82} parent=19 // pred_fallthru
          _
        // Predicated region
        $region66: #{forward.82} parent=19 // pred_check
          %p344 = pneg %p132
        $region67: #{forward.82} parent=19 // pred_check_branch
          %346 = sbr.rel (%p344) target = $region69
        $region68: #{forward.82} parent=19 // pred_region
          %p347 = scmp.lt.s32.totalorder %s19, 1
          %s348 = scalar_select %p347, %s19, 1
          %s349 = scalar_lea.vmem %s3, %s348
        $region69: #{forward.82} parent=19 // pred_fallthru
          _
        // Predicated region
        $region70: #{forward.82} parent=19 // pred_check
          %p350 = pneg %p160
        $region71: #{forward.82} parent=19 // pred_check_branch
          %352 = sbr.rel (%p350) target = $region73
        $region72: #{forward.82} parent=19 // pred_region
          %s353 = sand.u32 %s150, 1
          %s354 = sand.u32 %s150, 1
          %s355 = smul.addr %s354, 16
          %s356 = scalar_lea.vmem [#allocation4], %s355
          %s357 = smul.u32 2, %s18
          %s358 = smul.addr %s357, 2
          %s359 = sadd.s32 %s19, %s358
          %s360 = smul.addr %s359, 8
          %s361 = scalar_lea.vmem %s4, %s360
          // Predicated region
          $region74: #{forward.82} parent=72 // pred_check
            _
          $region75: #{forward.82} parent=72 // pred_check_branch
            %363 = sbr.rel (0) target = $region77
          $region76: #{forward.82} parent=72 // pred_region
            // Predicated region
            $region78: #{forward.82} parent=76 // pred_check
              _
            $region79: #{forward.82} parent=76 // pred_check_branch
              %365 = sbr.rel (0) target = $region81
            $region80: #{forward.82} parent=76 // pred_region
              // Predicated region
              $region93: #{forward.82} parent=80 // pred_check
                _
              $region94: #{forward.82} parent=80 // pred_check_branch
                %383 = sbr.rel (0) target = $region96
              $region95: #{forward.82} parent=80 // pred_region
                loop: start=0, step=1, limit=1
                $region97: #{forward.82} parent=95 // loop_pre_header
                  _
                $region98: #{forward.82} parent=95 // loop_header
                  %s385 = sphi 0, %s389
                  %p386 = scmp.ge.s32.totalorder %s385, 1
                  %s390 = sphi %s361, %s361
                  %s391 = sphi %s356, %s356
                $region99: #{forward.82} parent=95 // loop_header_branch
                  %388 = sbr.rel (%p386) target = $region103
                $region100: #{forward.82} parent=95 // loop_body
                  %v392 = vld [vmem:[%s390] sm:$0xff]
                  %393 = vst [vmem:[%s391] sm:$0xff] %v392
                  %v394 = vld [vmem:[%s390 + $0x10] sm:$0xff]
                  %395 = vst [vmem:[%s391 + $0x8] sm:$0xff] %v394
                $region101: #{forward.82} parent=95 // loop_footer
                  %s389 = sadd.s32 1, %s385
                $region102: #{forward.82} parent=95 // loop_footer_branch
                  %384 = sbr.rel target = $region98
                $region103: #{forward.82} parent=95 // loop_exit
                  _
              $region96: #{forward.82} parent=80 // pred_fallthru
                _
              // Predicated region
              $region104: #{forward.82} parent=80 // pred_check
                _
              $region105: #{forward.82} parent=80 // pred_check_branch
                %397 = sbr.rel target = $region107
              $region106: #{forward.82} parent=80 // pred_region
                _
              $region107: #{forward.82} parent=80 // pred_fallthru
                _
            $region81: #{forward.82} parent=76 // pred_fallthru
              _
            // Predicated region
            $region82: #{forward.82} parent=76 // pred_check
              _
            $region83: #{forward.82} parent=76 // pred_check_branch
              %367 = sbr.rel target = $region85
            $region84: #{forward.82} parent=76 // pred_region
              %s369 = ssub.s32 256, 1
              loop: start=0, step=1, limit=1
              $region86: #{forward.82} parent=84 // loop_pre_header
                _
              $region87: #{forward.82} parent=84 // loop_header
                %s371 = sphi 0, %s375
                %p372 = scmp.ge.s32.totalorder %s371, 1
                %s376 = sphi %s361, %s361
                %s377 = sphi %s356, %s356
              $region88: #{forward.82} parent=84 // loop_header_branch
                %374 = sbr.rel (%p372) target = $region92
              $region89: #{forward.82} parent=84 // loop_body
                %v378 = vld [vmem:[%s376] sm:%s369]
                %379 = vst [vmem:[%s377] sm:%s369] %v378
                %v380 = vld [vmem:[%s376 + $0x10] sm:%s369]
                %381 = vst [vmem:[%s377 + $0x8] sm:%s369] %v380
              $region90: #{forward.82} parent=84 // loop_footer
                %s375 = sadd.s32 1, %s371
              $region91: #{forward.82} parent=84 // loop_footer_branch
                %370 = sbr.rel target = $region87
              $region92: #{forward.82} parent=84 // loop_exit
                _
            $region85: #{forward.82} parent=76 // pred_fallthru
              _
          $region77: #{forward.82} parent=72 // pred_fallthru
            _
          %398 = vnop
        $region73: #{forward.82} parent=19 // pred_fallthru
          _
      $region20: #{forward.82} parent=5 // pred_fallthru
        _
      %p399 = scmp.le.s32.totalorder 1, %s11
      %p400 = scmp.lt.s32.totalorder %s11, 3
      %p401 = pnand %p399, %p400
      %p402 = pneg %p401
      // Predicated region
      $region108: #{forward.82} parent=5 // pred_check
        _
      $region109: #{forward.82} parent=5 // pred_check_branch
        %404 = sbr.rel (%p401) target = $region111
      $region110: #{forward.82} parent=5 // pred_region
        %s405 = ssub.s32 %s11, 1
        %s406 = sand.u32 %s73, 1
        %s407 = sand.u32 %s73, 1
        %s408 = smul.addr %s407, 64
        %s409 = scalar_lea.vmem [#allocation3], %s408
        // Predicated region
        $region112: #{forward.82} parent=110 // pred_check
          %p410 = pneg %p86
        $region113: #{forward.82} parent=110 // pred_check_branch
          %412 = sbr.rel (%p410) target = $region115
        $region114: #{forward.82} parent=110 // pred_region
          _
        $region115: #{forward.82} parent=110 // pred_fallthru
          _
        %s413 = sand.u32 %s153, 1
        %s414 = sand.u32 %s153, 1
        %s415 = smul.addr %s414, 16
        %s416 = scalar_lea.vmem [#allocation4], %s415
        // Predicated region
        $region116: #{forward.82} parent=110 // pred_check
          %p417 = pneg %p166
        $region117: #{forward.82} parent=110 // pred_check_branch
          %419 = sbr.rel (%p417) target = $region119
        $region118: #{forward.82} parent=110 // pred_region
          _
        $region119: #{forward.82} parent=110 // pred_fallthru
          _
        %s420 = smul.u32 2, %s21
        %p421 = scmp.lt.s32.totalorder %s420, 1
        %s422 = scalar_select %p421, %s420, 1
        %p423 = scmp.lt.s32.totalorder %s23, 0
        %s424 = scalar_select %p423, %s23, 0
        %s425 = sadd.s32 %s424, %s422
        %s426 = smul.addr %s425, 4
        %s427 = scalar_lea.vmem %s0, %s426
        %p428 = pneg %p58
        %p429 = pneg %p55
        %s430 = sand.u32 %s73, 1
        %s431 = sand.u32 %s73, 1
        %s432 = smul.addr %s431, 64
        %s433 = scalar_lea.vmem [#allocation3], %s432
        %p434 = pneg %p86
        %p435 = pneg %p83
        %p436 = scmp.lt.s32.totalorder %s22, 1
        %s437 = scalar_select %p436, %s22, 1
        %s438 = scalar_lea.vmem %s2, %s437
        %p439 = pneg %p112
        %p440 = pneg %p109
        %p441 = scmp.lt.s32.totalorder %s22, 1
        %s442 = scalar_select %p441, %s22, 1
        %s443 = scalar_lea.vmem %s3, %s442
        %p444 = pneg %p138
        %p445 = pneg %p135
        %s446 = sand.u32 %s153, 1
        %s447 = sand.u32 %s153, 1
        %s448 = smul.addr %s447, 16
        %s449 = scalar_lea.vmem [#allocation4], %s448
        %p450 = pneg %p166
        %p451 = pneg %p163
        %p452 = pneg %p194
        %p453 = pneg %p191
        %s454 = sand.u32 %s181, 1
        %s455 = sand.u32 %s181, 1
        %s456 = smul.addr %s455, 16
        %s457 = scalar_lea.vmem [#allocation5], %s456
        %s458 = smul.u32 2, %s21
        %p459 = scmp.lt.s32.totalorder %s458, 1
        %s460 = scalar_select %p459, %s458, 1
        %p461 = scmp.lt.s32.totalorder %s23, 0
        %s462 = scalar_select %p461, %s23, 0
        %s463 = sadd.s32 %s462, %s460
        %s464 = smul.addr %s463, 4
        %s465 = scalar_lea.vmem %s0, %s464
        %s466 = smul.u32 2, %s21
        %s467 = smul.u32 16, %s23
        %p468 = scmp.lt.s32.totalorder %s22, 1
        %s469 = scalar_select %p468, %s22, 1
        %s470 = scalar_lea.vmem %s2, %s469
        %p471 = scmp.lt.s32.totalorder %s22, 1
        %s472 = scalar_select %p471, %s22, 1
        %s473 = scalar_lea.vmem %s3, %s472
        %s474 = smul.u32 2, %s21
        %s475 = smul.u32 2, %s21
        %p477 = scmp.eq.s32.totalorder %s23, 0
        // Predicated region
        $region120: #{forward.82} parent=110 // pred_check
          %p478 = pneg %p477
        $region121: #{forward.82} parent=110 // pred_check_branch
          %480 = sbr.rel (%p478) target = $region123
        $region122: #{forward.82} parent=110 // pred_region
          %481 = vst [vmem:[#allocation2] sm:$0xff] 0.0
          %482 = vst [vmem:[#allocation2 + $0x8] sm:$0xff] 0.0
        $region123: #{forward.82} parent=110 // pred_fallthru
          _
        %v483 = vld [vmem:[#allocation2] sm:$0xff]
        %v484 = vld [vmem:[#allocation2 + $0x8] sm:$0xff]
        %v485 = vld [vmem:[%s465] sm:$0xf]
        %v486 = vld [vmem:[%s465 + $0x4] sm:$0xf]
        %v487 = vld [vmem:[%s409] sm:$0xf]
        %v488 = vld [vmem:[%s409 + $0x4] sm:$0xf]
        %v489 = vld [vmem:[%s409 + $0x8] sm:$0xf]
        %v490 = vld [vmem:[%s409 + $0xc] sm:$0xf]
        %v491 = vld [vmem:[%s409 + $0x10] sm:$0xf]
        %v492 = vld [vmem:[%s409 + $0x14] sm:$0xf]
        %v493 = vld [vmem:[%s409 + $0x18] sm:$0xf]
        %v494 = vld [vmem:[%s409 + $0x1c] sm:$0xf]
        %v495 = vld [vmem:[%s409 + $0x20] sm:$0xf]
        %v496 = vld [vmem:[%s409 + $0x24] sm:$0xf]
        %v497 = vld [vmem:[%s409 + $0x28] sm:$0xf]
        %v498 = vld [vmem:[%s409 + $0x2c] sm:$0xf]
        %v499 = vld [vmem:[%s409 + $0x30] sm:$0xf]
        %v500 = vld [vmem:[%s409 + $0x34] sm:$0xf]
        %v501 = vld [vmem:[%s409 + $0x38] sm:$0xf]
        %v502 = vld [vmem:[%s409 + $0x3c] sm:$0xf]
        %v505 = vunpack.c.l.b16 %v485
        %v506 = vunpack.c.l.b16 %v486
        %v507 = vpack.c.b16 %v506, %v505
        %v525 = vunpack.c.l.b16 %v487
        %v526 = vunpack.c.l.b16 %v488
        %v527 = vunpack.c.l.b16 %v489
        %v528 = vunpack.c.l.b16 %v490
        %v529 = vunpack.c.l.b16 %v491
        %v530 = vunpack.c.l.b16 %v492
        %v531 = vunpack.c.l.b16 %v493
        %v532 = vunpack.c.l.b16 %v494
        %v533 = vunpack.c.l.b16 %v495
        %v534 = vunpack.c.l.b16 %v496
        %v535 = vunpack.c.l.b16 %v497
        %v536 = vunpack.c.l.b16 %v498
        %v537 = vunpack.c.l.b16 %v499
        %v538 = vunpack.c.l.b16 %v500
        %v539 = vunpack.c.l.b16 %v501
        %v540 = vunpack.c.l.b16 %v502
        %v541 = vpack.c.b16 %v526, %v525
        %v542 = vpack.c.b16 %v528, %v527
        %v543 = vpack.c.b16 %v530, %v529
        %v544 = vpack.c.b16 %v532, %v531
        %v545 = vpack.c.b16 %v534, %v533
        %v546 = vpack.c.b16 %v536, %v535
        %v547 = vpack.c.b16 %v538, %v537
        %v548 = vpack.c.b16 %v540, %v539
        %557 = vmatprep.subr.bf16.mxu0 0
        %558 = vmatpush1.bf16.msra.mxu0 %v548
        %559 = vmatprep.subr.bf16.mxu0 0
        %560 = vmatpush1.bf16.msra.mxu0 %v547
        %561 = vmatprep.subr.bf16.mxu0 0
        %562 = vmatpush1.bf16.msra.mxu0 %v546
        %563 = vmatprep.subr.bf16.mxu0 0
        %564 = vmatpush1.bf16.msra.mxu0 %v545
        %565 = vmatprep.subr.bf16.mxu0 0
        %566 = vmatpush1.bf16.msra.mxu0 %v544
        %567 = vmatprep.subr.bf16.mxu0 0
        %568 = vmatpush1.bf16.msra.mxu0 %v543
        %569 = vmatprep.subr.bf16.mxu0 0
        %570 = vmatpush1.bf16.msra.mxu0 %v542
        %571 = vmatprep.subr.bf16.mxu0 0
        %572 = vmatpush1.bf16.msra.mxu0 %v541
        %573 = vmatprep.subr.bf16.mxu0 0
        %574 = vmatpush2.bf16.msra.mxu0 0
        %575 = vmatprep.subr.bf16.mxu0 0
        %576 = vmatpush2.bf16.msra.mxu0 0
        %577 = vmatprep.subr.bf16.mxu0 0
        %578 = vmatpush2.bf16.msra.mxu0 0
        %579 = vmatprep.subr.bf16.mxu0 0
        %580 = vmatpush2.bf16.msra.mxu0 0
        %581 = vmatprep.subr.bf16.mxu0 0
        %582 = vmatpush2.bf16.msra.mxu0 0
        %583 = vmatprep.subr.bf16.mxu0 0
        %584 = vmatpush2.bf16.msra.mxu0 0
        %585 = vmatprep.subr.bf16.mxu0 0
        %586 = vmatpush2.bf16.msra.mxu0 0
        %587 = vmatprep.subr.bf16.mxu0 0
        %588 = vmatpush2.bf16.msra.mxu0 0
        %589 = vmatprep.mubr.bf16.mxu0 0
        %590 = vmatmul.mubr.bf16.gmra.mxu0 %v507
        %v591 = vpop.f32.mrf.mxu0
        %v592 = vadd.f32 0.0, %v591
        %v593 = vpop.f32.mrf.mxu0
        %v594 = vpop.f32.mrf.mxu0
        %v595 = vadd.f32 0.0, %v594
        %v596 = vpop.f32.mrf.mxu0
        %597 = vdwg.mxu0
        %v598 = vadd.f32 %v483, %v592
        %v599 = vadd.f32 %v484, %v595
        %600 = vst [vmem:[#allocation2] sm:$0xff] %v598
        %601 = vst [vmem:[#allocation2 + $0x8] sm:$0xff] %v599
        // Predicated region
        $region124: #{forward.82} parent=110 // pred_check
          %p602 = pneg %p477
        $region125: #{forward.82} parent=110 // pred_check_branch
          %604 = sbr.rel (%p602) target = $region127
        $region126: #{forward.82} parent=110 // pred_region
          %v605 = vld [vmem:[#allocation2] sm:$0xff]
          %v606 = vld [vmem:[#allocation2 + $0x8] sm:$0xff]
          %v607 = vld [vmem:[%s470] sm:$0x1]
          %v609 = vlaneseq
          %v610 = vshrl.u32 %v609, 7
          %v611 = vsub.s32 0, %v610
          %v612 = vrot.slane %v607, %v611
          %v614 = vmul.f32 %v605, %v612
          %v615 = vmul.f32 %v606, %v612
          %v616 = vld [vmem:[%s473] sm:$0x1]
          %v618 = vlaneseq
          %v619 = vshrl.u32 %v618, 7
          %v620 = vsub.s32 0, %v619
          %v621 = vrot.slane %v616, %v620
          %v623 = vadd.f32 %v614, %v621
          %v624 = vadd.f32 %v615, %v621
          %v625 = vld [vmem:[%s416] sm:$0xff]
          %v626 = vld [vmem:[%s416 + $0x8] sm:$0xff]
          %v627 = vmul.f32 %v623, 0.2
          %v628 = vmul.f32 %v624, 0.2
          %v629 = vadd.f32 %v625, %v627
          %v630 = vadd.f32 %v626, %v628
          %631 = vst [vmem:[%s457] sm:$0xff] %v629
          %632 = vst [vmem:[%s457 + $0x8] sm:$0xff] %v630
        $region127: #{forward.82} parent=110 // pred_fallthru
          _
        %s633 = sand.u32 %s181, 1
        %s634 = sand.u32 %s181, 1
        %s635 = smul.addr %s634, 16
        %s636 = scalar_lea.vmem [#allocation5], %s635
        // Predicated region
        $region128: #{forward.82} parent=110 // pred_check
          %p637 = pneg %p191
        $region129: #{forward.82} parent=110 // pred_check_branch
          %639 = sbr.rel (%p637) target = $region131
        $region130: #{forward.82} parent=110 // pred_region
          %s640 = smul.u32 2, %s21
          %s641 = smul.addr %s640, 2
          %s642 = sadd.s32 %s22, %s641
          %s643 = smul.addr %s642, 8
          %s644 = scalar_lea.vmem %s5, %s643
          // Predicated region
          $region132: #{forward.82} parent=130 // pred_check
            _
          $region133: #{forward.82} parent=130 // pred_check_branch
            %646 = sbr.rel (0) target = $region135
          $region134: #{forward.82} parent=130 // pred_region
            // Predicated region
            $region136: #{forward.82} parent=134 // pred_check
              _
            $region137: #{forward.82} parent=134 // pred_check_branch
              %648 = sbr.rel (0) target = $region139
            $region138: #{forward.82} parent=134 // pred_region
              // Predicated region
              $region151: #{forward.82} parent=138 // pred_check
                _
              $region152: #{forward.82} parent=138 // pred_check_branch
                %666 = sbr.rel (0) target = $region154
              $region153: #{forward.82} parent=138 // pred_region
                loop: start=0, step=1, limit=1
                $region155: #{forward.82} parent=153 // loop_pre_header
                  _
                $region156: #{forward.82} parent=153 // loop_header
                  %s668 = sphi 0, %s672
                  %p669 = scmp.ge.s32.totalorder %s668, 1
                  %s673 = sphi %s636, %s636
                  %s674 = sphi %s644, %s644
                $region157: #{forward.82} parent=153 // loop_header_branch
                  %671 = sbr.rel (%p669) target = $region161
                $region158: #{forward.82} parent=153 // loop_body
                  %v675 = vld [vmem:[%s673] sm:$0xff]
                  %676 = vst [vmem:[%s674] sm:$0xff] %v675
                  %v677 = vld [vmem:[%s673 + $0x8] sm:$0xff]
                  %678 = vst [vmem:[%s674 + $0x10] sm:$0xff] %v677
                $region159: #{forward.82} parent=153 // loop_footer
                  %s672 = sadd.s32 1, %s668
                $region160: #{forward.82} parent=153 // loop_footer_branch
                  %667 = sbr.rel target = $region156
                $region161: #{forward.82} parent=153 // loop_exit
                  _
              $region154: #{forward.82} parent=138 // pred_fallthru
                _
              // Predicated region
              $region162: #{forward.82} parent=138 // pred_check
                _
              $region163: #{forward.82} parent=138 // pred_check_branch
                %680 = sbr.rel target = $region165
              $region164: #{forward.82} parent=138 // pred_region
                _
              $region165: #{forward.82} parent=138 // pred_fallthru
                _
            $region139: #{forward.82} parent=134 // pred_fallthru
              _
            // Predicated region
            $region140: #{forward.82} parent=134 // pred_check
              _
            $region141: #{forward.82} parent=134 // pred_check_branch
              %650 = sbr.rel target = $region143
            $region142: #{forward.82} parent=134 // pred_region
              %s652 = ssub.s32 256, 1
              loop: start=0, step=1, limit=1
              $region144: #{forward.82} parent=142 // loop_pre_header
                _
              $region145: #{forward.82} parent=142 // loop_header
                %s654 = sphi 0, %s658
                %p655 = scmp.ge.s32.totalorder %s654, 1
                %s659 = sphi %s636, %s636
                %s660 = sphi %s644, %s644
              $region146: #{forward.82} parent=142 // loop_header_branch
                %657 = sbr.rel (%p655) target = $region150
              $region147: #{forward.82} parent=142 // loop_body
                %v661 = vld [vmem:[%s659] sm:%s652]
                %662 = vst [vmem:[%s660] sm:%s652] %v661
                %v663 = vld [vmem:[%s659 + $0x8] sm:%s652]
                %664 = vst [vmem:[%s660 + $0x10] sm:%s652] %v663
              $region148: #{forward.82} parent=142 // loop_footer
                %s658 = sadd.s32 1, %s654
              $region149: #{forward.82} parent=142 // loop_footer_branch
                %653 = sbr.rel target = $region145
              $region150: #{forward.82} parent=142 // loop_exit
                _
            $region143: #{forward.82} parent=134 // pred_fallthru
              _
          $region135: #{forward.82} parent=130 // pred_fallthru
            _
          %681 = vnop
        $region131: #{forward.82} parent=110 // pred_fallthru
          _
      $region111: #{forward.82} parent=5 // pred_fallthru
        _
      %p682 = scmp.le.s32.totalorder 2, %s11
      // Predicated region
      $region166: #{forward.82} parent=5 // pred_check
        %p683 = pneg %p682
      $region167: #{forward.82} parent=5 // pred_check_branch
        %685 = sbr.rel (%p683) target = $region169
      $region168: #{forward.82} parent=5 // pred_region
        %s686 = ssub.s32 %s11, 2
        // Predicated region
        $region170: #{forward.82} parent=168 // pred_check
          %p687 = pneg %p197
        $region171: #{forward.82} parent=168 // pred_check_branch
          %689 = sbr.rel (%p687) target = $region173
        $region172: #{forward.82} parent=168 // pred_region
          %s690 = sand.u32 %s182, 1
          %s691 = sand.u32 %s182, 1
          %s692 = smul.addr %s691, 16
          %s693 = scalar_lea.vmem [#allocation5], %s692
        $region173: #{forward.82} parent=168 // pred_fallthru
          _
      $region169: #{forward.82} parent=5 // pred_fallthru
        _
    $region6: #{forward.82} parent=1 // loop_footer
      %s15 = sadd.s32 1, %s11
    $region7: #{forward.82} parent=1 // loop_footer_branch
      %10 = sbr.rel target = $region3
    $region8: #{forward.82} parent=1 // loop_exit
      _

// kernel: forward.78
$region0: #{forward.78}
  #allocation0 [shape = 'u32[]', space=smem, size = 0x4, offset = 0x4, fixed_abs, tag = 'smem constant byte address 0x4 - core index']
  #allocation1 [shape = 'u32[144,128]{1,0:T(1,128)}', space=vmem, size = 0x12000, scoped, tag = 'internal scratch']
  #allocation2 [shape = 'f32[16,128]{1,0:T(8,128)}', space=vmem, size = 0x2000, scoped, tag = 'scratch operand']
  %s0 = inlined_call_operand.vmem [shape: bf16[16,128], index: 0, kind: input, shape index: {}]
  %s1 = inlined_call_operand.vmem [shape: bf16[128,256], index: 1, kind: input, shape index: {}]
  %s2 = inlined_call_operand.vmem [shape: f32[1,256], index: 2, kind: input, shape index: {}]
  %s3 = inlined_call_operand.vmem [shape: f32[1,256], index: 3, kind: input, shape index: {}]
  %s4 = inlined_call_operand.vmem [shape: f32[16,256], index: 4, kind: input, shape index: {}]
  %s5 = inlined_call_operand.vmem [shape: f32[16,256], index: 5, kind: output, shape index: {}]
  %s6 = sld [smem:[#allocation0]]
  $region174: #{forward.78} parent=0
    _
  %s8 = ssub.s32 1, %s6
  %s9 = scalar_select 0, %s8, %s6
  $region1: #{forward.78} parent=0
    #allocation3 [shape = 'u8[65536]{0}', space=vmem, size = 0x10000, scoped, tag = 'input window, operand 1']
    #allocation4 [shape = 'u8[16384]{0}', space=vmem, size = 0x4000, scoped, tag = 'input window, operand 4']
    #allocation5 [shape = 'u8[16384]{0}', space=vmem, size = 0x4000, scoped, tag = 'output window, operand 0']
    loop: start=0, step=1, limit=4
    $region2: #{forward.78} parent=1 // loop_pre_header
      _
    $region3: #{forward.78} parent=1 // loop_header
      %s11 = sphi 0, %s15
      %p12 = scmp.ge.s32.totalorder %s11, 4
      %s18 = sphi 0, %s37
      %s19 = sphi 0, %s33
      %s20 = sphi 0, %s29
      %s21 = sphi 0, %s18
      %s22 = sphi 0, %s19
      %s23 = sphi 0, %s20
      %s24 = sphi 0, %s21
      %s25 = sphi 0, %s22
      %s26 = sphi 0, %s23
      %s42 = sphi 0, %s44
      %s45 = sphi 0, %s42
      %s46 = sphi 0, %s45
      %s62 = sphi 0, %s46
      %s70 = sphi 0, %s72
      %s73 = sphi 0, %s70
      %s74 = sphi 0, %s73
      %s90 = sphi 0, %s74
      %s96 = sphi 0, %s98
      %s99 = sphi 0, %s96
      %s100 = sphi 0, %s99
      %s116 = sphi 0, %s100
      %s122 = sphi 0, %s124
      %s125 = sphi 0, %s122
      %s126 = sphi 0, %s125
      %s142 = sphi 0, %s126
      %s150 = sphi 0, %s152
      %s153 = sphi 0, %s150
      %s154 = sphi 0, %s153
      %s170 = sphi 0, %s154
      %s178 = sphi 0, %s180
      %s181 = sphi 0, %s178
      %s182 = sphi 0, %s181
      %s198 = sphi 0, %s182
    $region4: #{forward.78} parent=1 // loop_header_branch
      %14 = sbr.rel (%p12) target = $region8
    $region5: #{forward.78} parent=1 // loop_body
      %s16 = ssub.s32 %s11, 1
      %s17 = ssub.s32 %s11, 2
      %s27 = sadd.s32 1, %s20
      %p28 = scmp.ge.s32.totalorder %s27, 1
      %s29 = scalar_select %p28, 0, %s27
      %s30 = sadd.s32 1, %s19
      %s31 = scalar_select %p28, %s30, %s19
      %p32 = scmp.ge.s32.totalorder %s31, 2
      %s33 = scalar_select %p32, 0, %s31
      %s34 = sadd.s32 1, %s18
      %s35 = scalar_select %p32, %s34, %s18
      %p36 = scmp.ge.s32.totalorder %s35, 1
      %s37 = scalar_select %p36, 0, %s35
      %s38 = ssub.s32 %s18, %s37
      %s39 = ssub.s32 %s20, %s29
      %s40 = sor.u32 %s38, %s39
      %p41 = scmp.eq.s32.totalorder %s40, 0
      %s43 = sadd.s32 %s42, 1
      %s44 = scalar_select %p41, %s42, %s43
      %p47 = pneg %p41
      %p48 = scmp.eq.s32.totalorder %s11, 1
      %p49 = por %p47, %p48
      %p50 = scmp.ne.s32.totalorder %s42, %s45
      %p51 = scmp.eq.s32.totalorder %s11, 0
      %p52 = por %p50, %p51
      %p53 = scmp.ne.s32.totalorder %s42, %s45
      %p54 = scmp.eq.s32.totalorder %s16, 1
      %p55 = por %p53, %p54
      %p56 = scmp.ne.s32.totalorder %s45, %s46
      %p57 = scmp.eq.s32.totalorder %s16, 0
      %p58 = por %p56, %p57
      %p59 = scmp.ne.s32.totalorder %s45, %s46
      %p60 = scmp.eq.s32.totalorder %s17, 1
      %p61 = por %p59, %p60
      %p63 = scmp.ne.s32.totalorder %s46, %s62
      %p64 = scmp.eq.s32.totalorder %s17, 0
      %p65 = por %p63, %p64
      %s66 = ssub.s32 %s20, %s29
      %s67 = ssub.s32 %s19, %s33
      %s68 = sor.u32 %s66, %s67
      %p69 = scmp.eq.s32.totalorder %s68, 0
      %s71 = sadd.s32 %s70, 1
      %s72 = scalar_select %p69, %s70, %s71
      %p75 = pneg %p69
      %p76 = scmp.eq.s32.totalorder %s11, 1
      %p77 = por %p75, %p76
      %p78 = scmp.ne.s32.totalorder %s70, %s73
      %p79 = scmp.eq.s32.totalorder %s11, 0
      %p80 = por %p78, %p79
      %p81 = scmp.ne.s32.totalorder %s70, %s73
      %p82 = scmp.eq.s32.totalorder %s16, 1
      %p83 = por %p81, %p82
      %p84 = scmp.ne.s32.totalorder %s73, %s74
      %p85 = scmp.eq.s32.totalorder %s16, 0
      %p86 = por %p84, %p85
      %p87 = scmp.ne.s32.totalorder %s73, %s74
      %p88 = scmp.eq.s32.totalorder %s17, 1
      %p89 = por %p87, %p88
      %p91 = scmp.ne.s32.totalorder %s74, %s90
      %p92 = scmp.eq.s32.totalorder %s17, 0
      %p93 = por %p91, %p92
      %s94 = ssub.s32 %s19, %s33
      %p95 = scmp.eq.s32.totalorder %s94, 0
      %s97 = sadd.s32 %s96, 1
      %s98 = scalar_select %p95, %s96, %s97
      %p101 = pneg %p95
      %p102 = scmp.eq.s32.totalorder %s11, 1
      %p103 = por %p101, %p102
      %p104 = scmp.ne.s32.totalorder %s96, %s99
      %p105 = scmp.eq.s32.totalorder %s11, 0
      %p106 = por %p104, %p105
      %p107 = scmp.ne.s32.totalorder %s96, %s99
      %p108 = scmp.eq.s32.totalorder %s16, 1
      %p109 = por %p107, %p108
      %p110 = scmp.ne.s32.totalorder %s99, %s100
      %p111 = scmp.eq.s32.totalorder %s16, 0
      %p112 = por %p110, %p111
      %p113 = scmp.ne.s32.totalorder %s99, %s100
      %p114 = scmp.eq.s32.totalorder %s17, 1
      %p115 = por %p113, %p114
      %p117 = scmp.ne.s32.totalorder %s100, %s116
      %p118 = scmp.eq.s32.totalorder %s17, 0
      %p119 = por %p117, %p118
      %s120 = ssub.s32 %s19, %s33
      %p121 = scmp.eq.s32.totalorder %s120, 0
      %s123 = sadd.s32 %s122, 1
      %s124 = scalar_select %p121, %s122, %s123
      %p127 = pneg %p121
      %p128 = scmp.eq.s32.totalorder %s11, 1
      %p129 = por %p127, %p128
      %p130 = scmp.ne.s32.totalorder %s122, %s125
      %p131 = scmp.eq.s32.totalorder %s11, 0
      %p132 = por %p130, %p131
      %p133 = scmp.ne.s32.totalorder %s122, %s125
      %p134 = scmp.eq.s32.totalorder %s16, 1
      %p135 = por %p133, %p134
      %p136 = scmp.ne.s32.totalorder %s125, %s126
      %p137 = scmp.eq.s32.totalorder %s16, 0
      %p138 = por %p136, %p137
      %p139 = scmp.ne.s32.totalorder %s125, %s126
      %p140 = scmp.eq.s32.totalorder %s17, 1
      %p141 = por %p139, %p140
      %p143 = scmp.ne.s32.totalorder %s126, %s142
      %p144 = scmp.eq.s32.totalorder %s17, 0
      %p145 = por %p143, %p144
      %s146 = ssub.s32 %s18, %s37
      %s147 = ssub.s32 %s19, %s33
      %s148 = sor.u32 %s146, %s147
      %p149 = scmp.eq.s32.totalorder %s148, 0
      %s151 = sadd.s32 %s150, 1
      %s152 = scalar_select %p149, %s150, %s151
      %p155 = pneg %p149
      %p156 = scmp.eq.s32.totalorder %s11, 1
      %p157 = por %p155, %p156
      %p158 = scmp.ne.s32.totalorder %s150, %s153
      %p159 = scmp.eq.s32.totalorder %s11, 0
      %p160 = por %p158, %p159
      %p161 = scmp.ne.s32.totalorder %s150, %s153
      %p162 = scmp.eq.s32.totalorder %s16, 1
      %p163 = por %p161, %p162
      %p164 = scmp.ne.s32.totalorder %s153, %s154
      %p165 = scmp.eq.s32.totalorder %s16, 0
      %p166 = por %p164, %p165
      %p167 = scmp.ne.s32.totalorder %s153, %s154
      %p168 = scmp.eq.s32.totalorder %s17, 1
      %p169 = por %p167, %p168
      %p171 = scmp.ne.s32.totalorder %s154, %s170
      %p172 = scmp.eq.s32.totalorder %s17, 0
      %p173 = por %p171, %p172
      %s174 = ssub.s32 %s18, %s37
      %s175 = ssub.s32 %s19, %s33
      %s176 = sor.u32 %s174, %s175
      %p177 = scmp.eq.s32.totalorder %s176, 0
      %s179 = sadd.s32 %s178, 1
      %s180 = scalar_select %p177, %s178, %s179
      %p183 = pneg %p177
      %p184 = scmp.eq.s32.totalorder %s11, 1
      %p185 = por %p183, %p184
      %p186 = scmp.ne.s32.totalorder %s178, %s181
      %p187 = scmp.eq.s32.totalorder %s11, 0
      %p188 = por %p186, %p187
      %p189 = scmp.ne.s32.totalorder %s178, %s181
      %p190 = scmp.eq.s32.totalorder %s16, 1
      %p191 = por %p189, %p190
      %p192 = scmp.ne.s32.totalorder %s181, %s182
      %p193 = scmp.eq.s32.totalorder %s16, 0
      %p194 = por %p192, %p193
      %p195 = scmp.ne.s32.totalorder %s181, %s182
      %p196 = scmp.eq.s32.totalorder %s17, 1
      %p197 = por %p195, %p196
      %p199 = scmp.ne.s32.totalorder %s182, %s198
      %p200 = scmp.eq.s32.totalorder %s17, 0
      %p201 = por %p199, %p200
      %p202 = scmp.le.s32.totalorder 1, %s11
      %p203 = scmp.lt.s32.totalorder %s11, 3
      %p204 = pnand %p202, %p203
      %p205 = pneg %p204
      // Predicated region
      $region9: #{forward.78} parent=5 // pred_check
        _
      $region10: #{forward.78} parent=5 // pred_check_branch
        %207 = sbr.rel (%p204) target = $region12
      $region11: #{forward.78} parent=5 // pred_region
        %s208 = ssub.s32 %s11, 1
        // Predicated region
        $region13: #{forward.78} parent=11 // pred_check
          %p209 = pneg %p58
        $region14: #{forward.78} parent=11 // pred_check_branch
          %211 = sbr.rel (%p209) target = $region16
        $region15: #{forward.78} parent=11 // pred_region
          %s212 = smul.u32 2, %s21
          %p213 = scmp.lt.s32.totalorder %s212, 1
          %s214 = scalar_select %p213, %s212, 1
          %p215 = scmp.lt.s32.totalorder %s23, 0
          %s216 = scalar_select %p215, %s23, 0
          %s217 = sadd.s32 %s216, %s214
          %s218 = smul.addr %s217, 4
          %s219 = scalar_lea.vmem %s0, %s218
          %s220 = smul.u32 2, %s21
        $region16: #{forward.78} parent=11 // pred_fallthru
          _
      $region12: #{forward.78} parent=5 // pred_fallthru
        _
      %p221 = scmp.lt.s32.totalorder %s11, 2
      // Predicated region
      $region17: #{forward.78} parent=5 // pred_check
        %p222 = pneg %p221
      $region18: #{forward.78} parent=5 // pred_check_branch
        %224 = sbr.rel (%p222) target = $region20
      $region19: #{forward.78} parent=5 // pred_region
        // Predicated region
        $region21: #{forward.78} parent=19 // pred_check
          %p225 = pneg %p80
        $region22: #{forward.78} parent=19 // pred_check_branch
          %227 = sbr.rel (%p225) target = $region24
        $region23: #{forward.78} parent=19 // pred_region
          %s228 = sand.u32 %s70, 1
          %s229 = sand.u32 %s70, 1
          %s230 = smul.addr %s229, 64
          %s231 = scalar_lea.vmem [#allocation3], %s230
          %s232 = smul.u32 16, %s20
          %s233 = smul.addr %s232, 2
          %s234 = sadd.s32 %s19, %s233
          %s235 = smul.addr %s234, 4
          %s236 = scalar_lea.vmem %s1, %s235
          // Predicated region
          $region25: #{forward.78} parent=23 // pred_check
            _
          $region26: #{forward.78} parent=23 // pred_check_branch
            %238 = sbr.rel (0) target = $region28
          $region27: #{forward.78} parent=23 // pred_region
            // Predicated region
            $region29: #{forward.78} parent=27 // pred_check
              _
            $region30: #{forward.78} parent=27 // pred_check_branch
              %240 = sbr.rel target = $region32
            $region31: #{forward.78} parent=27 // pred_region
              // Predicated region
              $region44: #{forward.78} parent=31 // pred_check
                _
              $region45: #{forward.78} parent=31 // pred_check_branch
                %286 = sbr.rel (0) target = $region47
              $region46: #{forward.78} parent=31 // pred_region
                loop: start=0, step=1, limit=1
                $region48: #{forward.78} parent=46 // loop_pre_header
                  _
                $region49: #{forward.78} parent=46 // loop_header
                  %s288 = sphi 0, %s292
                  %p289 = scmp.ge.s32.totalorder %s288, 1
                  %s293 = sphi %s236, %s236
                  %s294 = sphi %s231, %s231
                $region50: #{forward.78} parent=46 // loop_header_branch
                  %291 = sbr.rel (%p289) target = $region54
                $region51: #{forward.78} parent=46 // loop_body
                  _
                $region52: #{forward.78} parent=46 // loop_footer
                  %s292 = sadd.s32 1, %s288
                $region53: #{forward.78} parent=46 // loop_footer_branch
                  %287 = sbr.rel target = $region49
                $region54: #{forward.78} parent=46 // loop_exit
                  _
                %s296 = ssub.s32 16, 1
                loop: start=0, step=1, limit=1
                $region55: #{forward.78} parent=46 // loop_pre_header
                  _
                $region56: #{forward.78} parent=46 // loop_header
                  %s298 = sphi 0, %s302
                  %p299 = scmp.ge.s32.totalorder %s298, 1
                  %s303 = sphi %s236, %s236
                  %s304 = sphi %s231, %s231
                $region57: #{forward.78} parent=46 // loop_header_branch
                  %301 = sbr.rel (%p299) target = $region61
                $region58: #{forward.78} parent=46 // loop_body
                  %v305 = vld [vmem:[%s303] sm:%s296]
                  %306 = vst [vmem:[%s304] sm:%s296] %v305
                  %v307 = vld [vmem:[%s303 + $0x8] sm:%s296]
                  %308 = vst [vmem:[%s304 + $0x4] sm:%s296] %v307
                  %v309 = vld [vmem:[%s303 + $0x10] sm:%s296]
                  %310 = vst [vmem:[%s304 + $0x8] sm:%s296] %v309
                  %v311 = vld [vmem:[%s303 + $0x18] sm:%s296]
                  %312 = vst [vmem:[%s304 + $0xc] sm:%s296] %v311
                  %v313 = vld [vmem:[%s303 + $0x20] sm:%s296]
                  %314 = vst [vmem:[%s304 + $0x10] sm:%s296] %v313
                  %v315 = vld [vmem:[%s303 + $0x28] sm:%s296]
                  %316 = vst [vmem:[%s304 + $0x14] sm:%s296] %v315
                  %v317 = vld [vmem:[%s303 + $0x30] sm:%s296]
                  %318 = vst [vmem:[%s304 + $0x18] sm:%s296] %v317
                  %v319 = vld [vmem:[%s303 + $0x38] sm:%s296]
                  %320 = vst [vmem:[%s304 + $0x1c] sm:%s296] %v319
                  %v321 = vld [vmem:[%s303 + $0x40] sm:%s296]
                  %322 = vst [vmem:[%s304 + $0x20] sm:%s296] %v321
                  %v323 = vld [vmem:[%s303 + $0x48] sm:%s296]
                  %324 = vst [vmem:[%s304 + $0x24] sm:%s296] %v323
                  %v325 = vld [vmem:[%s303 + $0x50] sm:%s296]
                  %326 = vst [vmem:[%s304 + $0x28] sm:%s296] %v325
                  %v327 = vld [vmem:[%s303 + $0x58] sm:%s296]
                  %328 = vst [vmem:[%s304 + $0x2c] sm:%s296] %v327
                  %v329 = vld [vmem:[%s303 + $0x60] sm:%s296]
                  %330 = vst [vmem:[%s304 + $0x30] sm:%s296] %v329
                  %v331 = vld [vmem:[%s303 + $0x68] sm:%s296]
                  %332 = vst [vmem:[%s304 + $0x34] sm:%s296] %v331
                  %v333 = vld [vmem:[%s303 + $0x70] sm:%s296]
                  %334 = vst [vmem:[%s304 + $0x38] sm:%s296] %v333
                  %v335 = vld [vmem:[%s303 + $0x78] sm:%s296]
                  %336 = vst [vmem:[%s304 + $0x3c] sm:%s296] %v335
                $region59: #{forward.78} parent=46 // loop_footer
                  %s302 = sadd.s32 1, %s298
                $region60: #{forward.78} parent=46 // loop_footer_branch
                  %297 = sbr.rel target = $region56
                $region61: #{forward.78} parent=46 // loop_exit
                  _
              $region47: #{forward.78} parent=31 // pred_fallthru
                _
            $region32: #{forward.78} parent=27 // pred_fallthru
              _
            // Predicated region
            $region33: #{forward.78} parent=27 // pred_check
              _
            $region34: #{forward.78} parent=27 // pred_check_branch
              %242 = sbr.rel (0) target = $region36
            $region35: #{forward.78} parent=27 // pred_region
              %s244 = ssub.s32 16, 1
              loop: start=0, step=1, limit=1
              $region37: #{forward.78} parent=35 // loop_pre_header
                _
              $region38: #{forward.78} parent=35 // loop_header
                %s246 = sphi 0, %s250
                %p247 = scmp.ge.s32.totalorder %s246, 1
                %s251 = sphi %s236, %s236
                %s252 = sphi %s231, %s231
              $region39: #{forward.78} parent=35 // loop_header_branch
                %249 = sbr.rel (%p247) target = $region43
              $region40: #{forward.78} parent=35 // loop_body
                %v253 = vld [vmem:[%s251] sm:%s244]
                %254 = vst [vmem:[%s252] sm:%s244] %v253
                %v255 = vld [vmem:[%s251 + $0x8] sm:%s244]
                %256 = vst [vmem:[%s252 + $0x4] sm:%s244] %v255
                %v257 = vld [vmem:[%s251 + $0x10] sm:%s244]
                %258 = vst [vmem:[%s252 + $0x8] sm:%s244] %v257
                %v259 = vld [vmem:[%s251 + $0x18] sm:%s244]
                %260 = vst [vmem:[%s252 + $0xc] sm:%s244] %v259
                %v261 = vld [vmem:[%s251 + $0x20] sm:%s244]
                %262 = vst [vmem:[%s252 + $0x10] sm:%s244] %v261
                %v263 = vld [vmem:[%s251 + $0x28] sm:%s244]
                %264 = vst [vmem:[%s252 + $0x14] sm:%s244] %v263
                %v265 = vld [vmem:[%s251 + $0x30] sm:%s244]
                %266 = vst [vmem:[%s252 + $0x18] sm:%s244] %v265
                %v267 = vld [vmem:[%s251 + $0x38] sm:%s244]
                %268 = vst [vmem:[%s252 + $0x1c] sm:%s244] %v267
                %v269 = vld [vmem:[%s251 + $0x40] sm:%s244]
                %270 = vst [vmem:[%s252 + $0x20] sm:%s244] %v269
                %v271 = vld [vmem:[%s251 + $0x48] sm:%s244]
                %272 = vst [vmem:[%s252 + $0x24] sm:%s244] %v271
                %v273 = vld [vmem:[%s251 + $0x50] sm:%s244]
                %274 = vst [vmem:[%s252 + $0x28] sm:%s244] %v273
                %v275 = vld [vmem:[%s251 + $0x58] sm:%s244]
                %276 = vst [vmem:[%s252 + $0x2c] sm:%s244] %v275
                %v277 = vld [vmem:[%s251 + $0x60] sm:%s244]
                %278 = vst [vmem:[%s252 + $0x30] sm:%s244] %v277
                %v279 = vld [vmem:[%s251 + $0x68] sm:%s244]
                %280 = vst [vmem:[%s252 + $0x34] sm:%s244] %v279
                %v281 = vld [vmem:[%s251 + $0x70] sm:%s244]
                %282 = vst [vmem:[%s252 + $0x38] sm:%s244] %v281
                %v283 = vld [vmem:[%s251 + $0x78] sm:%s244]
                %284 = vst [vmem:[%s252 + $0x3c] sm:%s244] %v283
              $region41: #{forward.78} parent=35 // loop_footer
                %s250 = sadd.s32 1, %s246
              $region42: #{forward.78} parent=35 // loop_footer_branch
                %245 = sbr.rel target = $region38
              $region43: #{forward.78} parent=35 // loop_exit
                _
            $region36: #{forward.78} parent=27 // pred_fallthru
              _
          $region28: #{forward.78} parent=23 // pred_fallthru
            _
          %337 = vnop
        $region24: #{forward.78} parent=19 // pred_fallthru
          _
        // Predicated region
        $region62: #{forward.78} parent=19 // pred_check
          %p338 = pneg %p106
        $region63: #{forward.78} parent=19 // pred_check_branch
          %340 = sbr.rel (%p338) target = $region65
        $region64: #{forward.78} parent=19 // pred_region
          %p341 = scmp.lt.s32.totalorder %s19, 1
          %s342 = scalar_select %p341, %s19, 1
          %s343 = scalar_lea.vmem %s2, %s342
        $region65: #{forward.78} parent=19 // pred_fallthru
          _
        // Predicated region
        $region66: #{forward.78} parent=19 // pred_check
          %p344 = pneg %p132
        $region67: #{forward.78} parent=19 // pred_check_branch
          %346 = sbr.rel (%p344) target = $region69
        $region68: #{forward.78} parent=19 // pred_region
          %p347 = scmp.lt.s32.totalorder %s19, 1
          %s348 = scalar_select %p347, %s19, 1
          %s349 = scalar_lea.vmem %s3, %s348
        $region69: #{forward.78} parent=19 // pred_fallthru
          _
        // Predicated region
        $region70: #{forward.78} parent=19 // pred_check
          %p350 = pneg %p160
        $region71: #{forward.78} parent=19 // pred_check_branch
          %352 = sbr.rel (%p350) target = $region73
        $region72: #{forward.78} parent=19 // pred_region
          %s353 = sand.u32 %s150, 1
          %s354 = sand.u32 %s150, 1
          %s355 = smul.addr %s354, 16
          %s356 = scalar_lea.vmem [#allocation4], %s355
          %s357 = smul.u32 2, %s18
          %s358 = smul.addr %s357, 2
          %s359 = sadd.s32 %s19, %s358
          %s360 = smul.addr %s359, 8
          %s361 = scalar_lea.vmem %s4, %s360
          // Predicated region
          $region74: #{forward.78} parent=72 // pred_check
            _
          $region75: #{forward.78} parent=72 // pred_check_branch
            %363 = sbr.rel (0) target = $region77
          $region76: #{forward.78} parent=72 // pred_region
            // Predicated region
            $region78: #{forward.78} parent=76 // pred_check
              _
            $region79: #{forward.78} parent=76 // pred_check_branch
              %365 = sbr.rel (0) target = $region81
            $region80: #{forward.78} parent=76 // pred_region
              // Predicated region
              $region93: #{forward.78} parent=80 // pred_check
                _
              $region94: #{forward.78} parent=80 // pred_check_branch
                %383 = sbr.rel (0) target = $region96
              $region95: #{forward.78} parent=80 // pred_region
                loop: start=0, step=1, limit=1
                $region97: #{forward.78} parent=95 // loop_pre_header
                  _
                $region98: #{forward.78} parent=95 // loop_header
                  %s385 = sphi 0, %s389
                  %p386 = scmp.ge.s32.totalorder %s385, 1
                  %s390 = sphi %s361, %s361
                  %s391 = sphi %s356, %s356
                $region99: #{forward.78} parent=95 // loop_header_branch
                  %388 = sbr.rel (%p386) target = $region103
                $region100: #{forward.78} parent=95 // loop_body
                  %v392 = vld [vmem:[%s390] sm:$0xff]
                  %393 = vst [vmem:[%s391] sm:$0xff] %v392
                  %v394 = vld [vmem:[%s390 + $0x10] sm:$0xff]
                  %395 = vst [vmem:[%s391 + $0x8] sm:$0xff] %v394
                $region101: #{forward.78} parent=95 // loop_footer
                  %s389 = sadd.s32 1, %s385
                $region102: #{forward.78} parent=95 // loop_footer_branch
                  %384 = sbr.rel target = $region98
                $region103: #{forward.78} parent=95 // loop_exit
                  _
              $region96: #{forward.78} parent=80 // pred_fallthru
                _
              // Predicated region
              $region104: #{forward.78} parent=80 // pred_check
                _
              $region105: #{forward.78} parent=80 // pred_check_branch
                %397 = sbr.rel target = $region107
              $region106: #{forward.78} parent=80 // pred_region
                _
              $region107: #{forward.78} parent=80 // pred_fallthru
                _
            $region81: #{forward.78} parent=76 // pred_fallthru
              _
            // Predicated region
            $region82: #{forward.78} parent=76 // pred_check
              _
            $region83: #{forward.78} parent=76 // pred_check_branch
              %367 = sbr.rel target = $region85
            $region84: #{forward.78} parent=76 // pred_region
              %s369 = ssub.s32 256, 1
              loop: start=0, step=1, limit=1
              $region86: #{forward.78} parent=84 // loop_pre_header
                _
              $region87: #{forward.78} parent=84 // loop_header
                %s371 = sphi 0, %s375
                %p372 = scmp.ge.s32.totalorder %s371, 1
                %s376 = sphi %s361, %s361
                %s377 = sphi %s356, %s356
              $region88: #{forward.78} parent=84 // loop_header_branch
                %374 = sbr.rel (%p372) target = $region92
              $region89: #{forward.78} parent=84 // loop_body
                %v378 = vld [vmem:[%s376] sm:%s369]
                %379 = vst [vmem:[%s377] sm:%s369] %v378
                %v380 = vld [vmem:[%s376 + $0x10] sm:%s369]
                %381 = vst [vmem:[%s377 + $0x8] sm:%s369] %v380
              $region90: #{forward.78} parent=84 // loop_footer
                %s375 = sadd.s32 1, %s371
              $region91: #{forward.78} parent=84 // loop_footer_branch
                %370 = sbr.rel target = $region87
              $region92: #{forward.78} parent=84 // loop_exit
                _
            $region85: #{forward.78} parent=76 // pred_fallthru
              _
          $region77: #{forward.78} parent=72 // pred_fallthru
            _
          %398 = vnop
        $region73: #{forward.78} parent=19 // pred_fallthru
          _
      $region20: #{forward.78} parent=5 // pred_fallthru
        _
      %p399 = scmp.le.s32.totalorder 1, %s11
      %p400 = scmp.lt.s32.totalorder %s11, 3
      %p401 = pnand %p399, %p400
      %p402 = pneg %p401
      // Predicated region
      $region108: #{forward.78} parent=5 // pred_check
        _
      $region109: #{forward.78} parent=5 // pred_check_branch
        %404 = sbr.rel (%p401) target = $region111
      $region110: #{forward.78} parent=5 // pred_region
        %s405 = ssub.s32 %s11, 1
        %s406 = sand.u32 %s73, 1
        %s407 = sand.u32 %s73, 1
        %s408 = smul.addr %s407, 64
        %s409 = scalar_lea.vmem [#allocation3], %s408
        // Predicated region
        $region112: #{forward.78} parent=110 // pred_check
          %p410 = pneg %p86
        $region113: #{forward.78} parent=110 // pred_check_branch
          %412 = sbr.rel (%p410) target = $region115
        $region114: #{forward.78} parent=110 // pred_region
          _
        $region115: #{forward.78} parent=110 // pred_fallthru
          _
        %s413 = sand.u32 %s153, 1
        %s414 = sand.u32 %s153, 1
        %s415 = smul.addr %s414, 16
        %s416 = scalar_lea.vmem [#allocation4], %s415
        // Predicated region
        $region116: #{forward.78} parent=110 // pred_check
          %p417 = pneg %p166
        $region117: #{forward.78} parent=110 // pred_check_branch
          %419 = sbr.rel (%p417) target = $region119
        $region118: #{forward.78} parent=110 // pred_region
          _
        $region119: #{forward.78} parent=110 // pred_fallthru
          _
        %s420 = smul.u32 2, %s21
        %p421 = scmp.lt.s32.totalorder %s420, 1
        %s422 = scalar_select %p421, %s420, 1
        %p423 = scmp.lt.s32.totalorder %s23, 0
        %s424 = scalar_select %p423, %s23, 0
        %s425 = sadd.s32 %s424, %s422
        %s426 = smul.addr %s425, 4
        %s427 = scalar_lea.vmem %s0, %s426
        %p428 = pneg %p58
        %p429 = pneg %p55
        %s430 = sand.u32 %s73, 1
        %s431 = sand.u32 %s73, 1
        %s432 = smul.addr %s431, 64
        %s433 = scalar_lea.vmem [#allocation3], %s432
        %p434 = pneg %p86
        %p435 = pneg %p83
        %p436 = scmp.lt.s32.totalorder %s22, 1
        %s437 = scalar_select %p436, %s22, 1
        %s438 = scalar_lea.vmem %s2, %s437
        %p439 = pneg %p112
        %p440 = pneg %p109
        %p441 = scmp.lt.s32.totalorder %s22, 1
        %s442 = scalar_select %p441, %s22, 1
        %s443 = scalar_lea.vmem %s3, %s442
        %p444 = pneg %p138
        %p445 = pneg %p135
        %s446 = sand.u32 %s153, 1
        %s447 = sand.u32 %s153, 1
        %s448 = smul.addr %s447, 16
        %s449 = scalar_lea.vmem [#allocation4], %s448
        %p450 = pneg %p166
        %p451 = pneg %p163
        %p452 = pneg %p194
        %p453 = pneg %p191
        %s454 = sand.u32 %s181, 1
        %s455 = sand.u32 %s181, 1
        %s456 = smul.addr %s455, 16
        %s457 = scalar_lea.vmem [#allocation5], %s456
        %s458 = smul.u32 2, %s21
        %p459 = scmp.lt.s32.totalorder %s458, 1
        %s460 = scalar_select %p459, %s458, 1
        %p461 = scmp.lt.s32.totalorder %s23, 0
        %s462 = scalar_select %p461, %s23, 0
        %s463 = sadd.s32 %s462, %s460
        %s464 = smul.addr %s463, 4
        %s465 = scalar_lea.vmem %s0, %s464
        %s466 = smul.u32 2, %s21
        %s467 = smul.u32 16, %s23
        %p468 = scmp.lt.s32.totalorder %s22, 1
        %s469 = scalar_select %p468, %s22, 1
        %s470 = scalar_lea.vmem %s2, %s469
        %p471 = scmp.lt.s32.totalorder %s22, 1
        %s472 = scalar_select %p471, %s22, 1
        %s473 = scalar_lea.vmem %s3, %s472
        %s474 = smul.u32 2, %s21
        %s475 = smul.u32 2, %s21
        %p477 = scmp.eq.s32.totalorder %s23, 0
        // Predicated region
        $region120: #{forward.78} parent=110 // pred_check
          %p478 = pneg %p477
        $region121: #{forward.78} parent=110 // pred_check_branch
          %480 = sbr.rel (%p478) target = $region123
        $region122: #{forward.78} parent=110 // pred_region
          %481 = vst [vmem:[#allocation2] sm:$0xff] 0.0
          %482 = vst [vmem:[#allocation2 + $0x8] sm:$0xff] 0.0
        $region123: #{forward.78} parent=110 // pred_fallthru
          _
        %v483 = vld [vmem:[#allocation2] sm:$0xff]
        %v484 = vld [vmem:[#allocation2 + $0x8] sm:$0xff]
        %v485 = vld [vmem:[%s465] sm:$0xf]
        %v486 = vld [vmem:[%s465 + $0x4] sm:$0xf]
        %v487 = vld [vmem:[%s409] sm:$0xf]
        %v488 = vld [vmem:[%s409 + $0x4] sm:$0xf]
        %v489 = vld [vmem:[%s409 + $0x8] sm:$0xf]
        %v490 = vld [vmem:[%s409 + $0xc] sm:$0xf]
        %v491 = vld [vmem:[%s409 + $0x10] sm:$0xf]
        %v492 = vld [vmem:[%s409 + $0x14] sm:$0xf]
        %v493 = vld [vmem:[%s409 + $0x18] sm:$0xf]
        %v494 = vld [vmem:[%s409 + $0x1c] sm:$0xf]
        %v495 = vld [vmem:[%s409 + $0x20] sm:$0xf]
        %v496 = vld [vmem:[%s409 + $0x24] sm:$0xf]
        %v497 = vld [vmem:[%s409 + $0x28] sm:$0xf]
        %v498 = vld [vmem:[%s409 + $0x2c] sm:$0xf]
        %v499 = vld [vmem:[%s409 + $0x30] sm:$0xf]
        %v500 = vld [vmem:[%s409 + $0x34] sm:$0xf]
        %v501 = vld [vmem:[%s409 + $0x38] sm:$0xf]
        %v502 = vld [vmem:[%s409 + $0x3c] sm:$0xf]
        %v505 = vunpack.c.l.b16 %v485
        %v506 = vunpack.c.l.b16 %v486
        %v507 = vpack.c.b16 %v506, %v505
        %v525 = vunpack.c.l.b16 %v487
        %v526 = vunpack.c.l.b16 %v488
        %v527 = vunpack.c.l.b16 %v489
        %v528 = vunpack.c.l.b16 %v490
        %v529 = vunpack.c.l.b16 %v491
        %v530 = vunpack.c.l.b16 %v492
        %v531 = vunpack.c.l.b16 %v493
        %v532 = vunpack.c.l.b16 %v494
        %v533 = vunpack.c.l.b16 %v495
        %v534 = vunpack.c.l.b16 %v496
        %v535 = vunpack.c.l.b16 %v497
        %v536 = vunpack.c.l.b16 %v498
        %v537 = vunpack.c.l.b16 %v499
        %v538 = vunpack.c.l.b16 %v500
        %v539 = vunpack.c.l.b16 %v501
        %v540 = vunpack.c.l.b16 %v502
        %v541 = vpack.c.b16 %v526, %v525
        %v542 = vpack.c.b16 %v528, %v527
        %v543 = vpack.c.b16 %v530, %v529
        %v544 = vpack.c.b16 %v532, %v531
        %v545 = vpack.c.b16 %v534, %v533
        %v546 = vpack.c.b16 %v536, %v535
        %v547 = vpack.c.b16 %v538, %v537
        %v548 = vpack.c.b16 %v540, %v539
        %557 = vmatprep.subr.bf16.mxu0 0
        %558 = vmatpush1.bf16.msra.mxu0 %v548
        %559 = vmatprep.subr.bf16.mxu0 0
        %560 = vmatpush1.bf16.msra.mxu0 %v547
        %561 = vmatprep.subr.bf16.mxu0 0
        %562 = vmatpush1.bf16.msra.mxu0 %v546
        %563 = vmatprep.subr.bf16.mxu0 0
        %564 = vmatpush1.bf16.msra.mxu0 %v545
        %565 = vmatprep.subr.bf16.mxu0 0
        %566 = vmatpush1.bf16.msra.mxu0 %v544
        %567 = vmatprep.subr.bf16.mxu0 0
        %568 = vmatpush1.bf16.msra.mxu0 %v543
        %569 = vmatprep.subr.bf16.mxu0 0
        %570 = vmatpush1.bf16.msra.mxu0 %v542
        %571 = vmatprep.subr.bf16.mxu0 0
        %572 = vmatpush1.bf16.msra.mxu0 %v541
        %573 = vmatprep.subr.bf16.mxu0 0
        %574 = vmatpush2.bf16.msra.mxu0 0
        %575 = vmatprep.subr.bf16.mxu0 0
        %576 = vmatpush2.bf16.msra.mxu0 0
        %577 = vmatprep.subr.bf16.mxu0 0
        %578 = vmatpush2.bf16.msra.mxu0 0
        %579 = vmatprep.subr.bf16.mxu0 0
        %580 = vmatpush2.bf16.msra.mxu0 0
        %581 = vmatprep.subr.bf16.mxu0 0
        %582 = vmatpush2.bf16.msra.mxu0 0
        %583 = vmatprep.subr.bf16.mxu0 0
        %584 = vmatpush2.bf16.msra.mxu0 0
        %585 = vmatprep.subr.bf16.mxu0 0
        %586 = vmatpush2.bf16.msra.mxu0 0
        %587 = vmatprep.subr.bf16.mxu0 0
        %588 = vmatpush2.bf16.msra.mxu0 0
        %589 = vmatprep.mubr.bf16.mxu0 0
        %590 = vmatmul.mubr.bf16.gmra.mxu0 %v507
        %v591 = vpop.f32.mrf.mxu0
        %v592 = vadd.f32 0.0, %v591
        %v593 = vpop.f32.mrf.mxu0
        %v594 = vpop.f32.mrf.mxu0
        %v595 = vadd.f32 0.0, %v594
        %v596 = vpop.f32.mrf.mxu0
        %597 = vdwg.mxu0
        %v598 = vadd.f32 %v483, %v592
        %v599 = vadd.f32 %v484, %v595
        %600 = vst [vmem:[#allocation2] sm:$0xff] %v598
        %601 = vst [vmem:[#allocation2 + $0x8] sm:$0xff] %v599
        // Predicated region
        $region124: #{forward.78} parent=110 // pred_check
          %p602 = pneg %p477
        $region125: #{forward.78} parent=110 // pred_check_branch
          %604 = sbr.rel (%p602) target = $region127
        $region126: #{forward.78} parent=110 // pred_region
          %v605 = vld [vmem:[#allocation2] sm:$0xff]
          %v606 = vld [vmem:[#allocation2 + $0x8] sm:$0xff]
          %v607 = vld [vmem:[%s470] sm:$0x1]
          %v609 = vlaneseq
          %v610 = vshrl.u32 %v609, 7
          %v611 = vsub.s32 0, %v610
          %v612 = vrot.slane %v607, %v611
          %v614 = vmul.f32 %v605, %v612
          %v615 = vmul.f32 %v606, %v612
          %v616 = vld [vmem:[%s473] sm:$0x1]
          %v618 = vlaneseq
          %v619 = vshrl.u32 %v618, 7
          %v620 = vsub.s32 0, %v619
          %v621 = vrot.slane %v616, %v620
          %v623 = vadd.f32 %v614, %v621
          %v624 = vadd.f32 %v615, %v621
          %v625 = vld [vmem:[%s416] sm:$0xff]
          %v626 = vld [vmem:[%s416 + $0x8] sm:$0xff]
          %v627 = vmul.f32 %v623, 0.2
          %v628 = vmul.f32 %v624, 0.2
          %v629 = vadd.f32 %v625, %v627
          %v630 = vadd.f32 %v626, %v628
          %v631 = vmax.f32 %v629, 0.0
          %v632 = vmax.f32 %v630, 0.0
          %633 = vst [vmem:[%s457] sm:$0xff] %v631
          %634 = vst [vmem:[%s457 + $0x8] sm:$0xff] %v632
        $region127: #{forward.78} parent=110 // pred_fallthru
          _
        %s635 = sand.u32 %s181, 1
        %s636 = sand.u32 %s181, 1
        %s637 = smul.addr %s636, 16
        %s638 = scalar_lea.vmem [#allocation5], %s637
        // Predicated region
        $region128: #{forward.78} parent=110 // pred_check
          %p639 = pneg %p191
        $region129: #{forward.78} parent=110 // pred_check_branch
          %641 = sbr.rel (%p639) target = $region131
        $region130: #{forward.78} parent=110 // pred_region
          %s642 = smul.u32 2, %s21
          %s643 = smul.addr %s642, 2
          %s644 = sadd.s32 %s22, %s643
          %s645 = smul.addr %s644, 8
          %s646 = scalar_lea.vmem %s5, %s645
          // Predicated region
          $region132: #{forward.78} parent=130 // pred_check
            _
          $region133: #{forward.78} parent=130 // pred_check_branch
            %648 = sbr.rel (0) target = $region135
          $region134: #{forward.78} parent=130 // pred_region
            // Predicated region
            $region136: #{forward.78} parent=134 // pred_check
              _
            $region137: #{forward.78} parent=134 // pred_check_branch
              %650 = sbr.rel (0) target = $region139
            $region138: #{forward.78} parent=134 // pred_region
              // Predicated region
              $region151: #{forward.78} parent=138 // pred_check
                _
              $region152: #{forward.78} parent=138 // pred_check_branch
                %668 = sbr.rel (0) target = $region154
              $region153: #{forward.78} parent=138 // pred_region
                loop: start=0, step=1, limit=1
                $region155: #{forward.78} parent=153 // loop_pre_header
                  _
                $region156: #{forward.78} parent=153 // loop_header
                  %s670 = sphi 0, %s674
                  %p671 = scmp.ge.s32.totalorder %s670, 1
                  %s675 = sphi %s638, %s638
                  %s676 = sphi %s646, %s646
                $region157: #{forward.78} parent=153 // loop_header_branch
                  %673 = sbr.rel (%p671) target = $region161
                $region158: #{forward.78} parent=153 // loop_body
                  %v677 = vld [vmem:[%s675] sm:$0xff]
                  %678 = vst [vmem:[%s676] sm:$0xff] %v677
                  %v679 = vld [vmem:[%s675 + $0x8] sm:$0xff]
                  %680 = vst [vmem:[%s676 + $0x10] sm:$0xff] %v679
                $region159: #{forward.78} parent=153 // loop_footer
                  %s674 = sadd.s32 1, %s670
                $region160: #{forward.78} parent=153 // loop_footer_branch
                  %669 = sbr.rel target = $region156
                $region161: #{forward.78} parent=153 // loop_exit
                  _
              $region154: #{forward.78} parent=138 // pred_fallthru
                _
              // Predicated region
              $region162: #{forward.78} parent=138 // pred_check
                _
              $region163: #{forward.78} parent=138 // pred_check_branch
                %682 = sbr.rel target = $region165
              $region164: #{forward.78} parent=138 // pred_region
                _
              $region165: #{forward.78} parent=138 // pred_fallthru
                _
            $region139: #{forward.78} parent=134 // pred_fallthru
              _
            // Predicated region
            $region140: #{forward.78} parent=134 // pred_check
              _
            $region141: #{forward.78} parent=134 // pred_check_branch
              %652 = sbr.rel target = $region143
            $region142: #{forward.78} parent=134 // pred_region
              %s654 = ssub.s32 256, 1
              loop: start=0, step=1, limit=1
              $region144: #{forward.78} parent=142 // loop_pre_header
                _
              $region145: #{forward.78} parent=142 // loop_header
                %s656 = sphi 0, %s660
                %p657 = scmp.ge.s32.totalorder %s656, 1
                %s661 = sphi %s638, %s638
                %s662 = sphi %s646, %s646
              $region146: #{forward.78} parent=142 // loop_header_branch
                %659 = sbr.rel (%p657) target = $region150
              $region147: #{forward.78} parent=142 // loop_body
                %v663 = vld [vmem:[%s661] sm:%s654]
                %664 = vst [vmem:[%s662] sm:%s654] %v663
                %v665 = vld [vmem:[%s661 + $0x8] sm:%s654]
                %666 = vst [vmem:[%s662 + $0x10] sm:%s654] %v665
              $region148: #{forward.78} parent=142 // loop_footer
                %s660 = sadd.s32 1, %s656
              $region149: #{forward.78} parent=142 // loop_footer_branch
                %655 = sbr.rel target = $region145
              $region150: #{forward.78} parent=142 // loop_exit
                _
            $region143: #{forward.78} parent=134 // pred_fallthru
              _
          $region135: #{forward.78} parent=130 // pred_fallthru
            _
          %683 = vnop
        $region131: #{forward.78} parent=110 // pred_fallthru
          _
      $region111: #{forward.78} parent=5 // pred_fallthru
        _
      %p684 = scmp.le.s32.totalorder 2, %s11
      // Predicated region
      $region166: #{forward.78} parent=5 // pred_check
        %p685 = pneg %p684
      $region167: #{forward.78} parent=5 // pred_check_branch
        %687 = sbr.rel (%p685) target = $region169
      $region168: #{forward.78} parent=5 // pred_region
        %s688 = ssub.s32 %s11, 2
        // Predicated region
        $region170: #{forward.78} parent=168 // pred_check
          %p689 = pneg %p197
        $region171: #{forward.78} parent=168 // pred_check_branch
          %691 = sbr.rel (%p689) target = $region173
        $region172: #{forward.78} parent=168 // pred_region
          %s692 = sand.u32 %s182, 1
          %s693 = sand.u32 %s182, 1
          %s694 = smul.addr %s693, 16
          %s695 = scalar_lea.vmem [#allocation5], %s694
        $region173: #{forward.78} parent=168 // pred_fallthru
          _
      $region169: #{forward.78} parent=5 // pred_fallthru
        _
    $region6: #{forward.78} parent=1 // loop_footer
      %s15 = sadd.s32 1, %s11
    $region7: #{forward.78} parent=1 // loop_footer_branch
      %10 = sbr.rel target = $region3
    $region8: #{forward.78} parent=1 // loop_exit
      _

// kernel: forward.83
$region0: #{forward.83}
  #allocation0 [shape = 'u32[]', space=smem, size = 0x4, offset = 0x4, fixed_abs, tag = 'smem constant byte address 0x4 - core index']
  #allocation1 [shape = 'u32[144,128]{1,0:T(1,128)}', space=vmem, size = 0x12000, scoped, tag = 'internal scratch']
  %s0 = inlined_call_operand.vmem [shape: f32[2,1,224], index: 0, kind: input, shape index: {}]
  %s1 = inlined_call_operand.vmem [shape: f32[224,64], index: 1, kind: input, shape index: {}]
  %s2 = inlined_call_operand.vmem [shape: f32[1,64], index: 2, kind: input, shape index: {}]
  %s3 = inlined_call_operand.vmem [shape: f32[1,64], index: 3, kind: input, shape index: {}]
  %s4 = inlined_call_operand.hbm [shape: f32[2,64], index: 4, kind: output, shape index: {}]
  %s5 = sld [smem:[#allocation0]]
  $region26: #{forward.83} parent=0
    _
  %s7 = ssub.s32 1, %s5
  %s8 = scalar_select 0, %s7, %s5
  $region1: #{forward.83} parent=0
    #allocation2 [shape = 'u8[1024]{0}', space=vmem, size = 0x400, scoped, tag = 'output window, operand 0, single buffered']
    #allocation3 [shape = 's32[1]{0}', space=sflag, size = 0x4, scoped, tag = 'scoped memory for forward.83']
    %9 = vsyncpa [#allocation3], 0
    // Predicated region
    $region2: #{forward.83} parent=1 // pred_check
      _
    $region3: #{forward.83} parent=1 // pred_check_branch
      %11 = sbr.rel (0) target = $region5
    $region4: #{forward.83} parent=1 // pred_region
      _
    $region5: #{forward.83} parent=1 // pred_fallthru
      _
    // Predicated region
    $region6: #{forward.83} parent=1 // pred_check
      _
    $region7: #{forward.83} parent=1 // pred_check_branch
      %13 = sbr.rel (0) target = $region9
    $region8: #{forward.83} parent=1 // pred_region
      _
    $region9: #{forward.83} parent=1 // pred_fallthru
      _
    // Predicated region
    $region10: #{forward.83} parent=1 // pred_check
      _
    $region11: #{forward.83} parent=1 // pred_check_branch
      %15 = sbr.rel (0) target = $region13
    $region12: #{forward.83} parent=1 // pred_region
      _
    $region13: #{forward.83} parent=1 // pred_fallthru
      _
    // Predicated region
    $region14: #{forward.83} parent=1 // pred_check
      _
    $region15: #{forward.83} parent=1 // pred_check_branch
      %17 = sbr.rel (0) target = $region17
    $region16: #{forward.83} parent=1 // pred_region
      _
    $region17: #{forward.83} parent=1 // pred_fallthru
      _
    %v18 = vld [vmem:[%s0] sm:$0x3]
    %v19 = vld [vmem:[%s0 + $0x2] sm:$0x3]
    %v20 = vadd.f32 %v18, 0.0
    %v21 = vadd.f32 %v19, 0.0
    %v22 = vld [vmem:[%s1] sm:$0xff]
    %v23 = vld [vmem:[%s1 + $0x8] sm:$0xff]
    %v24 = vld [vmem:[%s1 + $0x10] sm:$0xff]
    %v25 = vld [vmem:[%s1 + $0x18] sm:$0xff]
    %v26 = vld [vmem:[%s1 + $0x20] sm:$0xff]
    %v27 = vld [vmem:[%s1 + $0x28] sm:$0xff]
    %v28 = vld [vmem:[%s1 + $0x30] sm:$0xff]
    %v29 = vld [vmem:[%s1 + $0x38] sm:$0xff]
    %v30 = vld [vmem:[%s1 + $0x40] sm:$0xff]
    %v31 = vld [vmem:[%s1 + $0x48] sm:$0xff]
    %v32 = vld [vmem:[%s1 + $0x50] sm:$0xff]
    %v33 = vld [vmem:[%s1 + $0x58] sm:$0xff]
    %v34 = vld [vmem:[%s1 + $0x60] sm:$0xff]
    %v35 = vld [vmem:[%s1 + $0x68] sm:$0xff]
    %v36 = vld [vmem:[%s1 + $0x70] sm:$0xff]
    %v37 = vld [vmem:[%s1 + $0x78] sm:$0xff]
    %v38 = vld [vmem:[%s1 + $0x80] sm:$0xff]
    %v39 = vld [vmem:[%s1 + $0x88] sm:$0xff]
    %v40 = vld [vmem:[%s1 + $0x90] sm:$0xff]
    %v41 = vld [vmem:[%s1 + $0x98] sm:$0xff]
    %v42 = vld [vmem:[%s1 + $0xa0] sm:$0xff]
    %v43 = vld [vmem:[%s1 + $0xa8] sm:$0xff]
    %v44 = vld [vmem:[%s1 + $0xb0] sm:$0xff]
    %v45 = vld [vmem:[%s1 + $0xb8] sm:$0xff]
    %v46 = vld [vmem:[%s1 + $0xc0] sm:$0xff]
    %v47 = vld [vmem:[%s1 + $0xc8] sm:$0xff]
    %v48 = vld [vmem:[%s1 + $0xd0] sm:$0xff]
    %v49 = vld [vmem:[%s1 + $0xd8] sm:$0xff]
    %v52 = vcombine.low %v20, %v21
    %v54 = vunpack.c.l.s4 1966171168
    %v55 = vunpack.c.0.s8 %v54
    %v56 = vlaneseq
    %v57 = vshrl.u32 %v56, 7
    %v58 = vsub.s32 %v55, %v57
    %v59 = vrot.slane %v52, %v58
    %v60 = vcombine.high %v59, %v59
    %v62 = vunpack.c.l.s4 1966171168
    %v63 = vunpack.c.0.s8 %v62
    %v64 = vlaneseq
    %v65 = vshrl.u32 %v64, 7
    %v66 = vsub.s32 %v63, %v65
    %v67 = vrot.slane %v59, %v66
    %v69 = vunpack.c.l.s4 1966171168
    %v70 = vunpack.c.0.s8 %v69
    %v71 = vlaneseq
    %v72 = vshrl.u32 %v71, 7
    %v73 = vsub.s32 %v70, %v72
    %v74 = vrot.slane %v60, %v73
    %vm76 = vcmask 785408
    %v77 = vsel %vm76, %v74, 0
    %79 = vmatprep.subr.mxu0 0.0
    %80 = vmatpush1.msra.mxu0 %v37
    %81 = vmatprep.subr.mxu0 0.0
    %82 = vmatpush1.msra.mxu0 %v36
    %83 = vmatprep.subr.mxu0 0.0
    %84 = vmatpush1.msra.mxu0 %v35
    %85 = vmatprep.subr.mxu0 0.0
    %86 = vmatpush1.msra.mxu0 %v34
    %87 = vmatprep.subr.mxu0 0.0
    %88 = vmatpush1.msra.mxu0 %v33
    %89 = vmatprep.subr.mxu0 0.0
    %90 = vmatpush1.msra.mxu0 %v32
    %91 = vmatprep.subr.mxu0 0.0
    %92 = vmatpush1.msra.mxu0 %v31
    %93 = vmatprep.subr.mxu0 0.0
    %94 = vmatpush1.msra.mxu0 %v30
    %95 = vmatprep.subr.mxu0 0.0
    %96 = vmatpush1.msra.mxu0 %v29
    %97 = vmatprep.subr.mxu0 0.0
    %98 = vmatpush1.msra.mxu0 %v28
    %99 = vmatprep.subr.mxu0 0.0
    %100 = vmatpush1.msra.mxu0 %v27
    %101 = vmatprep.subr.mxu0 0.0
    %102 = vmatpush1.msra.mxu0 %v26
    %103 = vmatprep.subr.mxu0 0.0
    %104 = vmatpush1.msra.mxu0 %v25
    %105 = vmatprep.subr.mxu0 0.0
    %106 = vmatpush1.msra.mxu0 %v24
    %107 = vmatprep.subr.mxu0 0.0
    %108 = vmatpush1.msra.mxu0 %v23
    %109 = vmatprep.subr.mxu0 0.0
    %110 = vmatpush1.msra.mxu0 %v22
    %111 = vmatprep.subr.mxu0 0.0
    %112 = vmatpush2.msra.mxu0 0.0
    %113 = vmatprep.subr.mxu0 0.0
    %114 = vmatpush2.msra.mxu0 0.0
    %115 = vmatprep.subr.mxu0 0.0
    %116 = vmatpush2.msra.mxu0 0.0
    %117 = vmatprep.subr.mxu0 0.0
    %118 = vmatpush2.msra.mxu0 0.0
    %119 = vmatprep.subr.mxu0 0.0
    %120 = vmatpush2.msra.mxu0 %v49
    %121 = vmatprep.subr.mxu0 0.0
    %122 = vmatpush2.msra.mxu0 %v48
    %123 = vmatprep.subr.mxu0 0.0
    %124 = vmatpush2.msra.mxu0 %v47
    %125 = vmatprep.subr.mxu0 0.0
    %126 = vmatpush2.msra.mxu0 %v46
    %127 = vmatprep.subr.mxu0 0.0
    %128 = vmatpush2.msra.mxu0 %v45
    %129 = vmatprep.subr.mxu0 0.0
    %130 = vmatpush2.msra.mxu0 %v44
    %131 = vmatprep.subr.mxu0 0.0
    %132 = vmatpush2.msra.mxu0 %v43
    %133 = vmatprep.subr.mxu0 0.0
    %134 = vmatpush2.msra.mxu0 %v42
    %135 = vmatprep.subr.mxu0 0.0
    %136 = vmatpush2.msra.mxu0 %v41
    %137 = vmatprep.subr.mxu0 0.0
    %138 = vmatpush2.msra.mxu0 %v40
    %139 = vmatprep.subr.mxu0 0.0
    %140 = vmatpush2.msra.mxu0 %v39
    %141 = vmatprep.subr.mxu0 0.0
    %142 = vmatpush2.msra.mxu0 %v38
    %143 = vmatprep.mubr.f32.mxu0 %v77
    %144 = vmatmul.mubr.f32.gmra.mxu0 %v67
    %v145 = vpop.f32.mrf.mxu0
    %v146 = vadd.f32 0.0, %v145
    %v147 = vpop.f32.mrf.mxu0
    %148 = vdwg.mxu0
    %v149 = vld [vmem:[%s2] sm:$0x1]
    %v151 = vlaneseq
    %v152 = vshrl.u32 %v151, 7
    %v153 = vsub.s32 0, %v152
    %v154 = vrot.slane %v149, %v153
    %v156 = vmul.f32 %v146, %v154
    %v157 = vld [vmem:[%s3] sm:$0x1]
    %v159 = vlaneseq
    %v160 = vshrl.u32 %v159, 7
    %v161 = vsub.s32 0, %v160
    %v162 = vrot.slane %v157, %v161
    %v164 = vadd.f32 %v156, %v162
    %v165 = vmul.f32 %v164, %v164
    %vm166 = vcmask 517120
    %v167 = vsel %vm166, %v165, 0.0
    %168 = vadd.xlane.f32.xlu0 %v167
    %v169 = vpop.xlane.xlu0 %168
    %v170 = vrsqrt.pop %v169
    %v171 = vmul.f32 %v169, %v170
    %vm172 = vcmp.eq.f32.partialorder %v169, inf
    %v173 = vsel %vm172, %v169, %v171
    %vm174 = vcmp.eq.f32.partialorder %v169, 0.0
    %v175 = vand.u32 %v169, 2147483648
    %v176 = vsel %vm174, %v175, %v173
    %v177 = vmax.f32 %v176, 1e-12
    %v178 = vrcp.pop %v177
    %v179 = vmul.f32 %v164, %v178
    %180 = vst.msk [vmem:[#allocation2] sm:$0x3] %vm166, %v179
    // Predicated region
    $region18: #{forward.83} parent=1 // pred_check
      _
    $region19: #{forward.83} parent=1 // pred_check_branch
      %182 = sbr.rel (0) target = $region21
    $region20: #{forward.83} parent=1 // pred_region
      %s184 = ssub.s32 32, 32
      %185 = vsyncadd [#allocation3], %s184
      %s187 = sshll.u32 [#allocation2], 4
      %s188 = int_to_ptr.vmem [resolvable:$true] %s187
      %190 = dma.vmem_to_hbm [thread:$0]  %s188, 32, %s4, [#allocation3]
    $region21: #{forward.83} parent=1 // pred_fallthru
      _
    // Predicated region
    $region22: #{forward.83} parent=1 // pred_check
      _
    $region23: #{forward.83} parent=1 // pred_check_branch
      %192 = sbr.rel (0) target = $region25
    $region24: #{forward.83} parent=1 // pred_region
      %193 = dma.done [#allocation3], 32
    $region25: #{forward.83} parent=1 // pred_fallthru
      _
    %194 = vsyncpa [#allocation3], 1

</llo_original>
